<compile_context>
chip_gen: v6e
topology: v6e:2x2x1
jax: 0.10.0
libtpu: 0.0.40
codegen_flags: <defaults>
</compile_context>

<pallas_src>
import functools

import jax
import jax.numpy as jnp
from jax.experimental import pallas as pl
from jax.experimental.pallas import tpu as pltpu

N_NODES = 8        # nodes per graph (path graph from the test)
F_IN = 3           # input features
F_HID = 16         # hidden features (both GCN layers)
F_OUT = 7          # Linear(16, 7)
F_OUT_PAD = 8      # pad head rows to 8 for a clean (8, tile_b) output tile

STACK_IN = F_IN * N_NODES        # 24   (stacked input rows)
STACK_HID = F_HID * N_NODES      # 128  (stacked hidden rows)


def _round_up(n, m):
    return ((n + m - 1) // m) * m


def build_normalized_adjacency(edge_index, num_nodes):
    """GCNConv normalization: A_hat = D^{-1/2} (A + I) D^{-1/2} (dense, built once)."""
    src = edge_index[0]
    dst = edge_index[1]
    a = jnp.zeros((num_nodes, num_nodes), jnp.float32)
    a = a.at[dst, src].add(1.0)                       # message j -> i at [i, j]
    a = a + jnp.eye(num_nodes, dtype=jnp.float32)     # self loops
    deg = jnp.sum(a, axis=1)
    dinv = jnp.where(deg > 0, 1.0 / jnp.sqrt(deg), 0.0)
    return dinv[:, None] * a * dinv[None, :]


def init_params(key):
    """Deterministic synthetic weights, stored as (in, out)."""
    k1, k2, k3, k4, k5, k6 = jax.random.split(key, 6)
    w1 = jax.random.normal(k1, (F_IN, F_HID), jnp.float32) * 0.5    # GCNConv(3, 16)
    b1 = jax.random.normal(k2, (F_HID,), jnp.float32) * 0.1
    w2 = jax.random.normal(k3, (F_HID, F_HID), jnp.float32) * 0.25  # GCNConv(16, 16)
    b2 = jax.random.normal(k4, (F_HID,), jnp.float32) * 0.1
    wl = jax.random.normal(k5, (F_HID, F_OUT), jnp.float32) * 0.25  # Linear(16, 7)
    bl = jax.random.normal(k6, (F_OUT,), jnp.float32) * 0.1
    return (w1, b1, w2, b2, wl, bl)


def build_kernel_operands(adj_norm, params):
    """Fold the shared adjacency + model weights into 3 Kronecker MXU operands
    and 3 bias columns (all tiny, built once per call in plain JAX)."""
    w1, b1, w2, b2, wl, bl = params
    adj = adj_norm.astype(jnp.float32)
    wl_p = jnp.pad(wl, ((0, 0), (0, F_OUT_PAD - F_OUT))).astype(jnp.float32)
    bl_p = jnp.pad(bl, (0, F_OUT_PAD - F_OUT)).astype(jnp.float32)

    m1 = jnp.kron(w1.T.astype(jnp.float32), adj)                    # (128, 24)
    m2 = jnp.kron(w2.T.astype(jnp.float32), adj)                    # (128, 128)
    # Head fuses global_add_pool (sum over the 8 nodes of each feature block)
    # with Linear(16, 7):
    m3 = jnp.kron(wl_p.T, jnp.ones((1, N_NODES), jnp.float32))      # (8, 128)

    b1c = jnp.repeat(b1.astype(jnp.float32), N_NODES).reshape(STACK_HID, 1)
    b2c = jnp.repeat(b2.astype(jnp.float32), N_NODES).reshape(STACK_HID, 1)
    blc = bl_p.reshape(F_OUT_PAD, 1)
    return m1, m2, m3, b1c, b2c, blc


def _gnn_kernel(m1_ref, m2_ref, m3_ref, b1_ref, b2_ref, bl_ref, x_ref, o_ref):
    """One batch tile (tile_b graphs on the lane axis).

    m1_ref: (128, 24)  kron(W1^T, A_hat)      (VMEM, resident)
    m2_ref: (128, 128) kron(W2^T, A_hat)      (VMEM, resident)
    m3_ref: (8, 128)   kron(WL^T, ones(1,8))  (VMEM, resident)
    b*_ref: bias columns (128,1)/(128,1)/(8,1)
    x_ref : (24, tile_b)  stacked node features, batch on the lane axis
    o_ref : (8, tile_b)   outputs (7 real rows + 1 zero-weight pad row)
    """
    hi = jax.lax.Precision.HIGHEST

    # GCN layer 1:  relu( A_hat X W1 + b1 )  as one MXU matmul + bias/relu.
    h1 = jnp.dot(m1_ref[...], x_ref[...],
                 preferred_element_type=jnp.float32, precision=hi)   # (128, TB)
    h1 = jnp.maximum(h1 + b1_ref[...], 0.0)

    # GCN layer 2:  relu( A_hat H1 W2 + b2 )  as one MXU matmul + bias/relu.
    h2 = jnp.dot(m2_ref[...], h1,
                 preferred_element_type=jnp.float32, precision=hi)   # (128, TB)
    h2 = jnp.maximum(h2 + b2_ref[...], 0.0)

    # global_add_pool + Linear(16, 7) fused into one (8,128) MXU matmul.
    y = jnp.dot(m3_ref[...], h2,
                preferred_element_type=jnp.float32, precision=hi)    # (8, TB)
    o_ref[...] = y + bl_ref[...]


def gnn_regression_multi_output(x_stack, adj_norm, params, *, tile_b=512):
    """Batched forward.

    x_stack: (F_IN*N_NODES, B) f32 in the lane-dense stacked layout
             x_stack[k*8 + j, b] = x[graph b, node j, feature k].
    Returns (B, 7) f32.
    """
    stack_in, B = x_stack.shape
    assert stack_in == STACK_IN, x_stack.shape

    tile_b = min(tile_b, _round_up(B, 128))
    b_pad = _round_up(B, tile_b)

    xs = x_stack.astype(jnp.float32)
    if b_pad != B:
        xs = jnp.pad(xs, ((0, 0), (0, b_pad - B)))

    m1, m2, m3, b1c, b2c, blc = build_kernel_operands(adj_norm, params)

    const2 = lambda i: (0, 0)   # resident operands: constant block index
    out = pl.pallas_call(
        _gnn_kernel,
        out_shape=jax.ShapeDtypeStruct((F_OUT_PAD, b_pad), jnp.float32),
        grid=(b_pad // tile_b,),
        in_specs=[
            pl.BlockSpec((STACK_HID, STACK_IN), const2),    # m1 (128, 24)
            pl.BlockSpec((STACK_HID, STACK_HID), const2),   # m2 (128, 128)
            pl.BlockSpec((F_OUT_PAD, STACK_HID), const2),   # m3 (8, 128)
            pl.BlockSpec((STACK_HID, 1), const2),           # b1 column
            pl.BlockSpec((STACK_HID, 1), const2),           # b2 column
            pl.BlockSpec((F_OUT_PAD, 1), const2),           # bl column
            pl.BlockSpec((STACK_IN, tile_b), lambda i: (0, i)),  # batch tile of x
        ],
        out_specs=pl.BlockSpec((F_OUT_PAD, tile_b), lambda i: (0, i)),
        compiler_params=pltpu.CompilerParams(
            dimension_semantics=("parallel",)),
    )(m1, m2, m3, b1c, b2c, blc, xs)

    return out[:F_OUT, :B].T                                        # (B, 7)


def reference_forward(x_stack, adj_norm, params):
    """Pure-JAX batched reference matching the PyTorch module semantics."""
    P = jax.lax.Precision.HIGHEST
    w1, b1, w2, b2, wl, bl = params
    B = x_stack.shape[1]
    x = x_stack.reshape(F_IN, N_NODES, B).transpose(2, 1, 0)        # (B, N, F_IN)
    h = jnp.einsum('bnk,kf->bnf', x, w1, precision=P)
    h = jnp.maximum(jnp.einsum('ij,bjf->bif', adj_norm, h, precision=P) + b1, 0.0)
    h = jnp.einsum('bnf,fg->bng', h, w2, precision=P)
    h = jnp.maximum(jnp.einsum('ij,bjg->big', adj_norm, h, precision=P) + b2, 0.0)
    pooled = jnp.sum(h, axis=1)                       # global_add_pool per graph
    return jnp.einsum('bg,go->bo', pooled, wl, precision=P) + bl


if __name__ == "__main__":
    # Graph from the test file: 8-node path graph, bidirectional edges
    # (same structure for every graph in the batch; features differ).
    edge_index = jnp.array(
        [[0, 1, 1, 2, 2, 3, 3, 4, 4, 5, 5, 6, 6, 7],
         [1, 0, 2, 1, 3, 2, 4, 3, 5, 4, 6, 5, 7, 6]], dtype=jnp.int32)
    num_nodes = 8
    batch_graphs = 1024       # 2 parallel grid steps of 512 -> both v7x TCs busy
    tile_b = 512

    key = jax.random.PRNGKey(0)
    kx, kp = jax.random.split(key)
    # x is produced directly in the kernel's lane-dense stacked layout
    # (F_IN*N, B), so there is no wrapper-side HBM transpose before pallas_call.
    x_stack = jax.random.normal(kx, (STACK_IN, batch_graphs), jnp.float32)
    params = init_params(kp)

    adj_norm = build_normalized_adjacency(edge_index, num_nodes)  # built once

    fwd = jax.jit(functools.partial(gnn_regression_multi_output, tile_b=tile_b))
    out = jax.block_until_ready(fwd(x_stack, adj_norm, params))

    ref = reference_forward(x_stack, adj_norm, params)
    assert out.shape == (batch_graphs, F_OUT), out.shape
    max_err = float(jnp.max(jnp.abs(out - ref)))
    assert jnp.allclose(out, ref, atol=5e-4, rtol=1e-4), f"max abs err {max_err}"

    print("KERNEL_OK")
</pallas_src>

<mosaic_0001>
module attributes {stable_mosaic.version = 11 : i64} {
  func.func @_gnn_kernel(%arg0: i32, %arg1: memref<128x24xf32, #tpu.memory_space<vmem>>, %arg2: memref<128x128xf32, #tpu.memory_space<vmem>>, %arg3: memref<8x128xf32, #tpu.memory_space<vmem>>, %arg4: memref<128x1xf32, #tpu.memory_space<vmem>>, %arg5: memref<128x1xf32, #tpu.memory_space<vmem>>, %arg6: memref<8x1xf32, #tpu.memory_space<vmem>>, %arg7: memref<24x512xf32, #tpu.memory_space<vmem>>, %arg8: memref<8x512xf32, #tpu.memory_space<vmem>>) attributes {dimension_semantics = [#tpu.dimension_semantics<parallel>], iteration_bounds = array<i64: 2>, scalar_prefetch = 0 : i64, scratch_operands = 0 : i64, tpu.core_type = #tpu.core_type<tc>, window_params = [{pipeline_mode = #tpu.pipeline_mode<synchronous>, transform_indices = @transform_0, window_bounds = array<i64: 128, 24>}, {pipeline_mode = #tpu.pipeline_mode<synchronous>, transform_indices = @transform_1, window_bounds = array<i64: 128, 128>}, {pipeline_mode = #tpu.pipeline_mode<synchronous>, transform_indices = @transform_2, window_bounds = array<i64: 8, 128>}, {pipeline_mode = #tpu.pipeline_mode<synchronous>, transform_indices = @transform_3, window_bounds = array<i64: 128, 1>}, {pipeline_mode = #tpu.pipeline_mode<synchronous>, transform_indices = @transform_4, window_bounds = array<i64: 128, 1>}, {pipeline_mode = #tpu.pipeline_mode<synchronous>, transform_indices = @transform_5, window_bounds = array<i64: 8, 1>}, {transform_indices = @transform_6, window_bounds = array<i64: 24, 512>}, {transform_indices = @transform_7, window_bounds = array<i64: 8, 512>}]} {
    %c0 = arith.constant 0 : index
    %c0_0 = arith.constant 0 : index
    %0 = vector.load %arg1[%c0, %c0_0] : memref<128x24xf32, #tpu.memory_space<vmem>>, vector<128x24xf32>
    %c0_1 = arith.constant 0 : index
    %c0_2 = arith.constant 0 : index
    %1 = vector.load %arg7[%c0_1, %c0_2] : memref<24x512xf32, #tpu.memory_space<vmem>>, vector<24x512xf32>
    %cst = arith.constant dense<0.000000e+00> : vector<128x512xf32>
    %2 = tpu.matmul %0, %1, %cst {dimension_numbers = #tpu.dot_dimension_numbers<[1], [0], [0], [1], [0, 0, 1, 1], [], []>, precision = #tpu.contract_precision<fp32>} : vector<128x24xf32>, vector<24x512xf32>, vector<128x512xf32> -> vector<128x512xf32>
    %c0_3 = arith.constant 0 : index
    %c0_4 = arith.constant 0 : index
    %3 = vector.load %arg4[%c0_3, %c0_4] : memref<128x1xf32, #tpu.memory_space<vmem>>, vector<128x1xf32>
    %4 = vector.broadcast %3 : vector<128x1xf32> to vector<128x512xf32>
    %5 = arith.addf %2, %4 : vector<128x512xf32>
    %cst_5 = arith.constant 0.000000e+00 : f32
    %6 = vector.broadcast %cst_5 : f32 to vector<128x512xf32>
    %7 = arith.maximumf %5, %6 : vector<128x512xf32>
    %c0_6 = arith.constant 0 : index
    %c0_7 = arith.constant 0 : index
    %8 = vector.load %arg2[%c0_6, %c0_7] : memref<128x128xf32, #tpu.memory_space<vmem>>, vector<128x128xf32>
    %cst_8 = arith.constant dense<0.000000e+00> : vector<128x512xf32>
    %9 = tpu.matmul %8, %7, %cst_8 {dimension_numbers = #tpu.dot_dimension_numbers<[1], [0], [0], [1], [0, 0, 1, 1], [], []>, precision = #tpu.contract_precision<fp32>} : vector<128x128xf32>, vector<128x512xf32>, vector<128x512xf32> -> vector<128x512xf32>
    %c0_9 = arith.constant 0 : index
    %c0_10 = arith.constant 0 : index
    %10 = vector.load %arg5[%c0_9, %c0_10] : memref<128x1xf32, #tpu.memory_space<vmem>>, vector<128x1xf32>
    %11 = vector.broadcast %10 : vector<128x1xf32> to vector<128x512xf32>
    %12 = arith.addf %9, %11 : vector<128x512xf32>
    %cst_11 = arith.constant 0.000000e+00 : f32
    %13 = vector.broadcast %cst_11 : f32 to vector<128x512xf32>
    %14 = arith.maximumf %12, %13 : vector<128x512xf32>
    %c0_12 = arith.constant 0 : index
    %c0_13 = arith.constant 0 : index
    %15 = vector.load %arg3[%c0_12, %c0_13] : memref<8x128xf32, #tpu.memory_space<vmem>>, vector<8x128xf32>
    %cst_14 = arith.constant dense<0.000000e+00> : vector<8x512xf32>
    %16 = tpu.matmul %15, %14, %cst_14 {dimension_numbers = #tpu.dot_dimension_numbers<[1], [0], [0], [1], [0, 0, 1, 1], [], []>, precision = #tpu.contract_precision<fp32>} : vector<8x128xf32>, vector<128x512xf32>, vector<8x512xf32> -> vector<8x512xf32>
    %c0_15 = arith.constant 0 : index
    %c0_16 = arith.constant 0 : index
    %17 = vector.load %arg6[%c0_15, %c0_16] : memref<8x1xf32, #tpu.memory_space<vmem>>, vector<8x1xf32>
    %18 = vector.broadcast %17 : vector<8x1xf32> to vector<8x512xf32>
    %19 = arith.addf %16, %18 : vector<8x512xf32>
    %c0_17 = arith.constant 0 : index
    %c0_18 = arith.constant 0 : index
    %20 = vector.load %arg8[%c0_17, %c0_18] : memref<8x512xf32, #tpu.memory_space<vmem>>, vector<8x512xf32>
    tpu.vector_store %arg8[%c0_17, %c0_18], %19 {strides = array<i32>} : memref<8x512xf32, #tpu.memory_space<vmem>>, vector<8x512xf32>,
    return
  }
  func.func @transform_0(%arg0: i32) -> (i32, i32) {
    %c0_i32 = arith.constant 0 : i32
    %c0_i32_0 = arith.constant 0 : i32
    %c0_i32_1 = arith.constant 0 : i32
    return %c0_i32, %c0_i32_0 : i32, i32
  }
  func.func @transform_1(%arg0: i32) -> (i32, i32) {
    %c0_i32 = arith.constant 0 : i32
    %c0_i32_0 = arith.constant 0 : i32
    %c0_i32_1 = arith.constant 0 : i32
    return %c0_i32, %c0_i32_0 : i32, i32
  }
  func.func @transform_2(%arg0: i32) -> (i32, i32) {
    %c0_i32 = arith.constant 0 : i32
    %c0_i32_0 = arith.constant 0 : i32
    %c0_i32_1 = arith.constant 0 : i32
    return %c0_i32, %c0_i32_0 : i32, i32
  }
  func.func @transform_3(%arg0: i32) -> (i32, i32) {
    %c0_i32 = arith.constant 0 : i32
    %c0_i32_0 = arith.constant 0 : i32
    %c0_i32_1 = arith.constant 0 : i32
    return %c0_i32, %c0_i32_0 : i32, i32
  }
  func.func @transform_4(%arg0: i32) -> (i32, i32) {
    %c0_i32 = arith.constant 0 : i32
    %c0_i32_0 = arith.constant 0 : i32
    %c0_i32_1 = arith.constant 0 : i32
    return %c0_i32, %c0_i32_0 : i32, i32
  }
  func.func @transform_5(%arg0: i32) -> (i32, i32) {
    %c0_i32 = arith.constant 0 : i32
    %c0_i32_0 = arith.constant 0 : i32
    %c0_i32_1 = arith.constant 0 : i32
    return %c0_i32, %c0_i32_0 : i32, i32
  }
  func.func @transform_6(%arg0: i32) -> (i32, i32) {
    %c0_i32 = arith.constant 0 : i32
    %c0_i32_0 = arith.constant 0 : i32
    return %c0_i32, %arg0 : i32, i32
  }
  func.func @transform_7(%arg0: i32) -> (i32, i32) {
    %c0_i32 = arith.constant 0 : i32
    %c0_i32_0 = arith.constant 0 : i32
    return %c0_i32, %arg0 : i32, i32
  }
}

</mosaic_0001>

<llo_original>
// kernel: gnn_regression_multi_output.1
$region0: #{gnn_regression_multi_output.1}
  #allocation0 [shape = 'u32[]', space=smem, size = 0x4, offset = 0x4, fixed_abs, tag = 'smem constant byte address 0x4 - core index']
  #allocation1 [shape = 'u32[144,128]{1,0:T(1,128)}', space=vmem, size = 0x12000, scoped, tag = 'internal scratch']
  %s0 = inlined_call_operand.vmem [shape: f32[128,24], index: 0, kind: input, shape index: {}]
  %s1 = inlined_call_operand.vmem [shape: f32[128,128], index: 1, kind: input, shape index: {}]
  %s2 = inlined_call_operand.vmem [shape: f32[8,128], index: 2, kind: input, shape index: {}]
  %s3 = inlined_call_operand.vmem [shape: f32[128,1], index: 3, kind: input, shape index: {}]
  %s4 = inlined_call_operand.vmem [shape: f32[128,1], index: 4, kind: input, shape index: {}]
  %s5 = inlined_call_operand.vmem [shape: f32[8,1], index: 5, kind: input, shape index: {}]
  %s6 = inlined_call_operand.vmem [shape: f32[24,1024], index: 6, kind: input, shape index: {}]
  %s7 = inlined_call_operand.vmem [shape: f32[8,1024], index: 7, kind: output, shape index: {}]
  %s8 = sld [smem:[#allocation0]]
  $region84: #{gnn_regression_multi_output.1} parent=0
    _
  %s10 = ssub.s32 1, %s8
  %s11 = scalar_select 0, %s10, %s8
  $region1: #{gnn_regression_multi_output.1} parent=0
    #allocation2 [shape = 'u8[98304]{0}', space=vmem, size = 0x18000, scoped, tag = 'input window, operand 6']
    loop: start=0, step=1, limit=4
    $region2: #{gnn_regression_multi_output.1} parent=1 // loop_pre_header
      _
    $region3: #{gnn_regression_multi_output.1} parent=1 // loop_header
      %s13 = sphi 0, %s17
      %p14 = scmp.ge.s32.totalorder %s13, 4
      %s21 = sphi 0, %s21
      %s23 = sphi 0, %s21
      %s24 = sphi 0, %s23
      %s38 = sphi 0, %s24
      %s42 = sphi 0, %s42
      %s44 = sphi 0, %s42
      %s45 = sphi 0, %s44
      %s59 = sphi 0, %s45
      %s63 = sphi 0, %s63
      %s65 = sphi 0, %s63
      %s66 = sphi 0, %s65
      %s80 = sphi 0, %s66
      %s84 = sphi 0, %s84
      %s86 = sphi 0, %s84
      %s87 = sphi 0, %s86
      %s101 = sphi 0, %s87
      %s105 = sphi 0, %s105
      %s107 = sphi 0, %s105
      %s108 = sphi 0, %s107
      %s122 = sphi 0, %s108
      %s126 = sphi 0, %s126
      %s128 = sphi 0, %s126
      %s129 = sphi 0, %s128
      %s143 = sphi 0, %s129
      %s149 = sphi 0, %s151
      %s152 = sphi 0, %s149
      %s153 = sphi 0, %s152
      %s169 = sphi 0, %s153
      %s175 = sphi 0, %s177
      %s178 = sphi 0, %s175
      %s179 = sphi 0, %s178
      %s195 = sphi 0, %s179
    $region4: #{gnn_regression_multi_output.1} parent=1 // loop_header_branch
      %16 = sbr.rel (%p14) target = $region8
    $region5: #{gnn_regression_multi_output.1} parent=1 // loop_body
      %s18 = ssub.s32 %s13, 1
      %s19 = ssub.s32 %s13, 2
      %s20 = sadd.s32 %s13, 1
      %s22 = sadd.s32 %s21, 1
      %p25 = scmp.eq.s32.totalorder %s13, 1
      %p26 = scmp.ne.s32.totalorder %s21, %s23
      %p27 = scmp.eq.s32.totalorder %s13, 0
      %p28 = por %p26, %p27
      %p29 = scmp.ne.s32.totalorder %s21, %s23
      %p30 = scmp.eq.s32.totalorder %s18, 1
      %p31 = por %p29, %p30
      %p32 = scmp.ne.s32.totalorder %s23, %s24
      %p33 = scmp.eq.s32.totalorder %s18, 0
      %p34 = por %p32, %p33
      %p35 = scmp.ne.s32.totalorder %s23, %s24
      %p36 = scmp.eq.s32.totalorder %s19, 1
      %p37 = por %p35, %p36
      %p39 = scmp.ne.s32.totalorder %s24, %s38
      %p40 = scmp.eq.s32.totalorder %s19, 0
      %p41 = por %p39, %p40
      %s43 = sadd.s32 %s42, 1
      %p46 = scmp.eq.s32.totalorder %s13, 1
      %p47 = scmp.ne.s32.totalorder %s42, %s44
      %p48 = scmp.eq.s32.totalorder %s13, 0
      %p49 = por %p47, %p48
      %p50 = scmp.ne.s32.totalorder %s42, %s44
      %p51 = scmp.eq.s32.totalorder %s18, 1
      %p52 = por %p50, %p51
      %p53 = scmp.ne.s32.totalorder %s44, %s45
      %p54 = scmp.eq.s32.totalorder %s18, 0
      %p55 = por %p53, %p54
      %p56 = scmp.ne.s32.totalorder %s44, %s45
      %p57 = scmp.eq.s32.totalorder %s19, 1
      %p58 = por %p56, %p57
      %p60 = scmp.ne.s32.totalorder %s45, %s59
      %p61 = scmp.eq.s32.totalorder %s19, 0
      %p62 = por %p60, %p61
      %s64 = sadd.s32 %s63, 1
      %p67 = scmp.eq.s32.totalorder %s13, 1
      %p68 = scmp.ne.s32.totalorder %s63, %s65
      %p69 = scmp.eq.s32.totalorder %s13, 0
      %p70 = por %p68, %p69
      %p71 = scmp.ne.s32.totalorder %s63, %s65
      %p72 = scmp.eq.s32.totalorder %s18, 1
      %p73 = por %p71, %p72
      %p74 = scmp.ne.s32.totalorder %s65, %s66
      %p75 = scmp.eq.s32.totalorder %s18, 0
      %p76 = por %p74, %p75
      %p77 = scmp.ne.s32.totalorder %s65, %s66
      %p78 = scmp.eq.s32.totalorder %s19, 1
      %p79 = por %p77, %p78
      %p81 = scmp.ne.s32.totalorder %s66, %s80
      %p82 = scmp.eq.s32.totalorder %s19, 0
      %p83 = por %p81, %p82
      %s85 = sadd.s32 %s84, 1
      %p88 = scmp.eq.s32.totalorder %s13, 1
      %p89 = scmp.ne.s32.totalorder %s84, %s86
      %p90 = scmp.eq.s32.totalorder %s13, 0
      %p91 = por %p89, %p90
      %p92 = scmp.ne.s32.totalorder %s84, %s86
      %p93 = scmp.eq.s32.totalorder %s18, 1
      %p94 = por %p92, %p93
      %p95 = scmp.ne.s32.totalorder %s86, %s87
      %p96 = scmp.eq.s32.totalorder %s18, 0
      %p97 = por %p95, %p96
      %p98 = scmp.ne.s32.totalorder %s86, %s87
      %p99 = scmp.eq.s32.totalorder %s19, 1
      %p100 = por %p98, %p99
      %p102 = scmp.ne.s32.totalorder %s87, %s101
      %p103 = scmp.eq.s32.totalorder %s19, 0
      %p104 = por %p102, %p103
      %s106 = sadd.s32 %s105, 1
      %p109 = scmp.eq.s32.totalorder %s13, 1
      %p110 = scmp.ne.s32.totalorder %s105, %s107
      %p111 = scmp.eq.s32.totalorder %s13, 0
      %p112 = por %p110, %p111
      %p113 = scmp.ne.s32.totalorder %s105, %s107
      %p114 = scmp.eq.s32.totalorder %s18, 1
      %p115 = por %p113, %p114
      %p116 = scmp.ne.s32.totalorder %s107, %s108
      %p117 = scmp.eq.s32.totalorder %s18, 0
      %p118 = por %p116, %p117
      %p119 = scmp.ne.s32.totalorder %s107, %s108
      %p120 = scmp.eq.s32.totalorder %s19, 1
      %p121 = por %p119, %p120
      %p123 = scmp.ne.s32.totalorder %s108, %s122
      %p124 = scmp.eq.s32.totalorder %s19, 0
      %p125 = por %p123, %p124
      %s127 = sadd.s32 %s126, 1
      %p130 = scmp.eq.s32.totalorder %s13, 1
      %p131 = scmp.ne.s32.totalorder %s126, %s128
      %p132 = scmp.eq.s32.totalorder %s13, 0
      %p133 = por %p131, %p132
      %p134 = scmp.ne.s32.totalorder %s126, %s128
      %p135 = scmp.eq.s32.totalorder %s18, 1
      %p136 = por %p134, %p135
      %p137 = scmp.ne.s32.totalorder %s128, %s129
      %p138 = scmp.eq.s32.totalorder %s18, 0
      %p139 = por %p137, %p138
      %p140 = scmp.ne.s32.totalorder %s128, %s129
      %p141 = scmp.eq.s32.totalorder %s19, 1
      %p142 = por %p140, %p141
      %p144 = scmp.ne.s32.totalorder %s129, %s143
      %p145 = scmp.eq.s32.totalorder %s19, 0
      %p146 = por %p144, %p145
      %s147 = ssub.s32 %s13, %s20
      %p148 = scmp.eq.s32.totalorder %s147, 0
      %s150 = sadd.s32 %s149, 1
      %s151 = scalar_select %p148, %s149, %s150
      %p154 = pneg %p148
      %p155 = scmp.eq.s32.totalorder %s13, 1
      %p156 = por %p154, %p155
      %p157 = scmp.ne.s32.totalorder %s149, %s152
      %p158 = scmp.eq.s32.totalorder %s13, 0
      %p159 = por %p157, %p158
      %p160 = scmp.ne.s32.totalorder %s149, %s152
      %p161 = scmp.eq.s32.totalorder %s18, 1
      %p162 = por %p160, %p161
      %p163 = scmp.ne.s32.totalorder %s152, %s153
      %p164 = scmp.eq.s32.totalorder %s18, 0
      %p165 = por %p163, %p164
      %p166 = scmp.ne.s32.totalorder %s152, %s153
      %p167 = scmp.eq.s32.totalorder %s19, 1
      %p168 = por %p166, %p167
      %p170 = scmp.ne.s32.totalorder %s153, %s169
      %p171 = scmp.eq.s32.totalorder %s19, 0
      %p172 = por %p170, %p171
      %s173 = ssub.s32 %s13, %s20
      %p174 = scmp.eq.s32.totalorder %s173, 0
      %s176 = sadd.s32 %s175, 1
      %s177 = scalar_select %p174, %s175, %s176
      %p180 = pneg %p174
      %p181 = scmp.eq.s32.totalorder %s13, 1
      %p182 = por %p180, %p181
      %p183 = scmp.ne.s32.totalorder %s175, %s178
      %p184 = scmp.eq.s32.totalorder %s13, 0
      %p185 = por %p183, %p184
      %p186 = scmp.ne.s32.totalorder %s175, %s178
      %p187 = scmp.eq.s32.totalorder %s18, 1
      %p188 = por %p186, %p187
      %p189 = scmp.ne.s32.totalorder %s178, %s179
      %p190 = scmp.eq.s32.totalorder %s18, 0
      %p191 = por %p189, %p190
      %p192 = scmp.ne.s32.totalorder %s178, %s179
      %p193 = scmp.eq.s32.totalorder %s19, 1
      %p194 = por %p192, %p193
      %p196 = scmp.ne.s32.totalorder %s179, %s195
      %p197 = scmp.eq.s32.totalorder %s19, 0
      %p198 = por %p196, %p197
      %p199 = scmp.le.s32.totalorder 1, %s13
      %p200 = scmp.lt.s32.totalorder %s13, 3
      %p201 = pnand %p199, %p200
      %p202 = pneg %p201
      // Predicated region
      $region9: #{gnn_regression_multi_output.1} parent=5 // pred_check
        _
      $region10: #{gnn_regression_multi_output.1} parent=5 // pred_check_branch
        %204 = sbr.rel (%p201) target = $region12
      $region11: #{gnn_regression_multi_output.1} parent=5 // pred_region
        %s205 = ssub.s32 %s13, 1
        // Predicated region
        $region13: #{gnn_regression_multi_output.1} parent=11 // pred_check
          %p206 = pneg %p34
        $region14: #{gnn_regression_multi_output.1} parent=11 // pred_check_branch
          %208 = sbr.rel (%p206) target = $region16
        $region15: #{gnn_regression_multi_output.1} parent=11 // pred_region
          _
        $region16: #{gnn_regression_multi_output.1} parent=11 // pred_fallthru
          _
        // Predicated region
        $region17: #{gnn_regression_multi_output.1} parent=11 // pred_check
          %p209 = pneg %p55
        $region18: #{gnn_regression_multi_output.1} parent=11 // pred_check_branch
          %211 = sbr.rel (%p209) target = $region20
        $region19: #{gnn_regression_multi_output.1} parent=11 // pred_region
          _
        $region20: #{gnn_regression_multi_output.1} parent=11 // pred_fallthru
          _
        // Predicated region
        $region21: #{gnn_regression_multi_output.1} parent=11 // pred_check
          %p212 = pneg %p76
        $region22: #{gnn_regression_multi_output.1} parent=11 // pred_check_branch
          %214 = sbr.rel (%p212) target = $region24
        $region23: #{gnn_regression_multi_output.1} parent=11 // pred_region
          _
        $region24: #{gnn_regression_multi_output.1} parent=11 // pred_fallthru
          _
        // Predicated region
        $region25: #{gnn_regression_multi_output.1} parent=11 // pred_check
          %p215 = pneg %p97
        $region26: #{gnn_regression_multi_output.1} parent=11 // pred_check_branch
          %217 = sbr.rel (%p215) target = $region28
        $region27: #{gnn_regression_multi_output.1} parent=11 // pred_region
          _
        $region28: #{gnn_regression_multi_output.1} parent=11 // pred_fallthru
          _
        // Predicated region
        $region29: #{gnn_regression_multi_output.1} parent=11 // pred_check
          %p218 = pneg %p118
        $region30: #{gnn_regression_multi_output.1} parent=11 // pred_check_branch
          %220 = sbr.rel (%p218) target = $region32
        $region31: #{gnn_regression_multi_output.1} parent=11 // pred_region
          _
        $region32: #{gnn_regression_multi_output.1} parent=11 // pred_fallthru
          _
        // Predicated region
        $region33: #{gnn_regression_multi_output.1} parent=11 // pred_check
          %p221 = pneg %p139
        $region34: #{gnn_regression_multi_output.1} parent=11 // pred_check_branch
          %223 = sbr.rel (%p221) target = $region36
        $region35: #{gnn_regression_multi_output.1} parent=11 // pred_region
          _
        $region36: #{gnn_regression_multi_output.1} parent=11 // pred_fallthru
          _
      $region12: #{gnn_regression_multi_output.1} parent=5 // pred_fallthru
        _
      %p224 = scmp.lt.s32.totalorder %s13, 2
      // Predicated region
      $region37: #{gnn_regression_multi_output.1} parent=5 // pred_check
        %p225 = pneg %p224
      $region38: #{gnn_regression_multi_output.1} parent=5 // pred_check_branch
        %227 = sbr.rel (%p225) target = $region40
      $region39: #{gnn_regression_multi_output.1} parent=5 // pred_region
        // Predicated region
        $region41: #{gnn_regression_multi_output.1} parent=39 // pred_check
          %p228 = pneg %p159
        $region42: #{gnn_regression_multi_output.1} parent=39 // pred_check_branch
          %230 = sbr.rel (%p228) target = $region44
        $region43: #{gnn_regression_multi_output.1} parent=39 // pred_region
          %s231 = sand.u32 %s149, 1
          %s232 = sand.u32 %s149, 1
          %s233 = smul.addr %s232, 96
          %s234 = scalar_lea.vmem [#allocation2], %s233
          %s235 = smul.u32 4, %s13
          %s236 = smul.addr %s235, 8
          %s237 = scalar_lea.vmem %s6, %s236
          // Predicated region
          $region45: #{gnn_regression_multi_output.1} parent=43 // pred_check
            _
          $region46: #{gnn_regression_multi_output.1} parent=43 // pred_check_branch
            %239 = sbr.rel (0) target = $region48
          $region47: #{gnn_regression_multi_output.1} parent=43 // pred_region
            // Predicated region
            $region49: #{gnn_regression_multi_output.1} parent=47 // pred_check
              _
            $region50: #{gnn_regression_multi_output.1} parent=47 // pred_check_branch
              %241 = sbr.rel (0) target = $region52
            $region51: #{gnn_regression_multi_output.1} parent=47 // pred_region
              loop: start=0, step=1, limit=1
              $region53: #{gnn_regression_multi_output.1} parent=51 // loop_pre_header
                _
              $region54: #{gnn_regression_multi_output.1} parent=51 // loop_header
                %s243 = sphi 0, %s247
                %p244 = scmp.ge.s32.totalorder %s243, 1
                %s248 = sphi %s237, %s237
                %s249 = sphi %s234, %s234
              $region55: #{gnn_regression_multi_output.1} parent=51 // loop_header_branch
                %246 = sbr.rel (%p244) target = $region59
              $region56: #{gnn_regression_multi_output.1} parent=51 // loop_body
                %v250 = vld [vmem:[%s248] sm:$0xff]
                %251 = vst [vmem:[%s249] sm:$0xff] %v250
                %v252 = vld [vmem:[%s248 + $0x8] sm:$0xff]
                %253 = vst [vmem:[%s249 + $0x8] sm:$0xff] %v252
                %v254 = vld [vmem:[%s248 + $0x10] sm:$0xff]
                %255 = vst [vmem:[%s249 + $0x10] sm:$0xff] %v254
                %v256 = vld [vmem:[%s248 + $0x18] sm:$0xff]
                %257 = vst [vmem:[%s249 + $0x18] sm:$0xff] %v256
                %v258 = vld [vmem:[%s248 + $0x40] sm:$0xff]
                %259 = vst [vmem:[%s249 + $0x20] sm:$0xff] %v258
                %v260 = vld [vmem:[%s248 + $0x48] sm:$0xff]
                %261 = vst [vmem:[%s249 + $0x28] sm:$0xff] %v260
                %v262 = vld [vmem:[%s248 + $0x50] sm:$0xff]
                %263 = vst [vmem:[%s249 + $0x30] sm:$0xff] %v262
                %v264 = vld [vmem:[%s248 + $0x58] sm:$0xff]
                %265 = vst [vmem:[%s249 + $0x38] sm:$0xff] %v264
                %v266 = vld [vmem:[%s248 + $0x80] sm:$0xff]
                %267 = vst [vmem:[%s249 + $0x40] sm:$0xff] %v266
                %v268 = vld [vmem:[%s248 + $0x88] sm:$0xff]
                %269 = vst [vmem:[%s249 + $0x48] sm:$0xff] %v268
                %v270 = vld [vmem:[%s248 + $0x90] sm:$0xff]
                %271 = vst [vmem:[%s249 + $0x50] sm:$0xff] %v270
                %v272 = vld [vmem:[%s248 + $0x98] sm:$0xff]
                %273 = vst [vmem:[%s249 + $0x58] sm:$0xff] %v272
              $region57: #{gnn_regression_multi_output.1} parent=51 // loop_footer
                %s247 = sadd.s32 1, %s243
              $region58: #{gnn_regression_multi_output.1} parent=51 // loop_footer_branch
                %242 = sbr.rel target = $region54
              $region59: #{gnn_regression_multi_output.1} parent=51 // loop_exit
                _
            $region52: #{gnn_regression_multi_output.1} parent=47 // pred_fallthru
              _
            // Predicated region
            $region60: #{gnn_regression_multi_output.1} parent=47 // pred_check
              _
            $region61: #{gnn_regression_multi_output.1} parent=47 // pred_check_branch
              %275 = sbr.rel target = $region63
            $region62: #{gnn_regression_multi_output.1} parent=47 // pred_region
              _
            $region63: #{gnn_regression_multi_output.1} parent=47 // pred_fallthru
              _
          $region48: #{gnn_regression_multi_output.1} parent=43 // pred_fallthru
            _
          %276 = vnop
        $region44: #{gnn_regression_multi_output.1} parent=39 // pred_fallthru
          _
      $region40: #{gnn_regression_multi_output.1} parent=5 // pred_fallthru
        _
      %p277 = scmp.le.s32.totalorder 1, %s13
      %p278 = scmp.lt.s32.totalorder %s13, 3
      %p279 = pnand %p277, %p278
      %p280 = pneg %p279
      // Predicated region
      $region64: #{gnn_regression_multi_output.1} parent=5 // pred_check
        _
      $region65: #{gnn_regression_multi_output.1} parent=5 // pred_check_branch
        %282 = sbr.rel (%p279) target = $region67
      $region66: #{gnn_regression_multi_output.1} parent=5 // pred_region
        %s283 = ssub.s32 %s13, 1
        %s284 = sand.u32 %s152, 1
        %s285 = sand.u32 %s152, 1
        %s286 = smul.addr %s285, 96
        %s287 = scalar_lea.vmem [#allocation2], %s286
        // Predicated region
        $region68: #{gnn_regression_multi_output.1} parent=66 // pred_check
          %p288 = pneg %p165
        $region69: #{gnn_regression_multi_output.1} parent=66 // pred_check_branch
          %290 = sbr.rel (%p288) target = $region71
        $region70: #{gnn_regression_multi_output.1} parent=66 // pred_region
          _
        $region71: #{gnn_regression_multi_output.1} parent=66 // pred_fallthru
          _
        %p291 = pneg %p34
        %p292 = pneg %p31
        %p293 = pneg %p55
        %p294 = pneg %p52
        %p295 = pneg %p76
        %p296 = pneg %p73
        %p297 = pneg %p97
        %p298 = pneg %p94
        %p299 = pneg %p118
        %p300 = pneg %p115
        %p301 = pneg %p139
        %p302 = pneg %p136
        %s303 = sand.u32 %s152, 1
        %s304 = sand.u32 %s152, 1
        %s305 = smul.addr %s304, 96
        %s306 = scalar_lea.vmem [#allocation2], %s305
        %p307 = pneg %p165
        %p308 = pneg %p162
        %p309 = pneg %p191
        %p310 = pneg %p188
        %s311 = smul.u32 4, %s18
        %p312 = scmp.lt.s32.totalorder %s311, 7
        %s313 = scalar_select %p312, %s311, 7
        %s314 = smul.addr %s313, 8
        %s315 = scalar_lea.vmem %s7, %s314
        %s316 = smul.u32 4, %s18
        %s317 = smul.u32 4, %s18
        %p318 = scmp.lt.s32.totalorder %s317, 7
        %s319 = scalar_select %p318, %s317, 7
        %s320 = smul.addr %s319, 8
        %s321 = scalar_lea.vmem %s7, %s320
        %s322 = smul.u32 4, %s18
        %v323 = vld [vmem:[%s0] sm:$0xff]
        %v324 = vld [vmem:[%s0 + $0x8] sm:$0xff]
        %v325 = vld [vmem:[%s0 + $0x10] sm:$0xff]
        %v326 = vld [vmem:[%s0 + $0x18] sm:$0xff]
        %v327 = vld [vmem:[%s0 + $0x20] sm:$0xff]
        %v328 = vld [vmem:[%s0 + $0x28] sm:$0xff]
        %v329 = vld [vmem:[%s0 + $0x30] sm:$0xff]
        %v330 = vld [vmem:[%s0 + $0x38] sm:$0xff]
        %v331 = vld [vmem:[%s0 + $0x40] sm:$0xff]
        %v332 = vld [vmem:[%s0 + $0x48] sm:$0xff]
        %v333 = vld [vmem:[%s0 + $0x50] sm:$0xff]
        %v334 = vld [vmem:[%s0 + $0x58] sm:$0xff]
        %v335 = vld [vmem:[%s0 + $0x60] sm:$0xff]
        %v336 = vld [vmem:[%s0 + $0x68] sm:$0xff]
        %v337 = vld [vmem:[%s0 + $0x70] sm:$0xff]
        %v338 = vld [vmem:[%s0 + $0x78] sm:$0xff]
        %v339 = vld [vmem:[%s287] sm:$0xff]
        %v340 = vld [vmem:[%s287 + $0x8] sm:$0xff]
        %v341 = vld [vmem:[%s287 + $0x10] sm:$0xff]
        %v342 = vld [vmem:[%s287 + $0x18] sm:$0xff]
        %v343 = vld [vmem:[%s287 + $0x20] sm:$0xff]
        %v344 = vld [vmem:[%s287 + $0x28] sm:$0xff]
        %v345 = vld [vmem:[%s287 + $0x30] sm:$0xff]
        %v346 = vld [vmem:[%s287 + $0x38] sm:$0xff]
        %v347 = vld [vmem:[%s287 + $0x40] sm:$0xff]
        %v348 = vld [vmem:[%s287 + $0x48] sm:$0xff]
        %v349 = vld [vmem:[%s287 + $0x50] sm:$0xff]
        %v350 = vld [vmem:[%s287 + $0x58] sm:$0xff]
        %v351 = vld [vmem:[%s3] sm:$0xff]
        %v352 = vld [vmem:[%s3 + $0x8] sm:$0xff]
        %v353 = vld [vmem:[%s3 + $0x10] sm:$0xff]
        %v354 = vld [vmem:[%s3 + $0x18] sm:$0xff]
        %v355 = vld [vmem:[%s3 + $0x20] sm:$0xff]
        %v356 = vld [vmem:[%s3 + $0x28] sm:$0xff]
        %v357 = vld [vmem:[%s3 + $0x30] sm:$0xff]
        %v358 = vld [vmem:[%s3 + $0x38] sm:$0xff]
        %v359 = vld [vmem:[%s3 + $0x40] sm:$0xff]
        %v360 = vld [vmem:[%s3 + $0x48] sm:$0xff]
        %v361 = vld [vmem:[%s3 + $0x50] sm:$0xff]
        %v362 = vld [vmem:[%s3 + $0x58] sm:$0xff]
        %v363 = vld [vmem:[%s3 + $0x60] sm:$0xff]
        %v364 = vld [vmem:[%s3 + $0x68] sm:$0xff]
        %v365 = vld [vmem:[%s3 + $0x70] sm:$0xff]
        %v366 = vld [vmem:[%s3 + $0x78] sm:$0xff]
        %368 = vset.pattern.permute.xlu0 0
        %369 = vperm.xlu0 %368, %v351
        %v370 = vpop.permute.xlu0 %369
        %373 = vset.pattern.permute.xlu0 0
        %374 = vperm.xlu0 %373, %v352
        %v375 = vpop.permute.xlu0 %374
        %378 = vset.pattern.permute.xlu0 0
        %379 = vperm.xlu0 %378, %v353
        %v380 = vpop.permute.xlu0 %379
        %383 = vset.pattern.permute.xlu0 0
        %384 = vperm.xlu0 %383, %v354
        %v385 = vpop.permute.xlu0 %384
        %388 = vset.pattern.permute.xlu0 0
        %389 = vperm.xlu0 %388, %v355
        %v390 = vpop.permute.xlu0 %389
        %393 = vset.pattern.permute.xlu0 0
        %394 = vperm.xlu0 %393, %v356
        %v395 = vpop.permute.xlu0 %394
        %398 = vset.pattern.permute.xlu0 0
        %399 = vperm.xlu0 %398, %v357
        %v400 = vpop.permute.xlu0 %399
        %403 = vset.pattern.permute.xlu0 0
        %404 = vperm.xlu0 %403, %v358
        %v405 = vpop.permute.xlu0 %404
        %408 = vset.pattern.permute.xlu0 0
        %409 = vperm.xlu0 %408, %v359
        %v410 = vpop.permute.xlu0 %409
        %413 = vset.pattern.permute.xlu0 0
        %414 = vperm.xlu0 %413, %v360
        %v415 = vpop.permute.xlu0 %414
        %418 = vset.pattern.permute.xlu0 0
        %419 = vperm.xlu0 %418, %v361
        %v420 = vpop.permute.xlu0 %419
        %423 = vset.pattern.permute.xlu0 0
        %424 = vperm.xlu0 %423, %v362
        %v425 = vpop.permute.xlu0 %424
        %428 = vset.pattern.permute.xlu0 0
        %429 = vperm.xlu0 %428, %v363
        %v430 = vpop.permute.xlu0 %429
        %433 = vset.pattern.permute.xlu0 0
        %434 = vperm.xlu0 %433, %v364
        %v435 = vpop.permute.xlu0 %434
        %438 = vset.pattern.permute.xlu0 0
        %439 = vperm.xlu0 %438, %v365
        %v440 = vpop.permute.xlu0 %439
        %443 = vset.pattern.permute.xlu0 0
        %444 = vperm.xlu0 %443, %v366
        %v445 = vpop.permute.xlu0 %444
        %vm447 = vcmask 195584
        %v449 = vsel %vm447, %v323, 0
        %v452 = vsel %vm447, %v324, 0
        %v455 = vsel %vm447, %v325, 0
        %v458 = vsel %vm447, %v326, 0
        %v461 = vsel %vm447, %v327, 0
        %v464 = vsel %vm447, %v328, 0
        %v467 = vsel %vm447, %v329, 0
        %v470 = vsel %vm447, %v330, 0
        %v473 = vsel %vm447, %v331, 0
        %v476 = vsel %vm447, %v332, 0
        %v479 = vsel %vm447, %v333, 0
        %v482 = vsel %vm447, %v334, 0
        %v485 = vsel %vm447, %v335, 0
        %v488 = vsel %vm447, %v336, 0
        %v491 = vsel %vm447, %v337, 0
        %v494 = vsel %vm447, %v338, 0
        %496 = vmatprep.subr.mxu0 0.0
        %497 = vmatpush1.msra.mxu0 0.0
        %498 = vmatprep.subr.mxu0 0.0
        %499 = vmatpush1.msra.mxu0 0.0
        %500 = vmatprep.subr.mxu0 0.0
        %501 = vmatpush1.msra.mxu0 0.0
        %502 = vmatprep.subr.mxu0 0.0
        %503 = vmatpush1.msra.mxu0 0.0
        %504 = vmatprep.subr.mxu0 0.0
        %505 = vmatpush1.msra.mxu0 0.0
        %506 = vmatprep.subr.mxu0 0.0
        %507 = vmatpush1.msra.mxu0 0.0
        %508 = vmatprep.subr.mxu0 0.0
        %509 = vmatpush1.msra.mxu0 0.0
        %510 = vmatprep.subr.mxu0 0.0
        %511 = vmatpush1.msra.mxu0 0.0
        %512 = vmatprep.subr.mxu0 0.0
        %513 = vmatpush1.msra.mxu0 0.0
        %514 = vmatprep.subr.mxu0 0.0
        %515 = vmatpush1.msra.mxu0 0.0
        %516 = vmatprep.subr.mxu0 0.0
        %517 = vmatpush1.msra.mxu0 0.0
        %518 = vmatprep.subr.mxu0 0.0
        %519 = vmatpush1.msra.mxu0 0.0
        %520 = vmatprep.subr.mxu0 0.0
        %521 = vmatpush1.msra.mxu0 0.0
        %v522 = vand.u32 %v348, 4294901760
        %523 = vmatprep.subr.mxu0 %v522
        %v524 = vand.u32 %v347, 4294901760
        %525 = vmatpush1.msra.mxu0 %v524
        %v526 = vand.u32 %v344, 4294901760
        %527 = vmatprep.subr.mxu0 %v526
        %v528 = vand.u32 %v343, 4294901760
        %529 = vmatpush1.msra.mxu0 %v528
        %v530 = vand.u32 %v340, 4294901760
        %531 = vmatprep.subr.mxu0 %v530
        %v532 = vand.u32 %v339, 4294901760
        %533 = vmatpush1.msra.mxu0 %v532
        %534 = vmatprep.subr.mxu0 0.0
        %535 = vmatpush2.msra.mxu0 0.0
        %536 = vmatprep.subr.mxu0 0.0
        %537 = vmatpush2.msra.mxu0 0.0
        %538 = vmatprep.subr.mxu0 0.0
        %539 = vmatpush2.msra.mxu0 0.0
        %540 = vmatprep.subr.mxu0 0.0
        %541 = vmatpush2.msra.mxu0 0.0
        %542 = vmatprep.subr.mxu0 0.0
        %543 = vmatpush2.msra.mxu0 0.0
        %544 = vmatprep.subr.mxu0 0.0
        %545 = vmatpush2.msra.mxu0 0.0
        %546 = vmatprep.subr.mxu0 0.0
        %547 = vmatpush2.msra.mxu0 0.0
        %548 = vmatprep.subr.mxu0 0.0
        %549 = vmatpush2.msra.mxu0 0.0
        %550 = vmatprep.subr.mxu0 0.0
        %551 = vmatpush2.msra.mxu0 0.0
        %552 = vmatprep.subr.mxu0 0.0
        %553 = vmatpush2.msra.mxu0 0.0
        %554 = vmatprep.subr.mxu0 0.0
        %555 = vmatpush2.msra.mxu0 0.0
        %556 = vmatprep.subr.mxu0 0.0
        %557 = vmatpush2.msra.mxu0 0.0
        %558 = vmatprep.subr.mxu0 0.0
        %559 = vmatpush2.msra.mxu0 0.0
        %560 = vmatprep.subr.mxu0 0.0
        %561 = vmatpush2.msra.mxu0 0.0
        %562 = vmatprep.subr.mxu0 0.0
        %563 = vmatpush2.msra.mxu0 0.0
        %564 = vmatprep.subr.mxu0 0.0
        %565 = vmatpush2.msra.mxu0 0.0
        %566 = vmatprep.mubr.f32.mxu0 0.0
        %v567 = vand.u32 %v449, 4294901760
        %v568 = vsub.f32 %v449, %v567
        %v569 = vand.u32 %v568, 4294901760
        %v570 = vsub.f32 %v568, %v569
        %v571 = vand.u32 %v570, 4294901760
        %572 = vmatmul.mubr.f32.gmra.mxu0 %v571
        %v573 = vpop.f32.mrf.mxu0
        %v574 = vadd.f32 %v370, %v573
        %v575 = vpop.f32.mrf.mxu0
        %v576 = vadd.f32 %v370, %v575
        %577 = vmatprep.mubr.f32.mxu0 0.0
        %v578 = vand.u32 %v452, 4294901760
        %v579 = vsub.f32 %v452, %v578
        %v580 = vand.u32 %v579, 4294901760
        %v581 = vsub.f32 %v579, %v580
        %v582 = vand.u32 %v581, 4294901760
        %583 = vmatmul.mubr.f32.gmra.mxu0 %v582
        %v584 = vpop.f32.mrf.mxu0
        %v585 = vadd.f32 %v375, %v584
        %v586 = vpop.f32.mrf.mxu0
        %v587 = vadd.f32 %v375, %v586
        %588 = vmatprep.mubr.f32.mxu0 0.0
        %v589 = vand.u32 %v455, 4294901760
        %v590 = vsub.f32 %v455, %v589
        %v591 = vand.u32 %v590, 4294901760
        %v592 = vsub.f32 %v590, %v591
        %v593 = vand.u32 %v592, 4294901760
        %594 = vmatmul.mubr.f32.gmra.mxu0 %v593
        %v595 = vpop.f32.mrf.mxu0
        %v596 = vadd.f32 %v380, %v595
        %v597 = vpop.f32.mrf.mxu0
        %v598 = vadd.f32 %v380, %v597
        %599 = vmatprep.mubr.f32.mxu0 0.0
        %v600 = vand.u32 %v458, 4294901760
        %v601 = vsub.f32 %v458, %v600
        %v602 = vand.u32 %v601, 4294901760
        %v603 = vsub.f32 %v601, %v602
        %v604 = vand.u32 %v603, 4294901760
        %605 = vmatmul.mubr.f32.gmra.mxu0 %v604
        %v606 = vpop.f32.mrf.mxu0
        %v607 = vadd.f32 %v385, %v606
        %v608 = vpop.f32.mrf.mxu0
        %v609 = vadd.f32 %v385, %v608
        %610 = vmatprep.mubr.f32.mxu0 0.0
        %v611 = vand.u32 %v461, 4294901760
        %v612 = vsub.f32 %v461, %v611
        %v613 = vand.u32 %v612, 4294901760
        %v614 = vsub.f32 %v612, %v613
        %v615 = vand.u32 %v614, 4294901760
        %616 = vmatmul.mubr.f32.gmra.mxu0 %v615
        %v617 = vpop.f32.mrf.mxu0
        %v618 = vadd.f32 %v390, %v617
        %v619 = vpop.f32.mrf.mxu0
        %v620 = vadd.f32 %v390, %v619
        %621 = vmatprep.mubr.f32.mxu0 0.0
        %v622 = vand.u32 %v464, 4294901760
        %v623 = vsub.f32 %v464, %v622
        %v624 = vand.u32 %v623, 4294901760
        %v625 = vsub.f32 %v623, %v624
        %v626 = vand.u32 %v625, 4294901760
        %627 = vmatmul.mubr.f32.gmra.mxu0 %v626
        %v628 = vpop.f32.mrf.mxu0
        %v629 = vadd.f32 %v395, %v628
        %v630 = vpop.f32.mrf.mxu0
        %v631 = vadd.f32 %v395, %v630
        %632 = vmatprep.mubr.f32.mxu0 0.0
        %v633 = vand.u32 %v467, 4294901760
        %v634 = vsub.f32 %v467, %v633
        %v635 = vand.u32 %v634, 4294901760
        %v636 = vsub.f32 %v634, %v635
        %v637 = vand.u32 %v636, 4294901760
        %638 = vmatmul.mubr.f32.gmra.mxu0 %v637
        %v639 = vpop.f32.mrf.mxu0
        %v640 = vadd.f32 %v400, %v639
        %v641 = vpop.f32.mrf.mxu0
        %v642 = vadd.f32 %v400, %v641
        %643 = vmatprep.mubr.f32.mxu0 0.0
        %v644 = vand.u32 %v470, 4294901760
        %v645 = vsub.f32 %v470, %v644
        %v646 = vand.u32 %v645, 4294901760
        %v647 = vsub.f32 %v645, %v646
        %v648 = vand.u32 %v647, 4294901760
        %649 = vmatmul.mubr.f32.gmra.mxu0 %v648
        %v650 = vpop.f32.mrf.mxu0
        %v651 = vadd.f32 %v405, %v650
        %v652 = vpop.f32.mrf.mxu0
        %v653 = vadd.f32 %v405, %v652
        %654 = vmatprep.mubr.f32.mxu0 0.0
        %v655 = vand.u32 %v473, 4294901760
        %v656 = vsub.f32 %v473, %v655
        %v657 = vand.u32 %v656, 4294901760
        %v658 = vsub.f32 %v656, %v657
        %v659 = vand.u32 %v658, 4294901760
        %660 = vmatmul.mubr.f32.gmra.mxu0 %v659
        %v661 = vpop.f32.mrf.mxu0
        %v662 = vadd.f32 %v410, %v661
        %v663 = vpop.f32.mrf.mxu0
        %v664 = vadd.f32 %v410, %v663
        %665 = vmatprep.mubr.f32.mxu0 0.0
        %v666 = vand.u32 %v476, 4294901760
        %v667 = vsub.f32 %v476, %v666
        %v668 = vand.u32 %v667, 4294901760
        %v669 = vsub.f32 %v667, %v668
        %v670 = vand.u32 %v669, 4294901760
        %671 = vmatmul.mubr.f32.gmra.mxu0 %v670
        %v672 = vpop.f32.mrf.mxu0
        %v673 = vadd.f32 %v415, %v672
        %v674 = vpop.f32.mrf.mxu0
        %v675 = vadd.f32 %v415, %v674
        %676 = vmatprep.mubr.f32.mxu0 0.0
        %v677 = vand.u32 %v479, 4294901760
        %v678 = vsub.f32 %v479, %v677
        %v679 = vand.u32 %v678, 4294901760
        %v680 = vsub.f32 %v678, %v679
        %v681 = vand.u32 %v680, 4294901760
        %682 = vmatmul.mubr.f32.gmra.mxu0 %v681
        %v683 = vpop.f32.mrf.mxu0
        %v684 = vadd.f32 %v420, %v683
        %v685 = vpop.f32.mrf.mxu0
        %v686 = vadd.f32 %v420, %v685
        %687 = vmatprep.mubr.f32.mxu0 0.0
        %v688 = vand.u32 %v482, 4294901760
        %v689 = vsub.f32 %v482, %v688
        %v690 = vand.u32 %v689, 4294901760
        %v691 = vsub.f32 %v689, %v690
        %v692 = vand.u32 %v691, 4294901760
        %693 = vmatmul.mubr.f32.gmra.mxu0 %v692
        %v694 = vpop.f32.mrf.mxu0
        %v695 = vadd.f32 %v425, %v694
        %v696 = vpop.f32.mrf.mxu0
        %v697 = vadd.f32 %v425, %v696
        %698 = vmatprep.mubr.f32.mxu0 0.0
        %v699 = vand.u32 %v485, 4294901760
        %v700 = vsub.f32 %v485, %v699
        %v701 = vand.u32 %v700, 4294901760
        %v702 = vsub.f32 %v700, %v701
        %v703 = vand.u32 %v702, 4294901760
        %704 = vmatmul.mubr.f32.gmra.mxu0 %v703
        %v705 = vpop.f32.mrf.mxu0
        %v706 = vadd.f32 %v430, %v705
        %v707 = vpop.f32.mrf.mxu0
        %v708 = vadd.f32 %v430, %v707
        %709 = vmatprep.mubr.f32.mxu0 0.0
        %v710 = vand.u32 %v488, 4294901760
        %v711 = vsub.f32 %v488, %v710
        %v712 = vand.u32 %v711, 4294901760
        %v713 = vsub.f32 %v711, %v712
        %v714 = vand.u32 %v713, 4294901760
        %715 = vmatmul.mubr.f32.gmra.mxu0 %v714
        %v716 = vpop.f32.mrf.mxu0
        %v717 = vadd.f32 %v435, %v716
        %v718 = vpop.f32.mrf.mxu0
        %v719 = vadd.f32 %v435, %v718
        %720 = vmatprep.mubr.f32.mxu0 0.0
        %v721 = vand.u32 %v491, 4294901760
        %v722 = vsub.f32 %v491, %v721
        %v723 = vand.u32 %v722, 4294901760
        %v724 = vsub.f32 %v722, %v723
        %v725 = vand.u32 %v724, 4294901760
        %726 = vmatmul.mubr.f32.gmra.mxu0 %v725
        %v727 = vpop.f32.mrf.mxu0
        %v728 = vadd.f32 %v440, %v727
        %v729 = vpop.f32.mrf.mxu0
        %v730 = vadd.f32 %v440, %v729
        %731 = vmatprep.mubr.f32.mxu0 0.0
        %v732 = vand.u32 %v494, 4294901760
        %v733 = vsub.f32 %v494, %v732
        %v734 = vand.u32 %v733, 4294901760
        %v735 = vsub.f32 %v733, %v734
        %v736 = vand.u32 %v735, 4294901760
        %737 = vmatmul.mubr.f32.gmra.mxu0 %v736
        %v738 = vpop.f32.mrf.mxu0
        %v739 = vadd.f32 %v445, %v738
        %v740 = vpop.f32.mrf.mxu0
        %v741 = vadd.f32 %v445, %v740
        %742 = vdwg.mxu0
        %743 = vmatprep.subr.mxu0 0.0
        %744 = vmatpush1.msra.mxu0 0.0
        %745 = vmatprep.subr.mxu0 0.0
        %746 = vmatpush1.msra.mxu0 0.0
        %747 = vmatprep.subr.mxu0 0.0
        %748 = vmatpush1.msra.mxu0 0.0
        %749 = vmatprep.subr.mxu0 0.0
        %750 = vmatpush1.msra.mxu0 0.0
        %751 = vmatprep.subr.mxu0 0.0
        %752 = vmatpush1.msra.mxu0 0.0
        %753 = vmatprep.subr.mxu0 0.0
        %754 = vmatpush1.msra.mxu0 0.0
        %755 = vmatprep.subr.mxu0 0.0
        %756 = vmatpush1.msra.mxu0 0.0
        %757 = vmatprep.subr.mxu0 0.0
        %758 = vmatpush1.msra.mxu0 0.0
        %759 = vmatprep.subr.mxu0 0.0
        %760 = vmatpush1.msra.mxu0 0.0
        %761 = vmatprep.subr.mxu0 0.0
        %762 = vmatpush1.msra.mxu0 0.0
        %763 = vmatprep.subr.mxu0 0.0
        %764 = vmatpush1.msra.mxu0 0.0
        %765 = vmatprep.subr.mxu0 0.0
        %766 = vmatpush1.msra.mxu0 0.0
        %767 = vmatprep.subr.mxu0 0.0
        %768 = vmatpush1.msra.mxu0 0.0
        %v769 = vand.u32 %v348, 4294901760
        %v770 = vsub.f32 %v348, %v769
        %v771 = vand.u32 %v770, 4294901760
        %v772 = vsub.f32 %v770, %v771
        %v773 = vand.u32 %v772, 4294901760
        %774 = vmatprep.subr.mxu0 %v773
        %v775 = vand.u32 %v347, 4294901760
        %v776 = vsub.f32 %v347, %v775
        %v777 = vand.u32 %v776, 4294901760
        %v778 = vsub.f32 %v776, %v777
        %v779 = vand.u32 %v778, 4294901760
        %780 = vmatpush1.msra.mxu0 %v779
        %v781 = vand.u32 %v344, 4294901760
        %v782 = vsub.f32 %v344, %v781
        %v783 = vand.u32 %v782, 4294901760
        %v784 = vsub.f32 %v782, %v783
        %v785 = vand.u32 %v784, 4294901760
        %786 = vmatprep.subr.mxu0 %v785
        %v787 = vand.u32 %v343, 4294901760
        %v788 = vsub.f32 %v343, %v787
        %v789 = vand.u32 %v788, 4294901760
        %v790 = vsub.f32 %v788, %v789
        %v791 = vand.u32 %v790, 4294901760
        %792 = vmatpush1.msra.mxu0 %v791
        %v793 = vand.u32 %v340, 4294901760
        %v794 = vsub.f32 %v340, %v793
        %v795 = vand.u32 %v794, 4294901760
        %v796 = vsub.f32 %v794, %v795
        %v797 = vand.u32 %v796, 4294901760
        %798 = vmatprep.subr.mxu0 %v797
        %v799 = vand.u32 %v339, 4294901760
        %v800 = vsub.f32 %v339, %v799
        %v801 = vand.u32 %v800, 4294901760
        %v802 = vsub.f32 %v800, %v801
        %v803 = vand.u32 %v802, 4294901760
        %804 = vmatpush1.msra.mxu0 %v803
        %805 = vmatprep.subr.mxu0 0.0
        %806 = vmatpush2.msra.mxu0 0.0
        %807 = vmatprep.subr.mxu0 0.0
        %808 = vmatpush2.msra.mxu0 0.0
        %809 = vmatprep.subr.mxu0 0.0
        %810 = vmatpush2.msra.mxu0 0.0
        %811 = vmatprep.subr.mxu0 0.0
        %812 = vmatpush2.msra.mxu0 0.0
        %813 = vmatprep.subr.mxu0 0.0
        %814 = vmatpush2.msra.mxu0 0.0
        %815 = vmatprep.subr.mxu0 0.0
        %816 = vmatpush2.msra.mxu0 0.0
        %817 = vmatprep.subr.mxu0 0.0
        %818 = vmatpush2.msra.mxu0 0.0
        %819 = vmatprep.subr.mxu0 0.0
        %820 = vmatpush2.msra.mxu0 0.0
        %821 = vmatprep.subr.mxu0 0.0
        %822 = vmatpush2.msra.mxu0 0.0
        %823 = vmatprep.subr.mxu0 0.0
        %824 = vmatpush2.msra.mxu0 0.0
        %825 = vmatprep.subr.mxu0 0.0
        %826 = vmatpush2.msra.mxu0 0.0
        %827 = vmatprep.subr.mxu0 0.0
        %828 = vmatpush2.msra.mxu0 0.0
        %829 = vmatprep.subr.mxu0 0.0
        %830 = vmatpush2.msra.mxu0 0.0
        %831 = vmatprep.subr.mxu0 0.0
        %832 = vmatpush2.msra.mxu0 0.0
        %833 = vmatprep.subr.mxu0 0.0
        %834 = vmatpush2.msra.mxu0 0.0
        %835 = vmatprep.subr.mxu0 0.0
        %836 = vmatpush2.msra.mxu0 0.0
        %837 = vmatprep.mubr.f32.mxu0 0.0
        %v838 = vand.u32 %v449, 4294901760
        %839 = vmatmul.mubr.f32.gmra.mxu0 %v838
        %v840 = vpop.f32.mrf.mxu0
        %v841 = vadd.f32 %v574, %v840
        %v842 = vpop.f32.mrf.mxu0
        %v843 = vadd.f32 %v576, %v842
        %844 = vmatprep.mubr.f32.mxu0 0.0
        %v845 = vand.u32 %v452, 4294901760
        %846 = vmatmul.mubr.f32.gmra.mxu0 %v845
        %v847 = vpop.f32.mrf.mxu0
        %v848 = vadd.f32 %v585, %v847
        %v849 = vpop.f32.mrf.mxu0
        %v850 = vadd.f32 %v587, %v849
        %851 = vmatprep.mubr.f32.mxu0 0.0
        %v852 = vand.u32 %v455, 4294901760
        %853 = vmatmul.mubr.f32.gmra.mxu0 %v852
        %v854 = vpop.f32.mrf.mxu0
        %v855 = vadd.f32 %v596, %v854
        %v856 = vpop.f32.mrf.mxu0
        %v857 = vadd.f32 %v598, %v856
        %858 = vmatprep.mubr.f32.mxu0 0.0
        %v859 = vand.u32 %v458, 4294901760
        %860 = vmatmul.mubr.f32.gmra.mxu0 %v859
        %v861 = vpop.f32.mrf.mxu0
        %v862 = vadd.f32 %v607, %v861
        %v863 = vpop.f32.mrf.mxu0
        %v864 = vadd.f32 %v609, %v863
        %865 = vmatprep.mubr.f32.mxu0 0.0
        %v866 = vand.u32 %v461, 4294901760
        %867 = vmatmul.mubr.f32.gmra.mxu0 %v866
        %v868 = vpop.f32.mrf.mxu0
        %v869 = vadd.f32 %v618, %v868
        %v870 = vpop.f32.mrf.mxu0
        %v871 = vadd.f32 %v620, %v870
        %872 = vmatprep.mubr.f32.mxu0 0.0
        %v873 = vand.u32 %v464, 4294901760
        %874 = vmatmul.mubr.f32.gmra.mxu0 %v873
        %v875 = vpop.f32.mrf.mxu0
        %v876 = vadd.f32 %v629, %v875
        %v877 = vpop.f32.mrf.mxu0
        %v878 = vadd.f32 %v631, %v877
        %879 = vmatprep.mubr.f32.mxu0 0.0
        %v880 = vand.u32 %v467, 4294901760
        %881 = vmatmul.mubr.f32.gmra.mxu0 %v880
        %v882 = vpop.f32.mrf.mxu0
        %v883 = vadd.f32 %v640, %v882
        %v884 = vpop.f32.mrf.mxu0
        %v885 = vadd.f32 %v642, %v884
        %886 = vmatprep.mubr.f32.mxu0 0.0
        %v887 = vand.u32 %v470, 4294901760
        %888 = vmatmul.mubr.f32.gmra.mxu0 %v887
        %v889 = vpop.f32.mrf.mxu0
        %v890 = vadd.f32 %v651, %v889
        %v891 = vpop.f32.mrf.mxu0
        %v892 = vadd.f32 %v653, %v891
        %893 = vmatprep.mubr.f32.mxu0 0.0
        %v894 = vand.u32 %v473, 4294901760
        %895 = vmatmul.mubr.f32.gmra.mxu0 %v894
        %v896 = vpop.f32.mrf.mxu0
        %v897 = vadd.f32 %v662, %v896
        %v898 = vpop.f32.mrf.mxu0
        %v899 = vadd.f32 %v664, %v898
        %900 = vmatprep.mubr.f32.mxu0 0.0
        %v901 = vand.u32 %v476, 4294901760
        %902 = vmatmul.mubr.f32.gmra.mxu0 %v901
        %v903 = vpop.f32.mrf.mxu0
        %v904 = vadd.f32 %v673, %v903
        %v905 = vpop.f32.mrf.mxu0
        %v906 = vadd.f32 %v675, %v905
        %907 = vmatprep.mubr.f32.mxu0 0.0
        %v908 = vand.u32 %v479, 4294901760
        %909 = vmatmul.mubr.f32.gmra.mxu0 %v908
        %v910 = vpop.f32.mrf.mxu0
        %v911 = vadd.f32 %v684, %v910
        %v912 = vpop.f32.mrf.mxu0
        %v913 = vadd.f32 %v686, %v912
        %914 = vmatprep.mubr.f32.mxu0 0.0
        %v915 = vand.u32 %v482, 4294901760
        %916 = vmatmul.mubr.f32.gmra.mxu0 %v915
        %v917 = vpop.f32.mrf.mxu0
        %v918 = vadd.f32 %v695, %v917
        %v919 = vpop.f32.mrf.mxu0
        %v920 = vadd.f32 %v697, %v919
        %921 = vmatprep.mubr.f32.mxu0 0.0
        %v922 = vand.u32 %v485, 4294901760
        %923 = vmatmul.mubr.f32.gmra.mxu0 %v922
        %v924 = vpop.f32.mrf.mxu0
        %v925 = vadd.f32 %v706, %v924
        %v926 = vpop.f32.mrf.mxu0
        %v927 = vadd.f32 %v708, %v926
        %928 = vmatprep.mubr.f32.mxu0 0.0
        %v929 = vand.u32 %v488, 4294901760
        %930 = vmatmul.mubr.f32.gmra.mxu0 %v929
        %v931 = vpop.f32.mrf.mxu0
        %v932 = vadd.f32 %v717, %v931
        %v933 = vpop.f32.mrf.mxu0
        %v934 = vadd.f32 %v719, %v933
        %935 = vmatprep.mubr.f32.mxu0 0.0
        %v936 = vand.u32 %v491, 4294901760
        %937 = vmatmul.mubr.f32.gmra.mxu0 %v936
        %v938 = vpop.f32.mrf.mxu0
        %v939 = vadd.f32 %v728, %v938
        %v940 = vpop.f32.mrf.mxu0
        %v941 = vadd.f32 %v730, %v940
        %942 = vmatprep.mubr.f32.mxu0 0.0
        %v943 = vand.u32 %v494, 4294901760
        %944 = vmatmul.mubr.f32.gmra.mxu0 %v943
        %v945 = vpop.f32.mrf.mxu0
        %v946 = vadd.f32 %v739, %v945
        %v947 = vpop.f32.mrf.mxu0
        %v948 = vadd.f32 %v741, %v947
        %949 = vdwg.mxu0
        %950 = vmatprep.subr.mxu0 0.0
        %951 = vmatpush1.msra.mxu0 0.0
        %952 = vmatprep.subr.mxu0 0.0
        %953 = vmatpush1.msra.mxu0 0.0
        %954 = vmatprep.subr.mxu0 0.0
        %955 = vmatpush1.msra.mxu0 0.0
        %956 = vmatprep.subr.mxu0 0.0
        %957 = vmatpush1.msra.mxu0 0.0
        %958 = vmatprep.subr.mxu0 0.0
        %959 = vmatpush1.msra.mxu0 0.0
        %960 = vmatprep.subr.mxu0 0.0
        %961 = vmatpush1.msra.mxu0 0.0
        %962 = vmatprep.subr.mxu0 0.0
        %963 = vmatpush1.msra.mxu0 0.0
        %964 = vmatprep.subr.mxu0 0.0
        %965 = vmatpush1.msra.mxu0 0.0
        %966 = vmatprep.subr.mxu0 0.0
        %967 = vmatpush1.msra.mxu0 0.0
        %968 = vmatprep.subr.mxu0 0.0
        %969 = vmatpush1.msra.mxu0 0.0
        %970 = vmatprep.subr.mxu0 0.0
        %971 = vmatpush1.msra.mxu0 0.0
        %972 = vmatprep.subr.mxu0 0.0
        %973 = vmatpush1.msra.mxu0 0.0
        %974 = vmatprep.subr.mxu0 0.0
        %975 = vmatpush1.msra.mxu0 0.0
        %v976 = vand.u32 %v348, 4294901760
        %v977 = vsub.f32 %v348, %v976
        %978 = vmatprep.subr.mxu0 %v977
        %v979 = vand.u32 %v347, 4294901760
        %v980 = vsub.f32 %v347, %v979
        %981 = vmatpush1.msra.mxu0 %v980
        %v982 = vand.u32 %v344, 4294901760
        %v983 = vsub.f32 %v344, %v982
        %984 = vmatprep.subr.mxu0 %v983
        %v985 = vand.u32 %v343, 4294901760
        %v986 = vsub.f32 %v343, %v985
        %987 = vmatpush1.msra.mxu0 %v986
        %v988 = vand.u32 %v340, 4294901760
        %v989 = vsub.f32 %v340, %v988
        %990 = vmatprep.subr.mxu0 %v989
        %v991 = vand.u32 %v339, 4294901760
        %v992 = vsub.f32 %v339, %v991
        %993 = vmatpush1.msra.mxu0 %v992
        %994 = vmatprep.subr.mxu0 0.0
        %995 = vmatpush2.msra.mxu0 0.0
        %996 = vmatprep.subr.mxu0 0.0
        %997 = vmatpush2.msra.mxu0 0.0
        %998 = vmatprep.subr.mxu0 0.0
        %999 = vmatpush2.msra.mxu0 0.0
        %1000 = vmatprep.subr.mxu0 0.0
        %1001 = vmatpush2.msra.mxu0 0.0
        %1002 = vmatprep.subr.mxu0 0.0
        %1003 = vmatpush2.msra.mxu0 0.0
        %1004 = vmatprep.subr.mxu0 0.0
        %1005 = vmatpush2.msra.mxu0 0.0
        %1006 = vmatprep.subr.mxu0 0.0
        %1007 = vmatpush2.msra.mxu0 0.0
        %1008 = vmatprep.subr.mxu0 0.0
        %1009 = vmatpush2.msra.mxu0 0.0
        %1010 = vmatprep.subr.mxu0 0.0
        %1011 = vmatpush2.msra.mxu0 0.0
        %1012 = vmatprep.subr.mxu0 0.0
        %1013 = vmatpush2.msra.mxu0 0.0
        %1014 = vmatprep.subr.mxu0 0.0
        %1015 = vmatpush2.msra.mxu0 0.0
        %1016 = vmatprep.subr.mxu0 0.0
        %1017 = vmatpush2.msra.mxu0 0.0
        %1018 = vmatprep.subr.mxu0 0.0
        %1019 = vmatpush2.msra.mxu0 0.0
        %1020 = vmatprep.subr.mxu0 0.0
        %1021 = vmatpush2.msra.mxu0 0.0
        %1022 = vmatprep.subr.mxu0 0.0
        %1023 = vmatpush2.msra.mxu0 0.0
        %1024 = vmatprep.subr.mxu0 0.0
        %1025 = vmatpush2.msra.mxu0 0.0
        %1026 = vmatprep.mubr.f32.mxu0 0.0
        %v1027 = vand.u32 %v449, 4294901760
        %v1028 = vsub.f32 %v449, %v1027
        %1029 = vmatmul.mubr.f32.gmra.mxu0 %v1028
        %v1030 = vpop.f32.mrf.mxu0
        %v1031 = vadd.f32 %v841, %v1030
        %v1032 = vpop.f32.mrf.mxu0
        %v1033 = vadd.f32 %v843, %v1032
        %1034 = vmatprep.mubr.f32.mxu0 0.0
        %v1035 = vand.u32 %v452, 4294901760
        %v1036 = vsub.f32 %v452, %v1035
        %1037 = vmatmul.mubr.f32.gmra.mxu0 %v1036
        %v1038 = vpop.f32.mrf.mxu0
        %v1039 = vadd.f32 %v848, %v1038
        %v1040 = vpop.f32.mrf.mxu0
        %v1041 = vadd.f32 %v850, %v1040
        %1042 = vmatprep.mubr.f32.mxu0 0.0
        %v1043 = vand.u32 %v455, 4294901760
        %v1044 = vsub.f32 %v455, %v1043
        %1045 = vmatmul.mubr.f32.gmra.mxu0 %v1044
        %v1046 = vpop.f32.mrf.mxu0
        %v1047 = vadd.f32 %v855, %v1046
        %v1048 = vpop.f32.mrf.mxu0
        %v1049 = vadd.f32 %v857, %v1048
        %1050 = vmatprep.mubr.f32.mxu0 0.0
        %v1051 = vand.u32 %v458, 4294901760
        %v1052 = vsub.f32 %v458, %v1051
        %1053 = vmatmul.mubr.f32.gmra.mxu0 %v1052
        %v1054 = vpop.f32.mrf.mxu0
        %v1055 = vadd.f32 %v862, %v1054
        %v1056 = vpop.f32.mrf.mxu0
        %v1057 = vadd.f32 %v864, %v1056
        %1058 = vmatprep.mubr.f32.mxu0 0.0
        %v1059 = vand.u32 %v461, 4294901760
        %v1060 = vsub.f32 %v461, %v1059
        %1061 = vmatmul.mubr.f32.gmra.mxu0 %v1060
        %v1062 = vpop.f32.mrf.mxu0
        %v1063 = vadd.f32 %v869, %v1062
        %v1064 = vpop.f32.mrf.mxu0
        %v1065 = vadd.f32 %v871, %v1064
        %1066 = vmatprep.mubr.f32.mxu0 0.0
        %v1067 = vand.u32 %v464, 4294901760
        %v1068 = vsub.f32 %v464, %v1067
        %1069 = vmatmul.mubr.f32.gmra.mxu0 %v1068
        %v1070 = vpop.f32.mrf.mxu0
        %v1071 = vadd.f32 %v876, %v1070
        %v1072 = vpop.f32.mrf.mxu0
        %v1073 = vadd.f32 %v878, %v1072
        %1074 = vmatprep.mubr.f32.mxu0 0.0
        %v1075 = vand.u32 %v467, 4294901760
        %v1076 = vsub.f32 %v467, %v1075
        %1077 = vmatmul.mubr.f32.gmra.mxu0 %v1076
        %v1078 = vpop.f32.mrf.mxu0
        %v1079 = vadd.f32 %v883, %v1078
        %v1080 = vpop.f32.mrf.mxu0
        %v1081 = vadd.f32 %v885, %v1080
        %1082 = vmatprep.mubr.f32.mxu0 0.0
        %v1083 = vand.u32 %v470, 4294901760
        %v1084 = vsub.f32 %v470, %v1083
        %1085 = vmatmul.mubr.f32.gmra.mxu0 %v1084
        %v1086 = vpop.f32.mrf.mxu0
        %v1087 = vadd.f32 %v890, %v1086
        %v1088 = vpop.f32.mrf.mxu0
        %v1089 = vadd.f32 %v892, %v1088
        %1090 = vmatprep.mubr.f32.mxu0 0.0
        %v1091 = vand.u32 %v473, 4294901760
        %v1092 = vsub.f32 %v473, %v1091
        %1093 = vmatmul.mubr.f32.gmra.mxu0 %v1092
        %v1094 = vpop.f32.mrf.mxu0
        %v1095 = vadd.f32 %v897, %v1094
        %v1096 = vpop.f32.mrf.mxu0
        %v1097 = vadd.f32 %v899, %v1096
        %1098 = vmatprep.mubr.f32.mxu0 0.0
        %v1099 = vand.u32 %v476, 4294901760
        %v1100 = vsub.f32 %v476, %v1099
        %1101 = vmatmul.mubr.f32.gmra.mxu0 %v1100
        %v1102 = vpop.f32.mrf.mxu0
        %v1103 = vadd.f32 %v904, %v1102
        %v1104 = vpop.f32.mrf.mxu0
        %v1105 = vadd.f32 %v906, %v1104
        %1106 = vmatprep.mubr.f32.mxu0 0.0
        %v1107 = vand.u32 %v479, 4294901760
        %v1108 = vsub.f32 %v479, %v1107
        %1109 = vmatmul.mubr.f32.gmra.mxu0 %v1108
        %v1110 = vpop.f32.mrf.mxu0
        %v1111 = vadd.f32 %v911, %v1110
        %v1112 = vpop.f32.mrf.mxu0
        %v1113 = vadd.f32 %v913, %v1112
        %1114 = vmatprep.mubr.f32.mxu0 0.0
        %v1115 = vand.u32 %v482, 4294901760
        %v1116 = vsub.f32 %v482, %v1115
        %1117 = vmatmul.mubr.f32.gmra.mxu0 %v1116
        %v1118 = vpop.f32.mrf.mxu0
        %v1119 = vadd.f32 %v918, %v1118
        %v1120 = vpop.f32.mrf.mxu0
        %v1121 = vadd.f32 %v920, %v1120
        %1122 = vmatprep.mubr.f32.mxu0 0.0
        %v1123 = vand.u32 %v485, 4294901760
        %v1124 = vsub.f32 %v485, %v1123
        %1125 = vmatmul.mubr.f32.gmra.mxu0 %v1124
        %v1126 = vpop.f32.mrf.mxu0
        %v1127 = vadd.f32 %v925, %v1126
        %v1128 = vpop.f32.mrf.mxu0
        %v1129 = vadd.f32 %v927, %v1128
        %1130 = vmatprep.mubr.f32.mxu0 0.0
        %v1131 = vand.u32 %v488, 4294901760
        %v1132 = vsub.f32 %v488, %v1131
        %1133 = vmatmul.mubr.f32.gmra.mxu0 %v1132
        %v1134 = vpop.f32.mrf.mxu0
        %v1135 = vadd.f32 %v932, %v1134
        %v1136 = vpop.f32.mrf.mxu0
        %v1137 = vadd.f32 %v934, %v1136
        %1138 = vmatprep.mubr.f32.mxu0 0.0
        %v1139 = vand.u32 %v491, 4294901760
        %v1140 = vsub.f32 %v491, %v1139
        %1141 = vmatmul.mubr.f32.gmra.mxu0 %v1140
        %v1142 = vpop.f32.mrf.mxu0
        %v1143 = vadd.f32 %v939, %v1142
        %v1144 = vpop.f32.mrf.mxu0
        %v1145 = vadd.f32 %v941, %v1144
        %1146 = vmatprep.mubr.f32.mxu0 0.0
        %v1147 = vand.u32 %v494, 4294901760
        %v1148 = vsub.f32 %v494, %v1147
        %1149 = vmatmul.mubr.f32.gmra.mxu0 %v1148
        %v1150 = vpop.f32.mrf.mxu0
        %v1151 = vadd.f32 %v946, %v1150
        %v1152 = vpop.f32.mrf.mxu0
        %v1153 = vadd.f32 %v948, %v1152
        %1154 = vdwg.mxu0
        %1155 = vmatprep.subr.mxu0 0.0
        %1156 = vmatpush1.msra.mxu0 0.0
        %1157 = vmatprep.subr.mxu0 0.0
        %1158 = vmatpush1.msra.mxu0 0.0
        %1159 = vmatprep.subr.mxu0 0.0
        %1160 = vmatpush1.msra.mxu0 0.0
        %1161 = vmatprep.subr.mxu0 0.0
        %1162 = vmatpush1.msra.mxu0 0.0
        %1163 = vmatprep.subr.mxu0 0.0
        %1164 = vmatpush1.msra.mxu0 0.0
        %1165 = vmatprep.subr.mxu0 0.0
        %1166 = vmatpush1.msra.mxu0 0.0
        %1167 = vmatprep.subr.mxu0 0.0
        %1168 = vmatpush1.msra.mxu0 0.0
        %1169 = vmatprep.subr.mxu0 0.0
        %1170 = vmatpush1.msra.mxu0 0.0
        %1171 = vmatprep.subr.mxu0 0.0
        %1172 = vmatpush1.msra.mxu0 0.0
        %1173 = vmatprep.subr.mxu0 0.0
        %1174 = vmatpush1.msra.mxu0 0.0
        %1175 = vmatprep.subr.mxu0 0.0
        %1176 = vmatpush1.msra.mxu0 0.0
        %1177 = vmatprep.subr.mxu0 0.0
        %1178 = vmatpush1.msra.mxu0 0.0
        %1179 = vmatprep.subr.mxu0 0.0
        %1180 = vmatpush1.msra.mxu0 0.0
        %v1181 = vand.u32 %v348, 4294901760
        %1182 = vmatprep.subr.mxu0 %v1181
        %v1183 = vand.u32 %v347, 4294901760
        %1184 = vmatpush1.msra.mxu0 %v1183
        %v1185 = vand.u32 %v344, 4294901760
        %1186 = vmatprep.subr.mxu0 %v1185
        %v1187 = vand.u32 %v343, 4294901760
        %1188 = vmatpush1.msra.mxu0 %v1187
        %v1189 = vand.u32 %v340, 4294901760
        %1190 = vmatprep.subr.mxu0 %v1189
        %v1191 = vand.u32 %v339, 4294901760
        %1192 = vmatpush1.msra.mxu0 %v1191
        %1193 = vmatprep.subr.mxu0 0.0
        %1194 = vmatpush2.msra.mxu0 0.0
        %1195 = vmatprep.subr.mxu0 0.0
        %1196 = vmatpush2.msra.mxu0 0.0
        %1197 = vmatprep.subr.mxu0 0.0
        %1198 = vmatpush2.msra.mxu0 0.0
        %1199 = vmatprep.subr.mxu0 0.0
        %1200 = vmatpush2.msra.mxu0 0.0
        %1201 = vmatprep.subr.mxu0 0.0
        %1202 = vmatpush2.msra.mxu0 0.0
        %1203 = vmatprep.subr.mxu0 0.0
        %1204 = vmatpush2.msra.mxu0 0.0
        %1205 = vmatprep.subr.mxu0 0.0
        %1206 = vmatpush2.msra.mxu0 0.0
        %1207 = vmatprep.subr.mxu0 0.0
        %1208 = vmatpush2.msra.mxu0 0.0
        %1209 = vmatprep.subr.mxu0 0.0
        %1210 = vmatpush2.msra.mxu0 0.0
        %1211 = vmatprep.subr.mxu0 0.0
        %1212 = vmatpush2.msra.mxu0 0.0
        %1213 = vmatprep.subr.mxu0 0.0
        %1214 = vmatpush2.msra.mxu0 0.0
        %1215 = vmatprep.subr.mxu0 0.0
        %1216 = vmatpush2.msra.mxu0 0.0
        %1217 = vmatprep.subr.mxu0 0.0
        %1218 = vmatpush2.msra.mxu0 0.0
        %1219 = vmatprep.subr.mxu0 0.0
        %1220 = vmatpush2.msra.mxu0 0.0
        %1221 = vmatprep.subr.mxu0 0.0
        %1222 = vmatpush2.msra.mxu0 0.0
        %1223 = vmatprep.subr.mxu0 0.0
        %1224 = vmatpush2.msra.mxu0 0.0
        %1225 = vmatprep.mubr.f32.mxu0 0.0
        %v1226 = vand.u32 %v449, 4294901760
        %v1227 = vsub.f32 %v449, %v1226
        %v1228 = vand.u32 %v1227, 4294901760
        %1229 = vmatmul.mubr.f32.gmra.mxu0 %v1228
        %v1230 = vpop.f32.mrf.mxu0
        %v1231 = vadd.f32 %v1031, %v1230
        %v1232 = vpop.f32.mrf.mxu0
        %v1233 = vadd.f32 %v1033, %v1232
        %1234 = vmatprep.mubr.f32.mxu0 0.0
        %v1235 = vand.u32 %v452, 4294901760
        %v1236 = vsub.f32 %v452, %v1235
        %v1237 = vand.u32 %v1236, 4294901760
        %1238 = vmatmul.mubr.f32.gmra.mxu0 %v1237
        %v1239 = vpop.f32.mrf.mxu0
        %v1240 = vadd.f32 %v1039, %v1239
        %v1241 = vpop.f32.mrf.mxu0
        %v1242 = vadd.f32 %v1041, %v1241
        %1243 = vmatprep.mubr.f32.mxu0 0.0
        %v1244 = vand.u32 %v455, 4294901760
        %v1245 = vsub.f32 %v455, %v1244
        %v1246 = vand.u32 %v1245, 4294901760
        %1247 = vmatmul.mubr.f32.gmra.mxu0 %v1246
        %v1248 = vpop.f32.mrf.mxu0
        %v1249 = vadd.f32 %v1047, %v1248
        %v1250 = vpop.f32.mrf.mxu0
        %v1251 = vadd.f32 %v1049, %v1250
        %1252 = vmatprep.mubr.f32.mxu0 0.0
        %v1253 = vand.u32 %v458, 4294901760
        %v1254 = vsub.f32 %v458, %v1253
        %v1255 = vand.u32 %v1254, 4294901760
        %1256 = vmatmul.mubr.f32.gmra.mxu0 %v1255
        %v1257 = vpop.f32.mrf.mxu0
        %v1258 = vadd.f32 %v1055, %v1257
        %v1259 = vpop.f32.mrf.mxu0
        %v1260 = vadd.f32 %v1057, %v1259
        %1261 = vmatprep.mubr.f32.mxu0 0.0
        %v1262 = vand.u32 %v461, 4294901760
        %v1263 = vsub.f32 %v461, %v1262
        %v1264 = vand.u32 %v1263, 4294901760
        %1265 = vmatmul.mubr.f32.gmra.mxu0 %v1264
        %v1266 = vpop.f32.mrf.mxu0
        %v1267 = vadd.f32 %v1063, %v1266
        %v1268 = vpop.f32.mrf.mxu0
        %v1269 = vadd.f32 %v1065, %v1268
        %1270 = vmatprep.mubr.f32.mxu0 0.0
        %v1271 = vand.u32 %v464, 4294901760
        %v1272 = vsub.f32 %v464, %v1271
        %v1273 = vand.u32 %v1272, 4294901760
        %1274 = vmatmul.mubr.f32.gmra.mxu0 %v1273
        %v1275 = vpop.f32.mrf.mxu0
        %v1276 = vadd.f32 %v1071, %v1275
        %v1277 = vpop.f32.mrf.mxu0
        %v1278 = vadd.f32 %v1073, %v1277
        %1279 = vmatprep.mubr.f32.mxu0 0.0
        %v1280 = vand.u32 %v467, 4294901760
        %v1281 = vsub.f32 %v467, %v1280
        %v1282 = vand.u32 %v1281, 4294901760
        %1283 = vmatmul.mubr.f32.gmra.mxu0 %v1282
        %v1284 = vpop.f32.mrf.mxu0
        %v1285 = vadd.f32 %v1079, %v1284
        %v1286 = vpop.f32.mrf.mxu0
        %v1287 = vadd.f32 %v1081, %v1286
        %1288 = vmatprep.mubr.f32.mxu0 0.0
        %v1289 = vand.u32 %v470, 4294901760
        %v1290 = vsub.f32 %v470, %v1289
        %v1291 = vand.u32 %v1290, 4294901760
        %1292 = vmatmul.mubr.f32.gmra.mxu0 %v1291
        %v1293 = vpop.f32.mrf.mxu0
        %v1294 = vadd.f32 %v1087, %v1293
        %v1295 = vpop.f32.mrf.mxu0
        %v1296 = vadd.f32 %v1089, %v1295
        %1297 = vmatprep.mubr.f32.mxu0 0.0
        %v1298 = vand.u32 %v473, 4294901760
        %v1299 = vsub.f32 %v473, %v1298
        %v1300 = vand.u32 %v1299, 4294901760
        %1301 = vmatmul.mubr.f32.gmra.mxu0 %v1300
        %v1302 = vpop.f32.mrf.mxu0
        %v1303 = vadd.f32 %v1095, %v1302
        %v1304 = vpop.f32.mrf.mxu0
        %v1305 = vadd.f32 %v1097, %v1304
        %1306 = vmatprep.mubr.f32.mxu0 0.0
        %v1307 = vand.u32 %v476, 4294901760
        %v1308 = vsub.f32 %v476, %v1307
        %v1309 = vand.u32 %v1308, 4294901760
        %1310 = vmatmul.mubr.f32.gmra.mxu0 %v1309
        %v1311 = vpop.f32.mrf.mxu0
        %v1312 = vadd.f32 %v1103, %v1311
        %v1313 = vpop.f32.mrf.mxu0
        %v1314 = vadd.f32 %v1105, %v1313
        %1315 = vmatprep.mubr.f32.mxu0 0.0
        %v1316 = vand.u32 %v479, 4294901760
        %v1317 = vsub.f32 %v479, %v1316
        %v1318 = vand.u32 %v1317, 4294901760
        %1319 = vmatmul.mubr.f32.gmra.mxu0 %v1318
        %v1320 = vpop.f32.mrf.mxu0
        %v1321 = vadd.f32 %v1111, %v1320
        %v1322 = vpop.f32.mrf.mxu0
        %v1323 = vadd.f32 %v1113, %v1322
        %1324 = vmatprep.mubr.f32.mxu0 0.0
        %v1325 = vand.u32 %v482, 4294901760
        %v1326 = vsub.f32 %v482, %v1325
        %v1327 = vand.u32 %v1326, 4294901760
        %1328 = vmatmul.mubr.f32.gmra.mxu0 %v1327
        %v1329 = vpop.f32.mrf.mxu0
        %v1330 = vadd.f32 %v1119, %v1329
        %v1331 = vpop.f32.mrf.mxu0
        %v1332 = vadd.f32 %v1121, %v1331
        %1333 = vmatprep.mubr.f32.mxu0 0.0
        %v1334 = vand.u32 %v485, 4294901760
        %v1335 = vsub.f32 %v485, %v1334
        %v1336 = vand.u32 %v1335, 4294901760
        %1337 = vmatmul.mubr.f32.gmra.mxu0 %v1336
        %v1338 = vpop.f32.mrf.mxu0
        %v1339 = vadd.f32 %v1127, %v1338
        %v1340 = vpop.f32.mrf.mxu0
        %v1341 = vadd.f32 %v1129, %v1340
        %1342 = vmatprep.mubr.f32.mxu0 0.0
        %v1343 = vand.u32 %v488, 4294901760
        %v1344 = vsub.f32 %v488, %v1343
        %v1345 = vand.u32 %v1344, 4294901760
        %1346 = vmatmul.mubr.f32.gmra.mxu0 %v1345
        %v1347 = vpop.f32.mrf.mxu0
        %v1348 = vadd.f32 %v1135, %v1347
        %v1349 = vpop.f32.mrf.mxu0
        %v1350 = vadd.f32 %v1137, %v1349
        %1351 = vmatprep.mubr.f32.mxu0 0.0
        %v1352 = vand.u32 %v491, 4294901760
        %v1353 = vsub.f32 %v491, %v1352
        %v1354 = vand.u32 %v1353, 4294901760
        %1355 = vmatmul.mubr.f32.gmra.mxu0 %v1354
        %v1356 = vpop.f32.mrf.mxu0
        %v1357 = vadd.f32 %v1143, %v1356
        %v1358 = vpop.f32.mrf.mxu0
        %v1359 = vadd.f32 %v1145, %v1358
        %1360 = vmatprep.mubr.f32.mxu0 0.0
        %v1361 = vand.u32 %v494, 4294901760
        %v1362 = vsub.f32 %v494, %v1361
        %v1363 = vand.u32 %v1362, 4294901760
        %1364 = vmatmul.mubr.f32.gmra.mxu0 %v1363
        %v1365 = vpop.f32.mrf.mxu0
        %v1366 = vadd.f32 %v1151, %v1365
        %v1367 = vpop.f32.mrf.mxu0
        %v1368 = vadd.f32 %v1153, %v1367
        %1369 = vdwg.mxu0
        %1370 = vmatprep.subr.mxu0 0.0
        %1371 = vmatpush1.msra.mxu0 0.0
        %1372 = vmatprep.subr.mxu0 0.0
        %1373 = vmatpush1.msra.mxu0 0.0
        %1374 = vmatprep.subr.mxu0 0.0
        %1375 = vmatpush1.msra.mxu0 0.0
        %1376 = vmatprep.subr.mxu0 0.0
        %1377 = vmatpush1.msra.mxu0 0.0
        %1378 = vmatprep.subr.mxu0 0.0
        %1379 = vmatpush1.msra.mxu0 0.0
        %1380 = vmatprep.subr.mxu0 0.0
        %1381 = vmatpush1.msra.mxu0 0.0
        %1382 = vmatprep.subr.mxu0 0.0
        %1383 = vmatpush1.msra.mxu0 0.0
        %1384 = vmatprep.subr.mxu0 0.0
        %1385 = vmatpush1.msra.mxu0 0.0
        %1386 = vmatprep.subr.mxu0 0.0
        %1387 = vmatpush1.msra.mxu0 0.0
        %1388 = vmatprep.subr.mxu0 0.0
        %1389 = vmatpush1.msra.mxu0 0.0
        %1390 = vmatprep.subr.mxu0 0.0
        %1391 = vmatpush1.msra.mxu0 0.0
        %1392 = vmatprep.subr.mxu0 0.0
        %1393 = vmatpush1.msra.mxu0 0.0
        %1394 = vmatprep.subr.mxu0 0.0
        %1395 = vmatpush1.msra.mxu0 0.0
        %v1396 = vand.u32 %v348, 4294901760
        %v1397 = vsub.f32 %v348, %v1396
        %v1398 = vand.u32 %v1397, 4294901760
        %1399 = vmatprep.subr.mxu0 %v1398
        %v1400 = vand.u32 %v347, 4294901760
        %v1401 = vsub.f32 %v347, %v1400
        %v1402 = vand.u32 %v1401, 4294901760
        %1403 = vmatpush1.msra.mxu0 %v1402
        %v1404 = vand.u32 %v344, 4294901760
        %v1405 = vsub.f32 %v344, %v1404
        %v1406 = vand.u32 %v1405, 4294901760
        %1407 = vmatprep.subr.mxu0 %v1406
        %v1408 = vand.u32 %v343, 4294901760
        %v1409 = vsub.f32 %v343, %v1408
        %v1410 = vand.u32 %v1409, 4294901760
        %1411 = vmatpush1.msra.mxu0 %v1410
        %v1412 = vand.u32 %v340, 4294901760
        %v1413 = vsub.f32 %v340, %v1412
        %v1414 = vand.u32 %v1413, 4294901760
        %1415 = vmatprep.subr.mxu0 %v1414
        %v1416 = vand.u32 %v339, 4294901760
        %v1417 = vsub.f32 %v339, %v1416
        %v1418 = vand.u32 %v1417, 4294901760
        %1419 = vmatpush1.msra.mxu0 %v1418
        %1420 = vmatprep.subr.mxu0 0.0
        %1421 = vmatpush2.msra.mxu0 0.0
        %1422 = vmatprep.subr.mxu0 0.0
        %1423 = vmatpush2.msra.mxu0 0.0
        %1424 = vmatprep.subr.mxu0 0.0
        %1425 = vmatpush2.msra.mxu0 0.0
        %1426 = vmatprep.subr.mxu0 0.0
        %1427 = vmatpush2.msra.mxu0 0.0
        %1428 = vmatprep.subr.mxu0 0.0
        %1429 = vmatpush2.msra.mxu0 0.0
        %1430 = vmatprep.subr.mxu0 0.0
        %1431 = vmatpush2.msra.mxu0 0.0
        %1432 = vmatprep.subr.mxu0 0.0
        %1433 = vmatpush2.msra.mxu0 0.0
        %1434 = vmatprep.subr.mxu0 0.0
        %1435 = vmatpush2.msra.mxu0 0.0
        %1436 = vmatprep.subr.mxu0 0.0
        %1437 = vmatpush2.msra.mxu0 0.0
        %1438 = vmatprep.subr.mxu0 0.0
        %1439 = vmatpush2.msra.mxu0 0.0
        %1440 = vmatprep.subr.mxu0 0.0
        %1441 = vmatpush2.msra.mxu0 0.0
        %1442 = vmatprep.subr.mxu0 0.0
        %1443 = vmatpush2.msra.mxu0 0.0
        %1444 = vmatprep.subr.mxu0 0.0
        %1445 = vmatpush2.msra.mxu0 0.0
        %1446 = vmatprep.subr.mxu0 0.0
        %1447 = vmatpush2.msra.mxu0 0.0
        %1448 = vmatprep.subr.mxu0 0.0
        %1449 = vmatpush2.msra.mxu0 0.0
        %1450 = vmatprep.subr.mxu0 0.0
        %1451 = vmatpush2.msra.mxu0 0.0
        %1452 = vmatprep.mubr.f32.mxu0 0.0
        %v1453 = vand.u32 %v449, 4294901760
        %1454 = vmatmul.mubr.f32.gmra.mxu0 %v1453
        %v1455 = vpop.f32.mrf.mxu0
        %v1456 = vadd.f32 %v1231, %v1455
        %v1457 = vpop.f32.mrf.mxu0
        %v1458 = vadd.f32 %v1233, %v1457
        %1459 = vmatprep.mubr.f32.mxu0 0.0
        %v1460 = vand.u32 %v452, 4294901760
        %1461 = vmatmul.mubr.f32.gmra.mxu0 %v1460
        %v1462 = vpop.f32.mrf.mxu0
        %v1463 = vadd.f32 %v1240, %v1462
        %v1464 = vpop.f32.mrf.mxu0
        %v1465 = vadd.f32 %v1242, %v1464
        %1466 = vmatprep.mubr.f32.mxu0 0.0
        %v1467 = vand.u32 %v455, 4294901760
        %1468 = vmatmul.mubr.f32.gmra.mxu0 %v1467
        %v1469 = vpop.f32.mrf.mxu0
        %v1470 = vadd.f32 %v1249, %v1469
        %v1471 = vpop.f32.mrf.mxu0
        %v1472 = vadd.f32 %v1251, %v1471
        %1473 = vmatprep.mubr.f32.mxu0 0.0
        %v1474 = vand.u32 %v458, 4294901760
        %1475 = vmatmul.mubr.f32.gmra.mxu0 %v1474
        %v1476 = vpop.f32.mrf.mxu0
        %v1477 = vadd.f32 %v1258, %v1476
        %v1478 = vpop.f32.mrf.mxu0
        %v1479 = vadd.f32 %v1260, %v1478
        %1480 = vmatprep.mubr.f32.mxu0 0.0
        %v1481 = vand.u32 %v461, 4294901760
        %1482 = vmatmul.mubr.f32.gmra.mxu0 %v1481
        %v1483 = vpop.f32.mrf.mxu0
        %v1484 = vadd.f32 %v1267, %v1483
        %v1485 = vpop.f32.mrf.mxu0
        %v1486 = vadd.f32 %v1269, %v1485
        %1487 = vmatprep.mubr.f32.mxu0 0.0
        %v1488 = vand.u32 %v464, 4294901760
        %1489 = vmatmul.mubr.f32.gmra.mxu0 %v1488
        %v1490 = vpop.f32.mrf.mxu0
        %v1491 = vadd.f32 %v1276, %v1490
        %v1492 = vpop.f32.mrf.mxu0
        %v1493 = vadd.f32 %v1278, %v1492
        %1494 = vmatprep.mubr.f32.mxu0 0.0
        %v1495 = vand.u32 %v467, 4294901760
        %1496 = vmatmul.mubr.f32.gmra.mxu0 %v1495
        %v1497 = vpop.f32.mrf.mxu0
        %v1498 = vadd.f32 %v1285, %v1497
        %v1499 = vpop.f32.mrf.mxu0
        %v1500 = vadd.f32 %v1287, %v1499
        %1501 = vmatprep.mubr.f32.mxu0 0.0
        %v1502 = vand.u32 %v470, 4294901760
        %1503 = vmatmul.mubr.f32.gmra.mxu0 %v1502
        %v1504 = vpop.f32.mrf.mxu0
        %v1505 = vadd.f32 %v1294, %v1504
        %v1506 = vpop.f32.mrf.mxu0
        %v1507 = vadd.f32 %v1296, %v1506
        %1508 = vmatprep.mubr.f32.mxu0 0.0
        %v1509 = vand.u32 %v473, 4294901760
        %1510 = vmatmul.mubr.f32.gmra.mxu0 %v1509
        %v1511 = vpop.f32.mrf.mxu0
        %v1512 = vadd.f32 %v1303, %v1511
        %v1513 = vpop.f32.mrf.mxu0
        %v1514 = vadd.f32 %v1305, %v1513
        %1515 = vmatprep.mubr.f32.mxu0 0.0
        %v1516 = vand.u32 %v476, 4294901760
        %1517 = vmatmul.mubr.f32.gmra.mxu0 %v1516
        %v1518 = vpop.f32.mrf.mxu0
        %v1519 = vadd.f32 %v1312, %v1518
        %v1520 = vpop.f32.mrf.mxu0
        %v1521 = vadd.f32 %v1314, %v1520
        %1522 = vmatprep.mubr.f32.mxu0 0.0
        %v1523 = vand.u32 %v479, 4294901760
        %1524 = vmatmul.mubr.f32.gmra.mxu0 %v1523
        %v1525 = vpop.f32.mrf.mxu0
        %v1526 = vadd.f32 %v1321, %v1525
        %v1527 = vpop.f32.mrf.mxu0
        %v1528 = vadd.f32 %v1323, %v1527
        %1529 = vmatprep.mubr.f32.mxu0 0.0
        %v1530 = vand.u32 %v482, 4294901760
        %1531 = vmatmul.mubr.f32.gmra.mxu0 %v1530
        %v1532 = vpop.f32.mrf.mxu0
        %v1533 = vadd.f32 %v1330, %v1532
        %v1534 = vpop.f32.mrf.mxu0
        %v1535 = vadd.f32 %v1332, %v1534
        %1536 = vmatprep.mubr.f32.mxu0 0.0
        %v1537 = vand.u32 %v485, 4294901760
        %1538 = vmatmul.mubr.f32.gmra.mxu0 %v1537
        %v1539 = vpop.f32.mrf.mxu0
        %v1540 = vadd.f32 %v1339, %v1539
        %v1541 = vpop.f32.mrf.mxu0
        %v1542 = vadd.f32 %v1341, %v1541
        %1543 = vmatprep.mubr.f32.mxu0 0.0
        %v1544 = vand.u32 %v488, 4294901760
        %1545 = vmatmul.mubr.f32.gmra.mxu0 %v1544
        %v1546 = vpop.f32.mrf.mxu0
        %v1547 = vadd.f32 %v1348, %v1546
        %v1548 = vpop.f32.mrf.mxu0
        %v1549 = vadd.f32 %v1350, %v1548
        %1550 = vmatprep.mubr.f32.mxu0 0.0
        %v1551 = vand.u32 %v491, 4294901760
        %1552 = vmatmul.mubr.f32.gmra.mxu0 %v1551
        %v1553 = vpop.f32.mrf.mxu0
        %v1554 = vadd.f32 %v1357, %v1553
        %v1555 = vpop.f32.mrf.mxu0
        %v1556 = vadd.f32 %v1359, %v1555
        %1557 = vmatprep.mubr.f32.mxu0 0.0
        %v1558 = vand.u32 %v494, 4294901760
        %1559 = vmatmul.mubr.f32.gmra.mxu0 %v1558
        %v1560 = vpop.f32.mrf.mxu0
        %v1561 = vadd.f32 %v1366, %v1560
        %v1562 = vpop.f32.mrf.mxu0
        %v1563 = vadd.f32 %v1368, %v1562
        %1564 = vdwg.mxu0
        %1565 = vmatprep.subr.mxu0 0.0
        %1566 = vmatpush1.msra.mxu0 0.0
        %1567 = vmatprep.subr.mxu0 0.0
        %1568 = vmatpush1.msra.mxu0 0.0
        %1569 = vmatprep.subr.mxu0 0.0
        %1570 = vmatpush1.msra.mxu0 0.0
        %1571 = vmatprep.subr.mxu0 0.0
        %1572 = vmatpush1.msra.mxu0 0.0
        %1573 = vmatprep.subr.mxu0 0.0
        %1574 = vmatpush1.msra.mxu0 0.0
        %1575 = vmatprep.subr.mxu0 0.0
        %1576 = vmatpush1.msra.mxu0 0.0
        %1577 = vmatprep.subr.mxu0 0.0
        %1578 = vmatpush1.msra.mxu0 0.0
        %1579 = vmatprep.subr.mxu0 0.0
        %1580 = vmatpush1.msra.mxu0 0.0
        %1581 = vmatprep.subr.mxu0 0.0
        %1582 = vmatpush1.msra.mxu0 0.0
        %1583 = vmatprep.subr.mxu0 0.0
        %1584 = vmatpush1.msra.mxu0 0.0
        %1585 = vmatprep.subr.mxu0 0.0
        %1586 = vmatpush1.msra.mxu0 0.0
        %1587 = vmatprep.subr.mxu0 0.0
        %1588 = vmatpush1.msra.mxu0 0.0
        %1589 = vmatprep.subr.mxu0 0.0
        %1590 = vmatpush1.msra.mxu0 0.0
        %v1591 = vand.u32 %v348, 4294901760
        %1592 = vmatprep.subr.mxu0 %v1591
        %v1593 = vand.u32 %v347, 4294901760
        %1594 = vmatpush1.msra.mxu0 %v1593
        %v1595 = vand.u32 %v344, 4294901760
        %1596 = vmatprep.subr.mxu0 %v1595
        %v1597 = vand.u32 %v343, 4294901760
        %1598 = vmatpush1.msra.mxu0 %v1597
        %v1599 = vand.u32 %v340, 4294901760
        %1600 = vmatprep.subr.mxu0 %v1599
        %v1601 = vand.u32 %v339, 4294901760
        %1602 = vmatpush1.msra.mxu0 %v1601
        %1603 = vmatprep.subr.mxu0 0.0
        %1604 = vmatpush2.msra.mxu0 0.0
        %1605 = vmatprep.subr.mxu0 0.0
        %1606 = vmatpush2.msra.mxu0 0.0
        %1607 = vmatprep.subr.mxu0 0.0
        %1608 = vmatpush2.msra.mxu0 0.0
        %1609 = vmatprep.subr.mxu0 0.0
        %1610 = vmatpush2.msra.mxu0 0.0
        %1611 = vmatprep.subr.mxu0 0.0
        %1612 = vmatpush2.msra.mxu0 0.0
        %1613 = vmatprep.subr.mxu0 0.0
        %1614 = vmatpush2.msra.mxu0 0.0
        %1615 = vmatprep.subr.mxu0 0.0
        %1616 = vmatpush2.msra.mxu0 0.0
        %1617 = vmatprep.subr.mxu0 0.0
        %1618 = vmatpush2.msra.mxu0 0.0
        %1619 = vmatprep.subr.mxu0 0.0
        %1620 = vmatpush2.msra.mxu0 0.0
        %1621 = vmatprep.subr.mxu0 0.0
        %1622 = vmatpush2.msra.mxu0 0.0
        %1623 = vmatprep.subr.mxu0 0.0
        %1624 = vmatpush2.msra.mxu0 0.0
        %1625 = vmatprep.subr.mxu0 0.0
        %1626 = vmatpush2.msra.mxu0 0.0
        %1627 = vmatprep.subr.mxu0 0.0
        %1628 = vmatpush2.msra.mxu0 0.0
        %1629 = vmatprep.subr.mxu0 0.0
        %1630 = vmatpush2.msra.mxu0 0.0
        %1631 = vmatprep.subr.mxu0 0.0
        %1632 = vmatpush2.msra.mxu0 0.0
        %1633 = vmatprep.subr.mxu0 0.0
        %1634 = vmatpush2.msra.mxu0 0.0
        %1635 = vmatprep.mubr.f32.mxu0 0.0
        %v1636 = vand.u32 %v449, 4294901760
        %1637 = vmatmul.mubr.f32.gmra.mxu0 %v1636
        %v1638 = vpop.f32.mrf.mxu0
        %v1639 = vadd.f32 %v1456, %v1638
        %v1640 = vpop.f32.mrf.mxu0
        %v1641 = vadd.f32 %v1458, %v1640
        %1642 = vmatprep.mubr.f32.mxu0 0.0
        %v1643 = vand.u32 %v452, 4294901760
        %1644 = vmatmul.mubr.f32.gmra.mxu0 %v1643
        %v1645 = vpop.f32.mrf.mxu0
        %v1646 = vadd.f32 %v1463, %v1645
        %v1647 = vpop.f32.mrf.mxu0
        %v1648 = vadd.f32 %v1465, %v1647
        %1649 = vmatprep.mubr.f32.mxu0 0.0
        %v1650 = vand.u32 %v455, 4294901760
        %1651 = vmatmul.mubr.f32.gmra.mxu0 %v1650
        %v1652 = vpop.f32.mrf.mxu0
        %v1653 = vadd.f32 %v1470, %v1652
        %v1654 = vpop.f32.mrf.mxu0
        %v1655 = vadd.f32 %v1472, %v1654
        %1656 = vmatprep.mubr.f32.mxu0 0.0
        %v1657 = vand.u32 %v458, 4294901760
        %1658 = vmatmul.mubr.f32.gmra.mxu0 %v1657
        %v1659 = vpop.f32.mrf.mxu0
        %v1660 = vadd.f32 %v1477, %v1659
        %v1661 = vpop.f32.mrf.mxu0
        %v1662 = vadd.f32 %v1479, %v1661
        %1663 = vmatprep.mubr.f32.mxu0 0.0
        %v1664 = vand.u32 %v461, 4294901760
        %1665 = vmatmul.mubr.f32.gmra.mxu0 %v1664
        %v1666 = vpop.f32.mrf.mxu0
        %v1667 = vadd.f32 %v1484, %v1666
        %v1668 = vpop.f32.mrf.mxu0
        %v1669 = vadd.f32 %v1486, %v1668
        %1670 = vmatprep.mubr.f32.mxu0 0.0
        %v1671 = vand.u32 %v464, 4294901760
        %1672 = vmatmul.mubr.f32.gmra.mxu0 %v1671
        %v1673 = vpop.f32.mrf.mxu0
        %v1674 = vadd.f32 %v1491, %v1673
        %v1675 = vpop.f32.mrf.mxu0
        %v1676 = vadd.f32 %v1493, %v1675
        %1677 = vmatprep.mubr.f32.mxu0 0.0
        %v1678 = vand.u32 %v467, 4294901760
        %1679 = vmatmul.mubr.f32.gmra.mxu0 %v1678
        %v1680 = vpop.f32.mrf.mxu0
        %v1681 = vadd.f32 %v1498, %v1680
        %v1682 = vpop.f32.mrf.mxu0
        %v1683 = vadd.f32 %v1500, %v1682
        %1684 = vmatprep.mubr.f32.mxu0 0.0
        %v1685 = vand.u32 %v470, 4294901760
        %1686 = vmatmul.mubr.f32.gmra.mxu0 %v1685
        %v1687 = vpop.f32.mrf.mxu0
        %v1688 = vadd.f32 %v1505, %v1687
        %v1689 = vpop.f32.mrf.mxu0
        %v1690 = vadd.f32 %v1507, %v1689
        %1691 = vmatprep.mubr.f32.mxu0 0.0
        %v1692 = vand.u32 %v473, 4294901760
        %1693 = vmatmul.mubr.f32.gmra.mxu0 %v1692
        %v1694 = vpop.f32.mrf.mxu0
        %v1695 = vadd.f32 %v1512, %v1694
        %v1696 = vpop.f32.mrf.mxu0
        %v1697 = vadd.f32 %v1514, %v1696
        %1698 = vmatprep.mubr.f32.mxu0 0.0
        %v1699 = vand.u32 %v476, 4294901760
        %1700 = vmatmul.mubr.f32.gmra.mxu0 %v1699
        %v1701 = vpop.f32.mrf.mxu0
        %v1702 = vadd.f32 %v1519, %v1701
        %v1703 = vpop.f32.mrf.mxu0
        %v1704 = vadd.f32 %v1521, %v1703
        %1705 = vmatprep.mubr.f32.mxu0 0.0
        %v1706 = vand.u32 %v479, 4294901760
        %1707 = vmatmul.mubr.f32.gmra.mxu0 %v1706
        %v1708 = vpop.f32.mrf.mxu0
        %v1709 = vadd.f32 %v1526, %v1708
        %v1710 = vpop.f32.mrf.mxu0
        %v1711 = vadd.f32 %v1528, %v1710
        %1712 = vmatprep.mubr.f32.mxu0 0.0
        %v1713 = vand.u32 %v482, 4294901760
        %1714 = vmatmul.mubr.f32.gmra.mxu0 %v1713
        %v1715 = vpop.f32.mrf.mxu0
        %v1716 = vadd.f32 %v1533, %v1715
        %v1717 = vpop.f32.mrf.mxu0
        %v1718 = vadd.f32 %v1535, %v1717
        %1719 = vmatprep.mubr.f32.mxu0 0.0
        %v1720 = vand.u32 %v485, 4294901760
        %1721 = vmatmul.mubr.f32.gmra.mxu0 %v1720
        %v1722 = vpop.f32.mrf.mxu0
        %v1723 = vadd.f32 %v1540, %v1722
        %v1724 = vpop.f32.mrf.mxu0
        %v1725 = vadd.f32 %v1542, %v1724
        %1726 = vmatprep.mubr.f32.mxu0 0.0
        %v1727 = vand.u32 %v488, 4294901760
        %1728 = vmatmul.mubr.f32.gmra.mxu0 %v1727
        %v1729 = vpop.f32.mrf.mxu0
        %v1730 = vadd.f32 %v1547, %v1729
        %v1731 = vpop.f32.mrf.mxu0
        %v1732 = vadd.f32 %v1549, %v1731
        %1733 = vmatprep.mubr.f32.mxu0 0.0
        %v1734 = vand.u32 %v491, 4294901760
        %1735 = vmatmul.mubr.f32.gmra.mxu0 %v1734
        %v1736 = vpop.f32.mrf.mxu0
        %v1737 = vadd.f32 %v1554, %v1736
        %v1738 = vpop.f32.mrf.mxu0
        %v1739 = vadd.f32 %v1556, %v1738
        %1740 = vmatprep.mubr.f32.mxu0 0.0
        %v1741 = vand.u32 %v494, 4294901760
        %1742 = vmatmul.mubr.f32.gmra.mxu0 %v1741
        %v1743 = vpop.f32.mrf.mxu0
        %v1744 = vadd.f32 %v1561, %v1743
        %v1745 = vpop.f32.mrf.mxu0
        %v1746 = vadd.f32 %v1563, %v1745
        %1747 = vdwg.mxu0
        %1748 = vmatprep.subr.mxu0 0.0
        %1749 = vmatpush1.msra.mxu0 0.0
        %1750 = vmatprep.subr.mxu0 0.0
        %1751 = vmatpush1.msra.mxu0 0.0
        %1752 = vmatprep.subr.mxu0 0.0
        %1753 = vmatpush1.msra.mxu0 0.0
        %1754 = vmatprep.subr.mxu0 0.0
        %1755 = vmatpush1.msra.mxu0 0.0
        %1756 = vmatprep.subr.mxu0 0.0
        %1757 = vmatpush1.msra.mxu0 0.0
        %1758 = vmatprep.subr.mxu0 0.0
        %1759 = vmatpush1.msra.mxu0 0.0
        %1760 = vmatprep.subr.mxu0 0.0
        %1761 = vmatpush1.msra.mxu0 0.0
        %1762 = vmatprep.subr.mxu0 0.0
        %1763 = vmatpush1.msra.mxu0 0.0
        %1764 = vmatprep.subr.mxu0 0.0
        %1765 = vmatpush1.msra.mxu0 0.0
        %1766 = vmatprep.subr.mxu0 0.0
        %1767 = vmatpush1.msra.mxu0 0.0
        %1768 = vmatprep.subr.mxu0 0.0
        %1769 = vmatpush1.msra.mxu0 0.0
        %1770 = vmatprep.subr.mxu0 0.0
        %1771 = vmatpush1.msra.mxu0 0.0
        %1772 = vmatprep.subr.mxu0 0.0
        %1773 = vmatpush1.msra.mxu0 0.0
        %v1774 = vand.u32 %v350, 4294901760
        %1775 = vmatprep.subr.mxu0 %v1774
        %v1776 = vand.u32 %v349, 4294901760
        %1777 = vmatpush1.msra.mxu0 %v1776
        %v1778 = vand.u32 %v346, 4294901760
        %1779 = vmatprep.subr.mxu0 %v1778
        %v1780 = vand.u32 %v345, 4294901760
        %1781 = vmatpush1.msra.mxu0 %v1780
        %v1782 = vand.u32 %v342, 4294901760
        %1783 = vmatprep.subr.mxu0 %v1782
        %v1784 = vand.u32 %v341, 4294901760
        %1785 = vmatpush1.msra.mxu0 %v1784
        %1786 = vmatprep.subr.mxu0 0.0
        %1787 = vmatpush2.msra.mxu0 0.0
        %1788 = vmatprep.subr.mxu0 0.0
        %1789 = vmatpush2.msra.mxu0 0.0
        %1790 = vmatprep.subr.mxu0 0.0
        %1791 = vmatpush2.msra.mxu0 0.0
        %1792 = vmatprep.subr.mxu0 0.0
        %1793 = vmatpush2.msra.mxu0 0.0
        %1794 = vmatprep.subr.mxu0 0.0
        %1795 = vmatpush2.msra.mxu0 0.0
        %1796 = vmatprep.subr.mxu0 0.0
        %1797 = vmatpush2.msra.mxu0 0.0
        %1798 = vmatprep.subr.mxu0 0.0
        %1799 = vmatpush2.msra.mxu0 0.0
        %1800 = vmatprep.subr.mxu0 0.0
        %1801 = vmatpush2.msra.mxu0 0.0
        %1802 = vmatprep.subr.mxu0 0.0
        %1803 = vmatpush2.msra.mxu0 0.0
        %1804 = vmatprep.subr.mxu0 0.0
        %1805 = vmatpush2.msra.mxu0 0.0
        %1806 = vmatprep.subr.mxu0 0.0
        %1807 = vmatpush2.msra.mxu0 0.0
        %1808 = vmatprep.subr.mxu0 0.0
        %1809 = vmatpush2.msra.mxu0 0.0
        %1810 = vmatprep.subr.mxu0 0.0
        %1811 = vmatpush2.msra.mxu0 0.0
        %1812 = vmatprep.subr.mxu0 0.0
        %1813 = vmatpush2.msra.mxu0 0.0
        %1814 = vmatprep.subr.mxu0 0.0
        %1815 = vmatpush2.msra.mxu0 0.0
        %1816 = vmatprep.subr.mxu0 0.0
        %1817 = vmatpush2.msra.mxu0 0.0
        %1818 = vmatprep.mubr.f32.mxu0 0.0
        %v1819 = vand.u32 %v449, 4294901760
        %v1820 = vsub.f32 %v449, %v1819
        %v1821 = vand.u32 %v1820, 4294901760
        %v1822 = vsub.f32 %v1820, %v1821
        %v1823 = vand.u32 %v1822, 4294901760
        %1824 = vmatmul.mubr.f32.gmra.mxu0 %v1823
        %v1825 = vpop.f32.mrf.mxu0
        %v1826 = vadd.f32 %v370, %v1825
        %v1827 = vpop.f32.mrf.mxu0
        %v1828 = vadd.f32 %v370, %v1827
        %1829 = vmatprep.mubr.f32.mxu0 0.0
        %v1830 = vand.u32 %v452, 4294901760
        %v1831 = vsub.f32 %v452, %v1830
        %v1832 = vand.u32 %v1831, 4294901760
        %v1833 = vsub.f32 %v1831, %v1832
        %v1834 = vand.u32 %v1833, 4294901760
        %1835 = vmatmul.mubr.f32.gmra.mxu0 %v1834
        %v1836 = vpop.f32.mrf.mxu0
        %v1837 = vadd.f32 %v375, %v1836
        %v1838 = vpop.f32.mrf.mxu0
        %v1839 = vadd.f32 %v375, %v1838
        %1840 = vmatprep.mubr.f32.mxu0 0.0
        %v1841 = vand.u32 %v455, 4294901760
        %v1842 = vsub.f32 %v455, %v1841
        %v1843 = vand.u32 %v1842, 4294901760
        %v1844 = vsub.f32 %v1842, %v1843
        %v1845 = vand.u32 %v1844, 4294901760
        %1846 = vmatmul.mubr.f32.gmra.mxu0 %v1845
        %v1847 = vpop.f32.mrf.mxu0
        %v1848 = vadd.f32 %v380, %v1847
        %v1849 = vpop.f32.mrf.mxu0
        %v1850 = vadd.f32 %v380, %v1849
        %1851 = vmatprep.mubr.f32.mxu0 0.0
        %v1852 = vand.u32 %v458, 4294901760
        %v1853 = vsub.f32 %v458, %v1852
        %v1854 = vand.u32 %v1853, 4294901760
        %v1855 = vsub.f32 %v1853, %v1854
        %v1856 = vand.u32 %v1855, 4294901760
        %1857 = vmatmul.mubr.f32.gmra.mxu0 %v1856
        %v1858 = vpop.f32.mrf.mxu0
        %v1859 = vadd.f32 %v385, %v1858
        %v1860 = vpop.f32.mrf.mxu0
        %v1861 = vadd.f32 %v385, %v1860
        %1862 = vmatprep.mubr.f32.mxu0 0.0
        %v1863 = vand.u32 %v461, 4294901760
        %v1864 = vsub.f32 %v461, %v1863
        %v1865 = vand.u32 %v1864, 4294901760
        %v1866 = vsub.f32 %v1864, %v1865
        %v1867 = vand.u32 %v1866, 4294901760
        %1868 = vmatmul.mubr.f32.gmra.mxu0 %v1867
        %v1869 = vpop.f32.mrf.mxu0
        %v1870 = vadd.f32 %v390, %v1869
        %v1871 = vpop.f32.mrf.mxu0
        %v1872 = vadd.f32 %v390, %v1871
        %1873 = vmatprep.mubr.f32.mxu0 0.0
        %v1874 = vand.u32 %v464, 4294901760
        %v1875 = vsub.f32 %v464, %v1874
        %v1876 = vand.u32 %v1875, 4294901760
        %v1877 = vsub.f32 %v1875, %v1876
        %v1878 = vand.u32 %v1877, 4294901760
        %1879 = vmatmul.mubr.f32.gmra.mxu0 %v1878
        %v1880 = vpop.f32.mrf.mxu0
        %v1881 = vadd.f32 %v395, %v1880
        %v1882 = vpop.f32.mrf.mxu0
        %v1883 = vadd.f32 %v395, %v1882
        %1884 = vmatprep.mubr.f32.mxu0 0.0
        %v1885 = vand.u32 %v467, 4294901760
        %v1886 = vsub.f32 %v467, %v1885
        %v1887 = vand.u32 %v1886, 4294901760
        %v1888 = vsub.f32 %v1886, %v1887
        %v1889 = vand.u32 %v1888, 4294901760
        %1890 = vmatmul.mubr.f32.gmra.mxu0 %v1889
        %v1891 = vpop.f32.mrf.mxu0
        %v1892 = vadd.f32 %v400, %v1891
        %v1893 = vpop.f32.mrf.mxu0
        %v1894 = vadd.f32 %v400, %v1893
        %1895 = vmatprep.mubr.f32.mxu0 0.0
        %v1896 = vand.u32 %v470, 4294901760
        %v1897 = vsub.f32 %v470, %v1896
        %v1898 = vand.u32 %v1897, 4294901760
        %v1899 = vsub.f32 %v1897, %v1898
        %v1900 = vand.u32 %v1899, 4294901760
        %1901 = vmatmul.mubr.f32.gmra.mxu0 %v1900
        %v1902 = vpop.f32.mrf.mxu0
        %v1903 = vadd.f32 %v405, %v1902
        %v1904 = vpop.f32.mrf.mxu0
        %v1905 = vadd.f32 %v405, %v1904
        %1906 = vmatprep.mubr.f32.mxu0 0.0
        %v1907 = vand.u32 %v473, 4294901760
        %v1908 = vsub.f32 %v473, %v1907
        %v1909 = vand.u32 %v1908, 4294901760
        %v1910 = vsub.f32 %v1908, %v1909
        %v1911 = vand.u32 %v1910, 4294901760
        %1912 = vmatmul.mubr.f32.gmra.mxu0 %v1911
        %v1913 = vpop.f32.mrf.mxu0
        %v1914 = vadd.f32 %v410, %v1913
        %v1915 = vpop.f32.mrf.mxu0
        %v1916 = vadd.f32 %v410, %v1915
        %1917 = vmatprep.mubr.f32.mxu0 0.0
        %v1918 = vand.u32 %v476, 4294901760
        %v1919 = vsub.f32 %v476, %v1918
        %v1920 = vand.u32 %v1919, 4294901760
        %v1921 = vsub.f32 %v1919, %v1920
        %v1922 = vand.u32 %v1921, 4294901760
        %1923 = vmatmul.mubr.f32.gmra.mxu0 %v1922
        %v1924 = vpop.f32.mrf.mxu0
        %v1925 = vadd.f32 %v415, %v1924
        %v1926 = vpop.f32.mrf.mxu0
        %v1927 = vadd.f32 %v415, %v1926
        %1928 = vmatprep.mubr.f32.mxu0 0.0
        %v1929 = vand.u32 %v479, 4294901760
        %v1930 = vsub.f32 %v479, %v1929
        %v1931 = vand.u32 %v1930, 4294901760
        %v1932 = vsub.f32 %v1930, %v1931
        %v1933 = vand.u32 %v1932, 4294901760
        %1934 = vmatmul.mubr.f32.gmra.mxu0 %v1933
        %v1935 = vpop.f32.mrf.mxu0
        %v1936 = vadd.f32 %v420, %v1935
        %v1937 = vpop.f32.mrf.mxu0
        %v1938 = vadd.f32 %v420, %v1937
        %1939 = vmatprep.mubr.f32.mxu0 0.0
        %v1940 = vand.u32 %v482, 4294901760
        %v1941 = vsub.f32 %v482, %v1940
        %v1942 = vand.u32 %v1941, 4294901760
        %v1943 = vsub.f32 %v1941, %v1942
        %v1944 = vand.u32 %v1943, 4294901760
        %1945 = vmatmul.mubr.f32.gmra.mxu0 %v1944
        %v1946 = vpop.f32.mrf.mxu0
        %v1947 = vadd.f32 %v425, %v1946
        %v1948 = vpop.f32.mrf.mxu0
        %v1949 = vadd.f32 %v425, %v1948
        %1950 = vmatprep.mubr.f32.mxu0 0.0
        %v1951 = vand.u32 %v485, 4294901760
        %v1952 = vsub.f32 %v485, %v1951
        %v1953 = vand.u32 %v1952, 4294901760
        %v1954 = vsub.f32 %v1952, %v1953
        %v1955 = vand.u32 %v1954, 4294901760
        %1956 = vmatmul.mubr.f32.gmra.mxu0 %v1955
        %v1957 = vpop.f32.mrf.mxu0
        %v1958 = vadd.f32 %v430, %v1957
        %v1959 = vpop.f32.mrf.mxu0
        %v1960 = vadd.f32 %v430, %v1959
        %1961 = vmatprep.mubr.f32.mxu0 0.0
        %v1962 = vand.u32 %v488, 4294901760
        %v1963 = vsub.f32 %v488, %v1962
        %v1964 = vand.u32 %v1963, 4294901760
        %v1965 = vsub.f32 %v1963, %v1964
        %v1966 = vand.u32 %v1965, 4294901760
        %1967 = vmatmul.mubr.f32.gmra.mxu0 %v1966
        %v1968 = vpop.f32.mrf.mxu0
        %v1969 = vadd.f32 %v435, %v1968
        %v1970 = vpop.f32.mrf.mxu0
        %v1971 = vadd.f32 %v435, %v1970
        %1972 = vmatprep.mubr.f32.mxu0 0.0
        %v1973 = vand.u32 %v491, 4294901760
        %v1974 = vsub.f32 %v491, %v1973
        %v1975 = vand.u32 %v1974, 4294901760
        %v1976 = vsub.f32 %v1974, %v1975
        %v1977 = vand.u32 %v1976, 4294901760
        %1978 = vmatmul.mubr.f32.gmra.mxu0 %v1977
        %v1979 = vpop.f32.mrf.mxu0
        %v1980 = vadd.f32 %v440, %v1979
        %v1981 = vpop.f32.mrf.mxu0
        %v1982 = vadd.f32 %v440, %v1981
        %1983 = vmatprep.mubr.f32.mxu0 0.0
        %v1984 = vand.u32 %v494, 4294901760
        %v1985 = vsub.f32 %v494, %v1984
        %v1986 = vand.u32 %v1985, 4294901760
        %v1987 = vsub.f32 %v1985, %v1986
        %v1988 = vand.u32 %v1987, 4294901760
        %1989 = vmatmul.mubr.f32.gmra.mxu0 %v1988
        %v1990 = vpop.f32.mrf.mxu0
        %v1991 = vadd.f32 %v445, %v1990
        %v1992 = vpop.f32.mrf.mxu0
        %v1993 = vadd.f32 %v445, %v1992
        %1994 = vdwg.mxu0
        %1995 = vmatprep.subr.mxu0 0.0
        %1996 = vmatpush1.msra.mxu0 0.0
        %1997 = vmatprep.subr.mxu0 0.0
        %1998 = vmatpush1.msra.mxu0 0.0
        %1999 = vmatprep.subr.mxu0 0.0
        %2000 = vmatpush1.msra.mxu0 0.0
        %2001 = vmatprep.subr.mxu0 0.0
        %2002 = vmatpush1.msra.mxu0 0.0
        %2003 = vmatprep.subr.mxu0 0.0
        %2004 = vmatpush1.msra.mxu0 0.0
        %2005 = vmatprep.subr.mxu0 0.0
        %2006 = vmatpush1.msra.mxu0 0.0
        %2007 = vmatprep.subr.mxu0 0.0
        %2008 = vmatpush1.msra.mxu0 0.0
        %2009 = vmatprep.subr.mxu0 0.0
        %2010 = vmatpush1.msra.mxu0 0.0
        %2011 = vmatprep.subr.mxu0 0.0
        %2012 = vmatpush1.msra.mxu0 0.0
        %2013 = vmatprep.subr.mxu0 0.0
        %2014 = vmatpush1.msra.mxu0 0.0
        %2015 = vmatprep.subr.mxu0 0.0
        %2016 = vmatpush1.msra.mxu0 0.0
        %2017 = vmatprep.subr.mxu0 0.0
        %2018 = vmatpush1.msra.mxu0 0.0
        %2019 = vmatprep.subr.mxu0 0.0
        %2020 = vmatpush1.msra.mxu0 0.0
        %v2021 = vand.u32 %v350, 4294901760
        %v2022 = vsub.f32 %v350, %v2021
        %v2023 = vand.u32 %v2022, 4294901760
        %v2024 = vsub.f32 %v2022, %v2023
        %v2025 = vand.u32 %v2024, 4294901760
        %2026 = vmatprep.subr.mxu0 %v2025
        %v2027 = vand.u32 %v349, 4294901760
        %v2028 = vsub.f32 %v349, %v2027
        %v2029 = vand.u32 %v2028, 4294901760
        %v2030 = vsub.f32 %v2028, %v2029
        %v2031 = vand.u32 %v2030, 4294901760
        %2032 = vmatpush1.msra.mxu0 %v2031
        %v2033 = vand.u32 %v346, 4294901760
        %v2034 = vsub.f32 %v346, %v2033
        %v2035 = vand.u32 %v2034, 4294901760
        %v2036 = vsub.f32 %v2034, %v2035
        %v2037 = vand.u32 %v2036, 4294901760
        %2038 = vmatprep.subr.mxu0 %v2037
        %v2039 = vand.u32 %v345, 4294901760
        %v2040 = vsub.f32 %v345, %v2039
        %v2041 = vand.u32 %v2040, 4294901760
        %v2042 = vsub.f32 %v2040, %v2041
        %v2043 = vand.u32 %v2042, 4294901760
        %2044 = vmatpush1.msra.mxu0 %v2043
        %v2045 = vand.u32 %v342, 4294901760
        %v2046 = vsub.f32 %v342, %v2045
        %v2047 = vand.u32 %v2046, 4294901760
        %v2048 = vsub.f32 %v2046, %v2047
        %v2049 = vand.u32 %v2048, 4294901760
        %2050 = vmatprep.subr.mxu0 %v2049
        %v2051 = vand.u32 %v341, 4294901760
        %v2052 = vsub.f32 %v341, %v2051
        %v2053 = vand.u32 %v2052, 4294901760
        %v2054 = vsub.f32 %v2052, %v2053
        %v2055 = vand.u32 %v2054, 4294901760
        %2056 = vmatpush1.msra.mxu0 %v2055
        %2057 = vmatprep.subr.mxu0 0.0
        %2058 = vmatpush2.msra.mxu0 0.0
        %2059 = vmatprep.subr.mxu0 0.0
        %2060 = vmatpush2.msra.mxu0 0.0
        %2061 = vmatprep.subr.mxu0 0.0
        %2062 = vmatpush2.msra.mxu0 0.0
        %2063 = vmatprep.subr.mxu0 0.0
        %2064 = vmatpush2.msra.mxu0 0.0
        %2065 = vmatprep.subr.mxu0 0.0
        %2066 = vmatpush2.msra.mxu0 0.0
        %2067 = vmatprep.subr.mxu0 0.0
        %2068 = vmatpush2.msra.mxu0 0.0
        %2069 = vmatprep.subr.mxu0 0.0
        %2070 = vmatpush2.msra.mxu0 0.0
        %2071 = vmatprep.subr.mxu0 0.0
        %2072 = vmatpush2.msra.mxu0 0.0
        %2073 = vmatprep.subr.mxu0 0.0
        %2074 = vmatpush2.msra.mxu0 0.0
        %2075 = vmatprep.subr.mxu0 0.0
        %2076 = vmatpush2.msra.mxu0 0.0
        %2077 = vmatprep.subr.mxu0 0.0
        %2078 = vmatpush2.msra.mxu0 0.0
        %2079 = vmatprep.subr.mxu0 0.0
        %2080 = vmatpush2.msra.mxu0 0.0
        %2081 = vmatprep.subr.mxu0 0.0
        %2082 = vmatpush2.msra.mxu0 0.0
        %2083 = vmatprep.subr.mxu0 0.0
        %2084 = vmatpush2.msra.mxu0 0.0
        %2085 = vmatprep.subr.mxu0 0.0
        %2086 = vmatpush2.msra.mxu0 0.0
        %2087 = vmatprep.subr.mxu0 0.0
        %2088 = vmatpush2.msra.mxu0 0.0
        %2089 = vmatprep.mubr.f32.mxu0 0.0
        %v2090 = vand.u32 %v449, 4294901760
        %2091 = vmatmul.mubr.f32.gmra.mxu0 %v2090
        %v2092 = vpop.f32.mrf.mxu0
        %v2093 = vadd.f32 %v1826, %v2092
        %v2094 = vpop.f32.mrf.mxu0
        %v2095 = vadd.f32 %v1828, %v2094
        %2096 = vmatprep.mubr.f32.mxu0 0.0
        %v2097 = vand.u32 %v452, 4294901760
        %2098 = vmatmul.mubr.f32.gmra.mxu0 %v2097
        %v2099 = vpop.f32.mrf.mxu0
        %v2100 = vadd.f32 %v1837, %v2099
        %v2101 = vpop.f32.mrf.mxu0
        %v2102 = vadd.f32 %v1839, %v2101
        %2103 = vmatprep.mubr.f32.mxu0 0.0
        %v2104 = vand.u32 %v455, 4294901760
        %2105 = vmatmul.mubr.f32.gmra.mxu0 %v2104
        %v2106 = vpop.f32.mrf.mxu0
        %v2107 = vadd.f32 %v1848, %v2106
        %v2108 = vpop.f32.mrf.mxu0
        %v2109 = vadd.f32 %v1850, %v2108
        %2110 = vmatprep.mubr.f32.mxu0 0.0
        %v2111 = vand.u32 %v458, 4294901760
        %2112 = vmatmul.mubr.f32.gmra.mxu0 %v2111
        %v2113 = vpop.f32.mrf.mxu0
        %v2114 = vadd.f32 %v1859, %v2113
        %v2115 = vpop.f32.mrf.mxu0
        %v2116 = vadd.f32 %v1861, %v2115
        %2117 = vmatprep.mubr.f32.mxu0 0.0
        %v2118 = vand.u32 %v461, 4294901760
        %2119 = vmatmul.mubr.f32.gmra.mxu0 %v2118
        %v2120 = vpop.f32.mrf.mxu0
        %v2121 = vadd.f32 %v1870, %v2120
        %v2122 = vpop.f32.mrf.mxu0
        %v2123 = vadd.f32 %v1872, %v2122
        %2124 = vmatprep.mubr.f32.mxu0 0.0
        %v2125 = vand.u32 %v464, 4294901760
        %2126 = vmatmul.mubr.f32.gmra.mxu0 %v2125
        %v2127 = vpop.f32.mrf.mxu0
        %v2128 = vadd.f32 %v1881, %v2127
        %v2129 = vpop.f32.mrf.mxu0
        %v2130 = vadd.f32 %v1883, %v2129
        %2131 = vmatprep.mubr.f32.mxu0 0.0
        %v2132 = vand.u32 %v467, 4294901760
        %2133 = vmatmul.mubr.f32.gmra.mxu0 %v2132
        %v2134 = vpop.f32.mrf.mxu0
        %v2135 = vadd.f32 %v1892, %v2134
        %v2136 = vpop.f32.mrf.mxu0
        %v2137 = vadd.f32 %v1894, %v2136
        %2138 = vmatprep.mubr.f32.mxu0 0.0
        %v2139 = vand.u32 %v470, 4294901760
        %2140 = vmatmul.mubr.f32.gmra.mxu0 %v2139
        %v2141 = vpop.f32.mrf.mxu0
        %v2142 = vadd.f32 %v1903, %v2141
        %v2143 = vpop.f32.mrf.mxu0
        %v2144 = vadd.f32 %v1905, %v2143
        %2145 = vmatprep.mubr.f32.mxu0 0.0
        %v2146 = vand.u32 %v473, 4294901760
        %2147 = vmatmul.mubr.f32.gmra.mxu0 %v2146
        %v2148 = vpop.f32.mrf.mxu0
        %v2149 = vadd.f32 %v1914, %v2148
        %v2150 = vpop.f32.mrf.mxu0
        %v2151 = vadd.f32 %v1916, %v2150
        %2152 = vmatprep.mubr.f32.mxu0 0.0
        %v2153 = vand.u32 %v476, 4294901760
        %2154 = vmatmul.mubr.f32.gmra.mxu0 %v2153
        %v2155 = vpop.f32.mrf.mxu0
        %v2156 = vadd.f32 %v1925, %v2155
        %v2157 = vpop.f32.mrf.mxu0
        %v2158 = vadd.f32 %v1927, %v2157
        %2159 = vmatprep.mubr.f32.mxu0 0.0
        %v2160 = vand.u32 %v479, 4294901760
        %2161 = vmatmul.mubr.f32.gmra.mxu0 %v2160
        %v2162 = vpop.f32.mrf.mxu0
        %v2163 = vadd.f32 %v1936, %v2162
        %v2164 = vpop.f32.mrf.mxu0
        %v2165 = vadd.f32 %v1938, %v2164
        %2166 = vmatprep.mubr.f32.mxu0 0.0
        %v2167 = vand.u32 %v482, 4294901760
        %2168 = vmatmul.mubr.f32.gmra.mxu0 %v2167
        %v2169 = vpop.f32.mrf.mxu0
        %v2170 = vadd.f32 %v1947, %v2169
        %v2171 = vpop.f32.mrf.mxu0
        %v2172 = vadd.f32 %v1949, %v2171
        %2173 = vmatprep.mubr.f32.mxu0 0.0
        %v2174 = vand.u32 %v485, 4294901760
        %2175 = vmatmul.mubr.f32.gmra.mxu0 %v2174
        %v2176 = vpop.f32.mrf.mxu0
        %v2177 = vadd.f32 %v1958, %v2176
        %v2178 = vpop.f32.mrf.mxu0
        %v2179 = vadd.f32 %v1960, %v2178
        %2180 = vmatprep.mubr.f32.mxu0 0.0
        %v2181 = vand.u32 %v488, 4294901760
        %2182 = vmatmul.mubr.f32.gmra.mxu0 %v2181
        %v2183 = vpop.f32.mrf.mxu0
        %v2184 = vadd.f32 %v1969, %v2183
        %v2185 = vpop.f32.mrf.mxu0
        %v2186 = vadd.f32 %v1971, %v2185
        %2187 = vmatprep.mubr.f32.mxu0 0.0
        %v2188 = vand.u32 %v491, 4294901760
        %2189 = vmatmul.mubr.f32.gmra.mxu0 %v2188
        %v2190 = vpop.f32.mrf.mxu0
        %v2191 = vadd.f32 %v1980, %v2190
        %v2192 = vpop.f32.mrf.mxu0
        %v2193 = vadd.f32 %v1982, %v2192
        %2194 = vmatprep.mubr.f32.mxu0 0.0
        %v2195 = vand.u32 %v494, 4294901760
        %2196 = vmatmul.mubr.f32.gmra.mxu0 %v2195
        %v2197 = vpop.f32.mrf.mxu0
        %v2198 = vadd.f32 %v1991, %v2197
        %v2199 = vpop.f32.mrf.mxu0
        %v2200 = vadd.f32 %v1993, %v2199
        %2201 = vdwg.mxu0
        %2202 = vmatprep.subr.mxu0 0.0
        %2203 = vmatpush1.msra.mxu0 0.0
        %2204 = vmatprep.subr.mxu0 0.0
        %2205 = vmatpush1.msra.mxu0 0.0
        %2206 = vmatprep.subr.mxu0 0.0
        %2207 = vmatpush1.msra.mxu0 0.0
        %2208 = vmatprep.subr.mxu0 0.0
        %2209 = vmatpush1.msra.mxu0 0.0
        %2210 = vmatprep.subr.mxu0 0.0
        %2211 = vmatpush1.msra.mxu0 0.0
        %2212 = vmatprep.subr.mxu0 0.0
        %2213 = vmatpush1.msra.mxu0 0.0
        %2214 = vmatprep.subr.mxu0 0.0
        %2215 = vmatpush1.msra.mxu0 0.0
        %2216 = vmatprep.subr.mxu0 0.0
        %2217 = vmatpush1.msra.mxu0 0.0
        %2218 = vmatprep.subr.mxu0 0.0
        %2219 = vmatpush1.msra.mxu0 0.0
        %2220 = vmatprep.subr.mxu0 0.0
        %2221 = vmatpush1.msra.mxu0 0.0
        %2222 = vmatprep.subr.mxu0 0.0
        %2223 = vmatpush1.msra.mxu0 0.0
        %2224 = vmatprep.subr.mxu0 0.0
        %2225 = vmatpush1.msra.mxu0 0.0
        %2226 = vmatprep.subr.mxu0 0.0
        %2227 = vmatpush1.msra.mxu0 0.0
        %v2228 = vand.u32 %v350, 4294901760
        %v2229 = vsub.f32 %v350, %v2228
        %2230 = vmatprep.subr.mxu0 %v2229
        %v2231 = vand.u32 %v349, 4294901760
        %v2232 = vsub.f32 %v349, %v2231
        %2233 = vmatpush1.msra.mxu0 %v2232
        %v2234 = vand.u32 %v346, 4294901760
        %v2235 = vsub.f32 %v346, %v2234
        %2236 = vmatprep.subr.mxu0 %v2235
        %v2237 = vand.u32 %v345, 4294901760
        %v2238 = vsub.f32 %v345, %v2237
        %2239 = vmatpush1.msra.mxu0 %v2238
        %v2240 = vand.u32 %v342, 4294901760
        %v2241 = vsub.f32 %v342, %v2240
        %2242 = vmatprep.subr.mxu0 %v2241
        %v2243 = vand.u32 %v341, 4294901760
        %v2244 = vsub.f32 %v341, %v2243
        %2245 = vmatpush1.msra.mxu0 %v2244
        %2246 = vmatprep.subr.mxu0 0.0
        %2247 = vmatpush2.msra.mxu0 0.0
        %2248 = vmatprep.subr.mxu0 0.0
        %2249 = vmatpush2.msra.mxu0 0.0
        %2250 = vmatprep.subr.mxu0 0.0
        %2251 = vmatpush2.msra.mxu0 0.0
        %2252 = vmatprep.subr.mxu0 0.0
        %2253 = vmatpush2.msra.mxu0 0.0
        %2254 = vmatprep.subr.mxu0 0.0
        %2255 = vmatpush2.msra.mxu0 0.0
        %2256 = vmatprep.subr.mxu0 0.0
        %2257 = vmatpush2.msra.mxu0 0.0
        %2258 = vmatprep.subr.mxu0 0.0
        %2259 = vmatpush2.msra.mxu0 0.0
        %2260 = vmatprep.subr.mxu0 0.0
        %2261 = vmatpush2.msra.mxu0 0.0
        %2262 = vmatprep.subr.mxu0 0.0
        %2263 = vmatpush2.msra.mxu0 0.0
        %2264 = vmatprep.subr.mxu0 0.0
        %2265 = vmatpush2.msra.mxu0 0.0
        %2266 = vmatprep.subr.mxu0 0.0
        %2267 = vmatpush2.msra.mxu0 0.0
        %2268 = vmatprep.subr.mxu0 0.0
        %2269 = vmatpush2.msra.mxu0 0.0
        %2270 = vmatprep.subr.mxu0 0.0
        %2271 = vmatpush2.msra.mxu0 0.0
        %2272 = vmatprep.subr.mxu0 0.0
        %2273 = vmatpush2.msra.mxu0 0.0
        %2274 = vmatprep.subr.mxu0 0.0
        %2275 = vmatpush2.msra.mxu0 0.0
        %2276 = vmatprep.subr.mxu0 0.0
        %2277 = vmatpush2.msra.mxu0 0.0
        %2278 = vmatprep.mubr.f32.mxu0 0.0
        %v2279 = vand.u32 %v449, 4294901760
        %v2280 = vsub.f32 %v449, %v2279
        %2281 = vmatmul.mubr.f32.gmra.mxu0 %v2280
        %v2282 = vpop.f32.mrf.mxu0
        %v2283 = vadd.f32 %v2093, %v2282
        %v2284 = vpop.f32.mrf.mxu0
        %v2285 = vadd.f32 %v2095, %v2284
        %2286 = vmatprep.mubr.f32.mxu0 0.0
        %v2287 = vand.u32 %v452, 4294901760
        %v2288 = vsub.f32 %v452, %v2287
        %2289 = vmatmul.mubr.f32.gmra.mxu0 %v2288
        %v2290 = vpop.f32.mrf.mxu0
        %v2291 = vadd.f32 %v2100, %v2290
        %v2292 = vpop.f32.mrf.mxu0
        %v2293 = vadd.f32 %v2102, %v2292
        %2294 = vmatprep.mubr.f32.mxu0 0.0
        %v2295 = vand.u32 %v455, 4294901760
        %v2296 = vsub.f32 %v455, %v2295
        %2297 = vmatmul.mubr.f32.gmra.mxu0 %v2296
        %v2298 = vpop.f32.mrf.mxu0
        %v2299 = vadd.f32 %v2107, %v2298
        %v2300 = vpop.f32.mrf.mxu0
        %v2301 = vadd.f32 %v2109, %v2300
        %2302 = vmatprep.mubr.f32.mxu0 0.0
        %v2303 = vand.u32 %v458, 4294901760
        %v2304 = vsub.f32 %v458, %v2303
        %2305 = vmatmul.mubr.f32.gmra.mxu0 %v2304
        %v2306 = vpop.f32.mrf.mxu0
        %v2307 = vadd.f32 %v2114, %v2306
        %v2308 = vpop.f32.mrf.mxu0
        %v2309 = vadd.f32 %v2116, %v2308
        %2310 = vmatprep.mubr.f32.mxu0 0.0
        %v2311 = vand.u32 %v461, 4294901760
        %v2312 = vsub.f32 %v461, %v2311
        %2313 = vmatmul.mubr.f32.gmra.mxu0 %v2312
        %v2314 = vpop.f32.mrf.mxu0
        %v2315 = vadd.f32 %v2121, %v2314
        %v2316 = vpop.f32.mrf.mxu0
        %v2317 = vadd.f32 %v2123, %v2316
        %2318 = vmatprep.mubr.f32.mxu0 0.0
        %v2319 = vand.u32 %v464, 4294901760
        %v2320 = vsub.f32 %v464, %v2319
        %2321 = vmatmul.mubr.f32.gmra.mxu0 %v2320
        %v2322 = vpop.f32.mrf.mxu0
        %v2323 = vadd.f32 %v2128, %v2322
        %v2324 = vpop.f32.mrf.mxu0
        %v2325 = vadd.f32 %v2130, %v2324
        %2326 = vmatprep.mubr.f32.mxu0 0.0
        %v2327 = vand.u32 %v467, 4294901760
        %v2328 = vsub.f32 %v467, %v2327
        %2329 = vmatmul.mubr.f32.gmra.mxu0 %v2328
        %v2330 = vpop.f32.mrf.mxu0
        %v2331 = vadd.f32 %v2135, %v2330
        %v2332 = vpop.f32.mrf.mxu0
        %v2333 = vadd.f32 %v2137, %v2332
        %2334 = vmatprep.mubr.f32.mxu0 0.0
        %v2335 = vand.u32 %v470, 4294901760
        %v2336 = vsub.f32 %v470, %v2335
        %2337 = vmatmul.mubr.f32.gmra.mxu0 %v2336
        %v2338 = vpop.f32.mrf.mxu0
        %v2339 = vadd.f32 %v2142, %v2338
        %v2340 = vpop.f32.mrf.mxu0
        %v2341 = vadd.f32 %v2144, %v2340
        %2342 = vmatprep.mubr.f32.mxu0 0.0
        %v2343 = vand.u32 %v473, 4294901760
        %v2344 = vsub.f32 %v473, %v2343
        %2345 = vmatmul.mubr.f32.gmra.mxu0 %v2344
        %v2346 = vpop.f32.mrf.mxu0
        %v2347 = vadd.f32 %v2149, %v2346
        %v2348 = vpop.f32.mrf.mxu0
        %v2349 = vadd.f32 %v2151, %v2348
        %2350 = vmatprep.mubr.f32.mxu0 0.0
        %v2351 = vand.u32 %v476, 4294901760
        %v2352 = vsub.f32 %v476, %v2351
        %2353 = vmatmul.mubr.f32.gmra.mxu0 %v2352
        %v2354 = vpop.f32.mrf.mxu0
        %v2355 = vadd.f32 %v2156, %v2354
        %v2356 = vpop.f32.mrf.mxu0
        %v2357 = vadd.f32 %v2158, %v2356
        %2358 = vmatprep.mubr.f32.mxu0 0.0
        %v2359 = vand.u32 %v479, 4294901760
        %v2360 = vsub.f32 %v479, %v2359
        %2361 = vmatmul.mubr.f32.gmra.mxu0 %v2360
        %v2362 = vpop.f32.mrf.mxu0
        %v2363 = vadd.f32 %v2163, %v2362
        %v2364 = vpop.f32.mrf.mxu0
        %v2365 = vadd.f32 %v2165, %v2364
        %2366 = vmatprep.mubr.f32.mxu0 0.0
        %v2367 = vand.u32 %v482, 4294901760
        %v2368 = vsub.f32 %v482, %v2367
        %2369 = vmatmul.mubr.f32.gmra.mxu0 %v2368
        %v2370 = vpop.f32.mrf.mxu0
        %v2371 = vadd.f32 %v2170, %v2370
        %v2372 = vpop.f32.mrf.mxu0
        %v2373 = vadd.f32 %v2172, %v2372
        %2374 = vmatprep.mubr.f32.mxu0 0.0
        %v2375 = vand.u32 %v485, 4294901760
        %v2376 = vsub.f32 %v485, %v2375
        %2377 = vmatmul.mubr.f32.gmra.mxu0 %v2376
        %v2378 = vpop.f32.mrf.mxu0
        %v2379 = vadd.f32 %v2177, %v2378
        %v2380 = vpop.f32.mrf.mxu0
        %v2381 = vadd.f32 %v2179, %v2380
        %2382 = vmatprep.mubr.f32.mxu0 0.0
        %v2383 = vand.u32 %v488, 4294901760
        %v2384 = vsub.f32 %v488, %v2383
        %2385 = vmatmul.mubr.f32.gmra.mxu0 %v2384
        %v2386 = vpop.f32.mrf.mxu0
        %v2387 = vadd.f32 %v2184, %v2386
        %v2388 = vpop.f32.mrf.mxu0
        %v2389 = vadd.f32 %v2186, %v2388
        %2390 = vmatprep.mubr.f32.mxu0 0.0
        %v2391 = vand.u32 %v491, 4294901760
        %v2392 = vsub.f32 %v491, %v2391
        %2393 = vmatmul.mubr.f32.gmra.mxu0 %v2392
        %v2394 = vpop.f32.mrf.mxu0
        %v2395 = vadd.f32 %v2191, %v2394
        %v2396 = vpop.f32.mrf.mxu0
        %v2397 = vadd.f32 %v2193, %v2396
        %2398 = vmatprep.mubr.f32.mxu0 0.0
        %v2399 = vand.u32 %v494, 4294901760
        %v2400 = vsub.f32 %v494, %v2399
        %2401 = vmatmul.mubr.f32.gmra.mxu0 %v2400
        %v2402 = vpop.f32.mrf.mxu0
        %v2403 = vadd.f32 %v2198, %v2402
        %v2404 = vpop.f32.mrf.mxu0
        %v2405 = vadd.f32 %v2200, %v2404
        %2406 = vdwg.mxu0
        %2407 = vmatprep.subr.mxu0 0.0
        %2408 = vmatpush1.msra.mxu0 0.0
        %2409 = vmatprep.subr.mxu0 0.0
        %2410 = vmatpush1.msra.mxu0 0.0
        %2411 = vmatprep.subr.mxu0 0.0
        %2412 = vmatpush1.msra.mxu0 0.0
        %2413 = vmatprep.subr.mxu0 0.0
        %2414 = vmatpush1.msra.mxu0 0.0
        %2415 = vmatprep.subr.mxu0 0.0
        %2416 = vmatpush1.msra.mxu0 0.0
        %2417 = vmatprep.subr.mxu0 0.0
        %2418 = vmatpush1.msra.mxu0 0.0
        %2419 = vmatprep.subr.mxu0 0.0
        %2420 = vmatpush1.msra.mxu0 0.0
        %2421 = vmatprep.subr.mxu0 0.0
        %2422 = vmatpush1.msra.mxu0 0.0
        %2423 = vmatprep.subr.mxu0 0.0
        %2424 = vmatpush1.msra.mxu0 0.0
        %2425 = vmatprep.subr.mxu0 0.0
        %2426 = vmatpush1.msra.mxu0 0.0
        %2427 = vmatprep.subr.mxu0 0.0
        %2428 = vmatpush1.msra.mxu0 0.0
        %2429 = vmatprep.subr.mxu0 0.0
        %2430 = vmatpush1.msra.mxu0 0.0
        %2431 = vmatprep.subr.mxu0 0.0
        %2432 = vmatpush1.msra.mxu0 0.0
        %v2433 = vand.u32 %v350, 4294901760
        %2434 = vmatprep.subr.mxu0 %v2433
        %v2435 = vand.u32 %v349, 4294901760
        %2436 = vmatpush1.msra.mxu0 %v2435
        %v2437 = vand.u32 %v346, 4294901760
        %2438 = vmatprep.subr.mxu0 %v2437
        %v2439 = vand.u32 %v345, 4294901760
        %2440 = vmatpush1.msra.mxu0 %v2439
        %v2441 = vand.u32 %v342, 4294901760
        %2442 = vmatprep.subr.mxu0 %v2441
        %v2443 = vand.u32 %v341, 4294901760
        %2444 = vmatpush1.msra.mxu0 %v2443
        %2445 = vmatprep.subr.mxu0 0.0
        %2446 = vmatpush2.msra.mxu0 0.0
        %2447 = vmatprep.subr.mxu0 0.0
        %2448 = vmatpush2.msra.mxu0 0.0
        %2449 = vmatprep.subr.mxu0 0.0
        %2450 = vmatpush2.msra.mxu0 0.0
        %2451 = vmatprep.subr.mxu0 0.0
        %2452 = vmatpush2.msra.mxu0 0.0
        %2453 = vmatprep.subr.mxu0 0.0
        %2454 = vmatpush2.msra.mxu0 0.0
        %2455 = vmatprep.subr.mxu0 0.0
        %2456 = vmatpush2.msra.mxu0 0.0
        %2457 = vmatprep.subr.mxu0 0.0
        %2458 = vmatpush2.msra.mxu0 0.0
        %2459 = vmatprep.subr.mxu0 0.0
        %2460 = vmatpush2.msra.mxu0 0.0
        %2461 = vmatprep.subr.mxu0 0.0
        %2462 = vmatpush2.msra.mxu0 0.0
        %2463 = vmatprep.subr.mxu0 0.0
        %2464 = vmatpush2.msra.mxu0 0.0
        %2465 = vmatprep.subr.mxu0 0.0
        %2466 = vmatpush2.msra.mxu0 0.0
        %2467 = vmatprep.subr.mxu0 0.0
        %2468 = vmatpush2.msra.mxu0 0.0
        %2469 = vmatprep.subr.mxu0 0.0
        %2470 = vmatpush2.msra.mxu0 0.0
        %2471 = vmatprep.subr.mxu0 0.0
        %2472 = vmatpush2.msra.mxu0 0.0
        %2473 = vmatprep.subr.mxu0 0.0
        %2474 = vmatpush2.msra.mxu0 0.0
        %2475 = vmatprep.subr.mxu0 0.0
        %2476 = vmatpush2.msra.mxu0 0.0
        %2477 = vmatprep.mubr.f32.mxu0 0.0
        %v2478 = vand.u32 %v449, 4294901760
        %v2479 = vsub.f32 %v449, %v2478
        %v2480 = vand.u32 %v2479, 4294901760
        %2481 = vmatmul.mubr.f32.gmra.mxu0 %v2480
        %v2482 = vpop.f32.mrf.mxu0
        %v2483 = vadd.f32 %v2283, %v2482
        %v2484 = vpop.f32.mrf.mxu0
        %v2485 = vadd.f32 %v2285, %v2484
        %2486 = vmatprep.mubr.f32.mxu0 0.0
        %v2487 = vand.u32 %v452, 4294901760
        %v2488 = vsub.f32 %v452, %v2487
        %v2489 = vand.u32 %v2488, 4294901760
        %2490 = vmatmul.mubr.f32.gmra.mxu0 %v2489
        %v2491 = vpop.f32.mrf.mxu0
        %v2492 = vadd.f32 %v2291, %v2491
        %v2493 = vpop.f32.mrf.mxu0
        %v2494 = vadd.f32 %v2293, %v2493
        %2495 = vmatprep.mubr.f32.mxu0 0.0
        %v2496 = vand.u32 %v455, 4294901760
        %v2497 = vsub.f32 %v455, %v2496
        %v2498 = vand.u32 %v2497, 4294901760
        %2499 = vmatmul.mubr.f32.gmra.mxu0 %v2498
        %v2500 = vpop.f32.mrf.mxu0
        %v2501 = vadd.f32 %v2299, %v2500
        %v2502 = vpop.f32.mrf.mxu0
        %v2503 = vadd.f32 %v2301, %v2502
        %2504 = vmatprep.mubr.f32.mxu0 0.0
        %v2505 = vand.u32 %v458, 4294901760
        %v2506 = vsub.f32 %v458, %v2505
        %v2507 = vand.u32 %v2506, 4294901760
        %2508 = vmatmul.mubr.f32.gmra.mxu0 %v2507
        %v2509 = vpop.f32.mrf.mxu0
        %v2510 = vadd.f32 %v2307, %v2509
        %v2511 = vpop.f32.mrf.mxu0
        %v2512 = vadd.f32 %v2309, %v2511
        %2513 = vmatprep.mubr.f32.mxu0 0.0
        %v2514 = vand.u32 %v461, 4294901760
        %v2515 = vsub.f32 %v461, %v2514
        %v2516 = vand.u32 %v2515, 4294901760
        %2517 = vmatmul.mubr.f32.gmra.mxu0 %v2516
        %v2518 = vpop.f32.mrf.mxu0
        %v2519 = vadd.f32 %v2315, %v2518
        %v2520 = vpop.f32.mrf.mxu0
        %v2521 = vadd.f32 %v2317, %v2520
        %2522 = vmatprep.mubr.f32.mxu0 0.0
        %v2523 = vand.u32 %v464, 4294901760
        %v2524 = vsub.f32 %v464, %v2523
        %v2525 = vand.u32 %v2524, 4294901760
        %2526 = vmatmul.mubr.f32.gmra.mxu0 %v2525
        %v2527 = vpop.f32.mrf.mxu0
        %v2528 = vadd.f32 %v2323, %v2527
        %v2529 = vpop.f32.mrf.mxu0
        %v2530 = vadd.f32 %v2325, %v2529
        %2531 = vmatprep.mubr.f32.mxu0 0.0
        %v2532 = vand.u32 %v467, 4294901760
        %v2533 = vsub.f32 %v467, %v2532
        %v2534 = vand.u32 %v2533, 4294901760
        %2535 = vmatmul.mubr.f32.gmra.mxu0 %v2534
        %v2536 = vpop.f32.mrf.mxu0
        %v2537 = vadd.f32 %v2331, %v2536
        %v2538 = vpop.f32.mrf.mxu0
        %v2539 = vadd.f32 %v2333, %v2538
        %2540 = vmatprep.mubr.f32.mxu0 0.0
        %v2541 = vand.u32 %v470, 4294901760
        %v2542 = vsub.f32 %v470, %v2541
        %v2543 = vand.u32 %v2542, 4294901760
        %2544 = vmatmul.mubr.f32.gmra.mxu0 %v2543
        %v2545 = vpop.f32.mrf.mxu0
        %v2546 = vadd.f32 %v2339, %v2545
        %v2547 = vpop.f32.mrf.mxu0
        %v2548 = vadd.f32 %v2341, %v2547
        %2549 = vmatprep.mubr.f32.mxu0 0.0
        %v2550 = vand.u32 %v473, 4294901760
        %v2551 = vsub.f32 %v473, %v2550
        %v2552 = vand.u32 %v2551, 4294901760
        %2553 = vmatmul.mubr.f32.gmra.mxu0 %v2552
        %v2554 = vpop.f32.mrf.mxu0
        %v2555 = vadd.f32 %v2347, %v2554
        %v2556 = vpop.f32.mrf.mxu0
        %v2557 = vadd.f32 %v2349, %v2556
        %2558 = vmatprep.mubr.f32.mxu0 0.0
        %v2559 = vand.u32 %v476, 4294901760
        %v2560 = vsub.f32 %v476, %v2559
        %v2561 = vand.u32 %v2560, 4294901760
        %2562 = vmatmul.mubr.f32.gmra.mxu0 %v2561
        %v2563 = vpop.f32.mrf.mxu0
        %v2564 = vadd.f32 %v2355, %v2563
        %v2565 = vpop.f32.mrf.mxu0
        %v2566 = vadd.f32 %v2357, %v2565
        %2567 = vmatprep.mubr.f32.mxu0 0.0
        %v2568 = vand.u32 %v479, 4294901760
        %v2569 = vsub.f32 %v479, %v2568
        %v2570 = vand.u32 %v2569, 4294901760
        %2571 = vmatmul.mubr.f32.gmra.mxu0 %v2570
        %v2572 = vpop.f32.mrf.mxu0
        %v2573 = vadd.f32 %v2363, %v2572
        %v2574 = vpop.f32.mrf.mxu0
        %v2575 = vadd.f32 %v2365, %v2574
        %2576 = vmatprep.mubr.f32.mxu0 0.0
        %v2577 = vand.u32 %v482, 4294901760
        %v2578 = vsub.f32 %v482, %v2577
        %v2579 = vand.u32 %v2578, 4294901760
        %2580 = vmatmul.mubr.f32.gmra.mxu0 %v2579
        %v2581 = vpop.f32.mrf.mxu0
        %v2582 = vadd.f32 %v2371, %v2581
        %v2583 = vpop.f32.mrf.mxu0
        %v2584 = vadd.f32 %v2373, %v2583
        %2585 = vmatprep.mubr.f32.mxu0 0.0
        %v2586 = vand.u32 %v485, 4294901760
        %v2587 = vsub.f32 %v485, %v2586
        %v2588 = vand.u32 %v2587, 4294901760
        %2589 = vmatmul.mubr.f32.gmra.mxu0 %v2588
        %v2590 = vpop.f32.mrf.mxu0
        %v2591 = vadd.f32 %v2379, %v2590
        %v2592 = vpop.f32.mrf.mxu0
        %v2593 = vadd.f32 %v2381, %v2592
        %2594 = vmatprep.mubr.f32.mxu0 0.0
        %v2595 = vand.u32 %v488, 4294901760
        %v2596 = vsub.f32 %v488, %v2595
        %v2597 = vand.u32 %v2596, 4294901760
        %2598 = vmatmul.mubr.f32.gmra.mxu0 %v2597
        %v2599 = vpop.f32.mrf.mxu0
        %v2600 = vadd.f32 %v2387, %v2599
        %v2601 = vpop.f32.mrf.mxu0
        %v2602 = vadd.f32 %v2389, %v2601
        %2603 = vmatprep.mubr.f32.mxu0 0.0
        %v2604 = vand.u32 %v491, 4294901760
        %v2605 = vsub.f32 %v491, %v2604
        %v2606 = vand.u32 %v2605, 4294901760
        %2607 = vmatmul.mubr.f32.gmra.mxu0 %v2606
        %v2608 = vpop.f32.mrf.mxu0
        %v2609 = vadd.f32 %v2395, %v2608
        %v2610 = vpop.f32.mrf.mxu0
        %v2611 = vadd.f32 %v2397, %v2610
        %2612 = vmatprep.mubr.f32.mxu0 0.0
        %v2613 = vand.u32 %v494, 4294901760
        %v2614 = vsub.f32 %v494, %v2613
        %v2615 = vand.u32 %v2614, 4294901760
        %2616 = vmatmul.mubr.f32.gmra.mxu0 %v2615
        %v2617 = vpop.f32.mrf.mxu0
        %v2618 = vadd.f32 %v2403, %v2617
        %v2619 = vpop.f32.mrf.mxu0
        %v2620 = vadd.f32 %v2405, %v2619
        %2621 = vdwg.mxu0
        %2622 = vmatprep.subr.mxu0 0.0
        %2623 = vmatpush1.msra.mxu0 0.0
        %2624 = vmatprep.subr.mxu0 0.0
        %2625 = vmatpush1.msra.mxu0 0.0
        %2626 = vmatprep.subr.mxu0 0.0
        %2627 = vmatpush1.msra.mxu0 0.0
        %2628 = vmatprep.subr.mxu0 0.0
        %2629 = vmatpush1.msra.mxu0 0.0
        %2630 = vmatprep.subr.mxu0 0.0
        %2631 = vmatpush1.msra.mxu0 0.0
        %2632 = vmatprep.subr.mxu0 0.0
        %2633 = vmatpush1.msra.mxu0 0.0
        %2634 = vmatprep.subr.mxu0 0.0
        %2635 = vmatpush1.msra.mxu0 0.0
        %2636 = vmatprep.subr.mxu0 0.0
        %2637 = vmatpush1.msra.mxu0 0.0
        %2638 = vmatprep.subr.mxu0 0.0
        %2639 = vmatpush1.msra.mxu0 0.0
        %2640 = vmatprep.subr.mxu0 0.0
        %2641 = vmatpush1.msra.mxu0 0.0
        %2642 = vmatprep.subr.mxu0 0.0
        %2643 = vmatpush1.msra.mxu0 0.0
        %2644 = vmatprep.subr.mxu0 0.0
        %2645 = vmatpush1.msra.mxu0 0.0
        %2646 = vmatprep.subr.mxu0 0.0
        %2647 = vmatpush1.msra.mxu0 0.0
        %v2648 = vand.u32 %v350, 4294901760
        %v2649 = vsub.f32 %v350, %v2648
        %v2650 = vand.u32 %v2649, 4294901760
        %2651 = vmatprep.subr.mxu0 %v2650
        %v2652 = vand.u32 %v349, 4294901760
        %v2653 = vsub.f32 %v349, %v2652
        %v2654 = vand.u32 %v2653, 4294901760
        %2655 = vmatpush1.msra.mxu0 %v2654
        %v2656 = vand.u32 %v346, 4294901760
        %v2657 = vsub.f32 %v346, %v2656
        %v2658 = vand.u32 %v2657, 4294901760
        %2659 = vmatprep.subr.mxu0 %v2658
        %v2660 = vand.u32 %v345, 4294901760
        %v2661 = vsub.f32 %v345, %v2660
        %v2662 = vand.u32 %v2661, 4294901760
        %2663 = vmatpush1.msra.mxu0 %v2662
        %v2664 = vand.u32 %v342, 4294901760
        %v2665 = vsub.f32 %v342, %v2664
        %v2666 = vand.u32 %v2665, 4294901760
        %2667 = vmatprep.subr.mxu0 %v2666
        %v2668 = vand.u32 %v341, 4294901760
        %v2669 = vsub.f32 %v341, %v2668
        %v2670 = vand.u32 %v2669, 4294901760
        %2671 = vmatpush1.msra.mxu0 %v2670
        %2672 = vmatprep.subr.mxu0 0.0
        %2673 = vmatpush2.msra.mxu0 0.0
        %2674 = vmatprep.subr.mxu0 0.0
        %2675 = vmatpush2.msra.mxu0 0.0
        %2676 = vmatprep.subr.mxu0 0.0
        %2677 = vmatpush2.msra.mxu0 0.0
        %2678 = vmatprep.subr.mxu0 0.0
        %2679 = vmatpush2.msra.mxu0 0.0
        %2680 = vmatprep.subr.mxu0 0.0
        %2681 = vmatpush2.msra.mxu0 0.0
        %2682 = vmatprep.subr.mxu0 0.0
        %2683 = vmatpush2.msra.mxu0 0.0
        %2684 = vmatprep.subr.mxu0 0.0
        %2685 = vmatpush2.msra.mxu0 0.0
        %2686 = vmatprep.subr.mxu0 0.0
        %2687 = vmatpush2.msra.mxu0 0.0
        %2688 = vmatprep.subr.mxu0 0.0
        %2689 = vmatpush2.msra.mxu0 0.0
        %2690 = vmatprep.subr.mxu0 0.0
        %2691 = vmatpush2.msra.mxu0 0.0
        %2692 = vmatprep.subr.mxu0 0.0
        %2693 = vmatpush2.msra.mxu0 0.0
        %2694 = vmatprep.subr.mxu0 0.0
        %2695 = vmatpush2.msra.mxu0 0.0
        %2696 = vmatprep.subr.mxu0 0.0
        %2697 = vmatpush2.msra.mxu0 0.0
        %2698 = vmatprep.subr.mxu0 0.0
        %2699 = vmatpush2.msra.mxu0 0.0
        %2700 = vmatprep.subr.mxu0 0.0
        %2701 = vmatpush2.msra.mxu0 0.0
        %2702 = vmatprep.subr.mxu0 0.0
        %2703 = vmatpush2.msra.mxu0 0.0
        %2704 = vmatprep.mubr.f32.mxu0 0.0
        %v2705 = vand.u32 %v449, 4294901760
        %2706 = vmatmul.mubr.f32.gmra.mxu0 %v2705
        %v2707 = vpop.f32.mrf.mxu0
        %v2708 = vadd.f32 %v2483, %v2707
        %v2709 = vpop.f32.mrf.mxu0
        %v2710 = vadd.f32 %v2485, %v2709
        %2711 = vmatprep.mubr.f32.mxu0 0.0
        %v2712 = vand.u32 %v452, 4294901760
        %2713 = vmatmul.mubr.f32.gmra.mxu0 %v2712
        %v2714 = vpop.f32.mrf.mxu0
        %v2715 = vadd.f32 %v2492, %v2714
        %v2716 = vpop.f32.mrf.mxu0
        %v2717 = vadd.f32 %v2494, %v2716
        %2718 = vmatprep.mubr.f32.mxu0 0.0
        %v2719 = vand.u32 %v455, 4294901760
        %2720 = vmatmul.mubr.f32.gmra.mxu0 %v2719
        %v2721 = vpop.f32.mrf.mxu0
        %v2722 = vadd.f32 %v2501, %v2721
        %v2723 = vpop.f32.mrf.mxu0
        %v2724 = vadd.f32 %v2503, %v2723
        %2725 = vmatprep.mubr.f32.mxu0 0.0
        %v2726 = vand.u32 %v458, 4294901760
        %2727 = vmatmul.mubr.f32.gmra.mxu0 %v2726
        %v2728 = vpop.f32.mrf.mxu0
        %v2729 = vadd.f32 %v2510, %v2728
        %v2730 = vpop.f32.mrf.mxu0
        %v2731 = vadd.f32 %v2512, %v2730
        %2732 = vmatprep.mubr.f32.mxu0 0.0
        %v2733 = vand.u32 %v461, 4294901760
        %2734 = vmatmul.mubr.f32.gmra.mxu0 %v2733
        %v2735 = vpop.f32.mrf.mxu0
        %v2736 = vadd.f32 %v2519, %v2735
        %v2737 = vpop.f32.mrf.mxu0
        %v2738 = vadd.f32 %v2521, %v2737
        %2739 = vmatprep.mubr.f32.mxu0 0.0
        %v2740 = vand.u32 %v464, 4294901760
        %2741 = vmatmul.mubr.f32.gmra.mxu0 %v2740
        %v2742 = vpop.f32.mrf.mxu0
        %v2743 = vadd.f32 %v2528, %v2742
        %v2744 = vpop.f32.mrf.mxu0
        %v2745 = vadd.f32 %v2530, %v2744
        %2746 = vmatprep.mubr.f32.mxu0 0.0
        %v2747 = vand.u32 %v467, 4294901760
        %2748 = vmatmul.mubr.f32.gmra.mxu0 %v2747
        %v2749 = vpop.f32.mrf.mxu0
        %v2750 = vadd.f32 %v2537, %v2749
        %v2751 = vpop.f32.mrf.mxu0
        %v2752 = vadd.f32 %v2539, %v2751
        %2753 = vmatprep.mubr.f32.mxu0 0.0
        %v2754 = vand.u32 %v470, 4294901760
        %2755 = vmatmul.mubr.f32.gmra.mxu0 %v2754
        %v2756 = vpop.f32.mrf.mxu0
        %v2757 = vadd.f32 %v2546, %v2756
        %v2758 = vpop.f32.mrf.mxu0
        %v2759 = vadd.f32 %v2548, %v2758
        %2760 = vmatprep.mubr.f32.mxu0 0.0
        %v2761 = vand.u32 %v473, 4294901760
        %2762 = vmatmul.mubr.f32.gmra.mxu0 %v2761
        %v2763 = vpop.f32.mrf.mxu0
        %v2764 = vadd.f32 %v2555, %v2763
        %v2765 = vpop.f32.mrf.mxu0
        %v2766 = vadd.f32 %v2557, %v2765
        %2767 = vmatprep.mubr.f32.mxu0 0.0
        %v2768 = vand.u32 %v476, 4294901760
        %2769 = vmatmul.mubr.f32.gmra.mxu0 %v2768
        %v2770 = vpop.f32.mrf.mxu0
        %v2771 = vadd.f32 %v2564, %v2770
        %v2772 = vpop.f32.mrf.mxu0
        %v2773 = vadd.f32 %v2566, %v2772
        %2774 = vmatprep.mubr.f32.mxu0 0.0
        %v2775 = vand.u32 %v479, 4294901760
        %2776 = vmatmul.mubr.f32.gmra.mxu0 %v2775
        %v2777 = vpop.f32.mrf.mxu0
        %v2778 = vadd.f32 %v2573, %v2777
        %v2779 = vpop.f32.mrf.mxu0
        %v2780 = vadd.f32 %v2575, %v2779
        %2781 = vmatprep.mubr.f32.mxu0 0.0
        %v2782 = vand.u32 %v482, 4294901760
        %2783 = vmatmul.mubr.f32.gmra.mxu0 %v2782
        %v2784 = vpop.f32.mrf.mxu0
        %v2785 = vadd.f32 %v2582, %v2784
        %v2786 = vpop.f32.mrf.mxu0
        %v2787 = vadd.f32 %v2584, %v2786
        %2788 = vmatprep.mubr.f32.mxu0 0.0
        %v2789 = vand.u32 %v485, 4294901760
        %2790 = vmatmul.mubr.f32.gmra.mxu0 %v2789
        %v2791 = vpop.f32.mrf.mxu0
        %v2792 = vadd.f32 %v2591, %v2791
        %v2793 = vpop.f32.mrf.mxu0
        %v2794 = vadd.f32 %v2593, %v2793
        %2795 = vmatprep.mubr.f32.mxu0 0.0
        %v2796 = vand.u32 %v488, 4294901760
        %2797 = vmatmul.mubr.f32.gmra.mxu0 %v2796
        %v2798 = vpop.f32.mrf.mxu0
        %v2799 = vadd.f32 %v2600, %v2798
        %v2800 = vpop.f32.mrf.mxu0
        %v2801 = vadd.f32 %v2602, %v2800
        %2802 = vmatprep.mubr.f32.mxu0 0.0
        %v2803 = vand.u32 %v491, 4294901760
        %2804 = vmatmul.mubr.f32.gmra.mxu0 %v2803
        %v2805 = vpop.f32.mrf.mxu0
        %v2806 = vadd.f32 %v2609, %v2805
        %v2807 = vpop.f32.mrf.mxu0
        %v2808 = vadd.f32 %v2611, %v2807
        %2809 = vmatprep.mubr.f32.mxu0 0.0
        %v2810 = vand.u32 %v494, 4294901760
        %2811 = vmatmul.mubr.f32.gmra.mxu0 %v2810
        %v2812 = vpop.f32.mrf.mxu0
        %v2813 = vadd.f32 %v2618, %v2812
        %v2814 = vpop.f32.mrf.mxu0
        %v2815 = vadd.f32 %v2620, %v2814
        %2816 = vdwg.mxu0
        %2817 = vmatprep.subr.mxu0 0.0
        %2818 = vmatpush1.msra.mxu0 0.0
        %2819 = vmatprep.subr.mxu0 0.0
        %2820 = vmatpush1.msra.mxu0 0.0
        %2821 = vmatprep.subr.mxu0 0.0
        %2822 = vmatpush1.msra.mxu0 0.0
        %2823 = vmatprep.subr.mxu0 0.0
        %2824 = vmatpush1.msra.mxu0 0.0
        %2825 = vmatprep.subr.mxu0 0.0
        %2826 = vmatpush1.msra.mxu0 0.0
        %2827 = vmatprep.subr.mxu0 0.0
        %2828 = vmatpush1.msra.mxu0 0.0
        %2829 = vmatprep.subr.mxu0 0.0
        %2830 = vmatpush1.msra.mxu0 0.0
        %2831 = vmatprep.subr.mxu0 0.0
        %2832 = vmatpush1.msra.mxu0 0.0
        %2833 = vmatprep.subr.mxu0 0.0
        %2834 = vmatpush1.msra.mxu0 0.0
        %2835 = vmatprep.subr.mxu0 0.0
        %2836 = vmatpush1.msra.mxu0 0.0
        %2837 = vmatprep.subr.mxu0 0.0
        %2838 = vmatpush1.msra.mxu0 0.0
        %2839 = vmatprep.subr.mxu0 0.0
        %2840 = vmatpush1.msra.mxu0 0.0
        %2841 = vmatprep.subr.mxu0 0.0
        %2842 = vmatpush1.msra.mxu0 0.0
        %v2843 = vand.u32 %v350, 4294901760
        %2844 = vmatprep.subr.mxu0 %v2843
        %v2845 = vand.u32 %v349, 4294901760
        %2846 = vmatpush1.msra.mxu0 %v2845
        %v2847 = vand.u32 %v346, 4294901760
        %2848 = vmatprep.subr.mxu0 %v2847
        %v2849 = vand.u32 %v345, 4294901760
        %2850 = vmatpush1.msra.mxu0 %v2849
        %v2851 = vand.u32 %v342, 4294901760
        %2852 = vmatprep.subr.mxu0 %v2851
        %v2853 = vand.u32 %v341, 4294901760
        %2854 = vmatpush1.msra.mxu0 %v2853
        %2855 = vmatprep.subr.mxu0 0.0
        %2856 = vmatpush2.msra.mxu0 0.0
        %2857 = vmatprep.subr.mxu0 0.0
        %2858 = vmatpush2.msra.mxu0 0.0
        %2859 = vmatprep.subr.mxu0 0.0
        %2860 = vmatpush2.msra.mxu0 0.0
        %2861 = vmatprep.subr.mxu0 0.0
        %2862 = vmatpush2.msra.mxu0 0.0
        %2863 = vmatprep.subr.mxu0 0.0
        %2864 = vmatpush2.msra.mxu0 0.0
        %2865 = vmatprep.subr.mxu0 0.0
        %2866 = vmatpush2.msra.mxu0 0.0
        %2867 = vmatprep.subr.mxu0 0.0
        %2868 = vmatpush2.msra.mxu0 0.0
        %2869 = vmatprep.subr.mxu0 0.0
        %2870 = vmatpush2.msra.mxu0 0.0
        %2871 = vmatprep.subr.mxu0 0.0
        %2872 = vmatpush2.msra.mxu0 0.0
        %2873 = vmatprep.subr.mxu0 0.0
        %2874 = vmatpush2.msra.mxu0 0.0
        %2875 = vmatprep.subr.mxu0 0.0
        %2876 = vmatpush2.msra.mxu0 0.0
        %2877 = vmatprep.subr.mxu0 0.0
        %2878 = vmatpush2.msra.mxu0 0.0
        %2879 = vmatprep.subr.mxu0 0.0
        %2880 = vmatpush2.msra.mxu0 0.0
        %2881 = vmatprep.subr.mxu0 0.0
        %2882 = vmatpush2.msra.mxu0 0.0
        %2883 = vmatprep.subr.mxu0 0.0
        %2884 = vmatpush2.msra.mxu0 0.0
        %2885 = vmatprep.subr.mxu0 0.0
        %2886 = vmatpush2.msra.mxu0 0.0
        %2887 = vmatprep.mubr.f32.mxu0 0.0
        %v2888 = vand.u32 %v449, 4294901760
        %2889 = vmatmul.mubr.f32.gmra.mxu0 %v2888
        %v2890 = vpop.f32.mrf.mxu0
        %v2891 = vadd.f32 %v2708, %v2890
        %v2892 = vpop.f32.mrf.mxu0
        %v2893 = vadd.f32 %v2710, %v2892
        %2894 = vmatprep.mubr.f32.mxu0 0.0
        %v2895 = vand.u32 %v452, 4294901760
        %2896 = vmatmul.mubr.f32.gmra.mxu0 %v2895
        %v2897 = vpop.f32.mrf.mxu0
        %v2898 = vadd.f32 %v2715, %v2897
        %v2899 = vpop.f32.mrf.mxu0
        %v2900 = vadd.f32 %v2717, %v2899
        %2901 = vmatprep.mubr.f32.mxu0 0.0
        %v2902 = vand.u32 %v455, 4294901760
        %2903 = vmatmul.mubr.f32.gmra.mxu0 %v2902
        %v2904 = vpop.f32.mrf.mxu0
        %v2905 = vadd.f32 %v2722, %v2904
        %v2906 = vpop.f32.mrf.mxu0
        %v2907 = vadd.f32 %v2724, %v2906
        %2908 = vmatprep.mubr.f32.mxu0 0.0
        %v2909 = vand.u32 %v458, 4294901760
        %2910 = vmatmul.mubr.f32.gmra.mxu0 %v2909
        %v2911 = vpop.f32.mrf.mxu0
        %v2912 = vadd.f32 %v2729, %v2911
        %v2913 = vpop.f32.mrf.mxu0
        %v2914 = vadd.f32 %v2731, %v2913
        %2915 = vmatprep.mubr.f32.mxu0 0.0
        %v2916 = vand.u32 %v461, 4294901760
        %2917 = vmatmul.mubr.f32.gmra.mxu0 %v2916
        %v2918 = vpop.f32.mrf.mxu0
        %v2919 = vadd.f32 %v2736, %v2918
        %v2920 = vpop.f32.mrf.mxu0
        %v2921 = vadd.f32 %v2738, %v2920
        %2922 = vmatprep.mubr.f32.mxu0 0.0
        %v2923 = vand.u32 %v464, 4294901760
        %2924 = vmatmul.mubr.f32.gmra.mxu0 %v2923
        %v2925 = vpop.f32.mrf.mxu0
        %v2926 = vadd.f32 %v2743, %v2925
        %v2927 = vpop.f32.mrf.mxu0
        %v2928 = vadd.f32 %v2745, %v2927
        %2929 = vmatprep.mubr.f32.mxu0 0.0
        %v2930 = vand.u32 %v467, 4294901760
        %2931 = vmatmul.mubr.f32.gmra.mxu0 %v2930
        %v2932 = vpop.f32.mrf.mxu0
        %v2933 = vadd.f32 %v2750, %v2932
        %v2934 = vpop.f32.mrf.mxu0
        %v2935 = vadd.f32 %v2752, %v2934
        %2936 = vmatprep.mubr.f32.mxu0 0.0
        %v2937 = vand.u32 %v470, 4294901760
        %2938 = vmatmul.mubr.f32.gmra.mxu0 %v2937
        %v2939 = vpop.f32.mrf.mxu0
        %v2940 = vadd.f32 %v2757, %v2939
        %v2941 = vpop.f32.mrf.mxu0
        %v2942 = vadd.f32 %v2759, %v2941
        %2943 = vmatprep.mubr.f32.mxu0 0.0
        %v2944 = vand.u32 %v473, 4294901760
        %2945 = vmatmul.mubr.f32.gmra.mxu0 %v2944
        %v2946 = vpop.f32.mrf.mxu0
        %v2947 = vadd.f32 %v2764, %v2946
        %v2948 = vpop.f32.mrf.mxu0
        %v2949 = vadd.f32 %v2766, %v2948
        %2950 = vmatprep.mubr.f32.mxu0 0.0
        %v2951 = vand.u32 %v476, 4294901760
        %2952 = vmatmul.mubr.f32.gmra.mxu0 %v2951
        %v2953 = vpop.f32.mrf.mxu0
        %v2954 = vadd.f32 %v2771, %v2953
        %v2955 = vpop.f32.mrf.mxu0
        %v2956 = vadd.f32 %v2773, %v2955
        %2957 = vmatprep.mubr.f32.mxu0 0.0
        %v2958 = vand.u32 %v479, 4294901760
        %2959 = vmatmul.mubr.f32.gmra.mxu0 %v2958
        %v2960 = vpop.f32.mrf.mxu0
        %v2961 = vadd.f32 %v2778, %v2960
        %v2962 = vpop.f32.mrf.mxu0
        %v2963 = vadd.f32 %v2780, %v2962
        %2964 = vmatprep.mubr.f32.mxu0 0.0
        %v2965 = vand.u32 %v482, 4294901760
        %2966 = vmatmul.mubr.f32.gmra.mxu0 %v2965
        %v2967 = vpop.f32.mrf.mxu0
        %v2968 = vadd.f32 %v2785, %v2967
        %v2969 = vpop.f32.mrf.mxu0
        %v2970 = vadd.f32 %v2787, %v2969
        %2971 = vmatprep.mubr.f32.mxu0 0.0
        %v2972 = vand.u32 %v485, 4294901760
        %2973 = vmatmul.mubr.f32.gmra.mxu0 %v2972
        %v2974 = vpop.f32.mrf.mxu0
        %v2975 = vadd.f32 %v2792, %v2974
        %v2976 = vpop.f32.mrf.mxu0
        %v2977 = vadd.f32 %v2794, %v2976
        %2978 = vmatprep.mubr.f32.mxu0 0.0
        %v2979 = vand.u32 %v488, 4294901760
        %2980 = vmatmul.mubr.f32.gmra.mxu0 %v2979
        %v2981 = vpop.f32.mrf.mxu0
        %v2982 = vadd.f32 %v2799, %v2981
        %v2983 = vpop.f32.mrf.mxu0
        %v2984 = vadd.f32 %v2801, %v2983
        %2985 = vmatprep.mubr.f32.mxu0 0.0
        %v2986 = vand.u32 %v491, 4294901760
        %2987 = vmatmul.mubr.f32.gmra.mxu0 %v2986
        %v2988 = vpop.f32.mrf.mxu0
        %v2989 = vadd.f32 %v2806, %v2988
        %v2990 = vpop.f32.mrf.mxu0
        %v2991 = vadd.f32 %v2808, %v2990
        %2992 = vmatprep.mubr.f32.mxu0 0.0
        %v2993 = vand.u32 %v494, 4294901760
        %2994 = vmatmul.mubr.f32.gmra.mxu0 %v2993
        %v2995 = vpop.f32.mrf.mxu0
        %v2996 = vadd.f32 %v2813, %v2995
        %v2997 = vpop.f32.mrf.mxu0
        %v2998 = vadd.f32 %v2815, %v2997
        %2999 = vdwg.mxu0
        %v3000 = vmax.f32 %v1639, 0.0
        %v3001 = vmax.f32 %v1641, 0.0
        %v3002 = vmax.f32 %v2891, 0.0
        %v3003 = vmax.f32 %v2893, 0.0
        %v3004 = vmax.f32 %v1646, 0.0
        %v3005 = vmax.f32 %v1648, 0.0
        %v3006 = vmax.f32 %v2898, 0.0
        %v3007 = vmax.f32 %v2900, 0.0
        %v3008 = vmax.f32 %v1653, 0.0
        %v3009 = vmax.f32 %v1655, 0.0
        %v3010 = vmax.f32 %v2905, 0.0
        %v3011 = vmax.f32 %v2907, 0.0
        %v3012 = vmax.f32 %v1660, 0.0
        %v3013 = vmax.f32 %v1662, 0.0
        %v3014 = vmax.f32 %v2912, 0.0
        %v3015 = vmax.f32 %v2914, 0.0
        %v3016 = vmax.f32 %v1667, 0.0
        %v3017 = vmax.f32 %v1669, 0.0
        %v3018 = vmax.f32 %v2919, 0.0
        %v3019 = vmax.f32 %v2921, 0.0
        %v3020 = vmax.f32 %v1674, 0.0
        %v3021 = vmax.f32 %v1676, 0.0
        %v3022 = vmax.f32 %v2926, 0.0
        %v3023 = vmax.f32 %v2928, 0.0
        %v3024 = vmax.f32 %v1681, 0.0
        %v3025 = vmax.f32 %v1683, 0.0
        %v3026 = vmax.f32 %v2933, 0.0
        %v3027 = vmax.f32 %v2935, 0.0
        %v3028 = vmax.f32 %v1688, 0.0
        %v3029 = vmax.f32 %v1690, 0.0
        %v3030 = vmax.f32 %v2940, 0.0
        %v3031 = vmax.f32 %v2942, 0.0
        %v3032 = vmax.f32 %v1695, 0.0
        %v3033 = vmax.f32 %v1697, 0.0
        %v3034 = vmax.f32 %v2947, 0.0
        %v3035 = vmax.f32 %v2949, 0.0
        %v3036 = vmax.f32 %v1702, 0.0
        %v3037 = vmax.f32 %v1704, 0.0
        %v3038 = vmax.f32 %v2954, 0.0
        %v3039 = vmax.f32 %v2956, 0.0
        %v3040 = vmax.f32 %v1709, 0.0
        %v3041 = vmax.f32 %v1711, 0.0
        %v3042 = vmax.f32 %v2961, 0.0
        %v3043 = vmax.f32 %v2963, 0.0
        %v3044 = vmax.f32 %v1716, 0.0
        %v3045 = vmax.f32 %v1718, 0.0
        %v3046 = vmax.f32 %v2968, 0.0
        %v3047 = vmax.f32 %v2970, 0.0
        %v3048 = vmax.f32 %v1723, 0.0
        %v3049 = vmax.f32 %v1725, 0.0
        %v3050 = vmax.f32 %v2975, 0.0
        %v3051 = vmax.f32 %v2977, 0.0
        %v3052 = vmax.f32 %v1730, 0.0
        %v3053 = vmax.f32 %v1732, 0.0
        %v3054 = vmax.f32 %v2982, 0.0
        %v3055 = vmax.f32 %v2984, 0.0
        %v3056 = vmax.f32 %v1737, 0.0
        %v3057 = vmax.f32 %v1739, 0.0
        %v3058 = vmax.f32 %v2989, 0.0
        %v3059 = vmax.f32 %v2991, 0.0
        %v3060 = vmax.f32 %v1744, 0.0
        %v3061 = vmax.f32 %v1746, 0.0
        %v3062 = vmax.f32 %v2996, 0.0
        %v3063 = vmax.f32 %v2998, 0.0
        %v3064 = vld [vmem:[%s1] sm:$0xff]
        %v3065 = vld [vmem:[%s1 + $0x8] sm:$0xff]
        %v3066 = vld [vmem:[%s1 + $0x10] sm:$0xff]
        %v3067 = vld [vmem:[%s1 + $0x18] sm:$0xff]
        %v3068 = vld [vmem:[%s1 + $0x20] sm:$0xff]
        %v3069 = vld [vmem:[%s1 + $0x28] sm:$0xff]
        %v3070 = vld [vmem:[%s1 + $0x30] sm:$0xff]
        %v3071 = vld [vmem:[%s1 + $0x38] sm:$0xff]
        %v3072 = vld [vmem:[%s1 + $0x40] sm:$0xff]
        %v3073 = vld [vmem:[%s1 + $0x48] sm:$0xff]
        %v3074 = vld [vmem:[%s1 + $0x50] sm:$0xff]
        %v3075 = vld [vmem:[%s1 + $0x58] sm:$0xff]
        %v3076 = vld [vmem:[%s1 + $0x60] sm:$0xff]
        %v3077 = vld [vmem:[%s1 + $0x68] sm:$0xff]
        %v3078 = vld [vmem:[%s1 + $0x70] sm:$0xff]
        %v3079 = vld [vmem:[%s1 + $0x78] sm:$0xff]
        %v3080 = vld [vmem:[%s4] sm:$0xff]
        %v3081 = vld [vmem:[%s4 + $0x8] sm:$0xff]
        %v3082 = vld [vmem:[%s4 + $0x10] sm:$0xff]
        %v3083 = vld [vmem:[%s4 + $0x18] sm:$0xff]
        %v3084 = vld [vmem:[%s4 + $0x20] sm:$0xff]
        %v3085 = vld [vmem:[%s4 + $0x28] sm:$0xff]
        %v3086 = vld [vmem:[%s4 + $0x30] sm:$0xff]
        %v3087 = vld [vmem:[%s4 + $0x38] sm:$0xff]
        %v3088 = vld [vmem:[%s4 + $0x40] sm:$0xff]
        %v3089 = vld [vmem:[%s4 + $0x48] sm:$0xff]
        %v3090 = vld [vmem:[%s4 + $0x50] sm:$0xff]
        %v3091 = vld [vmem:[%s4 + $0x58] sm:$0xff]
        %v3092 = vld [vmem:[%s4 + $0x60] sm:$0xff]
        %v3093 = vld [vmem:[%s4 + $0x68] sm:$0xff]
        %v3094 = vld [vmem:[%s4 + $0x70] sm:$0xff]
        %v3095 = vld [vmem:[%s4 + $0x78] sm:$0xff]
        %3097 = vset.pattern.permute.xlu0 0
        %3098 = vperm.xlu0 %3097, %v3080
        %v3099 = vpop.permute.xlu0 %3098
        %3102 = vset.pattern.permute.xlu0 0
        %3103 = vperm.xlu0 %3102, %v3081
        %v3104 = vpop.permute.xlu0 %3103
        %3107 = vset.pattern.permute.xlu0 0
        %3108 = vperm.xlu0 %3107, %v3082
        %v3109 = vpop.permute.xlu0 %3108
        %3112 = vset.pattern.permute.xlu0 0
        %3113 = vperm.xlu0 %3112, %v3083
        %v3114 = vpop.permute.xlu0 %3113
        %3117 = vset.pattern.permute.xlu0 0
        %3118 = vperm.xlu0 %3117, %v3084
        %v3119 = vpop.permute.xlu0 %3118
        %3122 = vset.pattern.permute.xlu0 0
        %3123 = vperm.xlu0 %3122, %v3085
        %v3124 = vpop.permute.xlu0 %3123
        %3127 = vset.pattern.permute.xlu0 0
        %3128 = vperm.xlu0 %3127, %v3086
        %v3129 = vpop.permute.xlu0 %3128
        %3132 = vset.pattern.permute.xlu0 0
        %3133 = vperm.xlu0 %3132, %v3087
        %v3134 = vpop.permute.xlu0 %3133
        %3137 = vset.pattern.permute.xlu0 0
        %3138 = vperm.xlu0 %3137, %v3088
        %v3139 = vpop.permute.xlu0 %3138
        %3142 = vset.pattern.permute.xlu0 0
        %3143 = vperm.xlu0 %3142, %v3089
        %v3144 = vpop.permute.xlu0 %3143
        %3147 = vset.pattern.permute.xlu0 0
        %3148 = vperm.xlu0 %3147, %v3090
        %v3149 = vpop.permute.xlu0 %3148
        %3152 = vset.pattern.permute.xlu0 0
        %3153 = vperm.xlu0 %3152, %v3091
        %v3154 = vpop.permute.xlu0 %3153
        %3157 = vset.pattern.permute.xlu0 0
        %3158 = vperm.xlu0 %3157, %v3092
        %v3159 = vpop.permute.xlu0 %3158
        %3162 = vset.pattern.permute.xlu0 0
        %3163 = vperm.xlu0 %3162, %v3093
        %v3164 = vpop.permute.xlu0 %3163
        %3167 = vset.pattern.permute.xlu0 0
        %3168 = vperm.xlu0 %3167, %v3094
        %v3169 = vpop.permute.xlu0 %3168
        %3172 = vset.pattern.permute.xlu0 0
        %3173 = vperm.xlu0 %3172, %v3095
        %v3174 = vpop.permute.xlu0 %3173
        %v3176 = vand.u32 %v3061, 4294901760
        %3177 = vmatprep.subr.mxu0 %v3176
        %v3178 = vand.u32 %v3060, 4294901760
        %3179 = vmatpush1.msra.mxu0 %v3178
        %v3180 = vand.u32 %v3057, 4294901760
        %3181 = vmatprep.subr.mxu0 %v3180
        %v3182 = vand.u32 %v3056, 4294901760
        %3183 = vmatpush1.msra.mxu0 %v3182
        %v3184 = vand.u32 %v3053, 4294901760
        %3185 = vmatprep.subr.mxu0 %v3184
        %v3186 = vand.u32 %v3052, 4294901760
        %3187 = vmatpush1.msra.mxu0 %v3186
        %v3188 = vand.u32 %v3049, 4294901760
        %3189 = vmatprep.subr.mxu0 %v3188
        %v3190 = vand.u32 %v3048, 4294901760
        %3191 = vmatpush1.msra.mxu0 %v3190
        %v3192 = vand.u32 %v3045, 4294901760
        %3193 = vmatprep.subr.mxu0 %v3192
        %v3194 = vand.u32 %v3044, 4294901760
        %3195 = vmatpush1.msra.mxu0 %v3194
        %v3196 = vand.u32 %v3041, 4294901760
        %3197 = vmatprep.subr.mxu0 %v3196
        %v3198 = vand.u32 %v3040, 4294901760
        %3199 = vmatpush1.msra.mxu0 %v3198
        %v3200 = vand.u32 %v3037, 4294901760
        %3201 = vmatprep.subr.mxu0 %v3200
        %v3202 = vand.u32 %v3036, 4294901760
        %3203 = vmatpush1.msra.mxu0 %v3202
        %v3204 = vand.u32 %v3033, 4294901760
        %3205 = vmatprep.subr.mxu0 %v3204
        %v3206 = vand.u32 %v3032, 4294901760
        %3207 = vmatpush1.msra.mxu0 %v3206
        %v3208 = vand.u32 %v3029, 4294901760
        %3209 = vmatprep.subr.mxu0 %v3208
        %v3210 = vand.u32 %v3028, 4294901760
        %3211 = vmatpush1.msra.mxu0 %v3210
        %v3212 = vand.u32 %v3025, 4294901760
        %3213 = vmatprep.subr.mxu0 %v3212
        %v3214 = vand.u32 %v3024, 4294901760
        %3215 = vmatpush1.msra.mxu0 %v3214
        %v3216 = vand.u32 %v3021, 4294901760
        %3217 = vmatprep.subr.mxu0 %v3216
        %v3218 = vand.u32 %v3020, 4294901760
        %3219 = vmatpush1.msra.mxu0 %v3218
        %v3220 = vand.u32 %v3017, 4294901760
        %3221 = vmatprep.subr.mxu0 %v3220
        %v3222 = vand.u32 %v3016, 4294901760
        %3223 = vmatpush1.msra.mxu0 %v3222
        %v3224 = vand.u32 %v3013, 4294901760
        %3225 = vmatprep.subr.mxu0 %v3224
        %v3226 = vand.u32 %v3012, 4294901760
        %3227 = vmatpush1.msra.mxu0 %v3226
        %v3228 = vand.u32 %v3009, 4294901760
        %3229 = vmatprep.subr.mxu0 %v3228
        %v3230 = vand.u32 %v3008, 4294901760
        %3231 = vmatpush1.msra.mxu0 %v3230
        %v3232 = vand.u32 %v3005, 4294901760
        %3233 = vmatprep.subr.mxu0 %v3232
        %v3234 = vand.u32 %v3004, 4294901760
        %3235 = vmatpush1.msra.mxu0 %v3234
        %v3236 = vand.u32 %v3001, 4294901760
        %3237 = vmatprep.subr.mxu0 %v3236
        %v3238 = vand.u32 %v3000, 4294901760
        %3239 = vmatpush1.msra.mxu0 %v3238
        %3240 = vmatprep.subr.mxu0 0.0
        %3241 = vmatpush2.msra.mxu0 0.0
        %3242 = vmatprep.subr.mxu0 0.0
        %3243 = vmatpush2.msra.mxu0 0.0
        %3244 = vmatprep.subr.mxu0 0.0
        %3245 = vmatpush2.msra.mxu0 0.0
        %3246 = vmatprep.subr.mxu0 0.0
        %3247 = vmatpush2.msra.mxu0 0.0
        %3248 = vmatprep.subr.mxu0 0.0
        %3249 = vmatpush2.msra.mxu0 0.0
        %3250 = vmatprep.subr.mxu0 0.0
        %3251 = vmatpush2.msra.mxu0 0.0
        %3252 = vmatprep.subr.mxu0 0.0
        %3253 = vmatpush2.msra.mxu0 0.0
        %3254 = vmatprep.subr.mxu0 0.0
        %3255 = vmatpush2.msra.mxu0 0.0
        %3256 = vmatprep.subr.mxu0 0.0
        %3257 = vmatpush2.msra.mxu0 0.0
        %3258 = vmatprep.subr.mxu0 0.0
        %3259 = vmatpush2.msra.mxu0 0.0
        %3260 = vmatprep.subr.mxu0 0.0
        %3261 = vmatpush2.msra.mxu0 0.0
        %3262 = vmatprep.subr.mxu0 0.0
        %3263 = vmatpush2.msra.mxu0 0.0
        %3264 = vmatprep.subr.mxu0 0.0
        %3265 = vmatpush2.msra.mxu0 0.0
        %3266 = vmatprep.subr.mxu0 0.0
        %3267 = vmatpush2.msra.mxu0 0.0
        %3268 = vmatprep.subr.mxu0 0.0
        %3269 = vmatpush2.msra.mxu0 0.0
        %3270 = vmatprep.subr.mxu0 0.0
        %3271 = vmatpush2.msra.mxu0 0.0
        %3272 = vmatprep.mubr.f32.mxu0 0.0
        %v3273 = vand.u32 %v3064, 4294901760
        %v3274 = vsub.f32 %v3064, %v3273
        %v3275 = vand.u32 %v3274, 4294901760
        %v3276 = vsub.f32 %v3274, %v3275
        %v3277 = vand.u32 %v3276, 4294901760
        %3278 = vmatmul.mubr.f32.gmra.mxu0 %v3277
        %v3279 = vpop.f32.mrf.mxu0
        %v3280 = vadd.f32 %v3099, %v3279
        %v3281 = vpop.f32.mrf.mxu0
        %v3282 = vadd.f32 %v3099, %v3281
        %3283 = vmatprep.mubr.f32.mxu0 0.0
        %v3284 = vand.u32 %v3065, 4294901760
        %v3285 = vsub.f32 %v3065, %v3284
        %v3286 = vand.u32 %v3285, 4294901760
        %v3287 = vsub.f32 %v3285, %v3286
        %v3288 = vand.u32 %v3287, 4294901760
        %3289 = vmatmul.mubr.f32.gmra.mxu0 %v3288
        %v3290 = vpop.f32.mrf.mxu0
        %v3291 = vadd.f32 %v3104, %v3290
        %v3292 = vpop.f32.mrf.mxu0
        %v3293 = vadd.f32 %v3104, %v3292
        %3294 = vmatprep.mubr.f32.mxu0 0.0
        %v3295 = vand.u32 %v3066, 4294901760
        %v3296 = vsub.f32 %v3066, %v3295
        %v3297 = vand.u32 %v3296, 4294901760
        %v3298 = vsub.f32 %v3296, %v3297
        %v3299 = vand.u32 %v3298, 4294901760
        %3300 = vmatmul.mubr.f32.gmra.mxu0 %v3299
        %v3301 = vpop.f32.mrf.mxu0
        %v3302 = vadd.f32 %v3109, %v3301
        %v3303 = vpop.f32.mrf.mxu0
        %v3304 = vadd.f32 %v3109, %v3303
        %3305 = vmatprep.mubr.f32.mxu0 0.0
        %v3306 = vand.u32 %v3067, 4294901760
        %v3307 = vsub.f32 %v3067, %v3306
        %v3308 = vand.u32 %v3307, 4294901760
        %v3309 = vsub.f32 %v3307, %v3308
        %v3310 = vand.u32 %v3309, 4294901760
        %3311 = vmatmul.mubr.f32.gmra.mxu0 %v3310
        %v3312 = vpop.f32.mrf.mxu0
        %v3313 = vadd.f32 %v3114, %v3312
        %v3314 = vpop.f32.mrf.mxu0
        %v3315 = vadd.f32 %v3114, %v3314
        %3316 = vmatprep.mubr.f32.mxu0 0.0
        %v3317 = vand.u32 %v3068, 4294901760
        %v3318 = vsub.f32 %v3068, %v3317
        %v3319 = vand.u32 %v3318, 4294901760
        %v3320 = vsub.f32 %v3318, %v3319
        %v3321 = vand.u32 %v3320, 4294901760
        %3322 = vmatmul.mubr.f32.gmra.mxu0 %v3321
        %v3323 = vpop.f32.mrf.mxu0
        %v3324 = vadd.f32 %v3119, %v3323
        %v3325 = vpop.f32.mrf.mxu0
        %v3326 = vadd.f32 %v3119, %v3325
        %3327 = vmatprep.mubr.f32.mxu0 0.0
        %v3328 = vand.u32 %v3069, 4294901760
        %v3329 = vsub.f32 %v3069, %v3328
        %v3330 = vand.u32 %v3329, 4294901760
        %v3331 = vsub.f32 %v3329, %v3330
        %v3332 = vand.u32 %v3331, 4294901760
        %3333 = vmatmul.mubr.f32.gmra.mxu0 %v3332
        %v3334 = vpop.f32.mrf.mxu0
        %v3335 = vadd.f32 %v3124, %v3334
        %v3336 = vpop.f32.mrf.mxu0
        %v3337 = vadd.f32 %v3124, %v3336
        %3338 = vmatprep.mubr.f32.mxu0 0.0
        %v3339 = vand.u32 %v3070, 4294901760
        %v3340 = vsub.f32 %v3070, %v3339
        %v3341 = vand.u32 %v3340, 4294901760
        %v3342 = vsub.f32 %v3340, %v3341
        %v3343 = vand.u32 %v3342, 4294901760
        %3344 = vmatmul.mubr.f32.gmra.mxu0 %v3343
        %v3345 = vpop.f32.mrf.mxu0
        %v3346 = vadd.f32 %v3129, %v3345
        %v3347 = vpop.f32.mrf.mxu0
        %v3348 = vadd.f32 %v3129, %v3347
        %3349 = vmatprep.mubr.f32.mxu0 0.0
        %v3350 = vand.u32 %v3071, 4294901760
        %v3351 = vsub.f32 %v3071, %v3350
        %v3352 = vand.u32 %v3351, 4294901760
        %v3353 = vsub.f32 %v3351, %v3352
        %v3354 = vand.u32 %v3353, 4294901760
        %3355 = vmatmul.mubr.f32.gmra.mxu0 %v3354
        %v3356 = vpop.f32.mrf.mxu0
        %v3357 = vadd.f32 %v3134, %v3356
        %v3358 = vpop.f32.mrf.mxu0
        %v3359 = vadd.f32 %v3134, %v3358
        %3360 = vmatprep.mubr.f32.mxu0 0.0
        %v3361 = vand.u32 %v3072, 4294901760
        %v3362 = vsub.f32 %v3072, %v3361
        %v3363 = vand.u32 %v3362, 4294901760
        %v3364 = vsub.f32 %v3362, %v3363
        %v3365 = vand.u32 %v3364, 4294901760
        %3366 = vmatmul.mubr.f32.gmra.mxu0 %v3365
        %v3367 = vpop.f32.mrf.mxu0
        %v3368 = vadd.f32 %v3139, %v3367
        %v3369 = vpop.f32.mrf.mxu0
        %v3370 = vadd.f32 %v3139, %v3369
        %3371 = vmatprep.mubr.f32.mxu0 0.0
        %v3372 = vand.u32 %v3073, 4294901760
        %v3373 = vsub.f32 %v3073, %v3372
        %v3374 = vand.u32 %v3373, 4294901760
        %v3375 = vsub.f32 %v3373, %v3374
        %v3376 = vand.u32 %v3375, 4294901760
        %3377 = vmatmul.mubr.f32.gmra.mxu0 %v3376
        %v3378 = vpop.f32.mrf.mxu0
        %v3379 = vadd.f32 %v3144, %v3378
        %v3380 = vpop.f32.mrf.mxu0
        %v3381 = vadd.f32 %v3144, %v3380
        %3382 = vmatprep.mubr.f32.mxu0 0.0
        %v3383 = vand.u32 %v3074, 4294901760
        %v3384 = vsub.f32 %v3074, %v3383
        %v3385 = vand.u32 %v3384, 4294901760
        %v3386 = vsub.f32 %v3384, %v3385
        %v3387 = vand.u32 %v3386, 4294901760
        %3388 = vmatmul.mubr.f32.gmra.mxu0 %v3387
        %v3389 = vpop.f32.mrf.mxu0
        %v3390 = vadd.f32 %v3149, %v3389
        %v3391 = vpop.f32.mrf.mxu0
        %v3392 = vadd.f32 %v3149, %v3391
        %3393 = vmatprep.mubr.f32.mxu0 0.0
        %v3394 = vand.u32 %v3075, 4294901760
        %v3395 = vsub.f32 %v3075, %v3394
        %v3396 = vand.u32 %v3395, 4294901760
        %v3397 = vsub.f32 %v3395, %v3396
        %v3398 = vand.u32 %v3397, 4294901760
        %3399 = vmatmul.mubr.f32.gmra.mxu0 %v3398
        %v3400 = vpop.f32.mrf.mxu0
        %v3401 = vadd.f32 %v3154, %v3400
        %v3402 = vpop.f32.mrf.mxu0
        %v3403 = vadd.f32 %v3154, %v3402
        %3404 = vmatprep.mubr.f32.mxu0 0.0
        %v3405 = vand.u32 %v3076, 4294901760
        %v3406 = vsub.f32 %v3076, %v3405
        %v3407 = vand.u32 %v3406, 4294901760
        %v3408 = vsub.f32 %v3406, %v3407
        %v3409 = vand.u32 %v3408, 4294901760
        %3410 = vmatmul.mubr.f32.gmra.mxu0 %v3409
        %v3411 = vpop.f32.mrf.mxu0
        %v3412 = vadd.f32 %v3159, %v3411
        %v3413 = vpop.f32.mrf.mxu0
        %v3414 = vadd.f32 %v3159, %v3413
        %3415 = vmatprep.mubr.f32.mxu0 0.0
        %v3416 = vand.u32 %v3077, 4294901760
        %v3417 = vsub.f32 %v3077, %v3416
        %v3418 = vand.u32 %v3417, 4294901760
        %v3419 = vsub.f32 %v3417, %v3418
        %v3420 = vand.u32 %v3419, 4294901760
        %3421 = vmatmul.mubr.f32.gmra.mxu0 %v3420
        %v3422 = vpop.f32.mrf.mxu0
        %v3423 = vadd.f32 %v3164, %v3422
        %v3424 = vpop.f32.mrf.mxu0
        %v3425 = vadd.f32 %v3164, %v3424
        %3426 = vmatprep.mubr.f32.mxu0 0.0
        %v3427 = vand.u32 %v3078, 4294901760
        %v3428 = vsub.f32 %v3078, %v3427
        %v3429 = vand.u32 %v3428, 4294901760
        %v3430 = vsub.f32 %v3428, %v3429
        %v3431 = vand.u32 %v3430, 4294901760
        %3432 = vmatmul.mubr.f32.gmra.mxu0 %v3431
        %v3433 = vpop.f32.mrf.mxu0
        %v3434 = vadd.f32 %v3169, %v3433
        %v3435 = vpop.f32.mrf.mxu0
        %v3436 = vadd.f32 %v3169, %v3435
        %3437 = vmatprep.mubr.f32.mxu0 0.0
        %v3438 = vand.u32 %v3079, 4294901760
        %v3439 = vsub.f32 %v3079, %v3438
        %v3440 = vand.u32 %v3439, 4294901760
        %v3441 = vsub.f32 %v3439, %v3440
        %v3442 = vand.u32 %v3441, 4294901760
        %3443 = vmatmul.mubr.f32.gmra.mxu0 %v3442
        %v3444 = vpop.f32.mrf.mxu0
        %v3445 = vadd.f32 %v3174, %v3444
        %v3446 = vpop.f32.mrf.mxu0
        %v3447 = vadd.f32 %v3174, %v3446
        %3448 = vdwg.mxu0
        %v3449 = vand.u32 %v3061, 4294901760
        %v3450 = vsub.f32 %v3061, %v3449
        %v3451 = vand.u32 %v3450, 4294901760
        %v3452 = vsub.f32 %v3450, %v3451
        %v3453 = vand.u32 %v3452, 4294901760
        %3454 = vmatprep.subr.mxu0 %v3453
        %v3455 = vand.u32 %v3060, 4294901760
        %v3456 = vsub.f32 %v3060, %v3455
        %v3457 = vand.u32 %v3456, 4294901760
        %v3458 = vsub.f32 %v3456, %v3457
        %v3459 = vand.u32 %v3458, 4294901760
        %3460 = vmatpush1.msra.mxu0 %v3459
        %v3461 = vand.u32 %v3057, 4294901760
        %v3462 = vsub.f32 %v3057, %v3461
        %v3463 = vand.u32 %v3462, 4294901760
        %v3464 = vsub.f32 %v3462, %v3463
        %v3465 = vand.u32 %v3464, 4294901760
        %3466 = vmatprep.subr.mxu0 %v3465
        %v3467 = vand.u32 %v3056, 4294901760
        %v3468 = vsub.f32 %v3056, %v3467
        %v3469 = vand.u32 %v3468, 4294901760
        %v3470 = vsub.f32 %v3468, %v3469
        %v3471 = vand.u32 %v3470, 4294901760
        %3472 = vmatpush1.msra.mxu0 %v3471
        %v3473 = vand.u32 %v3053, 4294901760
        %v3474 = vsub.f32 %v3053, %v3473
        %v3475 = vand.u32 %v3474, 4294901760
        %v3476 = vsub.f32 %v3474, %v3475
        %v3477 = vand.u32 %v3476, 4294901760
        %3478 = vmatprep.subr.mxu0 %v3477
        %v3479 = vand.u32 %v3052, 4294901760
        %v3480 = vsub.f32 %v3052, %v3479
        %v3481 = vand.u32 %v3480, 4294901760
        %v3482 = vsub.f32 %v3480, %v3481
        %v3483 = vand.u32 %v3482, 4294901760
        %3484 = vmatpush1.msra.mxu0 %v3483
        %v3485 = vand.u32 %v3049, 4294901760
        %v3486 = vsub.f32 %v3049, %v3485
        %v3487 = vand.u32 %v3486, 4294901760
        %v3488 = vsub.f32 %v3486, %v3487
        %v3489 = vand.u32 %v3488, 4294901760
        %3490 = vmatprep.subr.mxu0 %v3489
        %v3491 = vand.u32 %v3048, 4294901760
        %v3492 = vsub.f32 %v3048, %v3491
        %v3493 = vand.u32 %v3492, 4294901760
        %v3494 = vsub.f32 %v3492, %v3493
        %v3495 = vand.u32 %v3494, 4294901760
        %3496 = vmatpush1.msra.mxu0 %v3495
        %v3497 = vand.u32 %v3045, 4294901760
        %v3498 = vsub.f32 %v3045, %v3497
        %v3499 = vand.u32 %v3498, 4294901760
        %v3500 = vsub.f32 %v3498, %v3499
        %v3501 = vand.u32 %v3500, 4294901760
        %3502 = vmatprep.subr.mxu0 %v3501
        %v3503 = vand.u32 %v3044, 4294901760
        %v3504 = vsub.f32 %v3044, %v3503
        %v3505 = vand.u32 %v3504, 4294901760
        %v3506 = vsub.f32 %v3504, %v3505
        %v3507 = vand.u32 %v3506, 4294901760
        %3508 = vmatpush1.msra.mxu0 %v3507
        %v3509 = vand.u32 %v3041, 4294901760
        %v3510 = vsub.f32 %v3041, %v3509
        %v3511 = vand.u32 %v3510, 4294901760
        %v3512 = vsub.f32 %v3510, %v3511
        %v3513 = vand.u32 %v3512, 4294901760
        %3514 = vmatprep.subr.mxu0 %v3513
        %v3515 = vand.u32 %v3040, 4294901760
        %v3516 = vsub.f32 %v3040, %v3515
        %v3517 = vand.u32 %v3516, 4294901760
        %v3518 = vsub.f32 %v3516, %v3517
        %v3519 = vand.u32 %v3518, 4294901760
        %3520 = vmatpush1.msra.mxu0 %v3519
        %v3521 = vand.u32 %v3037, 4294901760
        %v3522 = vsub.f32 %v3037, %v3521
        %v3523 = vand.u32 %v3522, 4294901760
        %v3524 = vsub.f32 %v3522, %v3523
        %v3525 = vand.u32 %v3524, 4294901760
        %3526 = vmatprep.subr.mxu0 %v3525
        %v3527 = vand.u32 %v3036, 4294901760
        %v3528 = vsub.f32 %v3036, %v3527
        %v3529 = vand.u32 %v3528, 4294901760
        %v3530 = vsub.f32 %v3528, %v3529
        %v3531 = vand.u32 %v3530, 4294901760
        %3532 = vmatpush1.msra.mxu0 %v3531
        %v3533 = vand.u32 %v3033, 4294901760
        %v3534 = vsub.f32 %v3033, %v3533
        %v3535 = vand.u32 %v3534, 4294901760
        %v3536 = vsub.f32 %v3534, %v3535
        %v3537 = vand.u32 %v3536, 4294901760
        %3538 = vmatprep.subr.mxu0 %v3537
        %v3539 = vand.u32 %v3032, 4294901760
        %v3540 = vsub.f32 %v3032, %v3539
        %v3541 = vand.u32 %v3540, 4294901760
        %v3542 = vsub.f32 %v3540, %v3541
        %v3543 = vand.u32 %v3542, 4294901760
        %3544 = vmatpush1.msra.mxu0 %v3543
        %v3545 = vand.u32 %v3029, 4294901760
        %v3546 = vsub.f32 %v3029, %v3545
        %v3547 = vand.u32 %v3546, 4294901760
        %v3548 = vsub.f32 %v3546, %v3547
        %v3549 = vand.u32 %v3548, 4294901760
        %3550 = vmatprep.subr.mxu0 %v3549
        %v3551 = vand.u32 %v3028, 4294901760
        %v3552 = vsub.f32 %v3028, %v3551
        %v3553 = vand.u32 %v3552, 4294901760
        %v3554 = vsub.f32 %v3552, %v3553
        %v3555 = vand.u32 %v3554, 4294901760
        %3556 = vmatpush1.msra.mxu0 %v3555
        %v3557 = vand.u32 %v3025, 4294901760
        %v3558 = vsub.f32 %v3025, %v3557
        %v3559 = vand.u32 %v3558, 4294901760
        %v3560 = vsub.f32 %v3558, %v3559
        %v3561 = vand.u32 %v3560, 4294901760
        %3562 = vmatprep.subr.mxu0 %v3561
        %v3563 = vand.u32 %v3024, 4294901760
        %v3564 = vsub.f32 %v3024, %v3563
        %v3565 = vand.u32 %v3564, 4294901760
        %v3566 = vsub.f32 %v3564, %v3565
        %v3567 = vand.u32 %v3566, 4294901760
        %3568 = vmatpush1.msra.mxu0 %v3567
        %v3569 = vand.u32 %v3021, 4294901760
        %v3570 = vsub.f32 %v3021, %v3569
        %v3571 = vand.u32 %v3570, 4294901760
        %v3572 = vsub.f32 %v3570, %v3571
        %v3573 = vand.u32 %v3572, 4294901760
        %3574 = vmatprep.subr.mxu0 %v3573
        %v3575 = vand.u32 %v3020, 4294901760
        %v3576 = vsub.f32 %v3020, %v3575
        %v3577 = vand.u32 %v3576, 4294901760
        %v3578 = vsub.f32 %v3576, %v3577
        %v3579 = vand.u32 %v3578, 4294901760
        %3580 = vmatpush1.msra.mxu0 %v3579
        %v3581 = vand.u32 %v3017, 4294901760
        %v3582 = vsub.f32 %v3017, %v3581
        %v3583 = vand.u32 %v3582, 4294901760
        %v3584 = vsub.f32 %v3582, %v3583
        %v3585 = vand.u32 %v3584, 4294901760
        %3586 = vmatprep.subr.mxu0 %v3585
        %v3587 = vand.u32 %v3016, 4294901760
        %v3588 = vsub.f32 %v3016, %v3587
        %v3589 = vand.u32 %v3588, 4294901760
        %v3590 = vsub.f32 %v3588, %v3589
        %v3591 = vand.u32 %v3590, 4294901760
        %3592 = vmatpush1.msra.mxu0 %v3591
        %v3593 = vand.u32 %v3013, 4294901760
        %v3594 = vsub.f32 %v3013, %v3593
        %v3595 = vand.u32 %v3594, 4294901760
        %v3596 = vsub.f32 %v3594, %v3595
        %v3597 = vand.u32 %v3596, 4294901760
        %3598 = vmatprep.subr.mxu0 %v3597
        %v3599 = vand.u32 %v3012, 4294901760
        %v3600 = vsub.f32 %v3012, %v3599
        %v3601 = vand.u32 %v3600, 4294901760
        %v3602 = vsub.f32 %v3600, %v3601
        %v3603 = vand.u32 %v3602, 4294901760
        %3604 = vmatpush1.msra.mxu0 %v3603
        %v3605 = vand.u32 %v3009, 4294901760
        %v3606 = vsub.f32 %v3009, %v3605
        %v3607 = vand.u32 %v3606, 4294901760
        %v3608 = vsub.f32 %v3606, %v3607
        %v3609 = vand.u32 %v3608, 4294901760
        %3610 = vmatprep.subr.mxu0 %v3609
        %v3611 = vand.u32 %v3008, 4294901760
        %v3612 = vsub.f32 %v3008, %v3611
        %v3613 = vand.u32 %v3612, 4294901760
        %v3614 = vsub.f32 %v3612, %v3613
        %v3615 = vand.u32 %v3614, 4294901760
        %3616 = vmatpush1.msra.mxu0 %v3615
        %v3617 = vand.u32 %v3005, 4294901760
        %v3618 = vsub.f32 %v3005, %v3617
        %v3619 = vand.u32 %v3618, 4294901760
        %v3620 = vsub.f32 %v3618, %v3619
        %v3621 = vand.u32 %v3620, 4294901760
        %3622 = vmatprep.subr.mxu0 %v3621
        %v3623 = vand.u32 %v3004, 4294901760
        %v3624 = vsub.f32 %v3004, %v3623
        %v3625 = vand.u32 %v3624, 4294901760
        %v3626 = vsub.f32 %v3624, %v3625
        %v3627 = vand.u32 %v3626, 4294901760
        %3628 = vmatpush1.msra.mxu0 %v3627
        %v3629 = vand.u32 %v3001, 4294901760
        %v3630 = vsub.f32 %v3001, %v3629
        %v3631 = vand.u32 %v3630, 4294901760
        %v3632 = vsub.f32 %v3630, %v3631
        %v3633 = vand.u32 %v3632, 4294901760
        %3634 = vmatprep.subr.mxu0 %v3633
        %v3635 = vand.u32 %v3000, 4294901760
        %v3636 = vsub.f32 %v3000, %v3635
        %v3637 = vand.u32 %v3636, 4294901760
        %v3638 = vsub.f32 %v3636, %v3637
        %v3639 = vand.u32 %v3638, 4294901760
        %3640 = vmatpush1.msra.mxu0 %v3639
        %3641 = vmatprep.subr.mxu0 0.0
        %3642 = vmatpush2.msra.mxu0 0.0
        %3643 = vmatprep.subr.mxu0 0.0
        %3644 = vmatpush2.msra.mxu0 0.0
        %3645 = vmatprep.subr.mxu0 0.0
        %3646 = vmatpush2.msra.mxu0 0.0
        %3647 = vmatprep.subr.mxu0 0.0
        %3648 = vmatpush2.msra.mxu0 0.0
        %3649 = vmatprep.subr.mxu0 0.0
        %3650 = vmatpush2.msra.mxu0 0.0
        %3651 = vmatprep.subr.mxu0 0.0
        %3652 = vmatpush2.msra.mxu0 0.0
        %3653 = vmatprep.subr.mxu0 0.0
        %3654 = vmatpush2.msra.mxu0 0.0
        %3655 = vmatprep.subr.mxu0 0.0
        %3656 = vmatpush2.msra.mxu0 0.0
        %3657 = vmatprep.subr.mxu0 0.0
        %3658 = vmatpush2.msra.mxu0 0.0
        %3659 = vmatprep.subr.mxu0 0.0
        %3660 = vmatpush2.msra.mxu0 0.0
        %3661 = vmatprep.subr.mxu0 0.0
        %3662 = vmatpush2.msra.mxu0 0.0
        %3663 = vmatprep.subr.mxu0 0.0
        %3664 = vmatpush2.msra.mxu0 0.0
        %3665 = vmatprep.subr.mxu0 0.0
        %3666 = vmatpush2.msra.mxu0 0.0
        %3667 = vmatprep.subr.mxu0 0.0
        %3668 = vmatpush2.msra.mxu0 0.0
        %3669 = vmatprep.subr.mxu0 0.0
        %3670 = vmatpush2.msra.mxu0 0.0
        %3671 = vmatprep.subr.mxu0 0.0
        %3672 = vmatpush2.msra.mxu0 0.0
        %3673 = vmatprep.mubr.f32.mxu0 0.0
        %v3674 = vand.u32 %v3064, 4294901760
        %3675 = vmatmul.mubr.f32.gmra.mxu0 %v3674
        %v3676 = vpop.f32.mrf.mxu0
        %v3677 = vadd.f32 %v3280, %v3676
        %v3678 = vpop.f32.mrf.mxu0
        %v3679 = vadd.f32 %v3282, %v3678
        %3680 = vmatprep.mubr.f32.mxu0 0.0
        %v3681 = vand.u32 %v3065, 4294901760
        %3682 = vmatmul.mubr.f32.gmra.mxu0 %v3681
        %v3683 = vpop.f32.mrf.mxu0
        %v3684 = vadd.f32 %v3291, %v3683
        %v3685 = vpop.f32.mrf.mxu0
        %v3686 = vadd.f32 %v3293, %v3685
        %3687 = vmatprep.mubr.f32.mxu0 0.0
        %v3688 = vand.u32 %v3066, 4294901760
        %3689 = vmatmul.mubr.f32.gmra.mxu0 %v3688
        %v3690 = vpop.f32.mrf.mxu0
        %v3691 = vadd.f32 %v3302, %v3690
        %v3692 = vpop.f32.mrf.mxu0
        %v3693 = vadd.f32 %v3304, %v3692
        %3694 = vmatprep.mubr.f32.mxu0 0.0
        %v3695 = vand.u32 %v3067, 4294901760
        %3696 = vmatmul.mubr.f32.gmra.mxu0 %v3695
        %v3697 = vpop.f32.mrf.mxu0
        %v3698 = vadd.f32 %v3313, %v3697
        %v3699 = vpop.f32.mrf.mxu0
        %v3700 = vadd.f32 %v3315, %v3699
        %3701 = vmatprep.mubr.f32.mxu0 0.0
        %v3702 = vand.u32 %v3068, 4294901760
        %3703 = vmatmul.mubr.f32.gmra.mxu0 %v3702
        %v3704 = vpop.f32.mrf.mxu0
        %v3705 = vadd.f32 %v3324, %v3704
        %v3706 = vpop.f32.mrf.mxu0
        %v3707 = vadd.f32 %v3326, %v3706
        %3708 = vmatprep.mubr.f32.mxu0 0.0
        %v3709 = vand.u32 %v3069, 4294901760
        %3710 = vmatmul.mubr.f32.gmra.mxu0 %v3709
        %v3711 = vpop.f32.mrf.mxu0
        %v3712 = vadd.f32 %v3335, %v3711
        %v3713 = vpop.f32.mrf.mxu0
        %v3714 = vadd.f32 %v3337, %v3713
        %3715 = vmatprep.mubr.f32.mxu0 0.0
        %v3716 = vand.u32 %v3070, 4294901760
        %3717 = vmatmul.mubr.f32.gmra.mxu0 %v3716
        %v3718 = vpop.f32.mrf.mxu0
        %v3719 = vadd.f32 %v3346, %v3718
        %v3720 = vpop.f32.mrf.mxu0
        %v3721 = vadd.f32 %v3348, %v3720
        %3722 = vmatprep.mubr.f32.mxu0 0.0
        %v3723 = vand.u32 %v3071, 4294901760
        %3724 = vmatmul.mubr.f32.gmra.mxu0 %v3723
        %v3725 = vpop.f32.mrf.mxu0
        %v3726 = vadd.f32 %v3357, %v3725
        %v3727 = vpop.f32.mrf.mxu0
        %v3728 = vadd.f32 %v3359, %v3727
        %3729 = vmatprep.mubr.f32.mxu0 0.0
        %v3730 = vand.u32 %v3072, 4294901760
        %3731 = vmatmul.mubr.f32.gmra.mxu0 %v3730
        %v3732 = vpop.f32.mrf.mxu0
        %v3733 = vadd.f32 %v3368, %v3732
        %v3734 = vpop.f32.mrf.mxu0
        %v3735 = vadd.f32 %v3370, %v3734
        %3736 = vmatprep.mubr.f32.mxu0 0.0
        %v3737 = vand.u32 %v3073, 4294901760
        %3738 = vmatmul.mubr.f32.gmra.mxu0 %v3737
        %v3739 = vpop.f32.mrf.mxu0
        %v3740 = vadd.f32 %v3379, %v3739
        %v3741 = vpop.f32.mrf.mxu0
        %v3742 = vadd.f32 %v3381, %v3741
        %3743 = vmatprep.mubr.f32.mxu0 0.0
        %v3744 = vand.u32 %v3074, 4294901760
        %3745 = vmatmul.mubr.f32.gmra.mxu0 %v3744
        %v3746 = vpop.f32.mrf.mxu0
        %v3747 = vadd.f32 %v3390, %v3746
        %v3748 = vpop.f32.mrf.mxu0
        %v3749 = vadd.f32 %v3392, %v3748
        %3750 = vmatprep.mubr.f32.mxu0 0.0
        %v3751 = vand.u32 %v3075, 4294901760
        %3752 = vmatmul.mubr.f32.gmra.mxu0 %v3751
        %v3753 = vpop.f32.mrf.mxu0
        %v3754 = vadd.f32 %v3401, %v3753
        %v3755 = vpop.f32.mrf.mxu0
        %v3756 = vadd.f32 %v3403, %v3755
        %3757 = vmatprep.mubr.f32.mxu0 0.0
        %v3758 = vand.u32 %v3076, 4294901760
        %3759 = vmatmul.mubr.f32.gmra.mxu0 %v3758
        %v3760 = vpop.f32.mrf.mxu0
        %v3761 = vadd.f32 %v3412, %v3760
        %v3762 = vpop.f32.mrf.mxu0
        %v3763 = vadd.f32 %v3414, %v3762
        %3764 = vmatprep.mubr.f32.mxu0 0.0
        %v3765 = vand.u32 %v3077, 4294901760
        %3766 = vmatmul.mubr.f32.gmra.mxu0 %v3765
        %v3767 = vpop.f32.mrf.mxu0
        %v3768 = vadd.f32 %v3423, %v3767
        %v3769 = vpop.f32.mrf.mxu0
        %v3770 = vadd.f32 %v3425, %v3769
        %3771 = vmatprep.mubr.f32.mxu0 0.0
        %v3772 = vand.u32 %v3078, 4294901760
        %3773 = vmatmul.mubr.f32.gmra.mxu0 %v3772
        %v3774 = vpop.f32.mrf.mxu0
        %v3775 = vadd.f32 %v3434, %v3774
        %v3776 = vpop.f32.mrf.mxu0
        %v3777 = vadd.f32 %v3436, %v3776
        %3778 = vmatprep.mubr.f32.mxu0 0.0
        %v3779 = vand.u32 %v3079, 4294901760
        %3780 = vmatmul.mubr.f32.gmra.mxu0 %v3779
        %v3781 = vpop.f32.mrf.mxu0
        %v3782 = vadd.f32 %v3445, %v3781
        %v3783 = vpop.f32.mrf.mxu0
        %v3784 = vadd.f32 %v3447, %v3783
        %3785 = vdwg.mxu0
        %v3786 = vand.u32 %v3061, 4294901760
        %v3787 = vsub.f32 %v3061, %v3786
        %3788 = vmatprep.subr.mxu0 %v3787
        %v3789 = vand.u32 %v3060, 4294901760
        %v3790 = vsub.f32 %v3060, %v3789
        %3791 = vmatpush1.msra.mxu0 %v3790
        %v3792 = vand.u32 %v3057, 4294901760
        %v3793 = vsub.f32 %v3057, %v3792
        %3794 = vmatprep.subr.mxu0 %v3793
        %v3795 = vand.u32 %v3056, 4294901760
        %v3796 = vsub.f32 %v3056, %v3795
        %3797 = vmatpush1.msra.mxu0 %v3796
        %v3798 = vand.u32 %v3053, 4294901760
        %v3799 = vsub.f32 %v3053, %v3798
        %3800 = vmatprep.subr.mxu0 %v3799
        %v3801 = vand.u32 %v3052, 4294901760
        %v3802 = vsub.f32 %v3052, %v3801
        %3803 = vmatpush1.msra.mxu0 %v3802
        %v3804 = vand.u32 %v3049, 4294901760
        %v3805 = vsub.f32 %v3049, %v3804
        %3806 = vmatprep.subr.mxu0 %v3805
        %v3807 = vand.u32 %v3048, 4294901760
        %v3808 = vsub.f32 %v3048, %v3807
        %3809 = vmatpush1.msra.mxu0 %v3808
        %v3810 = vand.u32 %v3045, 4294901760
        %v3811 = vsub.f32 %v3045, %v3810
        %3812 = vmatprep.subr.mxu0 %v3811
        %v3813 = vand.u32 %v3044, 4294901760
        %v3814 = vsub.f32 %v3044, %v3813
        %3815 = vmatpush1.msra.mxu0 %v3814
        %v3816 = vand.u32 %v3041, 4294901760
        %v3817 = vsub.f32 %v3041, %v3816
        %3818 = vmatprep.subr.mxu0 %v3817
        %v3819 = vand.u32 %v3040, 4294901760
        %v3820 = vsub.f32 %v3040, %v3819
        %3821 = vmatpush1.msra.mxu0 %v3820
        %v3822 = vand.u32 %v3037, 4294901760
        %v3823 = vsub.f32 %v3037, %v3822
        %3824 = vmatprep.subr.mxu0 %v3823
        %v3825 = vand.u32 %v3036, 4294901760
        %v3826 = vsub.f32 %v3036, %v3825
        %3827 = vmatpush1.msra.mxu0 %v3826
        %v3828 = vand.u32 %v3033, 4294901760
        %v3829 = vsub.f32 %v3033, %v3828
        %3830 = vmatprep.subr.mxu0 %v3829
        %v3831 = vand.u32 %v3032, 4294901760
        %v3832 = vsub.f32 %v3032, %v3831
        %3833 = vmatpush1.msra.mxu0 %v3832
        %v3834 = vand.u32 %v3029, 4294901760
        %v3835 = vsub.f32 %v3029, %v3834
        %3836 = vmatprep.subr.mxu0 %v3835
        %v3837 = vand.u32 %v3028, 4294901760
        %v3838 = vsub.f32 %v3028, %v3837
        %3839 = vmatpush1.msra.mxu0 %v3838
        %v3840 = vand.u32 %v3025, 4294901760
        %v3841 = vsub.f32 %v3025, %v3840
        %3842 = vmatprep.subr.mxu0 %v3841
        %v3843 = vand.u32 %v3024, 4294901760
        %v3844 = vsub.f32 %v3024, %v3843
        %3845 = vmatpush1.msra.mxu0 %v3844
        %v3846 = vand.u32 %v3021, 4294901760
        %v3847 = vsub.f32 %v3021, %v3846
        %3848 = vmatprep.subr.mxu0 %v3847
        %v3849 = vand.u32 %v3020, 4294901760
        %v3850 = vsub.f32 %v3020, %v3849
        %3851 = vmatpush1.msra.mxu0 %v3850
        %v3852 = vand.u32 %v3017, 4294901760
        %v3853 = vsub.f32 %v3017, %v3852
        %3854 = vmatprep.subr.mxu0 %v3853
        %v3855 = vand.u32 %v3016, 4294901760
        %v3856 = vsub.f32 %v3016, %v3855
        %3857 = vmatpush1.msra.mxu0 %v3856
        %v3858 = vand.u32 %v3013, 4294901760
        %v3859 = vsub.f32 %v3013, %v3858
        %3860 = vmatprep.subr.mxu0 %v3859
        %v3861 = vand.u32 %v3012, 4294901760
        %v3862 = vsub.f32 %v3012, %v3861
        %3863 = vmatpush1.msra.mxu0 %v3862
        %v3864 = vand.u32 %v3009, 4294901760
        %v3865 = vsub.f32 %v3009, %v3864
        %3866 = vmatprep.subr.mxu0 %v3865
        %v3867 = vand.u32 %v3008, 4294901760
        %v3868 = vsub.f32 %v3008, %v3867
        %3869 = vmatpush1.msra.mxu0 %v3868
        %v3870 = vand.u32 %v3005, 4294901760
        %v3871 = vsub.f32 %v3005, %v3870
        %3872 = vmatprep.subr.mxu0 %v3871
        %v3873 = vand.u32 %v3004, 4294901760
        %v3874 = vsub.f32 %v3004, %v3873
        %3875 = vmatpush1.msra.mxu0 %v3874
        %v3876 = vand.u32 %v3001, 4294901760
        %v3877 = vsub.f32 %v3001, %v3876
        %3878 = vmatprep.subr.mxu0 %v3877
        %v3879 = vand.u32 %v3000, 4294901760
        %v3880 = vsub.f32 %v3000, %v3879
        %3881 = vmatpush1.msra.mxu0 %v3880
        %3882 = vmatprep.subr.mxu0 0.0
        %3883 = vmatpush2.msra.mxu0 0.0
        %3884 = vmatprep.subr.mxu0 0.0
        %3885 = vmatpush2.msra.mxu0 0.0
        %3886 = vmatprep.subr.mxu0 0.0
        %3887 = vmatpush2.msra.mxu0 0.0
        %3888 = vmatprep.subr.mxu0 0.0
        %3889 = vmatpush2.msra.mxu0 0.0
        %3890 = vmatprep.subr.mxu0 0.0
        %3891 = vmatpush2.msra.mxu0 0.0
        %3892 = vmatprep.subr.mxu0 0.0
        %3893 = vmatpush2.msra.mxu0 0.0
        %3894 = vmatprep.subr.mxu0 0.0
        %3895 = vmatpush2.msra.mxu0 0.0
        %3896 = vmatprep.subr.mxu0 0.0
        %3897 = vmatpush2.msra.mxu0 0.0
        %3898 = vmatprep.subr.mxu0 0.0
        %3899 = vmatpush2.msra.mxu0 0.0
        %3900 = vmatprep.subr.mxu0 0.0
        %3901 = vmatpush2.msra.mxu0 0.0
        %3902 = vmatprep.subr.mxu0 0.0
        %3903 = vmatpush2.msra.mxu0 0.0
        %3904 = vmatprep.subr.mxu0 0.0
        %3905 = vmatpush2.msra.mxu0 0.0
        %3906 = vmatprep.subr.mxu0 0.0
        %3907 = vmatpush2.msra.mxu0 0.0
        %3908 = vmatprep.subr.mxu0 0.0
        %3909 = vmatpush2.msra.mxu0 0.0
        %3910 = vmatprep.subr.mxu0 0.0
        %3911 = vmatpush2.msra.mxu0 0.0
        %3912 = vmatprep.subr.mxu0 0.0
        %3913 = vmatpush2.msra.mxu0 0.0
        %3914 = vmatprep.mubr.f32.mxu0 0.0
        %v3915 = vand.u32 %v3064, 4294901760
        %v3916 = vsub.f32 %v3064, %v3915
        %3917 = vmatmul.mubr.f32.gmra.mxu0 %v3916
        %v3918 = vpop.f32.mrf.mxu0
        %v3919 = vadd.f32 %v3677, %v3918
        %v3920 = vpop.f32.mrf.mxu0
        %v3921 = vadd.f32 %v3679, %v3920
        %3922 = vmatprep.mubr.f32.mxu0 0.0
        %v3923 = vand.u32 %v3065, 4294901760
        %v3924 = vsub.f32 %v3065, %v3923
        %3925 = vmatmul.mubr.f32.gmra.mxu0 %v3924
        %v3926 = vpop.f32.mrf.mxu0
        %v3927 = vadd.f32 %v3684, %v3926
        %v3928 = vpop.f32.mrf.mxu0
        %v3929 = vadd.f32 %v3686, %v3928
        %3930 = vmatprep.mubr.f32.mxu0 0.0
        %v3931 = vand.u32 %v3066, 4294901760
        %v3932 = vsub.f32 %v3066, %v3931
        %3933 = vmatmul.mubr.f32.gmra.mxu0 %v3932
        %v3934 = vpop.f32.mrf.mxu0
        %v3935 = vadd.f32 %v3691, %v3934
        %v3936 = vpop.f32.mrf.mxu0
        %v3937 = vadd.f32 %v3693, %v3936
        %3938 = vmatprep.mubr.f32.mxu0 0.0
        %v3939 = vand.u32 %v3067, 4294901760
        %v3940 = vsub.f32 %v3067, %v3939
        %3941 = vmatmul.mubr.f32.gmra.mxu0 %v3940
        %v3942 = vpop.f32.mrf.mxu0
        %v3943 = vadd.f32 %v3698, %v3942
        %v3944 = vpop.f32.mrf.mxu0
        %v3945 = vadd.f32 %v3700, %v3944
        %3946 = vmatprep.mubr.f32.mxu0 0.0
        %v3947 = vand.u32 %v3068, 4294901760
        %v3948 = vsub.f32 %v3068, %v3947
        %3949 = vmatmul.mubr.f32.gmra.mxu0 %v3948
        %v3950 = vpop.f32.mrf.mxu0
        %v3951 = vadd.f32 %v3705, %v3950
        %v3952 = vpop.f32.mrf.mxu0
        %v3953 = vadd.f32 %v3707, %v3952
        %3954 = vmatprep.mubr.f32.mxu0 0.0
        %v3955 = vand.u32 %v3069, 4294901760
        %v3956 = vsub.f32 %v3069, %v3955
        %3957 = vmatmul.mubr.f32.gmra.mxu0 %v3956
        %v3958 = vpop.f32.mrf.mxu0
        %v3959 = vadd.f32 %v3712, %v3958
        %v3960 = vpop.f32.mrf.mxu0
        %v3961 = vadd.f32 %v3714, %v3960
        %3962 = vmatprep.mubr.f32.mxu0 0.0
        %v3963 = vand.u32 %v3070, 4294901760
        %v3964 = vsub.f32 %v3070, %v3963
        %3965 = vmatmul.mubr.f32.gmra.mxu0 %v3964
        %v3966 = vpop.f32.mrf.mxu0
        %v3967 = vadd.f32 %v3719, %v3966
        %v3968 = vpop.f32.mrf.mxu0
        %v3969 = vadd.f32 %v3721, %v3968
        %3970 = vmatprep.mubr.f32.mxu0 0.0
        %v3971 = vand.u32 %v3071, 4294901760
        %v3972 = vsub.f32 %v3071, %v3971
        %3973 = vmatmul.mubr.f32.gmra.mxu0 %v3972
        %v3974 = vpop.f32.mrf.mxu0
        %v3975 = vadd.f32 %v3726, %v3974
        %v3976 = vpop.f32.mrf.mxu0
        %v3977 = vadd.f32 %v3728, %v3976
        %3978 = vmatprep.mubr.f32.mxu0 0.0
        %v3979 = vand.u32 %v3072, 4294901760
        %v3980 = vsub.f32 %v3072, %v3979
        %3981 = vmatmul.mubr.f32.gmra.mxu0 %v3980
        %v3982 = vpop.f32.mrf.mxu0
        %v3983 = vadd.f32 %v3733, %v3982
        %v3984 = vpop.f32.mrf.mxu0
        %v3985 = vadd.f32 %v3735, %v3984
        %3986 = vmatprep.mubr.f32.mxu0 0.0
        %v3987 = vand.u32 %v3073, 4294901760
        %v3988 = vsub.f32 %v3073, %v3987
        %3989 = vmatmul.mubr.f32.gmra.mxu0 %v3988
        %v3990 = vpop.f32.mrf.mxu0
        %v3991 = vadd.f32 %v3740, %v3990
        %v3992 = vpop.f32.mrf.mxu0
        %v3993 = vadd.f32 %v3742, %v3992
        %3994 = vmatprep.mubr.f32.mxu0 0.0
        %v3995 = vand.u32 %v3074, 4294901760
        %v3996 = vsub.f32 %v3074, %v3995
        %3997 = vmatmul.mubr.f32.gmra.mxu0 %v3996
        %v3998 = vpop.f32.mrf.mxu0
        %v3999 = vadd.f32 %v3747, %v3998
        %v4000 = vpop.f32.mrf.mxu0
        %v4001 = vadd.f32 %v3749, %v4000
        %4002 = vmatprep.mubr.f32.mxu0 0.0
        %v4003 = vand.u32 %v3075, 4294901760
        %v4004 = vsub.f32 %v3075, %v4003
        %4005 = vmatmul.mubr.f32.gmra.mxu0 %v4004
        %v4006 = vpop.f32.mrf.mxu0
        %v4007 = vadd.f32 %v3754, %v4006
        %v4008 = vpop.f32.mrf.mxu0
        %v4009 = vadd.f32 %v3756, %v4008
        %4010 = vmatprep.mubr.f32.mxu0 0.0
        %v4011 = vand.u32 %v3076, 4294901760
        %v4012 = vsub.f32 %v3076, %v4011
        %4013 = vmatmul.mubr.f32.gmra.mxu0 %v4012
        %v4014 = vpop.f32.mrf.mxu0
        %v4015 = vadd.f32 %v3761, %v4014
        %v4016 = vpop.f32.mrf.mxu0
        %v4017 = vadd.f32 %v3763, %v4016
        %4018 = vmatprep.mubr.f32.mxu0 0.0
        %v4019 = vand.u32 %v3077, 4294901760
        %v4020 = vsub.f32 %v3077, %v4019
        %4021 = vmatmul.mubr.f32.gmra.mxu0 %v4020
        %v4022 = vpop.f32.mrf.mxu0
        %v4023 = vadd.f32 %v3768, %v4022
        %v4024 = vpop.f32.mrf.mxu0
        %v4025 = vadd.f32 %v3770, %v4024
        %4026 = vmatprep.mubr.f32.mxu0 0.0
        %v4027 = vand.u32 %v3078, 4294901760
        %v4028 = vsub.f32 %v3078, %v4027
        %4029 = vmatmul.mubr.f32.gmra.mxu0 %v4028
        %v4030 = vpop.f32.mrf.mxu0
        %v4031 = vadd.f32 %v3775, %v4030
        %v4032 = vpop.f32.mrf.mxu0
        %v4033 = vadd.f32 %v3777, %v4032
        %4034 = vmatprep.mubr.f32.mxu0 0.0
        %v4035 = vand.u32 %v3079, 4294901760
        %v4036 = vsub.f32 %v3079, %v4035
        %4037 = vmatmul.mubr.f32.gmra.mxu0 %v4036
        %v4038 = vpop.f32.mrf.mxu0
        %v4039 = vadd.f32 %v3782, %v4038
        %v4040 = vpop.f32.mrf.mxu0
        %v4041 = vadd.f32 %v3784, %v4040
        %4042 = vdwg.mxu0
        %v4043 = vand.u32 %v3061, 4294901760
        %4044 = vmatprep.subr.mxu0 %v4043
        %v4045 = vand.u32 %v3060, 4294901760
        %4046 = vmatpush1.msra.mxu0 %v4045
        %v4047 = vand.u32 %v3057, 4294901760
        %4048 = vmatprep.subr.mxu0 %v4047
        %v4049 = vand.u32 %v3056, 4294901760
        %4050 = vmatpush1.msra.mxu0 %v4049
        %v4051 = vand.u32 %v3053, 4294901760
        %4052 = vmatprep.subr.mxu0 %v4051
        %v4053 = vand.u32 %v3052, 4294901760
        %4054 = vmatpush1.msra.mxu0 %v4053
        %v4055 = vand.u32 %v3049, 4294901760
        %4056 = vmatprep.subr.mxu0 %v4055
        %v4057 = vand.u32 %v3048, 4294901760
        %4058 = vmatpush1.msra.mxu0 %v4057
        %v4059 = vand.u32 %v3045, 4294901760
        %4060 = vmatprep.subr.mxu0 %v4059
        %v4061 = vand.u32 %v3044, 4294901760
        %4062 = vmatpush1.msra.mxu0 %v4061
        %v4063 = vand.u32 %v3041, 4294901760
        %4064 = vmatprep.subr.mxu0 %v4063
        %v4065 = vand.u32 %v3040, 4294901760
        %4066 = vmatpush1.msra.mxu0 %v4065
        %v4067 = vand.u32 %v3037, 4294901760
        %4068 = vmatprep.subr.mxu0 %v4067
        %v4069 = vand.u32 %v3036, 4294901760
        %4070 = vmatpush1.msra.mxu0 %v4069
        %v4071 = vand.u32 %v3033, 4294901760
        %4072 = vmatprep.subr.mxu0 %v4071
        %v4073 = vand.u32 %v3032, 4294901760
        %4074 = vmatpush1.msra.mxu0 %v4073
        %v4075 = vand.u32 %v3029, 4294901760
        %4076 = vmatprep.subr.mxu0 %v4075
        %v4077 = vand.u32 %v3028, 4294901760
        %4078 = vmatpush1.msra.mxu0 %v4077
        %v4079 = vand.u32 %v3025, 4294901760
        %4080 = vmatprep.subr.mxu0 %v4079
        %v4081 = vand.u32 %v3024, 4294901760
        %4082 = vmatpush1.msra.mxu0 %v4081
        %v4083 = vand.u32 %v3021, 4294901760
        %4084 = vmatprep.subr.mxu0 %v4083
        %v4085 = vand.u32 %v3020, 4294901760
        %4086 = vmatpush1.msra.mxu0 %v4085
        %v4087 = vand.u32 %v3017, 4294901760
        %4088 = vmatprep.subr.mxu0 %v4087
        %v4089 = vand.u32 %v3016, 4294901760
        %4090 = vmatpush1.msra.mxu0 %v4089
        %v4091 = vand.u32 %v3013, 4294901760
        %4092 = vmatprep.subr.mxu0 %v4091
        %v4093 = vand.u32 %v3012, 4294901760
        %4094 = vmatpush1.msra.mxu0 %v4093
        %v4095 = vand.u32 %v3009, 4294901760
        %4096 = vmatprep.subr.mxu0 %v4095
        %v4097 = vand.u32 %v3008, 4294901760
        %4098 = vmatpush1.msra.mxu0 %v4097
        %v4099 = vand.u32 %v3005, 4294901760
        %4100 = vmatprep.subr.mxu0 %v4099
        %v4101 = vand.u32 %v3004, 4294901760
        %4102 = vmatpush1.msra.mxu0 %v4101
        %v4103 = vand.u32 %v3001, 4294901760
        %4104 = vmatprep.subr.mxu0 %v4103
        %v4105 = vand.u32 %v3000, 4294901760
        %4106 = vmatpush1.msra.mxu0 %v4105
        %4107 = vmatprep.subr.mxu0 0.0
        %4108 = vmatpush2.msra.mxu0 0.0
        %4109 = vmatprep.subr.mxu0 0.0
        %4110 = vmatpush2.msra.mxu0 0.0
        %4111 = vmatprep.subr.mxu0 0.0
        %4112 = vmatpush2.msra.mxu0 0.0
        %4113 = vmatprep.subr.mxu0 0.0
        %4114 = vmatpush2.msra.mxu0 0.0
        %4115 = vmatprep.subr.mxu0 0.0
        %4116 = vmatpush2.msra.mxu0 0.0
        %4117 = vmatprep.subr.mxu0 0.0
        %4118 = vmatpush2.msra.mxu0 0.0
        %4119 = vmatprep.subr.mxu0 0.0
        %4120 = vmatpush2.msra.mxu0 0.0
        %4121 = vmatprep.subr.mxu0 0.0
        %4122 = vmatpush2.msra.mxu0 0.0
        %4123 = vmatprep.subr.mxu0 0.0
        %4124 = vmatpush2.msra.mxu0 0.0
        %4125 = vmatprep.subr.mxu0 0.0
        %4126 = vmatpush2.msra.mxu0 0.0
        %4127 = vmatprep.subr.mxu0 0.0
        %4128 = vmatpush2.msra.mxu0 0.0
        %4129 = vmatprep.subr.mxu0 0.0
        %4130 = vmatpush2.msra.mxu0 0.0
        %4131 = vmatprep.subr.mxu0 0.0
        %4132 = vmatpush2.msra.mxu0 0.0
        %4133 = vmatprep.subr.mxu0 0.0
        %4134 = vmatpush2.msra.mxu0 0.0
        %4135 = vmatprep.subr.mxu0 0.0
        %4136 = vmatpush2.msra.mxu0 0.0
        %4137 = vmatprep.subr.mxu0 0.0
        %4138 = vmatpush2.msra.mxu0 0.0
        %4139 = vmatprep.mubr.f32.mxu0 0.0
        %v4140 = vand.u32 %v3064, 4294901760
        %v4141 = vsub.f32 %v3064, %v4140
        %v4142 = vand.u32 %v4141, 4294901760
        %4143 = vmatmul.mubr.f32.gmra.mxu0 %v4142
        %v4144 = vpop.f32.mrf.mxu0
        %v4145 = vadd.f32 %v3919, %v4144
        %v4146 = vpop.f32.mrf.mxu0
        %v4147 = vadd.f32 %v3921, %v4146
        %4148 = vmatprep.mubr.f32.mxu0 0.0
        %v4149 = vand.u32 %v3065, 4294901760
        %v4150 = vsub.f32 %v3065, %v4149
        %v4151 = vand.u32 %v4150, 4294901760
        %4152 = vmatmul.mubr.f32.gmra.mxu0 %v4151
        %v4153 = vpop.f32.mrf.mxu0
        %v4154 = vadd.f32 %v3927, %v4153
        %v4155 = vpop.f32.mrf.mxu0
        %v4156 = vadd.f32 %v3929, %v4155
        %4157 = vmatprep.mubr.f32.mxu0 0.0
        %v4158 = vand.u32 %v3066, 4294901760
        %v4159 = vsub.f32 %v3066, %v4158
        %v4160 = vand.u32 %v4159, 4294901760
        %4161 = vmatmul.mubr.f32.gmra.mxu0 %v4160
        %v4162 = vpop.f32.mrf.mxu0
        %v4163 = vadd.f32 %v3935, %v4162
        %v4164 = vpop.f32.mrf.mxu0
        %v4165 = vadd.f32 %v3937, %v4164
        %4166 = vmatprep.mubr.f32.mxu0 0.0
        %v4167 = vand.u32 %v3067, 4294901760
        %v4168 = vsub.f32 %v3067, %v4167
        %v4169 = vand.u32 %v4168, 4294901760
        %4170 = vmatmul.mubr.f32.gmra.mxu0 %v4169
        %v4171 = vpop.f32.mrf.mxu0
        %v4172 = vadd.f32 %v3943, %v4171
        %v4173 = vpop.f32.mrf.mxu0
        %v4174 = vadd.f32 %v3945, %v4173
        %4175 = vmatprep.mubr.f32.mxu0 0.0
        %v4176 = vand.u32 %v3068, 4294901760
        %v4177 = vsub.f32 %v3068, %v4176
        %v4178 = vand.u32 %v4177, 4294901760
        %4179 = vmatmul.mubr.f32.gmra.mxu0 %v4178
        %v4180 = vpop.f32.mrf.mxu0
        %v4181 = vadd.f32 %v3951, %v4180
        %v4182 = vpop.f32.mrf.mxu0
        %v4183 = vadd.f32 %v3953, %v4182
        %4184 = vmatprep.mubr.f32.mxu0 0.0
        %v4185 = vand.u32 %v3069, 4294901760
        %v4186 = vsub.f32 %v3069, %v4185
        %v4187 = vand.u32 %v4186, 4294901760
        %4188 = vmatmul.mubr.f32.gmra.mxu0 %v4187
        %v4189 = vpop.f32.mrf.mxu0
        %v4190 = vadd.f32 %v3959, %v4189
        %v4191 = vpop.f32.mrf.mxu0
        %v4192 = vadd.f32 %v3961, %v4191
        %4193 = vmatprep.mubr.f32.mxu0 0.0
        %v4194 = vand.u32 %v3070, 4294901760
        %v4195 = vsub.f32 %v3070, %v4194
        %v4196 = vand.u32 %v4195, 4294901760
        %4197 = vmatmul.mubr.f32.gmra.mxu0 %v4196
        %v4198 = vpop.f32.mrf.mxu0
        %v4199 = vadd.f32 %v3967, %v4198
        %v4200 = vpop.f32.mrf.mxu0
        %v4201 = vadd.f32 %v3969, %v4200
        %4202 = vmatprep.mubr.f32.mxu0 0.0
        %v4203 = vand.u32 %v3071, 4294901760
        %v4204 = vsub.f32 %v3071, %v4203
        %v4205 = vand.u32 %v4204, 4294901760
        %4206 = vmatmul.mubr.f32.gmra.mxu0 %v4205
        %v4207 = vpop.f32.mrf.mxu0
        %v4208 = vadd.f32 %v3975, %v4207
        %v4209 = vpop.f32.mrf.mxu0
        %v4210 = vadd.f32 %v3977, %v4209
        %4211 = vmatprep.mubr.f32.mxu0 0.0
        %v4212 = vand.u32 %v3072, 4294901760
        %v4213 = vsub.f32 %v3072, %v4212
        %v4214 = vand.u32 %v4213, 4294901760
        %4215 = vmatmul.mubr.f32.gmra.mxu0 %v4214
        %v4216 = vpop.f32.mrf.mxu0
        %v4217 = vadd.f32 %v3983, %v4216
        %v4218 = vpop.f32.mrf.mxu0
        %v4219 = vadd.f32 %v3985, %v4218
        %4220 = vmatprep.mubr.f32.mxu0 0.0
        %v4221 = vand.u32 %v3073, 4294901760
        %v4222 = vsub.f32 %v3073, %v4221
        %v4223 = vand.u32 %v4222, 4294901760
        %4224 = vmatmul.mubr.f32.gmra.mxu0 %v4223
        %v4225 = vpop.f32.mrf.mxu0
        %v4226 = vadd.f32 %v3991, %v4225
        %v4227 = vpop.f32.mrf.mxu0
        %v4228 = vadd.f32 %v3993, %v4227
        %4229 = vmatprep.mubr.f32.mxu0 0.0
        %v4230 = vand.u32 %v3074, 4294901760
        %v4231 = vsub.f32 %v3074, %v4230
        %v4232 = vand.u32 %v4231, 4294901760
        %4233 = vmatmul.mubr.f32.gmra.mxu0 %v4232
        %v4234 = vpop.f32.mrf.mxu0
        %v4235 = vadd.f32 %v3999, %v4234
        %v4236 = vpop.f32.mrf.mxu0
        %v4237 = vadd.f32 %v4001, %v4236
        %4238 = vmatprep.mubr.f32.mxu0 0.0
        %v4239 = vand.u32 %v3075, 4294901760
        %v4240 = vsub.f32 %v3075, %v4239
        %v4241 = vand.u32 %v4240, 4294901760
        %4242 = vmatmul.mubr.f32.gmra.mxu0 %v4241
        %v4243 = vpop.f32.mrf.mxu0
        %v4244 = vadd.f32 %v4007, %v4243
        %v4245 = vpop.f32.mrf.mxu0
        %v4246 = vadd.f32 %v4009, %v4245
        %4247 = vmatprep.mubr.f32.mxu0 0.0
        %v4248 = vand.u32 %v3076, 4294901760
        %v4249 = vsub.f32 %v3076, %v4248
        %v4250 = vand.u32 %v4249, 4294901760
        %4251 = vmatmul.mubr.f32.gmra.mxu0 %v4250
        %v4252 = vpop.f32.mrf.mxu0
        %v4253 = vadd.f32 %v4015, %v4252
        %v4254 = vpop.f32.mrf.mxu0
        %v4255 = vadd.f32 %v4017, %v4254
        %4256 = vmatprep.mubr.f32.mxu0 0.0
        %v4257 = vand.u32 %v3077, 4294901760
        %v4258 = vsub.f32 %v3077, %v4257
        %v4259 = vand.u32 %v4258, 4294901760
        %4260 = vmatmul.mubr.f32.gmra.mxu0 %v4259
        %v4261 = vpop.f32.mrf.mxu0
        %v4262 = vadd.f32 %v4023, %v4261
        %v4263 = vpop.f32.mrf.mxu0
        %v4264 = vadd.f32 %v4025, %v4263
        %4265 = vmatprep.mubr.f32.mxu0 0.0
        %v4266 = vand.u32 %v3078, 4294901760
        %v4267 = vsub.f32 %v3078, %v4266
        %v4268 = vand.u32 %v4267, 4294901760
        %4269 = vmatmul.mubr.f32.gmra.mxu0 %v4268
        %v4270 = vpop.f32.mrf.mxu0
        %v4271 = vadd.f32 %v4031, %v4270
        %v4272 = vpop.f32.mrf.mxu0
        %v4273 = vadd.f32 %v4033, %v4272
        %4274 = vmatprep.mubr.f32.mxu0 0.0
        %v4275 = vand.u32 %v3079, 4294901760
        %v4276 = vsub.f32 %v3079, %v4275
        %v4277 = vand.u32 %v4276, 4294901760
        %4278 = vmatmul.mubr.f32.gmra.mxu0 %v4277
        %v4279 = vpop.f32.mrf.mxu0
        %v4280 = vadd.f32 %v4039, %v4279
        %v4281 = vpop.f32.mrf.mxu0
        %v4282 = vadd.f32 %v4041, %v4281
        %4283 = vdwg.mxu0
        %v4284 = vand.u32 %v3061, 4294901760
        %v4285 = vsub.f32 %v3061, %v4284
        %v4286 = vand.u32 %v4285, 4294901760
        %4287 = vmatprep.subr.mxu0 %v4286
        %v4288 = vand.u32 %v3060, 4294901760
        %v4289 = vsub.f32 %v3060, %v4288
        %v4290 = vand.u32 %v4289, 4294901760
        %4291 = vmatpush1.msra.mxu0 %v4290
        %v4292 = vand.u32 %v3057, 4294901760
        %v4293 = vsub.f32 %v3057, %v4292
        %v4294 = vand.u32 %v4293, 4294901760
        %4295 = vmatprep.subr.mxu0 %v4294
        %v4296 = vand.u32 %v3056, 4294901760
        %v4297 = vsub.f32 %v3056, %v4296
        %v4298 = vand.u32 %v4297, 4294901760
        %4299 = vmatpush1.msra.mxu0 %v4298
        %v4300 = vand.u32 %v3053, 4294901760
        %v4301 = vsub.f32 %v3053, %v4300
        %v4302 = vand.u32 %v4301, 4294901760
        %4303 = vmatprep.subr.mxu0 %v4302
        %v4304 = vand.u32 %v3052, 4294901760
        %v4305 = vsub.f32 %v3052, %v4304
        %v4306 = vand.u32 %v4305, 4294901760
        %4307 = vmatpush1.msra.mxu0 %v4306
        %v4308 = vand.u32 %v3049, 4294901760
        %v4309 = vsub.f32 %v3049, %v4308
        %v4310 = vand.u32 %v4309, 4294901760
        %4311 = vmatprep.subr.mxu0 %v4310
        %v4312 = vand.u32 %v3048, 4294901760
        %v4313 = vsub.f32 %v3048, %v4312
        %v4314 = vand.u32 %v4313, 4294901760
        %4315 = vmatpush1.msra.mxu0 %v4314
        %v4316 = vand.u32 %v3045, 4294901760
        %v4317 = vsub.f32 %v3045, %v4316
        %v4318 = vand.u32 %v4317, 4294901760
        %4319 = vmatprep.subr.mxu0 %v4318
        %v4320 = vand.u32 %v3044, 4294901760
        %v4321 = vsub.f32 %v3044, %v4320
        %v4322 = vand.u32 %v4321, 4294901760
        %4323 = vmatpush1.msra.mxu0 %v4322
        %v4324 = vand.u32 %v3041, 4294901760
        %v4325 = vsub.f32 %v3041, %v4324
        %v4326 = vand.u32 %v4325, 4294901760
        %4327 = vmatprep.subr.mxu0 %v4326
        %v4328 = vand.u32 %v3040, 4294901760
        %v4329 = vsub.f32 %v3040, %v4328
        %v4330 = vand.u32 %v4329, 4294901760
        %4331 = vmatpush1.msra.mxu0 %v4330
        %v4332 = vand.u32 %v3037, 4294901760
        %v4333 = vsub.f32 %v3037, %v4332
        %v4334 = vand.u32 %v4333, 4294901760
        %4335 = vmatprep.subr.mxu0 %v4334
        %v4336 = vand.u32 %v3036, 4294901760
        %v4337 = vsub.f32 %v3036, %v4336
        %v4338 = vand.u32 %v4337, 4294901760
        %4339 = vmatpush1.msra.mxu0 %v4338
        %v4340 = vand.u32 %v3033, 4294901760
        %v4341 = vsub.f32 %v3033, %v4340
        %v4342 = vand.u32 %v4341, 4294901760
        %4343 = vmatprep.subr.mxu0 %v4342
        %v4344 = vand.u32 %v3032, 4294901760
        %v4345 = vsub.f32 %v3032, %v4344
        %v4346 = vand.u32 %v4345, 4294901760
        %4347 = vmatpush1.msra.mxu0 %v4346
        %v4348 = vand.u32 %v3029, 4294901760
        %v4349 = vsub.f32 %v3029, %v4348
        %v4350 = vand.u32 %v4349, 4294901760
        %4351 = vmatprep.subr.mxu0 %v4350
        %v4352 = vand.u32 %v3028, 4294901760
        %v4353 = vsub.f32 %v3028, %v4352
        %v4354 = vand.u32 %v4353, 4294901760
        %4355 = vmatpush1.msra.mxu0 %v4354
        %v4356 = vand.u32 %v3025, 4294901760
        %v4357 = vsub.f32 %v3025, %v4356
        %v4358 = vand.u32 %v4357, 4294901760
        %4359 = vmatprep.subr.mxu0 %v4358
        %v4360 = vand.u32 %v3024, 4294901760
        %v4361 = vsub.f32 %v3024, %v4360
        %v4362 = vand.u32 %v4361, 4294901760
        %4363 = vmatpush1.msra.mxu0 %v4362
        %v4364 = vand.u32 %v3021, 4294901760
        %v4365 = vsub.f32 %v3021, %v4364
        %v4366 = vand.u32 %v4365, 4294901760
        %4367 = vmatprep.subr.mxu0 %v4366
        %v4368 = vand.u32 %v3020, 4294901760
        %v4369 = vsub.f32 %v3020, %v4368
        %v4370 = vand.u32 %v4369, 4294901760
        %4371 = vmatpush1.msra.mxu0 %v4370
        %v4372 = vand.u32 %v3017, 4294901760
        %v4373 = vsub.f32 %v3017, %v4372
        %v4374 = vand.u32 %v4373, 4294901760
        %4375 = vmatprep.subr.mxu0 %v4374
        %v4376 = vand.u32 %v3016, 4294901760
        %v4377 = vsub.f32 %v3016, %v4376
        %v4378 = vand.u32 %v4377, 4294901760
        %4379 = vmatpush1.msra.mxu0 %v4378
        %v4380 = vand.u32 %v3013, 4294901760
        %v4381 = vsub.f32 %v3013, %v4380
        %v4382 = vand.u32 %v4381, 4294901760
        %4383 = vmatprep.subr.mxu0 %v4382
        %v4384 = vand.u32 %v3012, 4294901760
        %v4385 = vsub.f32 %v3012, %v4384
        %v4386 = vand.u32 %v4385, 4294901760
        %4387 = vmatpush1.msra.mxu0 %v4386
        %v4388 = vand.u32 %v3009, 4294901760
        %v4389 = vsub.f32 %v3009, %v4388
        %v4390 = vand.u32 %v4389, 4294901760
        %4391 = vmatprep.subr.mxu0 %v4390
        %v4392 = vand.u32 %v3008, 4294901760
        %v4393 = vsub.f32 %v3008, %v4392
        %v4394 = vand.u32 %v4393, 4294901760
        %4395 = vmatpush1.msra.mxu0 %v4394
        %v4396 = vand.u32 %v3005, 4294901760
        %v4397 = vsub.f32 %v3005, %v4396
        %v4398 = vand.u32 %v4397, 4294901760
        %4399 = vmatprep.subr.mxu0 %v4398
        %v4400 = vand.u32 %v3004, 4294901760
        %v4401 = vsub.f32 %v3004, %v4400
        %v4402 = vand.u32 %v4401, 4294901760
        %4403 = vmatpush1.msra.mxu0 %v4402
        %v4404 = vand.u32 %v3001, 4294901760
        %v4405 = vsub.f32 %v3001, %v4404
        %v4406 = vand.u32 %v4405, 4294901760
        %4407 = vmatprep.subr.mxu0 %v4406
        %v4408 = vand.u32 %v3000, 4294901760
        %v4409 = vsub.f32 %v3000, %v4408
        %v4410 = vand.u32 %v4409, 4294901760
        %4411 = vmatpush1.msra.mxu0 %v4410
        %4412 = vmatprep.subr.mxu0 0.0
        %4413 = vmatpush2.msra.mxu0 0.0
        %4414 = vmatprep.subr.mxu0 0.0
        %4415 = vmatpush2.msra.mxu0 0.0
        %4416 = vmatprep.subr.mxu0 0.0
        %4417 = vmatpush2.msra.mxu0 0.0
        %4418 = vmatprep.subr.mxu0 0.0
        %4419 = vmatpush2.msra.mxu0 0.0
        %4420 = vmatprep.subr.mxu0 0.0
        %4421 = vmatpush2.msra.mxu0 0.0
        %4422 = vmatprep.subr.mxu0 0.0
        %4423 = vmatpush2.msra.mxu0 0.0
        %4424 = vmatprep.subr.mxu0 0.0
        %4425 = vmatpush2.msra.mxu0 0.0
        %4426 = vmatprep.subr.mxu0 0.0
        %4427 = vmatpush2.msra.mxu0 0.0
        %4428 = vmatprep.subr.mxu0 0.0
        %4429 = vmatpush2.msra.mxu0 0.0
        %4430 = vmatprep.subr.mxu0 0.0
        %4431 = vmatpush2.msra.mxu0 0.0
        %4432 = vmatprep.subr.mxu0 0.0
        %4433 = vmatpush2.msra.mxu0 0.0
        %4434 = vmatprep.subr.mxu0 0.0
        %4435 = vmatpush2.msra.mxu0 0.0
        %4436 = vmatprep.subr.mxu0 0.0
        %4437 = vmatpush2.msra.mxu0 0.0
        %4438 = vmatprep.subr.mxu0 0.0
        %4439 = vmatpush2.msra.mxu0 0.0
        %4440 = vmatprep.subr.mxu0 0.0
        %4441 = vmatpush2.msra.mxu0 0.0
        %4442 = vmatprep.subr.mxu0 0.0
        %4443 = vmatpush2.msra.mxu0 0.0
        %4444 = vmatprep.mubr.f32.mxu0 0.0
        %v4445 = vand.u32 %v3064, 4294901760
        %4446 = vmatmul.mubr.f32.gmra.mxu0 %v4445
        %v4447 = vpop.f32.mrf.mxu0
        %v4448 = vadd.f32 %v4145, %v4447
        %v4449 = vpop.f32.mrf.mxu0
        %v4450 = vadd.f32 %v4147, %v4449
        %4451 = vmatprep.mubr.f32.mxu0 0.0
        %v4452 = vand.u32 %v3065, 4294901760
        %4453 = vmatmul.mubr.f32.gmra.mxu0 %v4452
        %v4454 = vpop.f32.mrf.mxu0
        %v4455 = vadd.f32 %v4154, %v4454
        %v4456 = vpop.f32.mrf.mxu0
        %v4457 = vadd.f32 %v4156, %v4456
        %4458 = vmatprep.mubr.f32.mxu0 0.0
        %v4459 = vand.u32 %v3066, 4294901760
        %4460 = vmatmul.mubr.f32.gmra.mxu0 %v4459
        %v4461 = vpop.f32.mrf.mxu0
        %v4462 = vadd.f32 %v4163, %v4461
        %v4463 = vpop.f32.mrf.mxu0
        %v4464 = vadd.f32 %v4165, %v4463
        %4465 = vmatprep.mubr.f32.mxu0 0.0
        %v4466 = vand.u32 %v3067, 4294901760
        %4467 = vmatmul.mubr.f32.gmra.mxu0 %v4466
        %v4468 = vpop.f32.mrf.mxu0
        %v4469 = vadd.f32 %v4172, %v4468
        %v4470 = vpop.f32.mrf.mxu0
        %v4471 = vadd.f32 %v4174, %v4470
        %4472 = vmatprep.mubr.f32.mxu0 0.0
        %v4473 = vand.u32 %v3068, 4294901760
        %4474 = vmatmul.mubr.f32.gmra.mxu0 %v4473
        %v4475 = vpop.f32.mrf.mxu0
        %v4476 = vadd.f32 %v4181, %v4475
        %v4477 = vpop.f32.mrf.mxu0
        %v4478 = vadd.f32 %v4183, %v4477
        %4479 = vmatprep.mubr.f32.mxu0 0.0
        %v4480 = vand.u32 %v3069, 4294901760
        %4481 = vmatmul.mubr.f32.gmra.mxu0 %v4480
        %v4482 = vpop.f32.mrf.mxu0
        %v4483 = vadd.f32 %v4190, %v4482
        %v4484 = vpop.f32.mrf.mxu0
        %v4485 = vadd.f32 %v4192, %v4484
        %4486 = vmatprep.mubr.f32.mxu0 0.0
        %v4487 = vand.u32 %v3070, 4294901760
        %4488 = vmatmul.mubr.f32.gmra.mxu0 %v4487
        %v4489 = vpop.f32.mrf.mxu0
        %v4490 = vadd.f32 %v4199, %v4489
        %v4491 = vpop.f32.mrf.mxu0
        %v4492 = vadd.f32 %v4201, %v4491
        %4493 = vmatprep.mubr.f32.mxu0 0.0
        %v4494 = vand.u32 %v3071, 4294901760
        %4495 = vmatmul.mubr.f32.gmra.mxu0 %v4494
        %v4496 = vpop.f32.mrf.mxu0
        %v4497 = vadd.f32 %v4208, %v4496
        %v4498 = vpop.f32.mrf.mxu0
        %v4499 = vadd.f32 %v4210, %v4498
        %4500 = vmatprep.mubr.f32.mxu0 0.0
        %v4501 = vand.u32 %v3072, 4294901760
        %4502 = vmatmul.mubr.f32.gmra.mxu0 %v4501
        %v4503 = vpop.f32.mrf.mxu0
        %v4504 = vadd.f32 %v4217, %v4503
        %v4505 = vpop.f32.mrf.mxu0
        %v4506 = vadd.f32 %v4219, %v4505
        %4507 = vmatprep.mubr.f32.mxu0 0.0
        %v4508 = vand.u32 %v3073, 4294901760
        %4509 = vmatmul.mubr.f32.gmra.mxu0 %v4508
        %v4510 = vpop.f32.mrf.mxu0
        %v4511 = vadd.f32 %v4226, %v4510
        %v4512 = vpop.f32.mrf.mxu0
        %v4513 = vadd.f32 %v4228, %v4512
        %4514 = vmatprep.mubr.f32.mxu0 0.0
        %v4515 = vand.u32 %v3074, 4294901760
        %4516 = vmatmul.mubr.f32.gmra.mxu0 %v4515
        %v4517 = vpop.f32.mrf.mxu0
        %v4518 = vadd.f32 %v4235, %v4517
        %v4519 = vpop.f32.mrf.mxu0
        %v4520 = vadd.f32 %v4237, %v4519
        %4521 = vmatprep.mubr.f32.mxu0 0.0
        %v4522 = vand.u32 %v3075, 4294901760
        %4523 = vmatmul.mubr.f32.gmra.mxu0 %v4522
        %v4524 = vpop.f32.mrf.mxu0
        %v4525 = vadd.f32 %v4244, %v4524
        %v4526 = vpop.f32.mrf.mxu0
        %v4527 = vadd.f32 %v4246, %v4526
        %4528 = vmatprep.mubr.f32.mxu0 0.0
        %v4529 = vand.u32 %v3076, 4294901760
        %4530 = vmatmul.mubr.f32.gmra.mxu0 %v4529
        %v4531 = vpop.f32.mrf.mxu0
        %v4532 = vadd.f32 %v4253, %v4531
        %v4533 = vpop.f32.mrf.mxu0
        %v4534 = vadd.f32 %v4255, %v4533
        %4535 = vmatprep.mubr.f32.mxu0 0.0
        %v4536 = vand.u32 %v3077, 4294901760
        %4537 = vmatmul.mubr.f32.gmra.mxu0 %v4536
        %v4538 = vpop.f32.mrf.mxu0
        %v4539 = vadd.f32 %v4262, %v4538
        %v4540 = vpop.f32.mrf.mxu0
        %v4541 = vadd.f32 %v4264, %v4540
        %4542 = vmatprep.mubr.f32.mxu0 0.0
        %v4543 = vand.u32 %v3078, 4294901760
        %4544 = vmatmul.mubr.f32.gmra.mxu0 %v4543
        %v4545 = vpop.f32.mrf.mxu0
        %v4546 = vadd.f32 %v4271, %v4545
        %v4547 = vpop.f32.mrf.mxu0
        %v4548 = vadd.f32 %v4273, %v4547
        %4549 = vmatprep.mubr.f32.mxu0 0.0
        %v4550 = vand.u32 %v3079, 4294901760
        %4551 = vmatmul.mubr.f32.gmra.mxu0 %v4550
        %v4552 = vpop.f32.mrf.mxu0
        %v4553 = vadd.f32 %v4280, %v4552
        %v4554 = vpop.f32.mrf.mxu0
        %v4555 = vadd.f32 %v4282, %v4554
        %4556 = vdwg.mxu0
        %v4557 = vand.u32 %v3061, 4294901760
        %4558 = vmatprep.subr.mxu0 %v4557
        %v4559 = vand.u32 %v3060, 4294901760
        %4560 = vmatpush1.msra.mxu0 %v4559
        %v4561 = vand.u32 %v3057, 4294901760
        %4562 = vmatprep.subr.mxu0 %v4561
        %v4563 = vand.u32 %v3056, 4294901760
        %4564 = vmatpush1.msra.mxu0 %v4563
        %v4565 = vand.u32 %v3053, 4294901760
        %4566 = vmatprep.subr.mxu0 %v4565
        %v4567 = vand.u32 %v3052, 4294901760
        %4568 = vmatpush1.msra.mxu0 %v4567
        %v4569 = vand.u32 %v3049, 4294901760
        %4570 = vmatprep.subr.mxu0 %v4569
        %v4571 = vand.u32 %v3048, 4294901760
        %4572 = vmatpush1.msra.mxu0 %v4571
        %v4573 = vand.u32 %v3045, 4294901760
        %4574 = vmatprep.subr.mxu0 %v4573
        %v4575 = vand.u32 %v3044, 4294901760
        %4576 = vmatpush1.msra.mxu0 %v4575
        %v4577 = vand.u32 %v3041, 4294901760
        %4578 = vmatprep.subr.mxu0 %v4577
        %v4579 = vand.u32 %v3040, 4294901760
        %4580 = vmatpush1.msra.mxu0 %v4579
        %v4581 = vand.u32 %v3037, 4294901760
        %4582 = vmatprep.subr.mxu0 %v4581
        %v4583 = vand.u32 %v3036, 4294901760
        %4584 = vmatpush1.msra.mxu0 %v4583
        %v4585 = vand.u32 %v3033, 4294901760
        %4586 = vmatprep.subr.mxu0 %v4585
        %v4587 = vand.u32 %v3032, 4294901760
        %4588 = vmatpush1.msra.mxu0 %v4587
        %v4589 = vand.u32 %v3029, 4294901760
        %4590 = vmatprep.subr.mxu0 %v4589
        %v4591 = vand.u32 %v3028, 4294901760
        %4592 = vmatpush1.msra.mxu0 %v4591
        %v4593 = vand.u32 %v3025, 4294901760
        %4594 = vmatprep.subr.mxu0 %v4593
        %v4595 = vand.u32 %v3024, 4294901760
        %4596 = vmatpush1.msra.mxu0 %v4595
        %v4597 = vand.u32 %v3021, 4294901760
        %4598 = vmatprep.subr.mxu0 %v4597
        %v4599 = vand.u32 %v3020, 4294901760
        %4600 = vmatpush1.msra.mxu0 %v4599
        %v4601 = vand.u32 %v3017, 4294901760
        %4602 = vmatprep.subr.mxu0 %v4601
        %v4603 = vand.u32 %v3016, 4294901760
        %4604 = vmatpush1.msra.mxu0 %v4603
        %v4605 = vand.u32 %v3013, 4294901760
        %4606 = vmatprep.subr.mxu0 %v4605
        %v4607 = vand.u32 %v3012, 4294901760
        %4608 = vmatpush1.msra.mxu0 %v4607
        %v4609 = vand.u32 %v3009, 4294901760
        %4610 = vmatprep.subr.mxu0 %v4609
        %v4611 = vand.u32 %v3008, 4294901760
        %4612 = vmatpush1.msra.mxu0 %v4611
        %v4613 = vand.u32 %v3005, 4294901760
        %4614 = vmatprep.subr.mxu0 %v4613
        %v4615 = vand.u32 %v3004, 4294901760
        %4616 = vmatpush1.msra.mxu0 %v4615
        %v4617 = vand.u32 %v3001, 4294901760
        %4618 = vmatprep.subr.mxu0 %v4617
        %v4619 = vand.u32 %v3000, 4294901760
        %4620 = vmatpush1.msra.mxu0 %v4619
        %4621 = vmatprep.subr.mxu0 0.0
        %4622 = vmatpush2.msra.mxu0 0.0
        %4623 = vmatprep.subr.mxu0 0.0
        %4624 = vmatpush2.msra.mxu0 0.0
        %4625 = vmatprep.subr.mxu0 0.0
        %4626 = vmatpush2.msra.mxu0 0.0
        %4627 = vmatprep.subr.mxu0 0.0
        %4628 = vmatpush2.msra.mxu0 0.0
        %4629 = vmatprep.subr.mxu0 0.0
        %4630 = vmatpush2.msra.mxu0 0.0
        %4631 = vmatprep.subr.mxu0 0.0
        %4632 = vmatpush2.msra.mxu0 0.0
        %4633 = vmatprep.subr.mxu0 0.0
        %4634 = vmatpush2.msra.mxu0 0.0
        %4635 = vmatprep.subr.mxu0 0.0
        %4636 = vmatpush2.msra.mxu0 0.0
        %4637 = vmatprep.subr.mxu0 0.0
        %4638 = vmatpush2.msra.mxu0 0.0
        %4639 = vmatprep.subr.mxu0 0.0
        %4640 = vmatpush2.msra.mxu0 0.0
        %4641 = vmatprep.subr.mxu0 0.0
        %4642 = vmatpush2.msra.mxu0 0.0
        %4643 = vmatprep.subr.mxu0 0.0
        %4644 = vmatpush2.msra.mxu0 0.0
        %4645 = vmatprep.subr.mxu0 0.0
        %4646 = vmatpush2.msra.mxu0 0.0
        %4647 = vmatprep.subr.mxu0 0.0
        %4648 = vmatpush2.msra.mxu0 0.0
        %4649 = vmatprep.subr.mxu0 0.0
        %4650 = vmatpush2.msra.mxu0 0.0
        %4651 = vmatprep.subr.mxu0 0.0
        %4652 = vmatpush2.msra.mxu0 0.0
        %4653 = vmatprep.mubr.f32.mxu0 0.0
        %v4654 = vand.u32 %v3064, 4294901760
        %4655 = vmatmul.mubr.f32.gmra.mxu0 %v4654
        %v4656 = vpop.f32.mrf.mxu0
        %v4657 = vadd.f32 %v4448, %v4656
        %v4658 = vpop.f32.mrf.mxu0
        %v4659 = vadd.f32 %v4450, %v4658
        %4660 = vmatprep.mubr.f32.mxu0 0.0
        %v4661 = vand.u32 %v3065, 4294901760
        %4662 = vmatmul.mubr.f32.gmra.mxu0 %v4661
        %v4663 = vpop.f32.mrf.mxu0
        %v4664 = vadd.f32 %v4455, %v4663
        %v4665 = vpop.f32.mrf.mxu0
        %v4666 = vadd.f32 %v4457, %v4665
        %4667 = vmatprep.mubr.f32.mxu0 0.0
        %v4668 = vand.u32 %v3066, 4294901760
        %4669 = vmatmul.mubr.f32.gmra.mxu0 %v4668
        %v4670 = vpop.f32.mrf.mxu0
        %v4671 = vadd.f32 %v4462, %v4670
        %v4672 = vpop.f32.mrf.mxu0
        %v4673 = vadd.f32 %v4464, %v4672
        %4674 = vmatprep.mubr.f32.mxu0 0.0
        %v4675 = vand.u32 %v3067, 4294901760
        %4676 = vmatmul.mubr.f32.gmra.mxu0 %v4675
        %v4677 = vpop.f32.mrf.mxu0
        %v4678 = vadd.f32 %v4469, %v4677
        %v4679 = vpop.f32.mrf.mxu0
        %v4680 = vadd.f32 %v4471, %v4679
        %4681 = vmatprep.mubr.f32.mxu0 0.0
        %v4682 = vand.u32 %v3068, 4294901760
        %4683 = vmatmul.mubr.f32.gmra.mxu0 %v4682
        %v4684 = vpop.f32.mrf.mxu0
        %v4685 = vadd.f32 %v4476, %v4684
        %v4686 = vpop.f32.mrf.mxu0
        %v4687 = vadd.f32 %v4478, %v4686
        %4688 = vmatprep.mubr.f32.mxu0 0.0
        %v4689 = vand.u32 %v3069, 4294901760
        %4690 = vmatmul.mubr.f32.gmra.mxu0 %v4689
        %v4691 = vpop.f32.mrf.mxu0
        %v4692 = vadd.f32 %v4483, %v4691
        %v4693 = vpop.f32.mrf.mxu0
        %v4694 = vadd.f32 %v4485, %v4693
        %4695 = vmatprep.mubr.f32.mxu0 0.0
        %v4696 = vand.u32 %v3070, 4294901760
        %4697 = vmatmul.mubr.f32.gmra.mxu0 %v4696
        %v4698 = vpop.f32.mrf.mxu0
        %v4699 = vadd.f32 %v4490, %v4698
        %v4700 = vpop.f32.mrf.mxu0
        %v4701 = vadd.f32 %v4492, %v4700
        %4702 = vmatprep.mubr.f32.mxu0 0.0
        %v4703 = vand.u32 %v3071, 4294901760
        %4704 = vmatmul.mubr.f32.gmra.mxu0 %v4703
        %v4705 = vpop.f32.mrf.mxu0
        %v4706 = vadd.f32 %v4497, %v4705
        %v4707 = vpop.f32.mrf.mxu0
        %v4708 = vadd.f32 %v4499, %v4707
        %4709 = vmatprep.mubr.f32.mxu0 0.0
        %v4710 = vand.u32 %v3072, 4294901760
        %4711 = vmatmul.mubr.f32.gmra.mxu0 %v4710
        %v4712 = vpop.f32.mrf.mxu0
        %v4713 = vadd.f32 %v4504, %v4712
        %v4714 = vpop.f32.mrf.mxu0
        %v4715 = vadd.f32 %v4506, %v4714
        %4716 = vmatprep.mubr.f32.mxu0 0.0
        %v4717 = vand.u32 %v3073, 4294901760
        %4718 = vmatmul.mubr.f32.gmra.mxu0 %v4717
        %v4719 = vpop.f32.mrf.mxu0
        %v4720 = vadd.f32 %v4511, %v4719
        %v4721 = vpop.f32.mrf.mxu0
        %v4722 = vadd.f32 %v4513, %v4721
        %4723 = vmatprep.mubr.f32.mxu0 0.0
        %v4724 = vand.u32 %v3074, 4294901760
        %4725 = vmatmul.mubr.f32.gmra.mxu0 %v4724
        %v4726 = vpop.f32.mrf.mxu0
        %v4727 = vadd.f32 %v4518, %v4726
        %v4728 = vpop.f32.mrf.mxu0
        %v4729 = vadd.f32 %v4520, %v4728
        %4730 = vmatprep.mubr.f32.mxu0 0.0
        %v4731 = vand.u32 %v3075, 4294901760
        %4732 = vmatmul.mubr.f32.gmra.mxu0 %v4731
        %v4733 = vpop.f32.mrf.mxu0
        %v4734 = vadd.f32 %v4525, %v4733
        %v4735 = vpop.f32.mrf.mxu0
        %v4736 = vadd.f32 %v4527, %v4735
        %4737 = vmatprep.mubr.f32.mxu0 0.0
        %v4738 = vand.u32 %v3076, 4294901760
        %4739 = vmatmul.mubr.f32.gmra.mxu0 %v4738
        %v4740 = vpop.f32.mrf.mxu0
        %v4741 = vadd.f32 %v4532, %v4740
        %v4742 = vpop.f32.mrf.mxu0
        %v4743 = vadd.f32 %v4534, %v4742
        %4744 = vmatprep.mubr.f32.mxu0 0.0
        %v4745 = vand.u32 %v3077, 4294901760
        %4746 = vmatmul.mubr.f32.gmra.mxu0 %v4745
        %v4747 = vpop.f32.mrf.mxu0
        %v4748 = vadd.f32 %v4539, %v4747
        %v4749 = vpop.f32.mrf.mxu0
        %v4750 = vadd.f32 %v4541, %v4749
        %4751 = vmatprep.mubr.f32.mxu0 0.0
        %v4752 = vand.u32 %v3078, 4294901760
        %4753 = vmatmul.mubr.f32.gmra.mxu0 %v4752
        %v4754 = vpop.f32.mrf.mxu0
        %v4755 = vadd.f32 %v4546, %v4754
        %v4756 = vpop.f32.mrf.mxu0
        %v4757 = vadd.f32 %v4548, %v4756
        %4758 = vmatprep.mubr.f32.mxu0 0.0
        %v4759 = vand.u32 %v3079, 4294901760
        %4760 = vmatmul.mubr.f32.gmra.mxu0 %v4759
        %v4761 = vpop.f32.mrf.mxu0
        %v4762 = vadd.f32 %v4553, %v4761
        %v4763 = vpop.f32.mrf.mxu0
        %v4764 = vadd.f32 %v4555, %v4763
        %4765 = vdwg.mxu0
        %v4766 = vand.u32 %v3063, 4294901760
        %4767 = vmatprep.subr.mxu0 %v4766
        %v4768 = vand.u32 %v3062, 4294901760
        %4769 = vmatpush1.msra.mxu0 %v4768
        %v4770 = vand.u32 %v3059, 4294901760
        %4771 = vmatprep.subr.mxu0 %v4770
        %v4772 = vand.u32 %v3058, 4294901760
        %4773 = vmatpush1.msra.mxu0 %v4772
        %v4774 = vand.u32 %v3055, 4294901760
        %4775 = vmatprep.subr.mxu0 %v4774
        %v4776 = vand.u32 %v3054, 4294901760
        %4777 = vmatpush1.msra.mxu0 %v4776
        %v4778 = vand.u32 %v3051, 4294901760
        %4779 = vmatprep.subr.mxu0 %v4778
        %v4780 = vand.u32 %v3050, 4294901760
        %4781 = vmatpush1.msra.mxu0 %v4780
        %v4782 = vand.u32 %v3047, 4294901760
        %4783 = vmatprep.subr.mxu0 %v4782
        %v4784 = vand.u32 %v3046, 4294901760
        %4785 = vmatpush1.msra.mxu0 %v4784
        %v4786 = vand.u32 %v3043, 4294901760
        %4787 = vmatprep.subr.mxu0 %v4786
        %v4788 = vand.u32 %v3042, 4294901760
        %4789 = vmatpush1.msra.mxu0 %v4788
        %v4790 = vand.u32 %v3039, 4294901760
        %4791 = vmatprep.subr.mxu0 %v4790
        %v4792 = vand.u32 %v3038, 4294901760
        %4793 = vmatpush1.msra.mxu0 %v4792
        %v4794 = vand.u32 %v3035, 4294901760
        %4795 = vmatprep.subr.mxu0 %v4794
        %v4796 = vand.u32 %v3034, 4294901760
        %4797 = vmatpush1.msra.mxu0 %v4796
        %v4798 = vand.u32 %v3031, 4294901760
        %4799 = vmatprep.subr.mxu0 %v4798
        %v4800 = vand.u32 %v3030, 4294901760
        %4801 = vmatpush1.msra.mxu0 %v4800
        %v4802 = vand.u32 %v3027, 4294901760
        %4803 = vmatprep.subr.mxu0 %v4802
        %v4804 = vand.u32 %v3026, 4294901760
        %4805 = vmatpush1.msra.mxu0 %v4804
        %v4806 = vand.u32 %v3023, 4294901760
        %4807 = vmatprep.subr.mxu0 %v4806
        %v4808 = vand.u32 %v3022, 4294901760
        %4809 = vmatpush1.msra.mxu0 %v4808
        %v4810 = vand.u32 %v3019, 4294901760
        %4811 = vmatprep.subr.mxu0 %v4810
        %v4812 = vand.u32 %v3018, 4294901760
        %4813 = vmatpush1.msra.mxu0 %v4812
        %v4814 = vand.u32 %v3015, 4294901760
        %4815 = vmatprep.subr.mxu0 %v4814
        %v4816 = vand.u32 %v3014, 4294901760
        %4817 = vmatpush1.msra.mxu0 %v4816
        %v4818 = vand.u32 %v3011, 4294901760
        %4819 = vmatprep.subr.mxu0 %v4818
        %v4820 = vand.u32 %v3010, 4294901760
        %4821 = vmatpush1.msra.mxu0 %v4820
        %v4822 = vand.u32 %v3007, 4294901760
        %4823 = vmatprep.subr.mxu0 %v4822
        %v4824 = vand.u32 %v3006, 4294901760
        %4825 = vmatpush1.msra.mxu0 %v4824
        %v4826 = vand.u32 %v3003, 4294901760
        %4827 = vmatprep.subr.mxu0 %v4826
        %v4828 = vand.u32 %v3002, 4294901760
        %4829 = vmatpush1.msra.mxu0 %v4828
        %4830 = vmatprep.subr.mxu0 0.0
        %4831 = vmatpush2.msra.mxu0 0.0
        %4832 = vmatprep.subr.mxu0 0.0
        %4833 = vmatpush2.msra.mxu0 0.0
        %4834 = vmatprep.subr.mxu0 0.0
        %4835 = vmatpush2.msra.mxu0 0.0
        %4836 = vmatprep.subr.mxu0 0.0
        %4837 = vmatpush2.msra.mxu0 0.0
        %4838 = vmatprep.subr.mxu0 0.0
        %4839 = vmatpush2.msra.mxu0 0.0
        %4840 = vmatprep.subr.mxu0 0.0
        %4841 = vmatpush2.msra.mxu0 0.0
        %4842 = vmatprep.subr.mxu0 0.0
        %4843 = vmatpush2.msra.mxu0 0.0
        %4844 = vmatprep.subr.mxu0 0.0
        %4845 = vmatpush2.msra.mxu0 0.0
        %4846 = vmatprep.subr.mxu0 0.0
        %4847 = vmatpush2.msra.mxu0 0.0
        %4848 = vmatprep.subr.mxu0 0.0
        %4849 = vmatpush2.msra.mxu0 0.0
        %4850 = vmatprep.subr.mxu0 0.0
        %4851 = vmatpush2.msra.mxu0 0.0
        %4852 = vmatprep.subr.mxu0 0.0
        %4853 = vmatpush2.msra.mxu0 0.0
        %4854 = vmatprep.subr.mxu0 0.0
        %4855 = vmatpush2.msra.mxu0 0.0
        %4856 = vmatprep.subr.mxu0 0.0
        %4857 = vmatpush2.msra.mxu0 0.0
        %4858 = vmatprep.subr.mxu0 0.0
        %4859 = vmatpush2.msra.mxu0 0.0
        %4860 = vmatprep.subr.mxu0 0.0
        %4861 = vmatpush2.msra.mxu0 0.0
        %4862 = vmatprep.mubr.f32.mxu0 0.0
        %v4863 = vand.u32 %v3064, 4294901760
        %v4864 = vsub.f32 %v3064, %v4863
        %v4865 = vand.u32 %v4864, 4294901760
        %v4866 = vsub.f32 %v4864, %v4865
        %v4867 = vand.u32 %v4866, 4294901760
        %4868 = vmatmul.mubr.f32.gmra.mxu0 %v4867
        %v4869 = vpop.f32.mrf.mxu0
        %v4870 = vadd.f32 %v3099, %v4869
        %v4871 = vpop.f32.mrf.mxu0
        %v4872 = vadd.f32 %v3099, %v4871
        %4873 = vmatprep.mubr.f32.mxu0 0.0
        %v4874 = vand.u32 %v3065, 4294901760
        %v4875 = vsub.f32 %v3065, %v4874
        %v4876 = vand.u32 %v4875, 4294901760
        %v4877 = vsub.f32 %v4875, %v4876
        %v4878 = vand.u32 %v4877, 4294901760
        %4879 = vmatmul.mubr.f32.gmra.mxu0 %v4878
        %v4880 = vpop.f32.mrf.mxu0
        %v4881 = vadd.f32 %v3104, %v4880
        %v4882 = vpop.f32.mrf.mxu0
        %v4883 = vadd.f32 %v3104, %v4882
        %4884 = vmatprep.mubr.f32.mxu0 0.0
        %v4885 = vand.u32 %v3066, 4294901760
        %v4886 = vsub.f32 %v3066, %v4885
        %v4887 = vand.u32 %v4886, 4294901760
        %v4888 = vsub.f32 %v4886, %v4887
        %v4889 = vand.u32 %v4888, 4294901760
        %4890 = vmatmul.mubr.f32.gmra.mxu0 %v4889
        %v4891 = vpop.f32.mrf.mxu0
        %v4892 = vadd.f32 %v3109, %v4891
        %v4893 = vpop.f32.mrf.mxu0
        %v4894 = vadd.f32 %v3109, %v4893
        %4895 = vmatprep.mubr.f32.mxu0 0.0
        %v4896 = vand.u32 %v3067, 4294901760
        %v4897 = vsub.f32 %v3067, %v4896
        %v4898 = vand.u32 %v4897, 4294901760
        %v4899 = vsub.f32 %v4897, %v4898
        %v4900 = vand.u32 %v4899, 4294901760
        %4901 = vmatmul.mubr.f32.gmra.mxu0 %v4900
        %v4902 = vpop.f32.mrf.mxu0
        %v4903 = vadd.f32 %v3114, %v4902
        %v4904 = vpop.f32.mrf.mxu0
        %v4905 = vadd.f32 %v3114, %v4904
        %4906 = vmatprep.mubr.f32.mxu0 0.0
        %v4907 = vand.u32 %v3068, 4294901760
        %v4908 = vsub.f32 %v3068, %v4907
        %v4909 = vand.u32 %v4908, 4294901760
        %v4910 = vsub.f32 %v4908, %v4909
        %v4911 = vand.u32 %v4910, 4294901760
        %4912 = vmatmul.mubr.f32.gmra.mxu0 %v4911
        %v4913 = vpop.f32.mrf.mxu0
        %v4914 = vadd.f32 %v3119, %v4913
        %v4915 = vpop.f32.mrf.mxu0
        %v4916 = vadd.f32 %v3119, %v4915
        %4917 = vmatprep.mubr.f32.mxu0 0.0
        %v4918 = vand.u32 %v3069, 4294901760
        %v4919 = vsub.f32 %v3069, %v4918
        %v4920 = vand.u32 %v4919, 4294901760
        %v4921 = vsub.f32 %v4919, %v4920
        %v4922 = vand.u32 %v4921, 4294901760
        %4923 = vmatmul.mubr.f32.gmra.mxu0 %v4922
        %v4924 = vpop.f32.mrf.mxu0
        %v4925 = vadd.f32 %v3124, %v4924
        %v4926 = vpop.f32.mrf.mxu0
        %v4927 = vadd.f32 %v3124, %v4926
        %4928 = vmatprep.mubr.f32.mxu0 0.0
        %v4929 = vand.u32 %v3070, 4294901760
        %v4930 = vsub.f32 %v3070, %v4929
        %v4931 = vand.u32 %v4930, 4294901760
        %v4932 = vsub.f32 %v4930, %v4931
        %v4933 = vand.u32 %v4932, 4294901760
        %4934 = vmatmul.mubr.f32.gmra.mxu0 %v4933
        %v4935 = vpop.f32.mrf.mxu0
        %v4936 = vadd.f32 %v3129, %v4935
        %v4937 = vpop.f32.mrf.mxu0
        %v4938 = vadd.f32 %v3129, %v4937
        %4939 = vmatprep.mubr.f32.mxu0 0.0
        %v4940 = vand.u32 %v3071, 4294901760
        %v4941 = vsub.f32 %v3071, %v4940
        %v4942 = vand.u32 %v4941, 4294901760
        %v4943 = vsub.f32 %v4941, %v4942
        %v4944 = vand.u32 %v4943, 4294901760
        %4945 = vmatmul.mubr.f32.gmra.mxu0 %v4944
        %v4946 = vpop.f32.mrf.mxu0
        %v4947 = vadd.f32 %v3134, %v4946
        %v4948 = vpop.f32.mrf.mxu0
        %v4949 = vadd.f32 %v3134, %v4948
        %4950 = vmatprep.mubr.f32.mxu0 0.0
        %v4951 = vand.u32 %v3072, 4294901760
        %v4952 = vsub.f32 %v3072, %v4951
        %v4953 = vand.u32 %v4952, 4294901760
        %v4954 = vsub.f32 %v4952, %v4953
        %v4955 = vand.u32 %v4954, 4294901760
        %4956 = vmatmul.mubr.f32.gmra.mxu0 %v4955
        %v4957 = vpop.f32.mrf.mxu0
        %v4958 = vadd.f32 %v3139, %v4957
        %v4959 = vpop.f32.mrf.mxu0
        %v4960 = vadd.f32 %v3139, %v4959
        %4961 = vmatprep.mubr.f32.mxu0 0.0
        %v4962 = vand.u32 %v3073, 4294901760
        %v4963 = vsub.f32 %v3073, %v4962
        %v4964 = vand.u32 %v4963, 4294901760
        %v4965 = vsub.f32 %v4963, %v4964
        %v4966 = vand.u32 %v4965, 4294901760
        %4967 = vmatmul.mubr.f32.gmra.mxu0 %v4966
        %v4968 = vpop.f32.mrf.mxu0
        %v4969 = vadd.f32 %v3144, %v4968
        %v4970 = vpop.f32.mrf.mxu0
        %v4971 = vadd.f32 %v3144, %v4970
        %4972 = vmatprep.mubr.f32.mxu0 0.0
        %v4973 = vand.u32 %v3074, 4294901760
        %v4974 = vsub.f32 %v3074, %v4973
        %v4975 = vand.u32 %v4974, 4294901760
        %v4976 = vsub.f32 %v4974, %v4975
        %v4977 = vand.u32 %v4976, 4294901760
        %4978 = vmatmul.mubr.f32.gmra.mxu0 %v4977
        %v4979 = vpop.f32.mrf.mxu0
        %v4980 = vadd.f32 %v3149, %v4979
        %v4981 = vpop.f32.mrf.mxu0
        %v4982 = vadd.f32 %v3149, %v4981
        %4983 = vmatprep.mubr.f32.mxu0 0.0
        %v4984 = vand.u32 %v3075, 4294901760
        %v4985 = vsub.f32 %v3075, %v4984
        %v4986 = vand.u32 %v4985, 4294901760
        %v4987 = vsub.f32 %v4985, %v4986
        %v4988 = vand.u32 %v4987, 4294901760
        %4989 = vmatmul.mubr.f32.gmra.mxu0 %v4988
        %v4990 = vpop.f32.mrf.mxu0
        %v4991 = vadd.f32 %v3154, %v4990
        %v4992 = vpop.f32.mrf.mxu0
        %v4993 = vadd.f32 %v3154, %v4992
        %4994 = vmatprep.mubr.f32.mxu0 0.0
        %v4995 = vand.u32 %v3076, 4294901760
        %v4996 = vsub.f32 %v3076, %v4995
        %v4997 = vand.u32 %v4996, 4294901760
        %v4998 = vsub.f32 %v4996, %v4997
        %v4999 = vand.u32 %v4998, 4294901760
        %5000 = vmatmul.mubr.f32.gmra.mxu0 %v4999
        %v5001 = vpop.f32.mrf.mxu0
        %v5002 = vadd.f32 %v3159, %v5001
        %v5003 = vpop.f32.mrf.mxu0
        %v5004 = vadd.f32 %v3159, %v5003
        %5005 = vmatprep.mubr.f32.mxu0 0.0
        %v5006 = vand.u32 %v3077, 4294901760
        %v5007 = vsub.f32 %v3077, %v5006
        %v5008 = vand.u32 %v5007, 4294901760
        %v5009 = vsub.f32 %v5007, %v5008
        %v5010 = vand.u32 %v5009, 4294901760
        %5011 = vmatmul.mubr.f32.gmra.mxu0 %v5010
        %v5012 = vpop.f32.mrf.mxu0
        %v5013 = vadd.f32 %v3164, %v5012
        %v5014 = vpop.f32.mrf.mxu0
        %v5015 = vadd.f32 %v3164, %v5014
        %5016 = vmatprep.mubr.f32.mxu0 0.0
        %v5017 = vand.u32 %v3078, 4294901760
        %v5018 = vsub.f32 %v3078, %v5017
        %v5019 = vand.u32 %v5018, 4294901760
        %v5020 = vsub.f32 %v5018, %v5019
        %v5021 = vand.u32 %v5020, 4294901760
        %5022 = vmatmul.mubr.f32.gmra.mxu0 %v5021
        %v5023 = vpop.f32.mrf.mxu0
        %v5024 = vadd.f32 %v3169, %v5023
        %v5025 = vpop.f32.mrf.mxu0
        %v5026 = vadd.f32 %v3169, %v5025
        %5027 = vmatprep.mubr.f32.mxu0 0.0
        %v5028 = vand.u32 %v3079, 4294901760
        %v5029 = vsub.f32 %v3079, %v5028
        %v5030 = vand.u32 %v5029, 4294901760
        %v5031 = vsub.f32 %v5029, %v5030
        %v5032 = vand.u32 %v5031, 4294901760
        %5033 = vmatmul.mubr.f32.gmra.mxu0 %v5032
        %v5034 = vpop.f32.mrf.mxu0
        %v5035 = vadd.f32 %v3174, %v5034
        %v5036 = vpop.f32.mrf.mxu0
        %v5037 = vadd.f32 %v3174, %v5036
        %5038 = vdwg.mxu0
        %v5039 = vand.u32 %v3063, 4294901760
        %v5040 = vsub.f32 %v3063, %v5039
        %v5041 = vand.u32 %v5040, 4294901760
        %v5042 = vsub.f32 %v5040, %v5041
        %v5043 = vand.u32 %v5042, 4294901760
        %5044 = vmatprep.subr.mxu0 %v5043
        %v5045 = vand.u32 %v3062, 4294901760
        %v5046 = vsub.f32 %v3062, %v5045
        %v5047 = vand.u32 %v5046, 4294901760
        %v5048 = vsub.f32 %v5046, %v5047
        %v5049 = vand.u32 %v5048, 4294901760
        %5050 = vmatpush1.msra.mxu0 %v5049
        %v5051 = vand.u32 %v3059, 4294901760
        %v5052 = vsub.f32 %v3059, %v5051
        %v5053 = vand.u32 %v5052, 4294901760
        %v5054 = vsub.f32 %v5052, %v5053
        %v5055 = vand.u32 %v5054, 4294901760
        %5056 = vmatprep.subr.mxu0 %v5055
        %v5057 = vand.u32 %v3058, 4294901760
        %v5058 = vsub.f32 %v3058, %v5057
        %v5059 = vand.u32 %v5058, 4294901760
        %v5060 = vsub.f32 %v5058, %v5059
        %v5061 = vand.u32 %v5060, 4294901760
        %5062 = vmatpush1.msra.mxu0 %v5061
        %v5063 = vand.u32 %v3055, 4294901760
        %v5064 = vsub.f32 %v3055, %v5063
        %v5065 = vand.u32 %v5064, 4294901760
        %v5066 = vsub.f32 %v5064, %v5065
        %v5067 = vand.u32 %v5066, 4294901760
        %5068 = vmatprep.subr.mxu0 %v5067
        %v5069 = vand.u32 %v3054, 4294901760
        %v5070 = vsub.f32 %v3054, %v5069
        %v5071 = vand.u32 %v5070, 4294901760
        %v5072 = vsub.f32 %v5070, %v5071
        %v5073 = vand.u32 %v5072, 4294901760
        %5074 = vmatpush1.msra.mxu0 %v5073
        %v5075 = vand.u32 %v3051, 4294901760
        %v5076 = vsub.f32 %v3051, %v5075
        %v5077 = vand.u32 %v5076, 4294901760
        %v5078 = vsub.f32 %v5076, %v5077
        %v5079 = vand.u32 %v5078, 4294901760
        %5080 = vmatprep.subr.mxu0 %v5079
        %v5081 = vand.u32 %v3050, 4294901760
        %v5082 = vsub.f32 %v3050, %v5081
        %v5083 = vand.u32 %v5082, 4294901760
        %v5084 = vsub.f32 %v5082, %v5083
        %v5085 = vand.u32 %v5084, 4294901760
        %5086 = vmatpush1.msra.mxu0 %v5085
        %v5087 = vand.u32 %v3047, 4294901760
        %v5088 = vsub.f32 %v3047, %v5087
        %v5089 = vand.u32 %v5088, 4294901760
        %v5090 = vsub.f32 %v5088, %v5089
        %v5091 = vand.u32 %v5090, 4294901760
        %5092 = vmatprep.subr.mxu0 %v5091
        %v5093 = vand.u32 %v3046, 4294901760
        %v5094 = vsub.f32 %v3046, %v5093
        %v5095 = vand.u32 %v5094, 4294901760
        %v5096 = vsub.f32 %v5094, %v5095
        %v5097 = vand.u32 %v5096, 4294901760
        %5098 = vmatpush1.msra.mxu0 %v5097
        %v5099 = vand.u32 %v3043, 4294901760
        %v5100 = vsub.f32 %v3043, %v5099
        %v5101 = vand.u32 %v5100, 4294901760
        %v5102 = vsub.f32 %v5100, %v5101
        %v5103 = vand.u32 %v5102, 4294901760
        %5104 = vmatprep.subr.mxu0 %v5103
        %v5105 = vand.u32 %v3042, 4294901760
        %v5106 = vsub.f32 %v3042, %v5105
        %v5107 = vand.u32 %v5106, 4294901760
        %v5108 = vsub.f32 %v5106, %v5107
        %v5109 = vand.u32 %v5108, 4294901760
        %5110 = vmatpush1.msra.mxu0 %v5109
        %v5111 = vand.u32 %v3039, 4294901760
        %v5112 = vsub.f32 %v3039, %v5111
        %v5113 = vand.u32 %v5112, 4294901760
        %v5114 = vsub.f32 %v5112, %v5113
        %v5115 = vand.u32 %v5114, 4294901760
        %5116 = vmatprep.subr.mxu0 %v5115
        %v5117 = vand.u32 %v3038, 4294901760
        %v5118 = vsub.f32 %v3038, %v5117
        %v5119 = vand.u32 %v5118, 4294901760
        %v5120 = vsub.f32 %v5118, %v5119
        %v5121 = vand.u32 %v5120, 4294901760
        %5122 = vmatpush1.msra.mxu0 %v5121
        %v5123 = vand.u32 %v3035, 4294901760
        %v5124 = vsub.f32 %v3035, %v5123
        %v5125 = vand.u32 %v5124, 4294901760
        %v5126 = vsub.f32 %v5124, %v5125
        %v5127 = vand.u32 %v5126, 4294901760
        %5128 = vmatprep.subr.mxu0 %v5127
        %v5129 = vand.u32 %v3034, 4294901760
        %v5130 = vsub.f32 %v3034, %v5129
        %v5131 = vand.u32 %v5130, 4294901760
        %v5132 = vsub.f32 %v5130, %v5131
        %v5133 = vand.u32 %v5132, 4294901760
        %5134 = vmatpush1.msra.mxu0 %v5133
        %v5135 = vand.u32 %v3031, 4294901760
        %v5136 = vsub.f32 %v3031, %v5135
        %v5137 = vand.u32 %v5136, 4294901760
        %v5138 = vsub.f32 %v5136, %v5137
        %v5139 = vand.u32 %v5138, 4294901760
        %5140 = vmatprep.subr.mxu0 %v5139
        %v5141 = vand.u32 %v3030, 4294901760
        %v5142 = vsub.f32 %v3030, %v5141
        %v5143 = vand.u32 %v5142, 4294901760
        %v5144 = vsub.f32 %v5142, %v5143
        %v5145 = vand.u32 %v5144, 4294901760
        %5146 = vmatpush1.msra.mxu0 %v5145
        %v5147 = vand.u32 %v3027, 4294901760
        %v5148 = vsub.f32 %v3027, %v5147
        %v5149 = vand.u32 %v5148, 4294901760
        %v5150 = vsub.f32 %v5148, %v5149
        %v5151 = vand.u32 %v5150, 4294901760
        %5152 = vmatprep.subr.mxu0 %v5151
        %v5153 = vand.u32 %v3026, 4294901760
        %v5154 = vsub.f32 %v3026, %v5153
        %v5155 = vand.u32 %v5154, 4294901760
        %v5156 = vsub.f32 %v5154, %v5155
        %v5157 = vand.u32 %v5156, 4294901760
        %5158 = vmatpush1.msra.mxu0 %v5157
        %v5159 = vand.u32 %v3023, 4294901760
        %v5160 = vsub.f32 %v3023, %v5159
        %v5161 = vand.u32 %v5160, 4294901760
        %v5162 = vsub.f32 %v5160, %v5161
        %v5163 = vand.u32 %v5162, 4294901760
        %5164 = vmatprep.subr.mxu0 %v5163
        %v5165 = vand.u32 %v3022, 4294901760
        %v5166 = vsub.f32 %v3022, %v5165
        %v5167 = vand.u32 %v5166, 4294901760
        %v5168 = vsub.f32 %v5166, %v5167
        %v5169 = vand.u32 %v5168, 4294901760
        %5170 = vmatpush1.msra.mxu0 %v5169
        %v5171 = vand.u32 %v3019, 4294901760
        %v5172 = vsub.f32 %v3019, %v5171
        %v5173 = vand.u32 %v5172, 4294901760
        %v5174 = vsub.f32 %v5172, %v5173
        %v5175 = vand.u32 %v5174, 4294901760
        %5176 = vmatprep.subr.mxu0 %v5175
        %v5177 = vand.u32 %v3018, 4294901760
        %v5178 = vsub.f32 %v3018, %v5177
        %v5179 = vand.u32 %v5178, 4294901760
        %v5180 = vsub.f32 %v5178, %v5179
        %v5181 = vand.u32 %v5180, 4294901760
        %5182 = vmatpush1.msra.mxu0 %v5181
        %v5183 = vand.u32 %v3015, 4294901760
        %v5184 = vsub.f32 %v3015, %v5183
        %v5185 = vand.u32 %v5184, 4294901760
        %v5186 = vsub.f32 %v5184, %v5185
        %v5187 = vand.u32 %v5186, 4294901760
        %5188 = vmatprep.subr.mxu0 %v5187
        %v5189 = vand.u32 %v3014, 4294901760
        %v5190 = vsub.f32 %v3014, %v5189
        %v5191 = vand.u32 %v5190, 4294901760
        %v5192 = vsub.f32 %v5190, %v5191
        %v5193 = vand.u32 %v5192, 4294901760
        %5194 = vmatpush1.msra.mxu0 %v5193
        %v5195 = vand.u32 %v3011, 4294901760
        %v5196 = vsub.f32 %v3011, %v5195
        %v5197 = vand.u32 %v5196, 4294901760
        %v5198 = vsub.f32 %v5196, %v5197
        %v5199 = vand.u32 %v5198, 4294901760
        %5200 = vmatprep.subr.mxu0 %v5199
        %v5201 = vand.u32 %v3010, 4294901760
        %v5202 = vsub.f32 %v3010, %v5201
        %v5203 = vand.u32 %v5202, 4294901760
        %v5204 = vsub.f32 %v5202, %v5203
        %v5205 = vand.u32 %v5204, 4294901760
        %5206 = vmatpush1.msra.mxu0 %v5205
        %v5207 = vand.u32 %v3007, 4294901760
        %v5208 = vsub.f32 %v3007, %v5207
        %v5209 = vand.u32 %v5208, 4294901760
        %v5210 = vsub.f32 %v5208, %v5209
        %v5211 = vand.u32 %v5210, 4294901760
        %5212 = vmatprep.subr.mxu0 %v5211
        %v5213 = vand.u32 %v3006, 4294901760
        %v5214 = vsub.f32 %v3006, %v5213
        %v5215 = vand.u32 %v5214, 4294901760
        %v5216 = vsub.f32 %v5214, %v5215
        %v5217 = vand.u32 %v5216, 4294901760
        %5218 = vmatpush1.msra.mxu0 %v5217
        %v5219 = vand.u32 %v3003, 4294901760
        %v5220 = vsub.f32 %v3003, %v5219
        %v5221 = vand.u32 %v5220, 4294901760
        %v5222 = vsub.f32 %v5220, %v5221
        %v5223 = vand.u32 %v5222, 4294901760
        %5224 = vmatprep.subr.mxu0 %v5223
        %v5225 = vand.u32 %v3002, 4294901760
        %v5226 = vsub.f32 %v3002, %v5225
        %v5227 = vand.u32 %v5226, 4294901760
        %v5228 = vsub.f32 %v5226, %v5227
        %v5229 = vand.u32 %v5228, 4294901760
        %5230 = vmatpush1.msra.mxu0 %v5229
        %5231 = vmatprep.subr.mxu0 0.0
        %5232 = vmatpush2.msra.mxu0 0.0
        %5233 = vmatprep.subr.mxu0 0.0
        %5234 = vmatpush2.msra.mxu0 0.0
        %5235 = vmatprep.subr.mxu0 0.0
        %5236 = vmatpush2.msra.mxu0 0.0
        %5237 = vmatprep.subr.mxu0 0.0
        %5238 = vmatpush2.msra.mxu0 0.0
        %5239 = vmatprep.subr.mxu0 0.0
        %5240 = vmatpush2.msra.mxu0 0.0
        %5241 = vmatprep.subr.mxu0 0.0
        %5242 = vmatpush2.msra.mxu0 0.0
        %5243 = vmatprep.subr.mxu0 0.0
        %5244 = vmatpush2.msra.mxu0 0.0
        %5245 = vmatprep.subr.mxu0 0.0
        %5246 = vmatpush2.msra.mxu0 0.0
        %5247 = vmatprep.subr.mxu0 0.0
        %5248 = vmatpush2.msra.mxu0 0.0
        %5249 = vmatprep.subr.mxu0 0.0
        %5250 = vmatpush2.msra.mxu0 0.0
        %5251 = vmatprep.subr.mxu0 0.0
        %5252 = vmatpush2.msra.mxu0 0.0
        %5253 = vmatprep.subr.mxu0 0.0
        %5254 = vmatpush2.msra.mxu0 0.0
        %5255 = vmatprep.subr.mxu0 0.0
        %5256 = vmatpush2.msra.mxu0 0.0
        %5257 = vmatprep.subr.mxu0 0.0
        %5258 = vmatpush2.msra.mxu0 0.0
        %5259 = vmatprep.subr.mxu0 0.0
        %5260 = vmatpush2.msra.mxu0 0.0
        %5261 = vmatprep.subr.mxu0 0.0
        %5262 = vmatpush2.msra.mxu0 0.0
        %5263 = vmatprep.mubr.f32.mxu0 0.0
        %v5264 = vand.u32 %v3064, 4294901760
        %5265 = vmatmul.mubr.f32.gmra.mxu0 %v5264
        %v5266 = vpop.f32.mrf.mxu0
        %v5267 = vadd.f32 %v4870, %v5266
        %v5268 = vpop.f32.mrf.mxu0
        %v5269 = vadd.f32 %v4872, %v5268
        %5270 = vmatprep.mubr.f32.mxu0 0.0
        %v5271 = vand.u32 %v3065, 4294901760
        %5272 = vmatmul.mubr.f32.gmra.mxu0 %v5271
        %v5273 = vpop.f32.mrf.mxu0
        %v5274 = vadd.f32 %v4881, %v5273
        %v5275 = vpop.f32.mrf.mxu0
        %v5276 = vadd.f32 %v4883, %v5275
        %5277 = vmatprep.mubr.f32.mxu0 0.0
        %v5278 = vand.u32 %v3066, 4294901760
        %5279 = vmatmul.mubr.f32.gmra.mxu0 %v5278
        %v5280 = vpop.f32.mrf.mxu0
        %v5281 = vadd.f32 %v4892, %v5280
        %v5282 = vpop.f32.mrf.mxu0
        %v5283 = vadd.f32 %v4894, %v5282
        %5284 = vmatprep.mubr.f32.mxu0 0.0
        %v5285 = vand.u32 %v3067, 4294901760
        %5286 = vmatmul.mubr.f32.gmra.mxu0 %v5285
        %v5287 = vpop.f32.mrf.mxu0
        %v5288 = vadd.f32 %v4903, %v5287
        %v5289 = vpop.f32.mrf.mxu0
        %v5290 = vadd.f32 %v4905, %v5289
        %5291 = vmatprep.mubr.f32.mxu0 0.0
        %v5292 = vand.u32 %v3068, 4294901760
        %5293 = vmatmul.mubr.f32.gmra.mxu0 %v5292
        %v5294 = vpop.f32.mrf.mxu0
        %v5295 = vadd.f32 %v4914, %v5294
        %v5296 = vpop.f32.mrf.mxu0
        %v5297 = vadd.f32 %v4916, %v5296
        %5298 = vmatprep.mubr.f32.mxu0 0.0
        %v5299 = vand.u32 %v3069, 4294901760
        %5300 = vmatmul.mubr.f32.gmra.mxu0 %v5299
        %v5301 = vpop.f32.mrf.mxu0
        %v5302 = vadd.f32 %v4925, %v5301
        %v5303 = vpop.f32.mrf.mxu0
        %v5304 = vadd.f32 %v4927, %v5303
        %5305 = vmatprep.mubr.f32.mxu0 0.0
        %v5306 = vand.u32 %v3070, 4294901760
        %5307 = vmatmul.mubr.f32.gmra.mxu0 %v5306
        %v5308 = vpop.f32.mrf.mxu0
        %v5309 = vadd.f32 %v4936, %v5308
        %v5310 = vpop.f32.mrf.mxu0
        %v5311 = vadd.f32 %v4938, %v5310
        %5312 = vmatprep.mubr.f32.mxu0 0.0
        %v5313 = vand.u32 %v3071, 4294901760
        %5314 = vmatmul.mubr.f32.gmra.mxu0 %v5313
        %v5315 = vpop.f32.mrf.mxu0
        %v5316 = vadd.f32 %v4947, %v5315
        %v5317 = vpop.f32.mrf.mxu0
        %v5318 = vadd.f32 %v4949, %v5317
        %5319 = vmatprep.mubr.f32.mxu0 0.0
        %v5320 = vand.u32 %v3072, 4294901760
        %5321 = vmatmul.mubr.f32.gmra.mxu0 %v5320
        %v5322 = vpop.f32.mrf.mxu0
        %v5323 = vadd.f32 %v4958, %v5322
        %v5324 = vpop.f32.mrf.mxu0
        %v5325 = vadd.f32 %v4960, %v5324
        %5326 = vmatprep.mubr.f32.mxu0 0.0
        %v5327 = vand.u32 %v3073, 4294901760
        %5328 = vmatmul.mubr.f32.gmra.mxu0 %v5327
        %v5329 = vpop.f32.mrf.mxu0
        %v5330 = vadd.f32 %v4969, %v5329
        %v5331 = vpop.f32.mrf.mxu0
        %v5332 = vadd.f32 %v4971, %v5331
        %5333 = vmatprep.mubr.f32.mxu0 0.0
        %v5334 = vand.u32 %v3074, 4294901760
        %5335 = vmatmul.mubr.f32.gmra.mxu0 %v5334
        %v5336 = vpop.f32.mrf.mxu0
        %v5337 = vadd.f32 %v4980, %v5336
        %v5338 = vpop.f32.mrf.mxu0
        %v5339 = vadd.f32 %v4982, %v5338
        %5340 = vmatprep.mubr.f32.mxu0 0.0
        %v5341 = vand.u32 %v3075, 4294901760
        %5342 = vmatmul.mubr.f32.gmra.mxu0 %v5341
        %v5343 = vpop.f32.mrf.mxu0
        %v5344 = vadd.f32 %v4991, %v5343
        %v5345 = vpop.f32.mrf.mxu0
        %v5346 = vadd.f32 %v4993, %v5345
        %5347 = vmatprep.mubr.f32.mxu0 0.0
        %v5348 = vand.u32 %v3076, 4294901760
        %5349 = vmatmul.mubr.f32.gmra.mxu0 %v5348
        %v5350 = vpop.f32.mrf.mxu0
        %v5351 = vadd.f32 %v5002, %v5350
        %v5352 = vpop.f32.mrf.mxu0
        %v5353 = vadd.f32 %v5004, %v5352
        %5354 = vmatprep.mubr.f32.mxu0 0.0
        %v5355 = vand.u32 %v3077, 4294901760
        %5356 = vmatmul.mubr.f32.gmra.mxu0 %v5355
        %v5357 = vpop.f32.mrf.mxu0
        %v5358 = vadd.f32 %v5013, %v5357
        %v5359 = vpop.f32.mrf.mxu0
        %v5360 = vadd.f32 %v5015, %v5359
        %5361 = vmatprep.mubr.f32.mxu0 0.0
        %v5362 = vand.u32 %v3078, 4294901760
        %5363 = vmatmul.mubr.f32.gmra.mxu0 %v5362
        %v5364 = vpop.f32.mrf.mxu0
        %v5365 = vadd.f32 %v5024, %v5364
        %v5366 = vpop.f32.mrf.mxu0
        %v5367 = vadd.f32 %v5026, %v5366
        %5368 = vmatprep.mubr.f32.mxu0 0.0
        %v5369 = vand.u32 %v3079, 4294901760
        %5370 = vmatmul.mubr.f32.gmra.mxu0 %v5369
        %v5371 = vpop.f32.mrf.mxu0
        %v5372 = vadd.f32 %v5035, %v5371
        %v5373 = vpop.f32.mrf.mxu0
        %v5374 = vadd.f32 %v5037, %v5373
        %5375 = vdwg.mxu0
        %v5376 = vand.u32 %v3063, 4294901760
        %v5377 = vsub.f32 %v3063, %v5376
        %5378 = vmatprep.subr.mxu0 %v5377
        %v5379 = vand.u32 %v3062, 4294901760
        %v5380 = vsub.f32 %v3062, %v5379
        %5381 = vmatpush1.msra.mxu0 %v5380
        %v5382 = vand.u32 %v3059, 4294901760
        %v5383 = vsub.f32 %v3059, %v5382
        %5384 = vmatprep.subr.mxu0 %v5383
        %v5385 = vand.u32 %v3058, 4294901760
        %v5386 = vsub.f32 %v3058, %v5385
        %5387 = vmatpush1.msra.mxu0 %v5386
        %v5388 = vand.u32 %v3055, 4294901760
        %v5389 = vsub.f32 %v3055, %v5388
        %5390 = vmatprep.subr.mxu0 %v5389
        %v5391 = vand.u32 %v3054, 4294901760
        %v5392 = vsub.f32 %v3054, %v5391
        %5393 = vmatpush1.msra.mxu0 %v5392
        %v5394 = vand.u32 %v3051, 4294901760
        %v5395 = vsub.f32 %v3051, %v5394
        %5396 = vmatprep.subr.mxu0 %v5395
        %v5397 = vand.u32 %v3050, 4294901760
        %v5398 = vsub.f32 %v3050, %v5397
        %5399 = vmatpush1.msra.mxu0 %v5398
        %v5400 = vand.u32 %v3047, 4294901760
        %v5401 = vsub.f32 %v3047, %v5400
        %5402 = vmatprep.subr.mxu0 %v5401
        %v5403 = vand.u32 %v3046, 4294901760
        %v5404 = vsub.f32 %v3046, %v5403
        %5405 = vmatpush1.msra.mxu0 %v5404
        %v5406 = vand.u32 %v3043, 4294901760
        %v5407 = vsub.f32 %v3043, %v5406
        %5408 = vmatprep.subr.mxu0 %v5407
        %v5409 = vand.u32 %v3042, 4294901760
        %v5410 = vsub.f32 %v3042, %v5409
        %5411 = vmatpush1.msra.mxu0 %v5410
        %v5412 = vand.u32 %v3039, 4294901760
        %v5413 = vsub.f32 %v3039, %v5412
        %5414 = vmatprep.subr.mxu0 %v5413
        %v5415 = vand.u32 %v3038, 4294901760
        %v5416 = vsub.f32 %v3038, %v5415
        %5417 = vmatpush1.msra.mxu0 %v5416
        %v5418 = vand.u32 %v3035, 4294901760
        %v5419 = vsub.f32 %v3035, %v5418
        %5420 = vmatprep.subr.mxu0 %v5419
        %v5421 = vand.u32 %v3034, 4294901760
        %v5422 = vsub.f32 %v3034, %v5421
        %5423 = vmatpush1.msra.mxu0 %v5422
        %v5424 = vand.u32 %v3031, 4294901760
        %v5425 = vsub.f32 %v3031, %v5424
        %5426 = vmatprep.subr.mxu0 %v5425
        %v5427 = vand.u32 %v3030, 4294901760
        %v5428 = vsub.f32 %v3030, %v5427
        %5429 = vmatpush1.msra.mxu0 %v5428
        %v5430 = vand.u32 %v3027, 4294901760
        %v5431 = vsub.f32 %v3027, %v5430
        %5432 = vmatprep.subr.mxu0 %v5431
        %v5433 = vand.u32 %v3026, 4294901760
        %v5434 = vsub.f32 %v3026, %v5433
        %5435 = vmatpush1.msra.mxu0 %v5434
        %v5436 = vand.u32 %v3023, 4294901760
        %v5437 = vsub.f32 %v3023, %v5436
        %5438 = vmatprep.subr.mxu0 %v5437
        %v5439 = vand.u32 %v3022, 4294901760
        %v5440 = vsub.f32 %v3022, %v5439
        %5441 = vmatpush1.msra.mxu0 %v5440
        %v5442 = vand.u32 %v3019, 4294901760
        %v5443 = vsub.f32 %v3019, %v5442
        %5444 = vmatprep.subr.mxu0 %v5443
        %v5445 = vand.u32 %v3018, 4294901760
        %v5446 = vsub.f32 %v3018, %v5445
        %5447 = vmatpush1.msra.mxu0 %v5446
        %v5448 = vand.u32 %v3015, 4294901760
        %v5449 = vsub.f32 %v3015, %v5448
        %5450 = vmatprep.subr.mxu0 %v5449
        %v5451 = vand.u32 %v3014, 4294901760
        %v5452 = vsub.f32 %v3014, %v5451
        %5453 = vmatpush1.msra.mxu0 %v5452
        %v5454 = vand.u32 %v3011, 4294901760
        %v5455 = vsub.f32 %v3011, %v5454
        %5456 = vmatprep.subr.mxu0 %v5455
        %v5457 = vand.u32 %v3010, 4294901760
        %v5458 = vsub.f32 %v3010, %v5457
        %5459 = vmatpush1.msra.mxu0 %v5458
        %v5460 = vand.u32 %v3007, 4294901760
        %v5461 = vsub.f32 %v3007, %v5460
        %5462 = vmatprep.subr.mxu0 %v5461
        %v5463 = vand.u32 %v3006, 4294901760
        %v5464 = vsub.f32 %v3006, %v5463
        %5465 = vmatpush1.msra.mxu0 %v5464
        %v5466 = vand.u32 %v3003, 4294901760
        %v5467 = vsub.f32 %v3003, %v5466
        %5468 = vmatprep.subr.mxu0 %v5467
        %v5469 = vand.u32 %v3002, 4294901760
        %v5470 = vsub.f32 %v3002, %v5469
        %5471 = vmatpush1.msra.mxu0 %v5470
        %5472 = vmatprep.subr.mxu0 0.0
        %5473 = vmatpush2.msra.mxu0 0.0
        %5474 = vmatprep.subr.mxu0 0.0
        %5475 = vmatpush2.msra.mxu0 0.0
        %5476 = vmatprep.subr.mxu0 0.0
        %5477 = vmatpush2.msra.mxu0 0.0
        %5478 = vmatprep.subr.mxu0 0.0
        %5479 = vmatpush2.msra.mxu0 0.0
        %5480 = vmatprep.subr.mxu0 0.0
        %5481 = vmatpush2.msra.mxu0 0.0
        %5482 = vmatprep.subr.mxu0 0.0
        %5483 = vmatpush2.msra.mxu0 0.0
        %5484 = vmatprep.subr.mxu0 0.0
        %5485 = vmatpush2.msra.mxu0 0.0
        %5486 = vmatprep.subr.mxu0 0.0
        %5487 = vmatpush2.msra.mxu0 0.0
        %5488 = vmatprep.subr.mxu0 0.0
        %5489 = vmatpush2.msra.mxu0 0.0
        %5490 = vmatprep.subr.mxu0 0.0
        %5491 = vmatpush2.msra.mxu0 0.0
        %5492 = vmatprep.subr.mxu0 0.0
        %5493 = vmatpush2.msra.mxu0 0.0
        %5494 = vmatprep.subr.mxu0 0.0
        %5495 = vmatpush2.msra.mxu0 0.0
        %5496 = vmatprep.subr.mxu0 0.0
        %5497 = vmatpush2.msra.mxu0 0.0
        %5498 = vmatprep.subr.mxu0 0.0
        %5499 = vmatpush2.msra.mxu0 0.0
        %5500 = vmatprep.subr.mxu0 0.0
        %5501 = vmatpush2.msra.mxu0 0.0
        %5502 = vmatprep.subr.mxu0 0.0
        %5503 = vmatpush2.msra.mxu0 0.0
        %5504 = vmatprep.mubr.f32.mxu0 0.0
        %v5505 = vand.u32 %v3064, 4294901760
        %v5506 = vsub.f32 %v3064, %v5505
        %5507 = vmatmul.mubr.f32.gmra.mxu0 %v5506
        %v5508 = vpop.f32.mrf.mxu0
        %v5509 = vadd.f32 %v5267, %v5508
        %v5510 = vpop.f32.mrf.mxu0
        %v5511 = vadd.f32 %v5269, %v5510
        %5512 = vmatprep.mubr.f32.mxu0 0.0
        %v5513 = vand.u32 %v3065, 4294901760
        %v5514 = vsub.f32 %v3065, %v5513
        %5515 = vmatmul.mubr.f32.gmra.mxu0 %v5514
        %v5516 = vpop.f32.mrf.mxu0
        %v5517 = vadd.f32 %v5274, %v5516
        %v5518 = vpop.f32.mrf.mxu0
        %v5519 = vadd.f32 %v5276, %v5518
        %5520 = vmatprep.mubr.f32.mxu0 0.0
        %v5521 = vand.u32 %v3066, 4294901760
        %v5522 = vsub.f32 %v3066, %v5521
        %5523 = vmatmul.mubr.f32.gmra.mxu0 %v5522
        %v5524 = vpop.f32.mrf.mxu0
        %v5525 = vadd.f32 %v5281, %v5524
        %v5526 = vpop.f32.mrf.mxu0
        %v5527 = vadd.f32 %v5283, %v5526
        %5528 = vmatprep.mubr.f32.mxu0 0.0
        %v5529 = vand.u32 %v3067, 4294901760
        %v5530 = vsub.f32 %v3067, %v5529
        %5531 = vmatmul.mubr.f32.gmra.mxu0 %v5530
        %v5532 = vpop.f32.mrf.mxu0
        %v5533 = vadd.f32 %v5288, %v5532
        %v5534 = vpop.f32.mrf.mxu0
        %v5535 = vadd.f32 %v5290, %v5534
        %5536 = vmatprep.mubr.f32.mxu0 0.0
        %v5537 = vand.u32 %v3068, 4294901760
        %v5538 = vsub.f32 %v3068, %v5537
        %5539 = vmatmul.mubr.f32.gmra.mxu0 %v5538
        %v5540 = vpop.f32.mrf.mxu0
        %v5541 = vadd.f32 %v5295, %v5540
        %v5542 = vpop.f32.mrf.mxu0
        %v5543 = vadd.f32 %v5297, %v5542
        %5544 = vmatprep.mubr.f32.mxu0 0.0
        %v5545 = vand.u32 %v3069, 4294901760
        %v5546 = vsub.f32 %v3069, %v5545
        %5547 = vmatmul.mubr.f32.gmra.mxu0 %v5546
        %v5548 = vpop.f32.mrf.mxu0
        %v5549 = vadd.f32 %v5302, %v5548
        %v5550 = vpop.f32.mrf.mxu0
        %v5551 = vadd.f32 %v5304, %v5550
        %5552 = vmatprep.mubr.f32.mxu0 0.0
        %v5553 = vand.u32 %v3070, 4294901760
        %v5554 = vsub.f32 %v3070, %v5553
        %5555 = vmatmul.mubr.f32.gmra.mxu0 %v5554
        %v5556 = vpop.f32.mrf.mxu0
        %v5557 = vadd.f32 %v5309, %v5556
        %v5558 = vpop.f32.mrf.mxu0
        %v5559 = vadd.f32 %v5311, %v5558
        %5560 = vmatprep.mubr.f32.mxu0 0.0
        %v5561 = vand.u32 %v3071, 4294901760
        %v5562 = vsub.f32 %v3071, %v5561
        %5563 = vmatmul.mubr.f32.gmra.mxu0 %v5562
        %v5564 = vpop.f32.mrf.mxu0
        %v5565 = vadd.f32 %v5316, %v5564
        %v5566 = vpop.f32.mrf.mxu0
        %v5567 = vadd.f32 %v5318, %v5566
        %5568 = vmatprep.mubr.f32.mxu0 0.0
        %v5569 = vand.u32 %v3072, 4294901760
        %v5570 = vsub.f32 %v3072, %v5569
        %5571 = vmatmul.mubr.f32.gmra.mxu0 %v5570
        %v5572 = vpop.f32.mrf.mxu0
        %v5573 = vadd.f32 %v5323, %v5572
        %v5574 = vpop.f32.mrf.mxu0
        %v5575 = vadd.f32 %v5325, %v5574
        %5576 = vmatprep.mubr.f32.mxu0 0.0
        %v5577 = vand.u32 %v3073, 4294901760
        %v5578 = vsub.f32 %v3073, %v5577
        %5579 = vmatmul.mubr.f32.gmra.mxu0 %v5578
        %v5580 = vpop.f32.mrf.mxu0
        %v5581 = vadd.f32 %v5330, %v5580
        %v5582 = vpop.f32.mrf.mxu0
        %v5583 = vadd.f32 %v5332, %v5582
        %5584 = vmatprep.mubr.f32.mxu0 0.0
        %v5585 = vand.u32 %v3074, 4294901760
        %v5586 = vsub.f32 %v3074, %v5585
        %5587 = vmatmul.mubr.f32.gmra.mxu0 %v5586
        %v5588 = vpop.f32.mrf.mxu0
        %v5589 = vadd.f32 %v5337, %v5588
        %v5590 = vpop.f32.mrf.mxu0
        %v5591 = vadd.f32 %v5339, %v5590
        %5592 = vmatprep.mubr.f32.mxu0 0.0
        %v5593 = vand.u32 %v3075, 4294901760
        %v5594 = vsub.f32 %v3075, %v5593
        %5595 = vmatmul.mubr.f32.gmra.mxu0 %v5594
        %v5596 = vpop.f32.mrf.mxu0
        %v5597 = vadd.f32 %v5344, %v5596
        %v5598 = vpop.f32.mrf.mxu0
        %v5599 = vadd.f32 %v5346, %v5598
        %5600 = vmatprep.mubr.f32.mxu0 0.0
        %v5601 = vand.u32 %v3076, 4294901760
        %v5602 = vsub.f32 %v3076, %v5601
        %5603 = vmatmul.mubr.f32.gmra.mxu0 %v5602
        %v5604 = vpop.f32.mrf.mxu0
        %v5605 = vadd.f32 %v5351, %v5604
        %v5606 = vpop.f32.mrf.mxu0
        %v5607 = vadd.f32 %v5353, %v5606
        %5608 = vmatprep.mubr.f32.mxu0 0.0
        %v5609 = vand.u32 %v3077, 4294901760
        %v5610 = vsub.f32 %v3077, %v5609
        %5611 = vmatmul.mubr.f32.gmra.mxu0 %v5610
        %v5612 = vpop.f32.mrf.mxu0
        %v5613 = vadd.f32 %v5358, %v5612
        %v5614 = vpop.f32.mrf.mxu0
        %v5615 = vadd.f32 %v5360, %v5614
        %5616 = vmatprep.mubr.f32.mxu0 0.0
        %v5617 = vand.u32 %v3078, 4294901760
        %v5618 = vsub.f32 %v3078, %v5617
        %5619 = vmatmul.mubr.f32.gmra.mxu0 %v5618
        %v5620 = vpop.f32.mrf.mxu0
        %v5621 = vadd.f32 %v5365, %v5620
        %v5622 = vpop.f32.mrf.mxu0
        %v5623 = vadd.f32 %v5367, %v5622
        %5624 = vmatprep.mubr.f32.mxu0 0.0
        %v5625 = vand.u32 %v3079, 4294901760
        %v5626 = vsub.f32 %v3079, %v5625
        %5627 = vmatmul.mubr.f32.gmra.mxu0 %v5626
        %v5628 = vpop.f32.mrf.mxu0
        %v5629 = vadd.f32 %v5372, %v5628
        %v5630 = vpop.f32.mrf.mxu0
        %v5631 = vadd.f32 %v5374, %v5630
        %5632 = vdwg.mxu0
        %v5633 = vand.u32 %v3063, 4294901760
        %5634 = vmatprep.subr.mxu0 %v5633
        %v5635 = vand.u32 %v3062, 4294901760
        %5636 = vmatpush1.msra.mxu0 %v5635
        %v5637 = vand.u32 %v3059, 4294901760
        %5638 = vmatprep.subr.mxu0 %v5637
        %v5639 = vand.u32 %v3058, 4294901760
        %5640 = vmatpush1.msra.mxu0 %v5639
        %v5641 = vand.u32 %v3055, 4294901760
        %5642 = vmatprep.subr.mxu0 %v5641
        %v5643 = vand.u32 %v3054, 4294901760
        %5644 = vmatpush1.msra.mxu0 %v5643
        %v5645 = vand.u32 %v3051, 4294901760
        %5646 = vmatprep.subr.mxu0 %v5645
        %v5647 = vand.u32 %v3050, 4294901760
        %5648 = vmatpush1.msra.mxu0 %v5647
        %v5649 = vand.u32 %v3047, 4294901760
        %5650 = vmatprep.subr.mxu0 %v5649
        %v5651 = vand.u32 %v3046, 4294901760
        %5652 = vmatpush1.msra.mxu0 %v5651
        %v5653 = vand.u32 %v3043, 4294901760
        %5654 = vmatprep.subr.mxu0 %v5653
        %v5655 = vand.u32 %v3042, 4294901760
        %5656 = vmatpush1.msra.mxu0 %v5655
        %v5657 = vand.u32 %v3039, 4294901760
        %5658 = vmatprep.subr.mxu0 %v5657
        %v5659 = vand.u32 %v3038, 4294901760
        %5660 = vmatpush1.msra.mxu0 %v5659
        %v5661 = vand.u32 %v3035, 4294901760
        %5662 = vmatprep.subr.mxu0 %v5661
        %v5663 = vand.u32 %v3034, 4294901760
        %5664 = vmatpush1.msra.mxu0 %v5663
        %v5665 = vand.u32 %v3031, 4294901760
        %5666 = vmatprep.subr.mxu0 %v5665
        %v5667 = vand.u32 %v3030, 4294901760
        %5668 = vmatpush1.msra.mxu0 %v5667
        %v5669 = vand.u32 %v3027, 4294901760
        %5670 = vmatprep.subr.mxu0 %v5669
        %v5671 = vand.u32 %v3026, 4294901760
        %5672 = vmatpush1.msra.mxu0 %v5671
        %v5673 = vand.u32 %v3023, 4294901760
        %5674 = vmatprep.subr.mxu0 %v5673
        %v5675 = vand.u32 %v3022, 4294901760
        %5676 = vmatpush1.msra.mxu0 %v5675
        %v5677 = vand.u32 %v3019, 4294901760
        %5678 = vmatprep.subr.mxu0 %v5677
        %v5679 = vand.u32 %v3018, 4294901760
        %5680 = vmatpush1.msra.mxu0 %v5679
        %v5681 = vand.u32 %v3015, 4294901760
        %5682 = vmatprep.subr.mxu0 %v5681
        %v5683 = vand.u32 %v3014, 4294901760
        %5684 = vmatpush1.msra.mxu0 %v5683
        %v5685 = vand.u32 %v3011, 4294901760
        %5686 = vmatprep.subr.mxu0 %v5685
        %v5687 = vand.u32 %v3010, 4294901760
        %5688 = vmatpush1.msra.mxu0 %v5687
        %v5689 = vand.u32 %v3007, 4294901760
        %5690 = vmatprep.subr.mxu0 %v5689
        %v5691 = vand.u32 %v3006, 4294901760
        %5692 = vmatpush1.msra.mxu0 %v5691
        %v5693 = vand.u32 %v3003, 4294901760
        %5694 = vmatprep.subr.mxu0 %v5693
        %v5695 = vand.u32 %v3002, 4294901760
        %5696 = vmatpush1.msra.mxu0 %v5695
        %5697 = vmatprep.subr.mxu0 0.0
        %5698 = vmatpush2.msra.mxu0 0.0
        %5699 = vmatprep.subr.mxu0 0.0
        %5700 = vmatpush2.msra.mxu0 0.0
        %5701 = vmatprep.subr.mxu0 0.0
        %5702 = vmatpush2.msra.mxu0 0.0
        %5703 = vmatprep.subr.mxu0 0.0
        %5704 = vmatpush2.msra.mxu0 0.0
        %5705 = vmatprep.subr.mxu0 0.0
        %5706 = vmatpush2.msra.mxu0 0.0
        %5707 = vmatprep.subr.mxu0 0.0
        %5708 = vmatpush2.msra.mxu0 0.0
        %5709 = vmatprep.subr.mxu0 0.0
        %5710 = vmatpush2.msra.mxu0 0.0
        %5711 = vmatprep.subr.mxu0 0.0
        %5712 = vmatpush2.msra.mxu0 0.0
        %5713 = vmatprep.subr.mxu0 0.0
        %5714 = vmatpush2.msra.mxu0 0.0
        %5715 = vmatprep.subr.mxu0 0.0
        %5716 = vmatpush2.msra.mxu0 0.0
        %5717 = vmatprep.subr.mxu0 0.0
        %5718 = vmatpush2.msra.mxu0 0.0
        %5719 = vmatprep.subr.mxu0 0.0
        %5720 = vmatpush2.msra.mxu0 0.0
        %5721 = vmatprep.subr.mxu0 0.0
        %5722 = vmatpush2.msra.mxu0 0.0
        %5723 = vmatprep.subr.mxu0 0.0
        %5724 = vmatpush2.msra.mxu0 0.0
        %5725 = vmatprep.subr.mxu0 0.0
        %5726 = vmatpush2.msra.mxu0 0.0
        %5727 = vmatprep.subr.mxu0 0.0
        %5728 = vmatpush2.msra.mxu0 0.0
        %5729 = vmatprep.mubr.f32.mxu0 0.0
        %v5730 = vand.u32 %v3064, 4294901760
        %v5731 = vsub.f32 %v3064, %v5730
        %v5732 = vand.u32 %v5731, 4294901760
        %5733 = vmatmul.mubr.f32.gmra.mxu0 %v5732
        %v5734 = vpop.f32.mrf.mxu0
        %v5735 = vadd.f32 %v5509, %v5734
        %v5736 = vpop.f32.mrf.mxu0
        %v5737 = vadd.f32 %v5511, %v5736
        %5738 = vmatprep.mubr.f32.mxu0 0.0
        %v5739 = vand.u32 %v3065, 4294901760
        %v5740 = vsub.f32 %v3065, %v5739
        %v5741 = vand.u32 %v5740, 4294901760
        %5742 = vmatmul.mubr.f32.gmra.mxu0 %v5741
        %v5743 = vpop.f32.mrf.mxu0
        %v5744 = vadd.f32 %v5517, %v5743
        %v5745 = vpop.f32.mrf.mxu0
        %v5746 = vadd.f32 %v5519, %v5745
        %5747 = vmatprep.mubr.f32.mxu0 0.0
        %v5748 = vand.u32 %v3066, 4294901760
        %v5749 = vsub.f32 %v3066, %v5748
        %v5750 = vand.u32 %v5749, 4294901760
        %5751 = vmatmul.mubr.f32.gmra.mxu0 %v5750
        %v5752 = vpop.f32.mrf.mxu0
        %v5753 = vadd.f32 %v5525, %v5752
        %v5754 = vpop.f32.mrf.mxu0
        %v5755 = vadd.f32 %v5527, %v5754
        %5756 = vmatprep.mubr.f32.mxu0 0.0
        %v5757 = vand.u32 %v3067, 4294901760
        %v5758 = vsub.f32 %v3067, %v5757
        %v5759 = vand.u32 %v5758, 4294901760
        %5760 = vmatmul.mubr.f32.gmra.mxu0 %v5759
        %v5761 = vpop.f32.mrf.mxu0
        %v5762 = vadd.f32 %v5533, %v5761
        %v5763 = vpop.f32.mrf.mxu0
        %v5764 = vadd.f32 %v5535, %v5763
        %5765 = vmatprep.mubr.f32.mxu0 0.0
        %v5766 = vand.u32 %v3068, 4294901760
        %v5767 = vsub.f32 %v3068, %v5766
        %v5768 = vand.u32 %v5767, 4294901760
        %5769 = vmatmul.mubr.f32.gmra.mxu0 %v5768
        %v5770 = vpop.f32.mrf.mxu0
        %v5771 = vadd.f32 %v5541, %v5770
        %v5772 = vpop.f32.mrf.mxu0
        %v5773 = vadd.f32 %v5543, %v5772
        %5774 = vmatprep.mubr.f32.mxu0 0.0
        %v5775 = vand.u32 %v3069, 4294901760
        %v5776 = vsub.f32 %v3069, %v5775
        %v5777 = vand.u32 %v5776, 4294901760
        %5778 = vmatmul.mubr.f32.gmra.mxu0 %v5777
        %v5779 = vpop.f32.mrf.mxu0
        %v5780 = vadd.f32 %v5549, %v5779
        %v5781 = vpop.f32.mrf.mxu0
        %v5782 = vadd.f32 %v5551, %v5781
        %5783 = vmatprep.mubr.f32.mxu0 0.0
        %v5784 = vand.u32 %v3070, 4294901760
        %v5785 = vsub.f32 %v3070, %v5784
        %v5786 = vand.u32 %v5785, 4294901760
        %5787 = vmatmul.mubr.f32.gmra.mxu0 %v5786
        %v5788 = vpop.f32.mrf.mxu0
        %v5789 = vadd.f32 %v5557, %v5788
        %v5790 = vpop.f32.mrf.mxu0
        %v5791 = vadd.f32 %v5559, %v5790
        %5792 = vmatprep.mubr.f32.mxu0 0.0
        %v5793 = vand.u32 %v3071, 4294901760
        %v5794 = vsub.f32 %v3071, %v5793
        %v5795 = vand.u32 %v5794, 4294901760
        %5796 = vmatmul.mubr.f32.gmra.mxu0 %v5795
        %v5797 = vpop.f32.mrf.mxu0
        %v5798 = vadd.f32 %v5565, %v5797
        %v5799 = vpop.f32.mrf.mxu0
        %v5800 = vadd.f32 %v5567, %v5799
        %5801 = vmatprep.mubr.f32.mxu0 0.0
        %v5802 = vand.u32 %v3072, 4294901760
        %v5803 = vsub.f32 %v3072, %v5802
        %v5804 = vand.u32 %v5803, 4294901760
        %5805 = vmatmul.mubr.f32.gmra.mxu0 %v5804
        %v5806 = vpop.f32.mrf.mxu0
        %v5807 = vadd.f32 %v5573, %v5806
        %v5808 = vpop.f32.mrf.mxu0
        %v5809 = vadd.f32 %v5575, %v5808
        %5810 = vmatprep.mubr.f32.mxu0 0.0
        %v5811 = vand.u32 %v3073, 4294901760
        %v5812 = vsub.f32 %v3073, %v5811
        %v5813 = vand.u32 %v5812, 4294901760
        %5814 = vmatmul.mubr.f32.gmra.mxu0 %v5813
        %v5815 = vpop.f32.mrf.mxu0
        %v5816 = vadd.f32 %v5581, %v5815
        %v5817 = vpop.f32.mrf.mxu0
        %v5818 = vadd.f32 %v5583, %v5817
        %5819 = vmatprep.mubr.f32.mxu0 0.0
        %v5820 = vand.u32 %v3074, 4294901760
        %v5821 = vsub.f32 %v3074, %v5820
        %v5822 = vand.u32 %v5821, 4294901760
        %5823 = vmatmul.mubr.f32.gmra.mxu0 %v5822
        %v5824 = vpop.f32.mrf.mxu0
        %v5825 = vadd.f32 %v5589, %v5824
        %v5826 = vpop.f32.mrf.mxu0
        %v5827 = vadd.f32 %v5591, %v5826
        %5828 = vmatprep.mubr.f32.mxu0 0.0
        %v5829 = vand.u32 %v3075, 4294901760
        %v5830 = vsub.f32 %v3075, %v5829
        %v5831 = vand.u32 %v5830, 4294901760
        %5832 = vmatmul.mubr.f32.gmra.mxu0 %v5831
        %v5833 = vpop.f32.mrf.mxu0
        %v5834 = vadd.f32 %v5597, %v5833
        %v5835 = vpop.f32.mrf.mxu0
        %v5836 = vadd.f32 %v5599, %v5835
        %5837 = vmatprep.mubr.f32.mxu0 0.0
        %v5838 = vand.u32 %v3076, 4294901760
        %v5839 = vsub.f32 %v3076, %v5838
        %v5840 = vand.u32 %v5839, 4294901760
        %5841 = vmatmul.mubr.f32.gmra.mxu0 %v5840
        %v5842 = vpop.f32.mrf.mxu0
        %v5843 = vadd.f32 %v5605, %v5842
        %v5844 = vpop.f32.mrf.mxu0
        %v5845 = vadd.f32 %v5607, %v5844
        %5846 = vmatprep.mubr.f32.mxu0 0.0
        %v5847 = vand.u32 %v3077, 4294901760
        %v5848 = vsub.f32 %v3077, %v5847
        %v5849 = vand.u32 %v5848, 4294901760
        %5850 = vmatmul.mubr.f32.gmra.mxu0 %v5849
        %v5851 = vpop.f32.mrf.mxu0
        %v5852 = vadd.f32 %v5613, %v5851
        %v5853 = vpop.f32.mrf.mxu0
        %v5854 = vadd.f32 %v5615, %v5853
        %5855 = vmatprep.mubr.f32.mxu0 0.0
        %v5856 = vand.u32 %v3078, 4294901760
        %v5857 = vsub.f32 %v3078, %v5856
        %v5858 = vand.u32 %v5857, 4294901760
        %5859 = vmatmul.mubr.f32.gmra.mxu0 %v5858
        %v5860 = vpop.f32.mrf.mxu0
        %v5861 = vadd.f32 %v5621, %v5860
        %v5862 = vpop.f32.mrf.mxu0
        %v5863 = vadd.f32 %v5623, %v5862
        %5864 = vmatprep.mubr.f32.mxu0 0.0
        %v5865 = vand.u32 %v3079, 4294901760
        %v5866 = vsub.f32 %v3079, %v5865
        %v5867 = vand.u32 %v5866, 4294901760
        %5868 = vmatmul.mubr.f32.gmra.mxu0 %v5867
        %v5869 = vpop.f32.mrf.mxu0
        %v5870 = vadd.f32 %v5629, %v5869
        %v5871 = vpop.f32.mrf.mxu0
        %v5872 = vadd.f32 %v5631, %v5871
        %5873 = vdwg.mxu0
        %v5874 = vand.u32 %v3063, 4294901760
        %v5875 = vsub.f32 %v3063, %v5874
        %v5876 = vand.u32 %v5875, 4294901760
        %5877 = vmatprep.subr.mxu0 %v5876
        %v5878 = vand.u32 %v3062, 4294901760
        %v5879 = vsub.f32 %v3062, %v5878
        %v5880 = vand.u32 %v5879, 4294901760
        %5881 = vmatpush1.msra.mxu0 %v5880
        %v5882 = vand.u32 %v3059, 4294901760
        %v5883 = vsub.f32 %v3059, %v5882
        %v5884 = vand.u32 %v5883, 4294901760
        %5885 = vmatprep.subr.mxu0 %v5884
        %v5886 = vand.u32 %v3058, 4294901760
        %v5887 = vsub.f32 %v3058, %v5886
        %v5888 = vand.u32 %v5887, 4294901760
        %5889 = vmatpush1.msra.mxu0 %v5888
        %v5890 = vand.u32 %v3055, 4294901760
        %v5891 = vsub.f32 %v3055, %v5890
        %v5892 = vand.u32 %v5891, 4294901760
        %5893 = vmatprep.subr.mxu0 %v5892
        %v5894 = vand.u32 %v3054, 4294901760
        %v5895 = vsub.f32 %v3054, %v5894
        %v5896 = vand.u32 %v5895, 4294901760
        %5897 = vmatpush1.msra.mxu0 %v5896
        %v5898 = vand.u32 %v3051, 4294901760
        %v5899 = vsub.f32 %v3051, %v5898
        %v5900 = vand.u32 %v5899, 4294901760
        %5901 = vmatprep.subr.mxu0 %v5900
        %v5902 = vand.u32 %v3050, 4294901760
        %v5903 = vsub.f32 %v3050, %v5902
        %v5904 = vand.u32 %v5903, 4294901760
        %5905 = vmatpush1.msra.mxu0 %v5904
        %v5906 = vand.u32 %v3047, 4294901760
        %v5907 = vsub.f32 %v3047, %v5906
        %v5908 = vand.u32 %v5907, 4294901760
        %5909 = vmatprep.subr.mxu0 %v5908
        %v5910 = vand.u32 %v3046, 4294901760
        %v5911 = vsub.f32 %v3046, %v5910
        %v5912 = vand.u32 %v5911, 4294901760
        %5913 = vmatpush1.msra.mxu0 %v5912
        %v5914 = vand.u32 %v3043, 4294901760
        %v5915 = vsub.f32 %v3043, %v5914
        %v5916 = vand.u32 %v5915, 4294901760
        %5917 = vmatprep.subr.mxu0 %v5916
        %v5918 = vand.u32 %v3042, 4294901760
        %v5919 = vsub.f32 %v3042, %v5918
        %v5920 = vand.u32 %v5919, 4294901760
        %5921 = vmatpush1.msra.mxu0 %v5920
        %v5922 = vand.u32 %v3039, 4294901760
        %v5923 = vsub.f32 %v3039, %v5922
        %v5924 = vand.u32 %v5923, 4294901760
        %5925 = vmatprep.subr.mxu0 %v5924
        %v5926 = vand.u32 %v3038, 4294901760
        %v5927 = vsub.f32 %v3038, %v5926
        %v5928 = vand.u32 %v5927, 4294901760
        %5929 = vmatpush1.msra.mxu0 %v5928
        %v5930 = vand.u32 %v3035, 4294901760
        %v5931 = vsub.f32 %v3035, %v5930
        %v5932 = vand.u32 %v5931, 4294901760
        %5933 = vmatprep.subr.mxu0 %v5932
        %v5934 = vand.u32 %v3034, 4294901760
        %v5935 = vsub.f32 %v3034, %v5934
        %v5936 = vand.u32 %v5935, 4294901760
        %5937 = vmatpush1.msra.mxu0 %v5936
        %v5938 = vand.u32 %v3031, 4294901760
        %v5939 = vsub.f32 %v3031, %v5938
        %v5940 = vand.u32 %v5939, 4294901760
        %5941 = vmatprep.subr.mxu0 %v5940
        %v5942 = vand.u32 %v3030, 4294901760
        %v5943 = vsub.f32 %v3030, %v5942
        %v5944 = vand.u32 %v5943, 4294901760
        %5945 = vmatpush1.msra.mxu0 %v5944
        %v5946 = vand.u32 %v3027, 4294901760
        %v5947 = vsub.f32 %v3027, %v5946
        %v5948 = vand.u32 %v5947, 4294901760
        %5949 = vmatprep.subr.mxu0 %v5948
        %v5950 = vand.u32 %v3026, 4294901760
        %v5951 = vsub.f32 %v3026, %v5950
        %v5952 = vand.u32 %v5951, 4294901760
        %5953 = vmatpush1.msra.mxu0 %v5952
        %v5954 = vand.u32 %v3023, 4294901760
        %v5955 = vsub.f32 %v3023, %v5954
        %v5956 = vand.u32 %v5955, 4294901760
        %5957 = vmatprep.subr.mxu0 %v5956
        %v5958 = vand.u32 %v3022, 4294901760
        %v5959 = vsub.f32 %v3022, %v5958
        %v5960 = vand.u32 %v5959, 4294901760
        %5961 = vmatpush1.msra.mxu0 %v5960
        %v5962 = vand.u32 %v3019, 4294901760
        %v5963 = vsub.f32 %v3019, %v5962
        %v5964 = vand.u32 %v5963, 4294901760
        %5965 = vmatprep.subr.mxu0 %v5964
        %v5966 = vand.u32 %v3018, 4294901760
        %v5967 = vsub.f32 %v3018, %v5966
        %v5968 = vand.u32 %v5967, 4294901760
        %5969 = vmatpush1.msra.mxu0 %v5968
        %v5970 = vand.u32 %v3015, 4294901760
        %v5971 = vsub.f32 %v3015, %v5970
        %v5972 = vand.u32 %v5971, 4294901760
        %5973 = vmatprep.subr.mxu0 %v5972
        %v5974 = vand.u32 %v3014, 4294901760
        %v5975 = vsub.f32 %v3014, %v5974
        %v5976 = vand.u32 %v5975, 4294901760
        %5977 = vmatpush1.msra.mxu0 %v5976
        %v5978 = vand.u32 %v3011, 4294901760
        %v5979 = vsub.f32 %v3011, %v5978
        %v5980 = vand.u32 %v5979, 4294901760
        %5981 = vmatprep.subr.mxu0 %v5980
        %v5982 = vand.u32 %v3010, 4294901760
        %v5983 = vsub.f32 %v3010, %v5982
        %v5984 = vand.u32 %v5983, 4294901760
        %5985 = vmatpush1.msra.mxu0 %v5984
        %v5986 = vand.u32 %v3007, 4294901760
        %v5987 = vsub.f32 %v3007, %v5986
        %v5988 = vand.u32 %v5987, 4294901760
        %5989 = vmatprep.subr.mxu0 %v5988
        %v5990 = vand.u32 %v3006, 4294901760
        %v5991 = vsub.f32 %v3006, %v5990
        %v5992 = vand.u32 %v5991, 4294901760
        %5993 = vmatpush1.msra.mxu0 %v5992
        %v5994 = vand.u32 %v3003, 4294901760
        %v5995 = vsub.f32 %v3003, %v5994
        %v5996 = vand.u32 %v5995, 4294901760
        %5997 = vmatprep.subr.mxu0 %v5996
        %v5998 = vand.u32 %v3002, 4294901760
        %v5999 = vsub.f32 %v3002, %v5998
        %v6000 = vand.u32 %v5999, 4294901760
        %6001 = vmatpush1.msra.mxu0 %v6000
        %6002 = vmatprep.subr.mxu0 0.0
        %6003 = vmatpush2.msra.mxu0 0.0
        %6004 = vmatprep.subr.mxu0 0.0
        %6005 = vmatpush2.msra.mxu0 0.0
        %6006 = vmatprep.subr.mxu0 0.0
        %6007 = vmatpush2.msra.mxu0 0.0
        %6008 = vmatprep.subr.mxu0 0.0
        %6009 = vmatpush2.msra.mxu0 0.0
        %6010 = vmatprep.subr.mxu0 0.0
        %6011 = vmatpush2.msra.mxu0 0.0
        %6012 = vmatprep.subr.mxu0 0.0
        %6013 = vmatpush2.msra.mxu0 0.0
        %6014 = vmatprep.subr.mxu0 0.0
        %6015 = vmatpush2.msra.mxu0 0.0
        %6016 = vmatprep.subr.mxu0 0.0
        %6017 = vmatpush2.msra.mxu0 0.0
        %6018 = vmatprep.subr.mxu0 0.0
        %6019 = vmatpush2.msra.mxu0 0.0
        %6020 = vmatprep.subr.mxu0 0.0
        %6021 = vmatpush2.msra.mxu0 0.0
        %6022 = vmatprep.subr.mxu0 0.0
        %6023 = vmatpush2.msra.mxu0 0.0
        %6024 = vmatprep.subr.mxu0 0.0
        %6025 = vmatpush2.msra.mxu0 0.0
        %6026 = vmatprep.subr.mxu0 0.0
        %6027 = vmatpush2.msra.mxu0 0.0
        %6028 = vmatprep.subr.mxu0 0.0
        %6029 = vmatpush2.msra.mxu0 0.0
        %6030 = vmatprep.subr.mxu0 0.0
        %6031 = vmatpush2.msra.mxu0 0.0
        %6032 = vmatprep.subr.mxu0 0.0
        %6033 = vmatpush2.msra.mxu0 0.0
        %6034 = vmatprep.mubr.f32.mxu0 0.0
        %v6035 = vand.u32 %v3064, 4294901760
        %6036 = vmatmul.mubr.f32.gmra.mxu0 %v6035
        %v6037 = vpop.f32.mrf.mxu0
        %v6038 = vadd.f32 %v5735, %v6037
        %v6039 = vpop.f32.mrf.mxu0
        %v6040 = vadd.f32 %v5737, %v6039
        %6041 = vmatprep.mubr.f32.mxu0 0.0
        %v6042 = vand.u32 %v3065, 4294901760
        %6043 = vmatmul.mubr.f32.gmra.mxu0 %v6042
        %v6044 = vpop.f32.mrf.mxu0
        %v6045 = vadd.f32 %v5744, %v6044
        %v6046 = vpop.f32.mrf.mxu0
        %v6047 = vadd.f32 %v5746, %v6046
        %6048 = vmatprep.mubr.f32.mxu0 0.0
        %v6049 = vand.u32 %v3066, 4294901760
        %6050 = vmatmul.mubr.f32.gmra.mxu0 %v6049
        %v6051 = vpop.f32.mrf.mxu0
        %v6052 = vadd.f32 %v5753, %v6051
        %v6053 = vpop.f32.mrf.mxu0
        %v6054 = vadd.f32 %v5755, %v6053
        %6055 = vmatprep.mubr.f32.mxu0 0.0
        %v6056 = vand.u32 %v3067, 4294901760
        %6057 = vmatmul.mubr.f32.gmra.mxu0 %v6056
        %v6058 = vpop.f32.mrf.mxu0
        %v6059 = vadd.f32 %v5762, %v6058
        %v6060 = vpop.f32.mrf.mxu0
        %v6061 = vadd.f32 %v5764, %v6060
        %6062 = vmatprep.mubr.f32.mxu0 0.0
        %v6063 = vand.u32 %v3068, 4294901760
        %6064 = vmatmul.mubr.f32.gmra.mxu0 %v6063
        %v6065 = vpop.f32.mrf.mxu0
        %v6066 = vadd.f32 %v5771, %v6065
        %v6067 = vpop.f32.mrf.mxu0
        %v6068 = vadd.f32 %v5773, %v6067
        %6069 = vmatprep.mubr.f32.mxu0 0.0
        %v6070 = vand.u32 %v3069, 4294901760
        %6071 = vmatmul.mubr.f32.gmra.mxu0 %v6070
        %v6072 = vpop.f32.mrf.mxu0
        %v6073 = vadd.f32 %v5780, %v6072
        %v6074 = vpop.f32.mrf.mxu0
        %v6075 = vadd.f32 %v5782, %v6074
        %6076 = vmatprep.mubr.f32.mxu0 0.0
        %v6077 = vand.u32 %v3070, 4294901760
        %6078 = vmatmul.mubr.f32.gmra.mxu0 %v6077
        %v6079 = vpop.f32.mrf.mxu0
        %v6080 = vadd.f32 %v5789, %v6079
        %v6081 = vpop.f32.mrf.mxu0
        %v6082 = vadd.f32 %v5791, %v6081
        %6083 = vmatprep.mubr.f32.mxu0 0.0
        %v6084 = vand.u32 %v3071, 4294901760
        %6085 = vmatmul.mubr.f32.gmra.mxu0 %v6084
        %v6086 = vpop.f32.mrf.mxu0
        %v6087 = vadd.f32 %v5798, %v6086
        %v6088 = vpop.f32.mrf.mxu0
        %v6089 = vadd.f32 %v5800, %v6088
        %6090 = vmatprep.mubr.f32.mxu0 0.0
        %v6091 = vand.u32 %v3072, 4294901760
        %6092 = vmatmul.mubr.f32.gmra.mxu0 %v6091
        %v6093 = vpop.f32.mrf.mxu0
        %v6094 = vadd.f32 %v5807, %v6093
        %v6095 = vpop.f32.mrf.mxu0
        %v6096 = vadd.f32 %v5809, %v6095
        %6097 = vmatprep.mubr.f32.mxu0 0.0
        %v6098 = vand.u32 %v3073, 4294901760
        %6099 = vmatmul.mubr.f32.gmra.mxu0 %v6098
        %v6100 = vpop.f32.mrf.mxu0
        %v6101 = vadd.f32 %v5816, %v6100
        %v6102 = vpop.f32.mrf.mxu0
        %v6103 = vadd.f32 %v5818, %v6102
        %6104 = vmatprep.mubr.f32.mxu0 0.0
        %v6105 = vand.u32 %v3074, 4294901760
        %6106 = vmatmul.mubr.f32.gmra.mxu0 %v6105
        %v6107 = vpop.f32.mrf.mxu0
        %v6108 = vadd.f32 %v5825, %v6107
        %v6109 = vpop.f32.mrf.mxu0
        %v6110 = vadd.f32 %v5827, %v6109
        %6111 = vmatprep.mubr.f32.mxu0 0.0
        %v6112 = vand.u32 %v3075, 4294901760
        %6113 = vmatmul.mubr.f32.gmra.mxu0 %v6112
        %v6114 = vpop.f32.mrf.mxu0
        %v6115 = vadd.f32 %v5834, %v6114
        %v6116 = vpop.f32.mrf.mxu0
        %v6117 = vadd.f32 %v5836, %v6116
        %6118 = vmatprep.mubr.f32.mxu0 0.0
        %v6119 = vand.u32 %v3076, 4294901760
        %6120 = vmatmul.mubr.f32.gmra.mxu0 %v6119
        %v6121 = vpop.f32.mrf.mxu0
        %v6122 = vadd.f32 %v5843, %v6121
        %v6123 = vpop.f32.mrf.mxu0
        %v6124 = vadd.f32 %v5845, %v6123
        %6125 = vmatprep.mubr.f32.mxu0 0.0
        %v6126 = vand.u32 %v3077, 4294901760
        %6127 = vmatmul.mubr.f32.gmra.mxu0 %v6126
        %v6128 = vpop.f32.mrf.mxu0
        %v6129 = vadd.f32 %v5852, %v6128
        %v6130 = vpop.f32.mrf.mxu0
        %v6131 = vadd.f32 %v5854, %v6130
        %6132 = vmatprep.mubr.f32.mxu0 0.0
        %v6133 = vand.u32 %v3078, 4294901760
        %6134 = vmatmul.mubr.f32.gmra.mxu0 %v6133
        %v6135 = vpop.f32.mrf.mxu0
        %v6136 = vadd.f32 %v5861, %v6135
        %v6137 = vpop.f32.mrf.mxu0
        %v6138 = vadd.f32 %v5863, %v6137
        %6139 = vmatprep.mubr.f32.mxu0 0.0
        %v6140 = vand.u32 %v3079, 4294901760
        %6141 = vmatmul.mubr.f32.gmra.mxu0 %v6140
        %v6142 = vpop.f32.mrf.mxu0
        %v6143 = vadd.f32 %v5870, %v6142
        %v6144 = vpop.f32.mrf.mxu0
        %v6145 = vadd.f32 %v5872, %v6144
        %6146 = vdwg.mxu0
        %v6147 = vand.u32 %v3063, 4294901760
        %6148 = vmatprep.subr.mxu0 %v6147
        %v6149 = vand.u32 %v3062, 4294901760
        %6150 = vmatpush1.msra.mxu0 %v6149
        %v6151 = vand.u32 %v3059, 4294901760
        %6152 = vmatprep.subr.mxu0 %v6151
        %v6153 = vand.u32 %v3058, 4294901760
        %6154 = vmatpush1.msra.mxu0 %v6153
        %v6155 = vand.u32 %v3055, 4294901760
        %6156 = vmatprep.subr.mxu0 %v6155
        %v6157 = vand.u32 %v3054, 4294901760
        %6158 = vmatpush1.msra.mxu0 %v6157
        %v6159 = vand.u32 %v3051, 4294901760
        %6160 = vmatprep.subr.mxu0 %v6159
        %v6161 = vand.u32 %v3050, 4294901760
        %6162 = vmatpush1.msra.mxu0 %v6161
        %v6163 = vand.u32 %v3047, 4294901760
        %6164 = vmatprep.subr.mxu0 %v6163
        %v6165 = vand.u32 %v3046, 4294901760
        %6166 = vmatpush1.msra.mxu0 %v6165
        %v6167 = vand.u32 %v3043, 4294901760
        %6168 = vmatprep.subr.mxu0 %v6167
        %v6169 = vand.u32 %v3042, 4294901760
        %6170 = vmatpush1.msra.mxu0 %v6169
        %v6171 = vand.u32 %v3039, 4294901760
        %6172 = vmatprep.subr.mxu0 %v6171
        %v6173 = vand.u32 %v3038, 4294901760
        %6174 = vmatpush1.msra.mxu0 %v6173
        %v6175 = vand.u32 %v3035, 4294901760
        %6176 = vmatprep.subr.mxu0 %v6175
        %v6177 = vand.u32 %v3034, 4294901760
        %6178 = vmatpush1.msra.mxu0 %v6177
        %v6179 = vand.u32 %v3031, 4294901760
        %6180 = vmatprep.subr.mxu0 %v6179
        %v6181 = vand.u32 %v3030, 4294901760
        %6182 = vmatpush1.msra.mxu0 %v6181
        %v6183 = vand.u32 %v3027, 4294901760
        %6184 = vmatprep.subr.mxu0 %v6183
        %v6185 = vand.u32 %v3026, 4294901760
        %6186 = vmatpush1.msra.mxu0 %v6185
        %v6187 = vand.u32 %v3023, 4294901760
        %6188 = vmatprep.subr.mxu0 %v6187
        %v6189 = vand.u32 %v3022, 4294901760
        %6190 = vmatpush1.msra.mxu0 %v6189
        %v6191 = vand.u32 %v3019, 4294901760
        %6192 = vmatprep.subr.mxu0 %v6191
        %v6193 = vand.u32 %v3018, 4294901760
        %6194 = vmatpush1.msra.mxu0 %v6193
        %v6195 = vand.u32 %v3015, 4294901760
        %6196 = vmatprep.subr.mxu0 %v6195
        %v6197 = vand.u32 %v3014, 4294901760
        %6198 = vmatpush1.msra.mxu0 %v6197
        %v6199 = vand.u32 %v3011, 4294901760
        %6200 = vmatprep.subr.mxu0 %v6199
        %v6201 = vand.u32 %v3010, 4294901760
        %6202 = vmatpush1.msra.mxu0 %v6201
        %v6203 = vand.u32 %v3007, 4294901760
        %6204 = vmatprep.subr.mxu0 %v6203
        %v6205 = vand.u32 %v3006, 4294901760
        %6206 = vmatpush1.msra.mxu0 %v6205
        %v6207 = vand.u32 %v3003, 4294901760
        %6208 = vmatprep.subr.mxu0 %v6207
        %v6209 = vand.u32 %v3002, 4294901760
        %6210 = vmatpush1.msra.mxu0 %v6209
        %6211 = vmatprep.subr.mxu0 0.0
        %6212 = vmatpush2.msra.mxu0 0.0
        %6213 = vmatprep.subr.mxu0 0.0
        %6214 = vmatpush2.msra.mxu0 0.0
        %6215 = vmatprep.subr.mxu0 0.0
        %6216 = vmatpush2.msra.mxu0 0.0
        %6217 = vmatprep.subr.mxu0 0.0
        %6218 = vmatpush2.msra.mxu0 0.0
        %6219 = vmatprep.subr.mxu0 0.0
        %6220 = vmatpush2.msra.mxu0 0.0
        %6221 = vmatprep.subr.mxu0 0.0
        %6222 = vmatpush2.msra.mxu0 0.0
        %6223 = vmatprep.subr.mxu0 0.0
        %6224 = vmatpush2.msra.mxu0 0.0
        %6225 = vmatprep.subr.mxu0 0.0
        %6226 = vmatpush2.msra.mxu0 0.0
        %6227 = vmatprep.subr.mxu0 0.0
        %6228 = vmatpush2.msra.mxu0 0.0
        %6229 = vmatprep.subr.mxu0 0.0
        %6230 = vmatpush2.msra.mxu0 0.0
        %6231 = vmatprep.subr.mxu0 0.0
        %6232 = vmatpush2.msra.mxu0 0.0
        %6233 = vmatprep.subr.mxu0 0.0
        %6234 = vmatpush2.msra.mxu0 0.0
        %6235 = vmatprep.subr.mxu0 0.0
        %6236 = vmatpush2.msra.mxu0 0.0
        %6237 = vmatprep.subr.mxu0 0.0
        %6238 = vmatpush2.msra.mxu0 0.0
        %6239 = vmatprep.subr.mxu0 0.0
        %6240 = vmatpush2.msra.mxu0 0.0
        %6241 = vmatprep.subr.mxu0 0.0
        %6242 = vmatpush2.msra.mxu0 0.0
        %6243 = vmatprep.mubr.f32.mxu0 0.0
        %v6244 = vand.u32 %v3064, 4294901760
        %6245 = vmatmul.mubr.f32.gmra.mxu0 %v6244
        %v6246 = vpop.f32.mrf.mxu0
        %v6247 = vadd.f32 %v6038, %v6246
        %v6248 = vpop.f32.mrf.mxu0
        %v6249 = vadd.f32 %v6040, %v6248
        %6250 = vmatprep.mubr.f32.mxu0 0.0
        %v6251 = vand.u32 %v3065, 4294901760
        %6252 = vmatmul.mubr.f32.gmra.mxu0 %v6251
        %v6253 = vpop.f32.mrf.mxu0
        %v6254 = vadd.f32 %v6045, %v6253
        %v6255 = vpop.f32.mrf.mxu0
        %v6256 = vadd.f32 %v6047, %v6255
        %6257 = vmatprep.mubr.f32.mxu0 0.0
        %v6258 = vand.u32 %v3066, 4294901760
        %6259 = vmatmul.mubr.f32.gmra.mxu0 %v6258
        %v6260 = vpop.f32.mrf.mxu0
        %v6261 = vadd.f32 %v6052, %v6260
        %v6262 = vpop.f32.mrf.mxu0
        %v6263 = vadd.f32 %v6054, %v6262
        %6264 = vmatprep.mubr.f32.mxu0 0.0
        %v6265 = vand.u32 %v3067, 4294901760
        %6266 = vmatmul.mubr.f32.gmra.mxu0 %v6265
        %v6267 = vpop.f32.mrf.mxu0
        %v6268 = vadd.f32 %v6059, %v6267
        %v6269 = vpop.f32.mrf.mxu0
        %v6270 = vadd.f32 %v6061, %v6269
        %6271 = vmatprep.mubr.f32.mxu0 0.0
        %v6272 = vand.u32 %v3068, 4294901760
        %6273 = vmatmul.mubr.f32.gmra.mxu0 %v6272
        %v6274 = vpop.f32.mrf.mxu0
        %v6275 = vadd.f32 %v6066, %v6274
        %v6276 = vpop.f32.mrf.mxu0
        %v6277 = vadd.f32 %v6068, %v6276
        %6278 = vmatprep.mubr.f32.mxu0 0.0
        %v6279 = vand.u32 %v3069, 4294901760
        %6280 = vmatmul.mubr.f32.gmra.mxu0 %v6279
        %v6281 = vpop.f32.mrf.mxu0
        %v6282 = vadd.f32 %v6073, %v6281
        %v6283 = vpop.f32.mrf.mxu0
        %v6284 = vadd.f32 %v6075, %v6283
        %6285 = vmatprep.mubr.f32.mxu0 0.0
        %v6286 = vand.u32 %v3070, 4294901760
        %6287 = vmatmul.mubr.f32.gmra.mxu0 %v6286
        %v6288 = vpop.f32.mrf.mxu0
        %v6289 = vadd.f32 %v6080, %v6288
        %v6290 = vpop.f32.mrf.mxu0
        %v6291 = vadd.f32 %v6082, %v6290
        %6292 = vmatprep.mubr.f32.mxu0 0.0
        %v6293 = vand.u32 %v3071, 4294901760
        %6294 = vmatmul.mubr.f32.gmra.mxu0 %v6293
        %v6295 = vpop.f32.mrf.mxu0
        %v6296 = vadd.f32 %v6087, %v6295
        %v6297 = vpop.f32.mrf.mxu0
        %v6298 = vadd.f32 %v6089, %v6297
        %6299 = vmatprep.mubr.f32.mxu0 0.0
        %v6300 = vand.u32 %v3072, 4294901760
        %6301 = vmatmul.mubr.f32.gmra.mxu0 %v6300
        %v6302 = vpop.f32.mrf.mxu0
        %v6303 = vadd.f32 %v6094, %v6302
        %v6304 = vpop.f32.mrf.mxu0
        %v6305 = vadd.f32 %v6096, %v6304
        %6306 = vmatprep.mubr.f32.mxu0 0.0
        %v6307 = vand.u32 %v3073, 4294901760
        %6308 = vmatmul.mubr.f32.gmra.mxu0 %v6307
        %v6309 = vpop.f32.mrf.mxu0
        %v6310 = vadd.f32 %v6101, %v6309
        %v6311 = vpop.f32.mrf.mxu0
        %v6312 = vadd.f32 %v6103, %v6311
        %6313 = vmatprep.mubr.f32.mxu0 0.0
        %v6314 = vand.u32 %v3074, 4294901760
        %6315 = vmatmul.mubr.f32.gmra.mxu0 %v6314
        %v6316 = vpop.f32.mrf.mxu0
        %v6317 = vadd.f32 %v6108, %v6316
        %v6318 = vpop.f32.mrf.mxu0
        %v6319 = vadd.f32 %v6110, %v6318
        %6320 = vmatprep.mubr.f32.mxu0 0.0
        %v6321 = vand.u32 %v3075, 4294901760
        %6322 = vmatmul.mubr.f32.gmra.mxu0 %v6321
        %v6323 = vpop.f32.mrf.mxu0
        %v6324 = vadd.f32 %v6115, %v6323
        %v6325 = vpop.f32.mrf.mxu0
        %v6326 = vadd.f32 %v6117, %v6325
        %6327 = vmatprep.mubr.f32.mxu0 0.0
        %v6328 = vand.u32 %v3076, 4294901760
        %6329 = vmatmul.mubr.f32.gmra.mxu0 %v6328
        %v6330 = vpop.f32.mrf.mxu0
        %v6331 = vadd.f32 %v6122, %v6330
        %v6332 = vpop.f32.mrf.mxu0
        %v6333 = vadd.f32 %v6124, %v6332
        %6334 = vmatprep.mubr.f32.mxu0 0.0
        %v6335 = vand.u32 %v3077, 4294901760
        %6336 = vmatmul.mubr.f32.gmra.mxu0 %v6335
        %v6337 = vpop.f32.mrf.mxu0
        %v6338 = vadd.f32 %v6129, %v6337
        %v6339 = vpop.f32.mrf.mxu0
        %v6340 = vadd.f32 %v6131, %v6339
        %6341 = vmatprep.mubr.f32.mxu0 0.0
        %v6342 = vand.u32 %v3078, 4294901760
        %6343 = vmatmul.mubr.f32.gmra.mxu0 %v6342
        %v6344 = vpop.f32.mrf.mxu0
        %v6345 = vadd.f32 %v6136, %v6344
        %v6346 = vpop.f32.mrf.mxu0
        %v6347 = vadd.f32 %v6138, %v6346
        %6348 = vmatprep.mubr.f32.mxu0 0.0
        %v6349 = vand.u32 %v3079, 4294901760
        %6350 = vmatmul.mubr.f32.gmra.mxu0 %v6349
        %v6351 = vpop.f32.mrf.mxu0
        %v6352 = vadd.f32 %v6143, %v6351
        %v6353 = vpop.f32.mrf.mxu0
        %v6354 = vadd.f32 %v6145, %v6353
        %6355 = vdwg.mxu0
        %v6356 = vmax.f32 %v4657, 0.0
        %v6357 = vmax.f32 %v4659, 0.0
        %v6358 = vmax.f32 %v6247, 0.0
        %v6359 = vmax.f32 %v6249, 0.0
        %v6360 = vmax.f32 %v4664, 0.0
        %v6361 = vmax.f32 %v4666, 0.0
        %v6362 = vmax.f32 %v6254, 0.0
        %v6363 = vmax.f32 %v6256, 0.0
        %v6364 = vmax.f32 %v4671, 0.0
        %v6365 = vmax.f32 %v4673, 0.0
        %v6366 = vmax.f32 %v6261, 0.0
        %v6367 = vmax.f32 %v6263, 0.0
        %v6368 = vmax.f32 %v4678, 0.0
        %v6369 = vmax.f32 %v4680, 0.0
        %v6370 = vmax.f32 %v6268, 0.0
        %v6371 = vmax.f32 %v6270, 0.0
        %v6372 = vmax.f32 %v4685, 0.0
        %v6373 = vmax.f32 %v4687, 0.0
        %v6374 = vmax.f32 %v6275, 0.0
        %v6375 = vmax.f32 %v6277, 0.0
        %v6376 = vmax.f32 %v4692, 0.0
        %v6377 = vmax.f32 %v4694, 0.0
        %v6378 = vmax.f32 %v6282, 0.0
        %v6379 = vmax.f32 %v6284, 0.0
        %v6380 = vmax.f32 %v4699, 0.0
        %v6381 = vmax.f32 %v4701, 0.0
        %v6382 = vmax.f32 %v6289, 0.0
        %v6383 = vmax.f32 %v6291, 0.0
        %v6384 = vmax.f32 %v4706, 0.0
        %v6385 = vmax.f32 %v4708, 0.0
        %v6386 = vmax.f32 %v6296, 0.0
        %v6387 = vmax.f32 %v6298, 0.0
        %v6388 = vmax.f32 %v4713, 0.0
        %v6389 = vmax.f32 %v4715, 0.0
        %v6390 = vmax.f32 %v6303, 0.0
        %v6391 = vmax.f32 %v6305, 0.0
        %v6392 = vmax.f32 %v4720, 0.0
        %v6393 = vmax.f32 %v4722, 0.0
        %v6394 = vmax.f32 %v6310, 0.0
        %v6395 = vmax.f32 %v6312, 0.0
        %v6396 = vmax.f32 %v4727, 0.0
        %v6397 = vmax.f32 %v4729, 0.0
        %v6398 = vmax.f32 %v6317, 0.0
        %v6399 = vmax.f32 %v6319, 0.0
        %v6400 = vmax.f32 %v4734, 0.0
        %v6401 = vmax.f32 %v4736, 0.0
        %v6402 = vmax.f32 %v6324, 0.0
        %v6403 = vmax.f32 %v6326, 0.0
        %v6404 = vmax.f32 %v4741, 0.0
        %v6405 = vmax.f32 %v4743, 0.0
        %v6406 = vmax.f32 %v6331, 0.0
        %v6407 = vmax.f32 %v6333, 0.0
        %v6408 = vmax.f32 %v4748, 0.0
        %v6409 = vmax.f32 %v4750, 0.0
        %v6410 = vmax.f32 %v6338, 0.0
        %v6411 = vmax.f32 %v6340, 0.0
        %v6412 = vmax.f32 %v4755, 0.0
        %v6413 = vmax.f32 %v4757, 0.0
        %v6414 = vmax.f32 %v6345, 0.0
        %v6415 = vmax.f32 %v6347, 0.0
        %v6416 = vmax.f32 %v4762, 0.0
        %v6417 = vmax.f32 %v4764, 0.0
        %v6418 = vmax.f32 %v6352, 0.0
        %v6419 = vmax.f32 %v6354, 0.0
        %v6420 = vld [vmem:[%s2] sm:$0xff]
        %v6421 = vld [vmem:[%s5] sm:$0xff]
        %6423 = vset.pattern.permute.xlu0 0
        %6424 = vperm.xlu0 %6423, %v6421
        %v6425 = vpop.permute.xlu0 %6424
        %v6427 = vand.u32 %v6417, 4294901760
        %6428 = vmatprep.subr.mxu0 %v6427
        %v6429 = vand.u32 %v6416, 4294901760
        %6430 = vmatpush1.msra.mxu0 %v6429
        %v6431 = vand.u32 %v6413, 4294901760
        %6432 = vmatprep.subr.mxu0 %v6431
        %v6433 = vand.u32 %v6412, 4294901760
        %6434 = vmatpush1.msra.mxu0 %v6433
        %v6435 = vand.u32 %v6409, 4294901760
        %6436 = vmatprep.subr.mxu0 %v6435
        %v6437 = vand.u32 %v6408, 4294901760
        %6438 = vmatpush1.msra.mxu0 %v6437
        %v6439 = vand.u32 %v6405, 4294901760
        %6440 = vmatprep.subr.mxu0 %v6439
        %v6441 = vand.u32 %v6404, 4294901760
        %6442 = vmatpush1.msra.mxu0 %v6441
        %v6443 = vand.u32 %v6401, 4294901760
        %6444 = vmatprep.subr.mxu0 %v6443
        %v6445 = vand.u32 %v6400, 4294901760
        %6446 = vmatpush1.msra.mxu0 %v6445
        %v6447 = vand.u32 %v6397, 4294901760
        %6448 = vmatprep.subr.mxu0 %v6447
        %v6449 = vand.u32 %v6396, 4294901760
        %6450 = vmatpush1.msra.mxu0 %v6449
        %v6451 = vand.u32 %v6393, 4294901760
        %6452 = vmatprep.subr.mxu0 %v6451
        %v6453 = vand.u32 %v6392, 4294901760
        %6454 = vmatpush1.msra.mxu0 %v6453
        %v6455 = vand.u32 %v6389, 4294901760
        %6456 = vmatprep.subr.mxu0 %v6455
        %v6457 = vand.u32 %v6388, 4294901760
        %6458 = vmatpush1.msra.mxu0 %v6457
        %v6459 = vand.u32 %v6385, 4294901760
        %6460 = vmatprep.subr.mxu0 %v6459
        %v6461 = vand.u32 %v6384, 4294901760
        %6462 = vmatpush1.msra.mxu0 %v6461
        %v6463 = vand.u32 %v6381, 4294901760
        %6464 = vmatprep.subr.mxu0 %v6463
        %v6465 = vand.u32 %v6380, 4294901760
        %6466 = vmatpush1.msra.mxu0 %v6465
        %v6467 = vand.u32 %v6377, 4294901760
        %6468 = vmatprep.subr.mxu0 %v6467
        %v6469 = vand.u32 %v6376, 4294901760
        %6470 = vmatpush1.msra.mxu0 %v6469
        %v6471 = vand.u32 %v6373, 4294901760
        %6472 = vmatprep.subr.mxu0 %v6471
        %v6473 = vand.u32 %v6372, 4294901760
        %6474 = vmatpush1.msra.mxu0 %v6473
        %v6475 = vand.u32 %v6369, 4294901760
        %6476 = vmatprep.subr.mxu0 %v6475
        %v6477 = vand.u32 %v6368, 4294901760
        %6478 = vmatpush1.msra.mxu0 %v6477
        %v6479 = vand.u32 %v6365, 4294901760
        %6480 = vmatprep.subr.mxu0 %v6479
        %v6481 = vand.u32 %v6364, 4294901760
        %6482 = vmatpush1.msra.mxu0 %v6481
        %v6483 = vand.u32 %v6361, 4294901760
        %6484 = vmatprep.subr.mxu0 %v6483
        %v6485 = vand.u32 %v6360, 4294901760
        %6486 = vmatpush1.msra.mxu0 %v6485
        %v6487 = vand.u32 %v6357, 4294901760
        %6488 = vmatprep.subr.mxu0 %v6487
        %v6489 = vand.u32 %v6356, 4294901760
        %6490 = vmatpush1.msra.mxu0 %v6489
        %6491 = vmatprep.subr.mxu0 0.0
        %6492 = vmatpush2.msra.mxu0 0.0
        %6493 = vmatprep.subr.mxu0 0.0
        %6494 = vmatpush2.msra.mxu0 0.0
        %6495 = vmatprep.subr.mxu0 0.0
        %6496 = vmatpush2.msra.mxu0 0.0
        %6497 = vmatprep.subr.mxu0 0.0
        %6498 = vmatpush2.msra.mxu0 0.0
        %6499 = vmatprep.subr.mxu0 0.0
        %6500 = vmatpush2.msra.mxu0 0.0
        %6501 = vmatprep.subr.mxu0 0.0
        %6502 = vmatpush2.msra.mxu0 0.0
        %6503 = vmatprep.subr.mxu0 0.0
        %6504 = vmatpush2.msra.mxu0 0.0
        %6505 = vmatprep.subr.mxu0 0.0
        %6506 = vmatpush2.msra.mxu0 0.0
        %6507 = vmatprep.subr.mxu0 0.0
        %6508 = vmatpush2.msra.mxu0 0.0
        %6509 = vmatprep.subr.mxu0 0.0
        %6510 = vmatpush2.msra.mxu0 0.0
        %6511 = vmatprep.subr.mxu0 0.0
        %6512 = vmatpush2.msra.mxu0 0.0
        %6513 = vmatprep.subr.mxu0 0.0
        %6514 = vmatpush2.msra.mxu0 0.0
        %6515 = vmatprep.subr.mxu0 0.0
        %6516 = vmatpush2.msra.mxu0 0.0
        %6517 = vmatprep.subr.mxu0 0.0
        %6518 = vmatpush2.msra.mxu0 0.0
        %6519 = vmatprep.subr.mxu0 0.0
        %6520 = vmatpush2.msra.mxu0 0.0
        %6521 = vmatprep.subr.mxu0 0.0
        %6522 = vmatpush2.msra.mxu0 0.0
        %6523 = vmatprep.mubr.f32.mxu0 0.0
        %v6524 = vand.u32 %v6420, 4294901760
        %v6525 = vsub.f32 %v6420, %v6524
        %v6526 = vand.u32 %v6525, 4294901760
        %v6527 = vsub.f32 %v6525, %v6526
        %v6528 = vand.u32 %v6527, 4294901760
        %6529 = vmatmul.mubr.f32.gmra.mxu0 %v6528
        %v6530 = vpop.f32.mrf.mxu0
        %v6531 = vadd.f32 %v6425, %v6530
        %v6532 = vpop.f32.mrf.mxu0
        %v6533 = vadd.f32 %v6425, %v6532
        %6534 = vdwg.mxu0
        %v6535 = vand.u32 %v6417, 4294901760
        %v6536 = vsub.f32 %v6417, %v6535
        %v6537 = vand.u32 %v6536, 4294901760
        %v6538 = vsub.f32 %v6536, %v6537
        %v6539 = vand.u32 %v6538, 4294901760
        %6540 = vmatprep.subr.mxu0 %v6539
        %v6541 = vand.u32 %v6416, 4294901760
        %v6542 = vsub.f32 %v6416, %v6541
        %v6543 = vand.u32 %v6542, 4294901760
        %v6544 = vsub.f32 %v6542, %v6543
        %v6545 = vand.u32 %v6544, 4294901760
        %6546 = vmatpush1.msra.mxu0 %v6545
        %v6547 = vand.u32 %v6413, 4294901760
        %v6548 = vsub.f32 %v6413, %v6547
        %v6549 = vand.u32 %v6548, 4294901760
        %v6550 = vsub.f32 %v6548, %v6549
        %v6551 = vand.u32 %v6550, 4294901760
        %6552 = vmatprep.subr.mxu0 %v6551
        %v6553 = vand.u32 %v6412, 4294901760
        %v6554 = vsub.f32 %v6412, %v6553
        %v6555 = vand.u32 %v6554, 4294901760
        %v6556 = vsub.f32 %v6554, %v6555
        %v6557 = vand.u32 %v6556, 4294901760
        %6558 = vmatpush1.msra.mxu0 %v6557
        %v6559 = vand.u32 %v6409, 4294901760
        %v6560 = vsub.f32 %v6409, %v6559
        %v6561 = vand.u32 %v6560, 4294901760
        %v6562 = vsub.f32 %v6560, %v6561
        %v6563 = vand.u32 %v6562, 4294901760
        %6564 = vmatprep.subr.mxu0 %v6563
        %v6565 = vand.u32 %v6408, 4294901760
        %v6566 = vsub.f32 %v6408, %v6565
        %v6567 = vand.u32 %v6566, 4294901760
        %v6568 = vsub.f32 %v6566, %v6567
        %v6569 = vand.u32 %v6568, 4294901760
        %6570 = vmatpush1.msra.mxu0 %v6569
        %v6571 = vand.u32 %v6405, 4294901760
        %v6572 = vsub.f32 %v6405, %v6571
        %v6573 = vand.u32 %v6572, 4294901760
        %v6574 = vsub.f32 %v6572, %v6573
        %v6575 = vand.u32 %v6574, 4294901760
        %6576 = vmatprep.subr.mxu0 %v6575
        %v6577 = vand.u32 %v6404, 4294901760
        %v6578 = vsub.f32 %v6404, %v6577
        %v6579 = vand.u32 %v6578, 4294901760
        %v6580 = vsub.f32 %v6578, %v6579
        %v6581 = vand.u32 %v6580, 4294901760
        %6582 = vmatpush1.msra.mxu0 %v6581
        %v6583 = vand.u32 %v6401, 4294901760
        %v6584 = vsub.f32 %v6401, %v6583
        %v6585 = vand.u32 %v6584, 4294901760
        %v6586 = vsub.f32 %v6584, %v6585
        %v6587 = vand.u32 %v6586, 4294901760
        %6588 = vmatprep.subr.mxu0 %v6587
        %v6589 = vand.u32 %v6400, 4294901760
        %v6590 = vsub.f32 %v6400, %v6589
        %v6591 = vand.u32 %v6590, 4294901760
        %v6592 = vsub.f32 %v6590, %v6591
        %v6593 = vand.u32 %v6592, 4294901760
        %6594 = vmatpush1.msra.mxu0 %v6593
        %v6595 = vand.u32 %v6397, 4294901760
        %v6596 = vsub.f32 %v6397, %v6595
        %v6597 = vand.u32 %v6596, 4294901760
        %v6598 = vsub.f32 %v6596, %v6597
        %v6599 = vand.u32 %v6598, 4294901760
        %6600 = vmatprep.subr.mxu0 %v6599
        %v6601 = vand.u32 %v6396, 4294901760
        %v6602 = vsub.f32 %v6396, %v6601
        %v6603 = vand.u32 %v6602, 4294901760
        %v6604 = vsub.f32 %v6602, %v6603
        %v6605 = vand.u32 %v6604, 4294901760
        %6606 = vmatpush1.msra.mxu0 %v6605
        %v6607 = vand.u32 %v6393, 4294901760
        %v6608 = vsub.f32 %v6393, %v6607
        %v6609 = vand.u32 %v6608, 4294901760
        %v6610 = vsub.f32 %v6608, %v6609
        %v6611 = vand.u32 %v6610, 4294901760
        %6612 = vmatprep.subr.mxu0 %v6611
        %v6613 = vand.u32 %v6392, 4294901760
        %v6614 = vsub.f32 %v6392, %v6613
        %v6615 = vand.u32 %v6614, 4294901760
        %v6616 = vsub.f32 %v6614, %v6615
        %v6617 = vand.u32 %v6616, 4294901760
        %6618 = vmatpush1.msra.mxu0 %v6617
        %v6619 = vand.u32 %v6389, 4294901760
        %v6620 = vsub.f32 %v6389, %v6619
        %v6621 = vand.u32 %v6620, 4294901760
        %v6622 = vsub.f32 %v6620, %v6621
        %v6623 = vand.u32 %v6622, 4294901760
        %6624 = vmatprep.subr.mxu0 %v6623
        %v6625 = vand.u32 %v6388, 4294901760
        %v6626 = vsub.f32 %v6388, %v6625
        %v6627 = vand.u32 %v6626, 4294901760
        %v6628 = vsub.f32 %v6626, %v6627
        %v6629 = vand.u32 %v6628, 4294901760
        %6630 = vmatpush1.msra.mxu0 %v6629
        %v6631 = vand.u32 %v6385, 4294901760
        %v6632 = vsub.f32 %v6385, %v6631
        %v6633 = vand.u32 %v6632, 4294901760
        %v6634 = vsub.f32 %v6632, %v6633
        %v6635 = vand.u32 %v6634, 4294901760
        %6636 = vmatprep.subr.mxu0 %v6635
        %v6637 = vand.u32 %v6384, 4294901760
        %v6638 = vsub.f32 %v6384, %v6637
        %v6639 = vand.u32 %v6638, 4294901760
        %v6640 = vsub.f32 %v6638, %v6639
        %v6641 = vand.u32 %v6640, 4294901760
        %6642 = vmatpush1.msra.mxu0 %v6641
        %v6643 = vand.u32 %v6381, 4294901760
        %v6644 = vsub.f32 %v6381, %v6643
        %v6645 = vand.u32 %v6644, 4294901760
        %v6646 = vsub.f32 %v6644, %v6645
        %v6647 = vand.u32 %v6646, 4294901760
        %6648 = vmatprep.subr.mxu0 %v6647
        %v6649 = vand.u32 %v6380, 4294901760
        %v6650 = vsub.f32 %v6380, %v6649
        %v6651 = vand.u32 %v6650, 4294901760
        %v6652 = vsub.f32 %v6650, %v6651
        %v6653 = vand.u32 %v6652, 4294901760
        %6654 = vmatpush1.msra.mxu0 %v6653
        %v6655 = vand.u32 %v6377, 4294901760
        %v6656 = vsub.f32 %v6377, %v6655
        %v6657 = vand.u32 %v6656, 4294901760
        %v6658 = vsub.f32 %v6656, %v6657
        %v6659 = vand.u32 %v6658, 4294901760
        %6660 = vmatprep.subr.mxu0 %v6659
        %v6661 = vand.u32 %v6376, 4294901760
        %v6662 = vsub.f32 %v6376, %v6661
        %v6663 = vand.u32 %v6662, 4294901760
        %v6664 = vsub.f32 %v6662, %v6663
        %v6665 = vand.u32 %v6664, 4294901760
        %6666 = vmatpush1.msra.mxu0 %v6665
        %v6667 = vand.u32 %v6373, 4294901760
        %v6668 = vsub.f32 %v6373, %v6667
        %v6669 = vand.u32 %v6668, 4294901760
        %v6670 = vsub.f32 %v6668, %v6669
        %v6671 = vand.u32 %v6670, 4294901760
        %6672 = vmatprep.subr.mxu0 %v6671
        %v6673 = vand.u32 %v6372, 4294901760
        %v6674 = vsub.f32 %v6372, %v6673
        %v6675 = vand.u32 %v6674, 4294901760
        %v6676 = vsub.f32 %v6674, %v6675
        %v6677 = vand.u32 %v6676, 4294901760
        %6678 = vmatpush1.msra.mxu0 %v6677
        %v6679 = vand.u32 %v6369, 4294901760
        %v6680 = vsub.f32 %v6369, %v6679
        %v6681 = vand.u32 %v6680, 4294901760
        %v6682 = vsub.f32 %v6680, %v6681
        %v6683 = vand.u32 %v6682, 4294901760
        %6684 = vmatprep.subr.mxu0 %v6683
        %v6685 = vand.u32 %v6368, 4294901760
        %v6686 = vsub.f32 %v6368, %v6685
        %v6687 = vand.u32 %v6686, 4294901760
        %v6688 = vsub.f32 %v6686, %v6687
        %v6689 = vand.u32 %v6688, 4294901760
        %6690 = vmatpush1.msra.mxu0 %v6689
        %v6691 = vand.u32 %v6365, 4294901760
        %v6692 = vsub.f32 %v6365, %v6691
        %v6693 = vand.u32 %v6692, 4294901760
        %v6694 = vsub.f32 %v6692, %v6693
        %v6695 = vand.u32 %v6694, 4294901760
        %6696 = vmatprep.subr.mxu0 %v6695
        %v6697 = vand.u32 %v6364, 4294901760
        %v6698 = vsub.f32 %v6364, %v6697
        %v6699 = vand.u32 %v6698, 4294901760
        %v6700 = vsub.f32 %v6698, %v6699
        %v6701 = vand.u32 %v6700, 4294901760
        %6702 = vmatpush1.msra.mxu0 %v6701
        %v6703 = vand.u32 %v6361, 4294901760
        %v6704 = vsub.f32 %v6361, %v6703
        %v6705 = vand.u32 %v6704, 4294901760
        %v6706 = vsub.f32 %v6704, %v6705
        %v6707 = vand.u32 %v6706, 4294901760
        %6708 = vmatprep.subr.mxu0 %v6707
        %v6709 = vand.u32 %v6360, 4294901760
        %v6710 = vsub.f32 %v6360, %v6709
        %v6711 = vand.u32 %v6710, 4294901760
        %v6712 = vsub.f32 %v6710, %v6711
        %v6713 = vand.u32 %v6712, 4294901760
        %6714 = vmatpush1.msra.mxu0 %v6713
        %v6715 = vand.u32 %v6357, 4294901760
        %v6716 = vsub.f32 %v6357, %v6715
        %v6717 = vand.u32 %v6716, 4294901760
        %v6718 = vsub.f32 %v6716, %v6717
        %v6719 = vand.u32 %v6718, 4294901760
        %6720 = vmatprep.subr.mxu0 %v6719
        %v6721 = vand.u32 %v6356, 4294901760
        %v6722 = vsub.f32 %v6356, %v6721
        %v6723 = vand.u32 %v6722, 4294901760
        %v6724 = vsub.f32 %v6722, %v6723
        %v6725 = vand.u32 %v6724, 4294901760
        %6726 = vmatpush1.msra.mxu0 %v6725
        %6727 = vmatprep.subr.mxu0 0.0
        %6728 = vmatpush2.msra.mxu0 0.0
        %6729 = vmatprep.subr.mxu0 0.0
        %6730 = vmatpush2.msra.mxu0 0.0
        %6731 = vmatprep.subr.mxu0 0.0
        %6732 = vmatpush2.msra.mxu0 0.0
        %6733 = vmatprep.subr.mxu0 0.0
        %6734 = vmatpush2.msra.mxu0 0.0
        %6735 = vmatprep.subr.mxu0 0.0
        %6736 = vmatpush2.msra.mxu0 0.0
        %6737 = vmatprep.subr.mxu0 0.0
        %6738 = vmatpush2.msra.mxu0 0.0
        %6739 = vmatprep.subr.mxu0 0.0
        %6740 = vmatpush2.msra.mxu0 0.0
        %6741 = vmatprep.subr.mxu0 0.0
        %6742 = vmatpush2.msra.mxu0 0.0
        %6743 = vmatprep.subr.mxu0 0.0
        %6744 = vmatpush2.msra.mxu0 0.0
        %6745 = vmatprep.subr.mxu0 0.0
        %6746 = vmatpush2.msra.mxu0 0.0
        %6747 = vmatprep.subr.mxu0 0.0
        %6748 = vmatpush2.msra.mxu0 0.0
        %6749 = vmatprep.subr.mxu0 0.0
        %6750 = vmatpush2.msra.mxu0 0.0
        %6751 = vmatprep.subr.mxu0 0.0
        %6752 = vmatpush2.msra.mxu0 0.0
        %6753 = vmatprep.subr.mxu0 0.0
        %6754 = vmatpush2.msra.mxu0 0.0
        %6755 = vmatprep.subr.mxu0 0.0
        %6756 = vmatpush2.msra.mxu0 0.0
        %6757 = vmatprep.subr.mxu0 0.0
        %6758 = vmatpush2.msra.mxu0 0.0
        %6759 = vmatprep.mubr.f32.mxu0 0.0
        %v6760 = vand.u32 %v6420, 4294901760
        %6761 = vmatmul.mubr.f32.gmra.mxu0 %v6760
        %v6762 = vpop.f32.mrf.mxu0
        %v6763 = vadd.f32 %v6531, %v6762
        %v6764 = vpop.f32.mrf.mxu0
        %v6765 = vadd.f32 %v6533, %v6764
        %6766 = vdwg.mxu0
        %v6767 = vand.u32 %v6417, 4294901760
        %v6768 = vsub.f32 %v6417, %v6767
        %6769 = vmatprep.subr.mxu0 %v6768
        %v6770 = vand.u32 %v6416, 4294901760
        %v6771 = vsub.f32 %v6416, %v6770
        %6772 = vmatpush1.msra.mxu0 %v6771
        %v6773 = vand.u32 %v6413, 4294901760
        %v6774 = vsub.f32 %v6413, %v6773
        %6775 = vmatprep.subr.mxu0 %v6774
        %v6776 = vand.u32 %v6412, 4294901760
        %v6777 = vsub.f32 %v6412, %v6776
        %6778 = vmatpush1.msra.mxu0 %v6777
        %v6779 = vand.u32 %v6409, 4294901760
        %v6780 = vsub.f32 %v6409, %v6779
        %6781 = vmatprep.subr.mxu0 %v6780
        %v6782 = vand.u32 %v6408, 4294901760
        %v6783 = vsub.f32 %v6408, %v6782
        %6784 = vmatpush1.msra.mxu0 %v6783
        %v6785 = vand.u32 %v6405, 4294901760
        %v6786 = vsub.f32 %v6405, %v6785
        %6787 = vmatprep.subr.mxu0 %v6786
        %v6788 = vand.u32 %v6404, 4294901760
        %v6789 = vsub.f32 %v6404, %v6788
        %6790 = vmatpush1.msra.mxu0 %v6789
        %v6791 = vand.u32 %v6401, 4294901760
        %v6792 = vsub.f32 %v6401, %v6791
        %6793 = vmatprep.subr.mxu0 %v6792
        %v6794 = vand.u32 %v6400, 4294901760
        %v6795 = vsub.f32 %v6400, %v6794
        %6796 = vmatpush1.msra.mxu0 %v6795
        %v6797 = vand.u32 %v6397, 4294901760
        %v6798 = vsub.f32 %v6397, %v6797
        %6799 = vmatprep.subr.mxu0 %v6798
        %v6800 = vand.u32 %v6396, 4294901760
        %v6801 = vsub.f32 %v6396, %v6800
        %6802 = vmatpush1.msra.mxu0 %v6801
        %v6803 = vand.u32 %v6393, 4294901760
        %v6804 = vsub.f32 %v6393, %v6803
        %6805 = vmatprep.subr.mxu0 %v6804
        %v6806 = vand.u32 %v6392, 4294901760
        %v6807 = vsub.f32 %v6392, %v6806
        %6808 = vmatpush1.msra.mxu0 %v6807
        %v6809 = vand.u32 %v6389, 4294901760
        %v6810 = vsub.f32 %v6389, %v6809
        %6811 = vmatprep.subr.mxu0 %v6810
        %v6812 = vand.u32 %v6388, 4294901760
        %v6813 = vsub.f32 %v6388, %v6812
        %6814 = vmatpush1.msra.mxu0 %v6813
        %v6815 = vand.u32 %v6385, 4294901760
        %v6816 = vsub.f32 %v6385, %v6815
        %6817 = vmatprep.subr.mxu0 %v6816
        %v6818 = vand.u32 %v6384, 4294901760
        %v6819 = vsub.f32 %v6384, %v6818
        %6820 = vmatpush1.msra.mxu0 %v6819
        %v6821 = vand.u32 %v6381, 4294901760
        %v6822 = vsub.f32 %v6381, %v6821
        %6823 = vmatprep.subr.mxu0 %v6822
        %v6824 = vand.u32 %v6380, 4294901760
        %v6825 = vsub.f32 %v6380, %v6824
        %6826 = vmatpush1.msra.mxu0 %v6825
        %v6827 = vand.u32 %v6377, 4294901760
        %v6828 = vsub.f32 %v6377, %v6827
        %6829 = vmatprep.subr.mxu0 %v6828
        %v6830 = vand.u32 %v6376, 4294901760
        %v6831 = vsub.f32 %v6376, %v6830
        %6832 = vmatpush1.msra.mxu0 %v6831
        %v6833 = vand.u32 %v6373, 4294901760
        %v6834 = vsub.f32 %v6373, %v6833
        %6835 = vmatprep.subr.mxu0 %v6834
        %v6836 = vand.u32 %v6372, 4294901760
        %v6837 = vsub.f32 %v6372, %v6836
        %6838 = vmatpush1.msra.mxu0 %v6837
        %v6839 = vand.u32 %v6369, 4294901760
        %v6840 = vsub.f32 %v6369, %v6839
        %6841 = vmatprep.subr.mxu0 %v6840
        %v6842 = vand.u32 %v6368, 4294901760
        %v6843 = vsub.f32 %v6368, %v6842
        %6844 = vmatpush1.msra.mxu0 %v6843
        %v6845 = vand.u32 %v6365, 4294901760
        %v6846 = vsub.f32 %v6365, %v6845
        %6847 = vmatprep.subr.mxu0 %v6846
        %v6848 = vand.u32 %v6364, 4294901760
        %v6849 = vsub.f32 %v6364, %v6848
        %6850 = vmatpush1.msra.mxu0 %v6849
        %v6851 = vand.u32 %v6361, 4294901760
        %v6852 = vsub.f32 %v6361, %v6851
        %6853 = vmatprep.subr.mxu0 %v6852
        %v6854 = vand.u32 %v6360, 4294901760
        %v6855 = vsub.f32 %v6360, %v6854
        %6856 = vmatpush1.msra.mxu0 %v6855
        %v6857 = vand.u32 %v6357, 4294901760
        %v6858 = vsub.f32 %v6357, %v6857
        %6859 = vmatprep.subr.mxu0 %v6858
        %v6860 = vand.u32 %v6356, 4294901760
        %v6861 = vsub.f32 %v6356, %v6860
        %6862 = vmatpush1.msra.mxu0 %v6861
        %6863 = vmatprep.subr.mxu0 0.0
        %6864 = vmatpush2.msra.mxu0 0.0
        %6865 = vmatprep.subr.mxu0 0.0
        %6866 = vmatpush2.msra.mxu0 0.0
        %6867 = vmatprep.subr.mxu0 0.0
        %6868 = vmatpush2.msra.mxu0 0.0
        %6869 = vmatprep.subr.mxu0 0.0
        %6870 = vmatpush2.msra.mxu0 0.0
        %6871 = vmatprep.subr.mxu0 0.0
        %6872 = vmatpush2.msra.mxu0 0.0
        %6873 = vmatprep.subr.mxu0 0.0
        %6874 = vmatpush2.msra.mxu0 0.0
        %6875 = vmatprep.subr.mxu0 0.0
        %6876 = vmatpush2.msra.mxu0 0.0
        %6877 = vmatprep.subr.mxu0 0.0
        %6878 = vmatpush2.msra.mxu0 0.0
        %6879 = vmatprep.subr.mxu0 0.0
        %6880 = vmatpush2.msra.mxu0 0.0
        %6881 = vmatprep.subr.mxu0 0.0
        %6882 = vmatpush2.msra.mxu0 0.0
        %6883 = vmatprep.subr.mxu0 0.0
        %6884 = vmatpush2.msra.mxu0 0.0
        %6885 = vmatprep.subr.mxu0 0.0
        %6886 = vmatpush2.msra.mxu0 0.0
        %6887 = vmatprep.subr.mxu0 0.0
        %6888 = vmatpush2.msra.mxu0 0.0
        %6889 = vmatprep.subr.mxu0 0.0
        %6890 = vmatpush2.msra.mxu0 0.0
        %6891 = vmatprep.subr.mxu0 0.0
        %6892 = vmatpush2.msra.mxu0 0.0
        %6893 = vmatprep.subr.mxu0 0.0
        %6894 = vmatpush2.msra.mxu0 0.0
        %6895 = vmatprep.mubr.f32.mxu0 0.0
        %v6896 = vand.u32 %v6420, 4294901760
        %v6897 = vsub.f32 %v6420, %v6896
        %6898 = vmatmul.mubr.f32.gmra.mxu0 %v6897
        %v6899 = vpop.f32.mrf.mxu0
        %v6900 = vadd.f32 %v6763, %v6899
        %v6901 = vpop.f32.mrf.mxu0
        %v6902 = vadd.f32 %v6765, %v6901
        %6903 = vdwg.mxu0
        %v6904 = vand.u32 %v6417, 4294901760
        %6905 = vmatprep.subr.mxu0 %v6904
        %v6906 = vand.u32 %v6416, 4294901760
        %6907 = vmatpush1.msra.mxu0 %v6906
        %v6908 = vand.u32 %v6413, 4294901760
        %6909 = vmatprep.subr.mxu0 %v6908
        %v6910 = vand.u32 %v6412, 4294901760
        %6911 = vmatpush1.msra.mxu0 %v6910
        %v6912 = vand.u32 %v6409, 4294901760
        %6913 = vmatprep.subr.mxu0 %v6912
        %v6914 = vand.u32 %v6408, 4294901760
        %6915 = vmatpush1.msra.mxu0 %v6914
        %v6916 = vand.u32 %v6405, 4294901760
        %6917 = vmatprep.subr.mxu0 %v6916
        %v6918 = vand.u32 %v6404, 4294901760
        %6919 = vmatpush1.msra.mxu0 %v6918
        %v6920 = vand.u32 %v6401, 4294901760
        %6921 = vmatprep.subr.mxu0 %v6920
        %v6922 = vand.u32 %v6400, 4294901760
        %6923 = vmatpush1.msra.mxu0 %v6922
        %v6924 = vand.u32 %v6397, 4294901760
        %6925 = vmatprep.subr.mxu0 %v6924
        %v6926 = vand.u32 %v6396, 4294901760
        %6927 = vmatpush1.msra.mxu0 %v6926
        %v6928 = vand.u32 %v6393, 4294901760
        %6929 = vmatprep.subr.mxu0 %v6928
        %v6930 = vand.u32 %v6392, 4294901760
        %6931 = vmatpush1.msra.mxu0 %v6930
        %v6932 = vand.u32 %v6389, 4294901760
        %6933 = vmatprep.subr.mxu0 %v6932
        %v6934 = vand.u32 %v6388, 4294901760
        %6935 = vmatpush1.msra.mxu0 %v6934
        %v6936 = vand.u32 %v6385, 4294901760
        %6937 = vmatprep.subr.mxu0 %v6936
        %v6938 = vand.u32 %v6384, 4294901760
        %6939 = vmatpush1.msra.mxu0 %v6938
        %v6940 = vand.u32 %v6381, 4294901760
        %6941 = vmatprep.subr.mxu0 %v6940
        %v6942 = vand.u32 %v6380, 4294901760
        %6943 = vmatpush1.msra.mxu0 %v6942
        %v6944 = vand.u32 %v6377, 4294901760
        %6945 = vmatprep.subr.mxu0 %v6944
        %v6946 = vand.u32 %v6376, 4294901760
        %6947 = vmatpush1.msra.mxu0 %v6946
        %v6948 = vand.u32 %v6373, 4294901760
        %6949 = vmatprep.subr.mxu0 %v6948
        %v6950 = vand.u32 %v6372, 4294901760
        %6951 = vmatpush1.msra.mxu0 %v6950
        %v6952 = vand.u32 %v6369, 4294901760
        %6953 = vmatprep.subr.mxu0 %v6952
        %v6954 = vand.u32 %v6368, 4294901760
        %6955 = vmatpush1.msra.mxu0 %v6954
        %v6956 = vand.u32 %v6365, 4294901760
        %6957 = vmatprep.subr.mxu0 %v6956
        %v6958 = vand.u32 %v6364, 4294901760
        %6959 = vmatpush1.msra.mxu0 %v6958
        %v6960 = vand.u32 %v6361, 4294901760
        %6961 = vmatprep.subr.mxu0 %v6960
        %v6962 = vand.u32 %v6360, 4294901760
        %6963 = vmatpush1.msra.mxu0 %v6962
        %v6964 = vand.u32 %v6357, 4294901760
        %6965 = vmatprep.subr.mxu0 %v6964
        %v6966 = vand.u32 %v6356, 4294901760
        %6967 = vmatpush1.msra.mxu0 %v6966
        %6968 = vmatprep.subr.mxu0 0.0
        %6969 = vmatpush2.msra.mxu0 0.0
        %6970 = vmatprep.subr.mxu0 0.0
        %6971 = vmatpush2.msra.mxu0 0.0
        %6972 = vmatprep.subr.mxu0 0.0
        %6973 = vmatpush2.msra.mxu0 0.0
        %6974 = vmatprep.subr.mxu0 0.0
        %6975 = vmatpush2.msra.mxu0 0.0
        %6976 = vmatprep.subr.mxu0 0.0
        %6977 = vmatpush2.msra.mxu0 0.0
        %6978 = vmatprep.subr.mxu0 0.0
        %6979 = vmatpush2.msra.mxu0 0.0
        %6980 = vmatprep.subr.mxu0 0.0
        %6981 = vmatpush2.msra.mxu0 0.0
        %6982 = vmatprep.subr.mxu0 0.0
        %6983 = vmatpush2.msra.mxu0 0.0
        %6984 = vmatprep.subr.mxu0 0.0
        %6985 = vmatpush2.msra.mxu0 0.0
        %6986 = vmatprep.subr.mxu0 0.0
        %6987 = vmatpush2.msra.mxu0 0.0
        %6988 = vmatprep.subr.mxu0 0.0
        %6989 = vmatpush2.msra.mxu0 0.0
        %6990 = vmatprep.subr.mxu0 0.0
        %6991 = vmatpush2.msra.mxu0 0.0
        %6992 = vmatprep.subr.mxu0 0.0
        %6993 = vmatpush2.msra.mxu0 0.0
        %6994 = vmatprep.subr.mxu0 0.0
        %6995 = vmatpush2.msra.mxu0 0.0
        %6996 = vmatprep.subr.mxu0 0.0
        %6997 = vmatpush2.msra.mxu0 0.0
        %6998 = vmatprep.subr.mxu0 0.0
        %6999 = vmatpush2.msra.mxu0 0.0
        %7000 = vmatprep.mubr.f32.mxu0 0.0
        %v7001 = vand.u32 %v6420, 4294901760
        %v7002 = vsub.f32 %v6420, %v7001
        %v7003 = vand.u32 %v7002, 4294901760
        %7004 = vmatmul.mubr.f32.gmra.mxu0 %v7003
        %v7005 = vpop.f32.mrf.mxu0
        %v7006 = vadd.f32 %v6900, %v7005
        %v7007 = vpop.f32.mrf.mxu0
        %v7008 = vadd.f32 %v6902, %v7007
        %7009 = vdwg.mxu0
        %v7010 = vand.u32 %v6417, 4294901760
        %v7011 = vsub.f32 %v6417, %v7010
        %v7012 = vand.u32 %v7011, 4294901760
        %7013 = vmatprep.subr.mxu0 %v7012
        %v7014 = vand.u32 %v6416, 4294901760
        %v7015 = vsub.f32 %v6416, %v7014
        %v7016 = vand.u32 %v7015, 4294901760
        %7017 = vmatpush1.msra.mxu0 %v7016
        %v7018 = vand.u32 %v6413, 4294901760
        %v7019 = vsub.f32 %v6413, %v7018
        %v7020 = vand.u32 %v7019, 4294901760
        %7021 = vmatprep.subr.mxu0 %v7020
        %v7022 = vand.u32 %v6412, 4294901760
        %v7023 = vsub.f32 %v6412, %v7022
        %v7024 = vand.u32 %v7023, 4294901760
        %7025 = vmatpush1.msra.mxu0 %v7024
        %v7026 = vand.u32 %v6409, 4294901760
        %v7027 = vsub.f32 %v6409, %v7026
        %v7028 = vand.u32 %v7027, 4294901760
        %7029 = vmatprep.subr.mxu0 %v7028
        %v7030 = vand.u32 %v6408, 4294901760
        %v7031 = vsub.f32 %v6408, %v7030
        %v7032 = vand.u32 %v7031, 4294901760
        %7033 = vmatpush1.msra.mxu0 %v7032
        %v7034 = vand.u32 %v6405, 4294901760
        %v7035 = vsub.f32 %v6405, %v7034
        %v7036 = vand.u32 %v7035, 4294901760
        %7037 = vmatprep.subr.mxu0 %v7036
        %v7038 = vand.u32 %v6404, 4294901760
        %v7039 = vsub.f32 %v6404, %v7038
        %v7040 = vand.u32 %v7039, 4294901760
        %7041 = vmatpush1.msra.mxu0 %v7040
        %v7042 = vand.u32 %v6401, 4294901760
        %v7043 = vsub.f32 %v6401, %v7042
        %v7044 = vand.u32 %v7043, 4294901760
        %7045 = vmatprep.subr.mxu0 %v7044
        %v7046 = vand.u32 %v6400, 4294901760
        %v7047 = vsub.f32 %v6400, %v7046
        %v7048 = vand.u32 %v7047, 4294901760
        %7049 = vmatpush1.msra.mxu0 %v7048
        %v7050 = vand.u32 %v6397, 4294901760
        %v7051 = vsub.f32 %v6397, %v7050
        %v7052 = vand.u32 %v7051, 4294901760
        %7053 = vmatprep.subr.mxu0 %v7052
        %v7054 = vand.u32 %v6396, 4294901760
        %v7055 = vsub.f32 %v6396, %v7054
        %v7056 = vand.u32 %v7055, 4294901760
        %7057 = vmatpush1.msra.mxu0 %v7056
        %v7058 = vand.u32 %v6393, 4294901760
        %v7059 = vsub.f32 %v6393, %v7058
        %v7060 = vand.u32 %v7059, 4294901760
        %7061 = vmatprep.subr.mxu0 %v7060
        %v7062 = vand.u32 %v6392, 4294901760
        %v7063 = vsub.f32 %v6392, %v7062
        %v7064 = vand.u32 %v7063, 4294901760
        %7065 = vmatpush1.msra.mxu0 %v7064
        %v7066 = vand.u32 %v6389, 4294901760
        %v7067 = vsub.f32 %v6389, %v7066
        %v7068 = vand.u32 %v7067, 4294901760
        %7069 = vmatprep.subr.mxu0 %v7068
        %v7070 = vand.u32 %v6388, 4294901760
        %v7071 = vsub.f32 %v6388, %v7070
        %v7072 = vand.u32 %v7071, 4294901760
        %7073 = vmatpush1.msra.mxu0 %v7072
        %v7074 = vand.u32 %v6385, 4294901760
        %v7075 = vsub.f32 %v6385, %v7074
        %v7076 = vand.u32 %v7075, 4294901760
        %7077 = vmatprep.subr.mxu0 %v7076
        %v7078 = vand.u32 %v6384, 4294901760
        %v7079 = vsub.f32 %v6384, %v7078
        %v7080 = vand.u32 %v7079, 4294901760
        %7081 = vmatpush1.msra.mxu0 %v7080
        %v7082 = vand.u32 %v6381, 4294901760
        %v7083 = vsub.f32 %v6381, %v7082
        %v7084 = vand.u32 %v7083, 4294901760
        %7085 = vmatprep.subr.mxu0 %v7084
        %v7086 = vand.u32 %v6380, 4294901760
        %v7087 = vsub.f32 %v6380, %v7086
        %v7088 = vand.u32 %v7087, 4294901760
        %7089 = vmatpush1.msra.mxu0 %v7088
        %v7090 = vand.u32 %v6377, 4294901760
        %v7091 = vsub.f32 %v6377, %v7090
        %v7092 = vand.u32 %v7091, 4294901760
        %7093 = vmatprep.subr.mxu0 %v7092
        %v7094 = vand.u32 %v6376, 4294901760
        %v7095 = vsub.f32 %v6376, %v7094
        %v7096 = vand.u32 %v7095, 4294901760
        %7097 = vmatpush1.msra.mxu0 %v7096
        %v7098 = vand.u32 %v6373, 4294901760
        %v7099 = vsub.f32 %v6373, %v7098
        %v7100 = vand.u32 %v7099, 4294901760
        %7101 = vmatprep.subr.mxu0 %v7100
        %v7102 = vand.u32 %v6372, 4294901760
        %v7103 = vsub.f32 %v6372, %v7102
        %v7104 = vand.u32 %v7103, 4294901760
        %7105 = vmatpush1.msra.mxu0 %v7104
        %v7106 = vand.u32 %v6369, 4294901760
        %v7107 = vsub.f32 %v6369, %v7106
        %v7108 = vand.u32 %v7107, 4294901760
        %7109 = vmatprep.subr.mxu0 %v7108
        %v7110 = vand.u32 %v6368, 4294901760
        %v7111 = vsub.f32 %v6368, %v7110
        %v7112 = vand.u32 %v7111, 4294901760
        %7113 = vmatpush1.msra.mxu0 %v7112
        %v7114 = vand.u32 %v6365, 4294901760
        %v7115 = vsub.f32 %v6365, %v7114
        %v7116 = vand.u32 %v7115, 4294901760
        %7117 = vmatprep.subr.mxu0 %v7116
        %v7118 = vand.u32 %v6364, 4294901760
        %v7119 = vsub.f32 %v6364, %v7118
        %v7120 = vand.u32 %v7119, 4294901760
        %7121 = vmatpush1.msra.mxu0 %v7120
        %v7122 = vand.u32 %v6361, 4294901760
        %v7123 = vsub.f32 %v6361, %v7122
        %v7124 = vand.u32 %v7123, 4294901760
        %7125 = vmatprep.subr.mxu0 %v7124
        %v7126 = vand.u32 %v6360, 4294901760
        %v7127 = vsub.f32 %v6360, %v7126
        %v7128 = vand.u32 %v7127, 4294901760
        %7129 = vmatpush1.msra.mxu0 %v7128
        %v7130 = vand.u32 %v6357, 4294901760
        %v7131 = vsub.f32 %v6357, %v7130
        %v7132 = vand.u32 %v7131, 4294901760
        %7133 = vmatprep.subr.mxu0 %v7132
        %v7134 = vand.u32 %v6356, 4294901760
        %v7135 = vsub.f32 %v6356, %v7134
        %v7136 = vand.u32 %v7135, 4294901760
        %7137 = vmatpush1.msra.mxu0 %v7136
        %7138 = vmatprep.subr.mxu0 0.0
        %7139 = vmatpush2.msra.mxu0 0.0
        %7140 = vmatprep.subr.mxu0 0.0
        %7141 = vmatpush2.msra.mxu0 0.0
        %7142 = vmatprep.subr.mxu0 0.0
        %7143 = vmatpush2.msra.mxu0 0.0
        %7144 = vmatprep.subr.mxu0 0.0
        %7145 = vmatpush2.msra.mxu0 0.0
        %7146 = vmatprep.subr.mxu0 0.0
        %7147 = vmatpush2.msra.mxu0 0.0
        %7148 = vmatprep.subr.mxu0 0.0
        %7149 = vmatpush2.msra.mxu0 0.0
        %7150 = vmatprep.subr.mxu0 0.0
        %7151 = vmatpush2.msra.mxu0 0.0
        %7152 = vmatprep.subr.mxu0 0.0
        %7153 = vmatpush2.msra.mxu0 0.0
        %7154 = vmatprep.subr.mxu0 0.0
        %7155 = vmatpush2.msra.mxu0 0.0
        %7156 = vmatprep.subr.mxu0 0.0
        %7157 = vmatpush2.msra.mxu0 0.0
        %7158 = vmatprep.subr.mxu0 0.0
        %7159 = vmatpush2.msra.mxu0 0.0
        %7160 = vmatprep.subr.mxu0 0.0
        %7161 = vmatpush2.msra.mxu0 0.0
        %7162 = vmatprep.subr.mxu0 0.0
        %7163 = vmatpush2.msra.mxu0 0.0
        %7164 = vmatprep.subr.mxu0 0.0
        %7165 = vmatpush2.msra.mxu0 0.0
        %7166 = vmatprep.subr.mxu0 0.0
        %7167 = vmatpush2.msra.mxu0 0.0
        %7168 = vmatprep.subr.mxu0 0.0
        %7169 = vmatpush2.msra.mxu0 0.0
        %7170 = vmatprep.mubr.f32.mxu0 0.0
        %v7171 = vand.u32 %v6420, 4294901760
        %7172 = vmatmul.mubr.f32.gmra.mxu0 %v7171
        %v7173 = vpop.f32.mrf.mxu0
        %v7174 = vadd.f32 %v7006, %v7173
        %v7175 = vpop.f32.mrf.mxu0
        %v7176 = vadd.f32 %v7008, %v7175
        %7177 = vdwg.mxu0
        %v7178 = vand.u32 %v6417, 4294901760
        %7179 = vmatprep.subr.mxu0 %v7178
        %v7180 = vand.u32 %v6416, 4294901760
        %7181 = vmatpush1.msra.mxu0 %v7180
        %v7182 = vand.u32 %v6413, 4294901760
        %7183 = vmatprep.subr.mxu0 %v7182
        %v7184 = vand.u32 %v6412, 4294901760
        %7185 = vmatpush1.msra.mxu0 %v7184
        %v7186 = vand.u32 %v6409, 4294901760
        %7187 = vmatprep.subr.mxu0 %v7186
        %v7188 = vand.u32 %v6408, 4294901760
        %7189 = vmatpush1.msra.mxu0 %v7188
        %v7190 = vand.u32 %v6405, 4294901760
        %7191 = vmatprep.subr.mxu0 %v7190
        %v7192 = vand.u32 %v6404, 4294901760
        %7193 = vmatpush1.msra.mxu0 %v7192
        %v7194 = vand.u32 %v6401, 4294901760
        %7195 = vmatprep.subr.mxu0 %v7194
        %v7196 = vand.u32 %v6400, 4294901760
        %7197 = vmatpush1.msra.mxu0 %v7196
        %v7198 = vand.u32 %v6397, 4294901760
        %7199 = vmatprep.subr.mxu0 %v7198
        %v7200 = vand.u32 %v6396, 4294901760
        %7201 = vmatpush1.msra.mxu0 %v7200
        %v7202 = vand.u32 %v6393, 4294901760
        %7203 = vmatprep.subr.mxu0 %v7202
        %v7204 = vand.u32 %v6392, 4294901760
        %7205 = vmatpush1.msra.mxu0 %v7204
        %v7206 = vand.u32 %v6389, 4294901760
        %7207 = vmatprep.subr.mxu0 %v7206
        %v7208 = vand.u32 %v6388, 4294901760
        %7209 = vmatpush1.msra.mxu0 %v7208
        %v7210 = vand.u32 %v6385, 4294901760
        %7211 = vmatprep.subr.mxu0 %v7210
        %v7212 = vand.u32 %v6384, 4294901760
        %7213 = vmatpush1.msra.mxu0 %v7212
        %v7214 = vand.u32 %v6381, 4294901760
        %7215 = vmatprep.subr.mxu0 %v7214
        %v7216 = vand.u32 %v6380, 4294901760
        %7217 = vmatpush1.msra.mxu0 %v7216
        %v7218 = vand.u32 %v6377, 4294901760
        %7219 = vmatprep.subr.mxu0 %v7218
        %v7220 = vand.u32 %v6376, 4294901760
        %7221 = vmatpush1.msra.mxu0 %v7220
        %v7222 = vand.u32 %v6373, 4294901760
        %7223 = vmatprep.subr.mxu0 %v7222
        %v7224 = vand.u32 %v6372, 4294901760
        %7225 = vmatpush1.msra.mxu0 %v7224
        %v7226 = vand.u32 %v6369, 4294901760
        %7227 = vmatprep.subr.mxu0 %v7226
        %v7228 = vand.u32 %v6368, 4294901760
        %7229 = vmatpush1.msra.mxu0 %v7228
        %v7230 = vand.u32 %v6365, 4294901760
        %7231 = vmatprep.subr.mxu0 %v7230
        %v7232 = vand.u32 %v6364, 4294901760
        %7233 = vmatpush1.msra.mxu0 %v7232
        %v7234 = vand.u32 %v6361, 4294901760
        %7235 = vmatprep.subr.mxu0 %v7234
        %v7236 = vand.u32 %v6360, 4294901760
        %7237 = vmatpush1.msra.mxu0 %v7236
        %v7238 = vand.u32 %v6357, 4294901760
        %7239 = vmatprep.subr.mxu0 %v7238
        %v7240 = vand.u32 %v6356, 4294901760
        %7241 = vmatpush1.msra.mxu0 %v7240
        %7242 = vmatprep.subr.mxu0 0.0
        %7243 = vmatpush2.msra.mxu0 0.0
        %7244 = vmatprep.subr.mxu0 0.0
        %7245 = vmatpush2.msra.mxu0 0.0
        %7246 = vmatprep.subr.mxu0 0.0
        %7247 = vmatpush2.msra.mxu0 0.0
        %7248 = vmatprep.subr.mxu0 0.0
        %7249 = vmatpush2.msra.mxu0 0.0
        %7250 = vmatprep.subr.mxu0 0.0
        %7251 = vmatpush2.msra.mxu0 0.0
        %7252 = vmatprep.subr.mxu0 0.0
        %7253 = vmatpush2.msra.mxu0 0.0
        %7254 = vmatprep.subr.mxu0 0.0
        %7255 = vmatpush2.msra.mxu0 0.0
        %7256 = vmatprep.subr.mxu0 0.0
        %7257 = vmatpush2.msra.mxu0 0.0
        %7258 = vmatprep.subr.mxu0 0.0
        %7259 = vmatpush2.msra.mxu0 0.0
        %7260 = vmatprep.subr.mxu0 0.0
        %7261 = vmatpush2.msra.mxu0 0.0
        %7262 = vmatprep.subr.mxu0 0.0
        %7263 = vmatpush2.msra.mxu0 0.0
        %7264 = vmatprep.subr.mxu0 0.0
        %7265 = vmatpush2.msra.mxu0 0.0
        %7266 = vmatprep.subr.mxu0 0.0
        %7267 = vmatpush2.msra.mxu0 0.0
        %7268 = vmatprep.subr.mxu0 0.0
        %7269 = vmatpush2.msra.mxu0 0.0
        %7270 = vmatprep.subr.mxu0 0.0
        %7271 = vmatpush2.msra.mxu0 0.0
        %7272 = vmatprep.subr.mxu0 0.0
        %7273 = vmatpush2.msra.mxu0 0.0
        %7274 = vmatprep.mubr.f32.mxu0 0.0
        %v7275 = vand.u32 %v6420, 4294901760
        %7276 = vmatmul.mubr.f32.gmra.mxu0 %v7275
        %v7277 = vpop.f32.mrf.mxu0
        %v7278 = vadd.f32 %v7174, %v7277
        %v7279 = vpop.f32.mrf.mxu0
        %v7280 = vadd.f32 %v7176, %v7279
        %7281 = vdwg.mxu0
        %v7282 = vand.u32 %v6419, 4294901760
        %7283 = vmatprep.subr.mxu0 %v7282
        %v7284 = vand.u32 %v6418, 4294901760
        %7285 = vmatpush1.msra.mxu0 %v7284
        %v7286 = vand.u32 %v6415, 4294901760
        %7287 = vmatprep.subr.mxu0 %v7286
        %v7288 = vand.u32 %v6414, 4294901760
        %7289 = vmatpush1.msra.mxu0 %v7288
        %v7290 = vand.u32 %v6411, 4294901760
        %7291 = vmatprep.subr.mxu0 %v7290
        %v7292 = vand.u32 %v6410, 4294901760
        %7293 = vmatpush1.msra.mxu0 %v7292
        %v7294 = vand.u32 %v6407, 4294901760
        %7295 = vmatprep.subr.mxu0 %v7294
        %v7296 = vand.u32 %v6406, 4294901760
        %7297 = vmatpush1.msra.mxu0 %v7296
        %v7298 = vand.u32 %v6403, 4294901760
        %7299 = vmatprep.subr.mxu0 %v7298
        %v7300 = vand.u32 %v6402, 4294901760
        %7301 = vmatpush1.msra.mxu0 %v7300
        %v7302 = vand.u32 %v6399, 4294901760
        %7303 = vmatprep.subr.mxu0 %v7302
        %v7304 = vand.u32 %v6398, 4294901760
        %7305 = vmatpush1.msra.mxu0 %v7304
        %v7306 = vand.u32 %v6395, 4294901760
        %7307 = vmatprep.subr.mxu0 %v7306
        %v7308 = vand.u32 %v6394, 4294901760
        %7309 = vmatpush1.msra.mxu0 %v7308
        %v7310 = vand.u32 %v6391, 4294901760
        %7311 = vmatprep.subr.mxu0 %v7310
        %v7312 = vand.u32 %v6390, 4294901760
        %7313 = vmatpush1.msra.mxu0 %v7312
        %v7314 = vand.u32 %v6387, 4294901760
        %7315 = vmatprep.subr.mxu0 %v7314
        %v7316 = vand.u32 %v6386, 4294901760
        %7317 = vmatpush1.msra.mxu0 %v7316
        %v7318 = vand.u32 %v6383, 4294901760
        %7319 = vmatprep.subr.mxu0 %v7318
        %v7320 = vand.u32 %v6382, 4294901760
        %7321 = vmatpush1.msra.mxu0 %v7320
        %v7322 = vand.u32 %v6379, 4294901760
        %7323 = vmatprep.subr.mxu0 %v7322
        %v7324 = vand.u32 %v6378, 4294901760
        %7325 = vmatpush1.msra.mxu0 %v7324
        %v7326 = vand.u32 %v6375, 4294901760
        %7327 = vmatprep.subr.mxu0 %v7326
        %v7328 = vand.u32 %v6374, 4294901760
        %7329 = vmatpush1.msra.mxu0 %v7328
        %v7330 = vand.u32 %v6371, 4294901760
        %7331 = vmatprep.subr.mxu0 %v7330
        %v7332 = vand.u32 %v6370, 4294901760
        %7333 = vmatpush1.msra.mxu0 %v7332
        %v7334 = vand.u32 %v6367, 4294901760
        %7335 = vmatprep.subr.mxu0 %v7334
        %v7336 = vand.u32 %v6366, 4294901760
        %7337 = vmatpush1.msra.mxu0 %v7336
        %v7338 = vand.u32 %v6363, 4294901760
        %7339 = vmatprep.subr.mxu0 %v7338
        %v7340 = vand.u32 %v6362, 4294901760
        %7341 = vmatpush1.msra.mxu0 %v7340
        %v7342 = vand.u32 %v6359, 4294901760
        %7343 = vmatprep.subr.mxu0 %v7342
        %v7344 = vand.u32 %v6358, 4294901760
        %7345 = vmatpush1.msra.mxu0 %v7344
        %7346 = vmatprep.subr.mxu0 0.0
        %7347 = vmatpush2.msra.mxu0 0.0
        %7348 = vmatprep.subr.mxu0 0.0
        %7349 = vmatpush2.msra.mxu0 0.0
        %7350 = vmatprep.subr.mxu0 0.0
        %7351 = vmatpush2.msra.mxu0 0.0
        %7352 = vmatprep.subr.mxu0 0.0
        %7353 = vmatpush2.msra.mxu0 0.0
        %7354 = vmatprep.subr.mxu0 0.0
        %7355 = vmatpush2.msra.mxu0 0.0
        %7356 = vmatprep.subr.mxu0 0.0
        %7357 = vmatpush2.msra.mxu0 0.0
        %7358 = vmatprep.subr.mxu0 0.0
        %7359 = vmatpush2.msra.mxu0 0.0
        %7360 = vmatprep.subr.mxu0 0.0
        %7361 = vmatpush2.msra.mxu0 0.0
        %7362 = vmatprep.subr.mxu0 0.0
        %7363 = vmatpush2.msra.mxu0 0.0
        %7364 = vmatprep.subr.mxu0 0.0
        %7365 = vmatpush2.msra.mxu0 0.0
        %7366 = vmatprep.subr.mxu0 0.0
        %7367 = vmatpush2.msra.mxu0 0.0
        %7368 = vmatprep.subr.mxu0 0.0
        %7369 = vmatpush2.msra.mxu0 0.0
        %7370 = vmatprep.subr.mxu0 0.0
        %7371 = vmatpush2.msra.mxu0 0.0
        %7372 = vmatprep.subr.mxu0 0.0
        %7373 = vmatpush2.msra.mxu0 0.0
        %7374 = vmatprep.subr.mxu0 0.0
        %7375 = vmatpush2.msra.mxu0 0.0
        %7376 = vmatprep.subr.mxu0 0.0
        %7377 = vmatpush2.msra.mxu0 0.0
        %7378 = vmatprep.mubr.f32.mxu0 0.0
        %v7379 = vand.u32 %v6420, 4294901760
        %v7380 = vsub.f32 %v6420, %v7379
        %v7381 = vand.u32 %v7380, 4294901760
        %v7382 = vsub.f32 %v7380, %v7381
        %v7383 = vand.u32 %v7382, 4294901760
        %7384 = vmatmul.mubr.f32.gmra.mxu0 %v7383
        %v7385 = vpop.f32.mrf.mxu0
        %v7386 = vadd.f32 %v6425, %v7385
        %v7387 = vpop.f32.mrf.mxu0
        %v7388 = vadd.f32 %v6425, %v7387
        %7389 = vdwg.mxu0
        %v7390 = vand.u32 %v6419, 4294901760
        %v7391 = vsub.f32 %v6419, %v7390
        %v7392 = vand.u32 %v7391, 4294901760
        %v7393 = vsub.f32 %v7391, %v7392
        %v7394 = vand.u32 %v7393, 4294901760
        %7395 = vmatprep.subr.mxu0 %v7394
        %v7396 = vand.u32 %v6418, 4294901760
        %v7397 = vsub.f32 %v6418, %v7396
        %v7398 = vand.u32 %v7397, 4294901760
        %v7399 = vsub.f32 %v7397, %v7398
        %v7400 = vand.u32 %v7399, 4294901760
        %7401 = vmatpush1.msra.mxu0 %v7400
        %v7402 = vand.u32 %v6415, 4294901760
        %v7403 = vsub.f32 %v6415, %v7402
        %v7404 = vand.u32 %v7403, 4294901760
        %v7405 = vsub.f32 %v7403, %v7404
        %v7406 = vand.u32 %v7405, 4294901760
        %7407 = vmatprep.subr.mxu0 %v7406
        %v7408 = vand.u32 %v6414, 4294901760
        %v7409 = vsub.f32 %v6414, %v7408
        %v7410 = vand.u32 %v7409, 4294901760
        %v7411 = vsub.f32 %v7409, %v7410
        %v7412 = vand.u32 %v7411, 4294901760
        %7413 = vmatpush1.msra.mxu0 %v7412
        %v7414 = vand.u32 %v6411, 4294901760
        %v7415 = vsub.f32 %v6411, %v7414
        %v7416 = vand.u32 %v7415, 4294901760
        %v7417 = vsub.f32 %v7415, %v7416
        %v7418 = vand.u32 %v7417, 4294901760
        %7419 = vmatprep.subr.mxu0 %v7418
        %v7420 = vand.u32 %v6410, 4294901760
        %v7421 = vsub.f32 %v6410, %v7420
        %v7422 = vand.u32 %v7421, 4294901760
        %v7423 = vsub.f32 %v7421, %v7422
        %v7424 = vand.u32 %v7423, 4294901760
        %7425 = vmatpush1.msra.mxu0 %v7424
        %v7426 = vand.u32 %v6407, 4294901760
        %v7427 = vsub.f32 %v6407, %v7426
        %v7428 = vand.u32 %v7427, 4294901760
        %v7429 = vsub.f32 %v7427, %v7428
        %v7430 = vand.u32 %v7429, 4294901760
        %7431 = vmatprep.subr.mxu0 %v7430
        %v7432 = vand.u32 %v6406, 4294901760
        %v7433 = vsub.f32 %v6406, %v7432
        %v7434 = vand.u32 %v7433, 4294901760
        %v7435 = vsub.f32 %v7433, %v7434
        %v7436 = vand.u32 %v7435, 4294901760
        %7437 = vmatpush1.msra.mxu0 %v7436
        %v7438 = vand.u32 %v6403, 4294901760
        %v7439 = vsub.f32 %v6403, %v7438
        %v7440 = vand.u32 %v7439, 4294901760
        %v7441 = vsub.f32 %v7439, %v7440
        %v7442 = vand.u32 %v7441, 4294901760
        %7443 = vmatprep.subr.mxu0 %v7442
        %v7444 = vand.u32 %v6402, 4294901760
        %v7445 = vsub.f32 %v6402, %v7444
        %v7446 = vand.u32 %v7445, 4294901760
        %v7447 = vsub.f32 %v7445, %v7446
        %v7448 = vand.u32 %v7447, 4294901760
        %7449 = vmatpush1.msra.mxu0 %v7448
        %v7450 = vand.u32 %v6399, 4294901760
        %v7451 = vsub.f32 %v6399, %v7450
        %v7452 = vand.u32 %v7451, 4294901760
        %v7453 = vsub.f32 %v7451, %v7452
        %v7454 = vand.u32 %v7453, 4294901760
        %7455 = vmatprep.subr.mxu0 %v7454
        %v7456 = vand.u32 %v6398, 4294901760
        %v7457 = vsub.f32 %v6398, %v7456
        %v7458 = vand.u32 %v7457, 4294901760
        %v7459 = vsub.f32 %v7457, %v7458
        %v7460 = vand.u32 %v7459, 4294901760
        %7461 = vmatpush1.msra.mxu0 %v7460
        %v7462 = vand.u32 %v6395, 4294901760
        %v7463 = vsub.f32 %v6395, %v7462
        %v7464 = vand.u32 %v7463, 4294901760
        %v7465 = vsub.f32 %v7463, %v7464
        %v7466 = vand.u32 %v7465, 4294901760
        %7467 = vmatprep.subr.mxu0 %v7466
        %v7468 = vand.u32 %v6394, 4294901760
        %v7469 = vsub.f32 %v6394, %v7468
        %v7470 = vand.u32 %v7469, 4294901760
        %v7471 = vsub.f32 %v7469, %v7470
        %v7472 = vand.u32 %v7471, 4294901760
        %7473 = vmatpush1.msra.mxu0 %v7472
        %v7474 = vand.u32 %v6391, 4294901760
        %v7475 = vsub.f32 %v6391, %v7474
        %v7476 = vand.u32 %v7475, 4294901760
        %v7477 = vsub.f32 %v7475, %v7476
        %v7478 = vand.u32 %v7477, 4294901760
        %7479 = vmatprep.subr.mxu0 %v7478
        %v7480 = vand.u32 %v6390, 4294901760
        %v7481 = vsub.f32 %v6390, %v7480
        %v7482 = vand.u32 %v7481, 4294901760
        %v7483 = vsub.f32 %v7481, %v7482
        %v7484 = vand.u32 %v7483, 4294901760
        %7485 = vmatpush1.msra.mxu0 %v7484
        %v7486 = vand.u32 %v6387, 4294901760
        %v7487 = vsub.f32 %v6387, %v7486
        %v7488 = vand.u32 %v7487, 4294901760
        %v7489 = vsub.f32 %v7487, %v7488
        %v7490 = vand.u32 %v7489, 4294901760
        %7491 = vmatprep.subr.mxu0 %v7490
        %v7492 = vand.u32 %v6386, 4294901760
        %v7493 = vsub.f32 %v6386, %v7492
        %v7494 = vand.u32 %v7493, 4294901760
        %v7495 = vsub.f32 %v7493, %v7494
        %v7496 = vand.u32 %v7495, 4294901760
        %7497 = vmatpush1.msra.mxu0 %v7496
        %v7498 = vand.u32 %v6383, 4294901760
        %v7499 = vsub.f32 %v6383, %v7498
        %v7500 = vand.u32 %v7499, 4294901760
        %v7501 = vsub.f32 %v7499, %v7500
        %v7502 = vand.u32 %v7501, 4294901760
        %7503 = vmatprep.subr.mxu0 %v7502
        %v7504 = vand.u32 %v6382, 4294901760
        %v7505 = vsub.f32 %v6382, %v7504
        %v7506 = vand.u32 %v7505, 4294901760
        %v7507 = vsub.f32 %v7505, %v7506
        %v7508 = vand.u32 %v7507, 4294901760
        %7509 = vmatpush1.msra.mxu0 %v7508
        %v7510 = vand.u32 %v6379, 4294901760
        %v7511 = vsub.f32 %v6379, %v7510
        %v7512 = vand.u32 %v7511, 4294901760
        %v7513 = vsub.f32 %v7511, %v7512
        %v7514 = vand.u32 %v7513, 4294901760
        %7515 = vmatprep.subr.mxu0 %v7514
        %v7516 = vand.u32 %v6378, 4294901760
        %v7517 = vsub.f32 %v6378, %v7516
        %v7518 = vand.u32 %v7517, 4294901760
        %v7519 = vsub.f32 %v7517, %v7518
        %v7520 = vand.u32 %v7519, 4294901760
        %7521 = vmatpush1.msra.mxu0 %v7520
        %v7522 = vand.u32 %v6375, 4294901760
        %v7523 = vsub.f32 %v6375, %v7522
        %v7524 = vand.u32 %v7523, 4294901760
        %v7525 = vsub.f32 %v7523, %v7524
        %v7526 = vand.u32 %v7525, 4294901760
        %7527 = vmatprep.subr.mxu0 %v7526
        %v7528 = vand.u32 %v6374, 4294901760
        %v7529 = vsub.f32 %v6374, %v7528
        %v7530 = vand.u32 %v7529, 4294901760
        %v7531 = vsub.f32 %v7529, %v7530
        %v7532 = vand.u32 %v7531, 4294901760
        %7533 = vmatpush1.msra.mxu0 %v7532
        %v7534 = vand.u32 %v6371, 4294901760
        %v7535 = vsub.f32 %v6371, %v7534
        %v7536 = vand.u32 %v7535, 4294901760
        %v7537 = vsub.f32 %v7535, %v7536
        %v7538 = vand.u32 %v7537, 4294901760
        %7539 = vmatprep.subr.mxu0 %v7538
        %v7540 = vand.u32 %v6370, 4294901760
        %v7541 = vsub.f32 %v6370, %v7540
        %v7542 = vand.u32 %v7541, 4294901760
        %v7543 = vsub.f32 %v7541, %v7542
        %v7544 = vand.u32 %v7543, 4294901760
        %7545 = vmatpush1.msra.mxu0 %v7544
        %v7546 = vand.u32 %v6367, 4294901760
        %v7547 = vsub.f32 %v6367, %v7546
        %v7548 = vand.u32 %v7547, 4294901760
        %v7549 = vsub.f32 %v7547, %v7548
        %v7550 = vand.u32 %v7549, 4294901760
        %7551 = vmatprep.subr.mxu0 %v7550
        %v7552 = vand.u32 %v6366, 4294901760
        %v7553 = vsub.f32 %v6366, %v7552
        %v7554 = vand.u32 %v7553, 4294901760
        %v7555 = vsub.f32 %v7553, %v7554
        %v7556 = vand.u32 %v7555, 4294901760
        %7557 = vmatpush1.msra.mxu0 %v7556
        %v7558 = vand.u32 %v6363, 4294901760
        %v7559 = vsub.f32 %v6363, %v7558
        %v7560 = vand.u32 %v7559, 4294901760
        %v7561 = vsub.f32 %v7559, %v7560
        %v7562 = vand.u32 %v7561, 4294901760
        %7563 = vmatprep.subr.mxu0 %v7562
        %v7564 = vand.u32 %v6362, 4294901760
        %v7565 = vsub.f32 %v6362, %v7564
        %v7566 = vand.u32 %v7565, 4294901760
        %v7567 = vsub.f32 %v7565, %v7566
        %v7568 = vand.u32 %v7567, 4294901760
        %7569 = vmatpush1.msra.mxu0 %v7568
        %v7570 = vand.u32 %v6359, 4294901760
        %v7571 = vsub.f32 %v6359, %v7570
        %v7572 = vand.u32 %v7571, 4294901760
        %v7573 = vsub.f32 %v7571, %v7572
        %v7574 = vand.u32 %v7573, 4294901760
        %7575 = vmatprep.subr.mxu0 %v7574
        %v7576 = vand.u32 %v6358, 4294901760
        %v7577 = vsub.f32 %v6358, %v7576
        %v7578 = vand.u32 %v7577, 4294901760
        %v7579 = vsub.f32 %v7577, %v7578
        %v7580 = vand.u32 %v7579, 4294901760
        %7581 = vmatpush1.msra.mxu0 %v7580
        %7582 = vmatprep.subr.mxu0 0.0
        %7583 = vmatpush2.msra.mxu0 0.0
        %7584 = vmatprep.subr.mxu0 0.0
        %7585 = vmatpush2.msra.mxu0 0.0
        %7586 = vmatprep.subr.mxu0 0.0
        %7587 = vmatpush2.msra.mxu0 0.0
        %7588 = vmatprep.subr.mxu0 0.0
        %7589 = vmatpush2.msra.mxu0 0.0
        %7590 = vmatprep.subr.mxu0 0.0
        %7591 = vmatpush2.msra.mxu0 0.0
        %7592 = vmatprep.subr.mxu0 0.0
        %7593 = vmatpush2.msra.mxu0 0.0
        %7594 = vmatprep.subr.mxu0 0.0
        %7595 = vmatpush2.msra.mxu0 0.0
        %7596 = vmatprep.subr.mxu0 0.0
        %7597 = vmatpush2.msra.mxu0 0.0
        %7598 = vmatprep.subr.mxu0 0.0
        %7599 = vmatpush2.msra.mxu0 0.0
        %7600 = vmatprep.subr.mxu0 0.0
        %7601 = vmatpush2.msra.mxu0 0.0
        %7602 = vmatprep.subr.mxu0 0.0
        %7603 = vmatpush2.msra.mxu0 0.0
        %7604 = vmatprep.subr.mxu0 0.0
        %7605 = vmatpush2.msra.mxu0 0.0
        %7606 = vmatprep.subr.mxu0 0.0
        %7607 = vmatpush2.msra.mxu0 0.0
        %7608 = vmatprep.subr.mxu0 0.0
        %7609 = vmatpush2.msra.mxu0 0.0
        %7610 = vmatprep.subr.mxu0 0.0
        %7611 = vmatpush2.msra.mxu0 0.0
        %7612 = vmatprep.subr.mxu0 0.0
        %7613 = vmatpush2.msra.mxu0 0.0
        %7614 = vmatprep.mubr.f32.mxu0 0.0
        %v7615 = vand.u32 %v6420, 4294901760
        %7616 = vmatmul.mubr.f32.gmra.mxu0 %v7615
        %v7617 = vpop.f32.mrf.mxu0
        %v7618 = vadd.f32 %v7386, %v7617
        %v7619 = vpop.f32.mrf.mxu0
        %v7620 = vadd.f32 %v7388, %v7619
        %7621 = vdwg.mxu0
        %v7622 = vand.u32 %v6419, 4294901760
        %v7623 = vsub.f32 %v6419, %v7622
        %7624 = vmatprep.subr.mxu0 %v7623
        %v7625 = vand.u32 %v6418, 4294901760
        %v7626 = vsub.f32 %v6418, %v7625
        %7627 = vmatpush1.msra.mxu0 %v7626
        %v7628 = vand.u32 %v6415, 4294901760
        %v7629 = vsub.f32 %v6415, %v7628
        %7630 = vmatprep.subr.mxu0 %v7629
        %v7631 = vand.u32 %v6414, 4294901760
        %v7632 = vsub.f32 %v6414, %v7631
        %7633 = vmatpush1.msra.mxu0 %v7632
        %v7634 = vand.u32 %v6411, 4294901760
        %v7635 = vsub.f32 %v6411, %v7634
        %7636 = vmatprep.subr.mxu0 %v7635
        %v7637 = vand.u32 %v6410, 4294901760
        %v7638 = vsub.f32 %v6410, %v7637
        %7639 = vmatpush1.msra.mxu0 %v7638
        %v7640 = vand.u32 %v6407, 4294901760
        %v7641 = vsub.f32 %v6407, %v7640
        %7642 = vmatprep.subr.mxu0 %v7641
        %v7643 = vand.u32 %v6406, 4294901760
        %v7644 = vsub.f32 %v6406, %v7643
        %7645 = vmatpush1.msra.mxu0 %v7644
        %v7646 = vand.u32 %v6403, 4294901760
        %v7647 = vsub.f32 %v6403, %v7646
        %7648 = vmatprep.subr.mxu0 %v7647
        %v7649 = vand.u32 %v6402, 4294901760
        %v7650 = vsub.f32 %v6402, %v7649
        %7651 = vmatpush1.msra.mxu0 %v7650
        %v7652 = vand.u32 %v6399, 4294901760
        %v7653 = vsub.f32 %v6399, %v7652
        %7654 = vmatprep.subr.mxu0 %v7653
        %v7655 = vand.u32 %v6398, 4294901760
        %v7656 = vsub.f32 %v6398, %v7655
        %7657 = vmatpush1.msra.mxu0 %v7656
        %v7658 = vand.u32 %v6395, 4294901760
        %v7659 = vsub.f32 %v6395, %v7658
        %7660 = vmatprep.subr.mxu0 %v7659
        %v7661 = vand.u32 %v6394, 4294901760
        %v7662 = vsub.f32 %v6394, %v7661
        %7663 = vmatpush1.msra.mxu0 %v7662
        %v7664 = vand.u32 %v6391, 4294901760
        %v7665 = vsub.f32 %v6391, %v7664
        %7666 = vmatprep.subr.mxu0 %v7665
        %v7667 = vand.u32 %v6390, 4294901760
        %v7668 = vsub.f32 %v6390, %v7667
        %7669 = vmatpush1.msra.mxu0 %v7668
        %v7670 = vand.u32 %v6387, 4294901760
        %v7671 = vsub.f32 %v6387, %v7670
        %7672 = vmatprep.subr.mxu0 %v7671
        %v7673 = vand.u32 %v6386, 4294901760
        %v7674 = vsub.f32 %v6386, %v7673
        %7675 = vmatpush1.msra.mxu0 %v7674
        %v7676 = vand.u32 %v6383, 4294901760
        %v7677 = vsub.f32 %v6383, %v7676
        %7678 = vmatprep.subr.mxu0 %v7677
        %v7679 = vand.u32 %v6382, 4294901760
        %v7680 = vsub.f32 %v6382, %v7679
        %7681 = vmatpush1.msra.mxu0 %v7680
        %v7682 = vand.u32 %v6379, 4294901760
        %v7683 = vsub.f32 %v6379, %v7682
        %7684 = vmatprep.subr.mxu0 %v7683
        %v7685 = vand.u32 %v6378, 4294901760
        %v7686 = vsub.f32 %v6378, %v7685
        %7687 = vmatpush1.msra.mxu0 %v7686
        %v7688 = vand.u32 %v6375, 4294901760
        %v7689 = vsub.f32 %v6375, %v7688
        %7690 = vmatprep.subr.mxu0 %v7689
        %v7691 = vand.u32 %v6374, 4294901760
        %v7692 = vsub.f32 %v6374, %v7691
        %7693 = vmatpush1.msra.mxu0 %v7692
        %v7694 = vand.u32 %v6371, 4294901760
        %v7695 = vsub.f32 %v6371, %v7694
        %7696 = vmatprep.subr.mxu0 %v7695
        %v7697 = vand.u32 %v6370, 4294901760
        %v7698 = vsub.f32 %v6370, %v7697
        %7699 = vmatpush1.msra.mxu0 %v7698
        %v7700 = vand.u32 %v6367, 4294901760
        %v7701 = vsub.f32 %v6367, %v7700
        %7702 = vmatprep.subr.mxu0 %v7701
        %v7703 = vand.u32 %v6366, 4294901760
        %v7704 = vsub.f32 %v6366, %v7703
        %7705 = vmatpush1.msra.mxu0 %v7704
        %v7706 = vand.u32 %v6363, 4294901760
        %v7707 = vsub.f32 %v6363, %v7706
        %7708 = vmatprep.subr.mxu0 %v7707
        %v7709 = vand.u32 %v6362, 4294901760
        %v7710 = vsub.f32 %v6362, %v7709
        %7711 = vmatpush1.msra.mxu0 %v7710
        %v7712 = vand.u32 %v6359, 4294901760
        %v7713 = vsub.f32 %v6359, %v7712
        %7714 = vmatprep.subr.mxu0 %v7713
        %v7715 = vand.u32 %v6358, 4294901760
        %v7716 = vsub.f32 %v6358, %v7715
        %7717 = vmatpush1.msra.mxu0 %v7716
        %7718 = vmatprep.subr.mxu0 0.0
        %7719 = vmatpush2.msra.mxu0 0.0
        %7720 = vmatprep.subr.mxu0 0.0
        %7721 = vmatpush2.msra.mxu0 0.0
        %7722 = vmatprep.subr.mxu0 0.0
        %7723 = vmatpush2.msra.mxu0 0.0
        %7724 = vmatprep.subr.mxu0 0.0
        %7725 = vmatpush2.msra.mxu0 0.0
        %7726 = vmatprep.subr.mxu0 0.0
        %7727 = vmatpush2.msra.mxu0 0.0
        %7728 = vmatprep.subr.mxu0 0.0
        %7729 = vmatpush2.msra.mxu0 0.0
        %7730 = vmatprep.subr.mxu0 0.0
        %7731 = vmatpush2.msra.mxu0 0.0
        %7732 = vmatprep.subr.mxu0 0.0
        %7733 = vmatpush2.msra.mxu0 0.0
        %7734 = vmatprep.subr.mxu0 0.0
        %7735 = vmatpush2.msra.mxu0 0.0
        %7736 = vmatprep.subr.mxu0 0.0
        %7737 = vmatpush2.msra.mxu0 0.0
        %7738 = vmatprep.subr.mxu0 0.0
        %7739 = vmatpush2.msra.mxu0 0.0
        %7740 = vmatprep.subr.mxu0 0.0
        %7741 = vmatpush2.msra.mxu0 0.0
        %7742 = vmatprep.subr.mxu0 0.0
        %7743 = vmatpush2.msra.mxu0 0.0
        %7744 = vmatprep.subr.mxu0 0.0
        %7745 = vmatpush2.msra.mxu0 0.0
        %7746 = vmatprep.subr.mxu0 0.0
        %7747 = vmatpush2.msra.mxu0 0.0
        %7748 = vmatprep.subr.mxu0 0.0
        %7749 = vmatpush2.msra.mxu0 0.0
        %7750 = vmatprep.mubr.f32.mxu0 0.0
        %v7751 = vand.u32 %v6420, 4294901760
        %v7752 = vsub.f32 %v6420, %v7751
        %7753 = vmatmul.mubr.f32.gmra.mxu0 %v7752
        %v7754 = vpop.f32.mrf.mxu0
        %v7755 = vadd.f32 %v7618, %v7754
        %v7756 = vpop.f32.mrf.mxu0
        %v7757 = vadd.f32 %v7620, %v7756
        %7758 = vdwg.mxu0
        %v7759 = vand.u32 %v6419, 4294901760
        %7760 = vmatprep.subr.mxu0 %v7759
        %v7761 = vand.u32 %v6418, 4294901760
        %7762 = vmatpush1.msra.mxu0 %v7761
        %v7763 = vand.u32 %v6415, 4294901760
        %7764 = vmatprep.subr.mxu0 %v7763
        %v7765 = vand.u32 %v6414, 4294901760
        %7766 = vmatpush1.msra.mxu0 %v7765
        %v7767 = vand.u32 %v6411, 4294901760
        %7768 = vmatprep.subr.mxu0 %v7767
        %v7769 = vand.u32 %v6410, 4294901760
        %7770 = vmatpush1.msra.mxu0 %v7769
        %v7771 = vand.u32 %v6407, 4294901760
        %7772 = vmatprep.subr.mxu0 %v7771
        %v7773 = vand.u32 %v6406, 4294901760
        %7774 = vmatpush1.msra.mxu0 %v7773
        %v7775 = vand.u32 %v6403, 4294901760
        %7776 = vmatprep.subr.mxu0 %v7775
        %v7777 = vand.u32 %v6402, 4294901760
        %7778 = vmatpush1.msra.mxu0 %v7777
        %v7779 = vand.u32 %v6399, 4294901760
        %7780 = vmatprep.subr.mxu0 %v7779
        %v7781 = vand.u32 %v6398, 4294901760
        %7782 = vmatpush1.msra.mxu0 %v7781
        %v7783 = vand.u32 %v6395, 4294901760
        %7784 = vmatprep.subr.mxu0 %v7783
        %v7785 = vand.u32 %v6394, 4294901760
        %7786 = vmatpush1.msra.mxu0 %v7785
        %v7787 = vand.u32 %v6391, 4294901760
        %7788 = vmatprep.subr.mxu0 %v7787
        %v7789 = vand.u32 %v6390, 4294901760
        %7790 = vmatpush1.msra.mxu0 %v7789
        %v7791 = vand.u32 %v6387, 4294901760
        %7792 = vmatprep.subr.mxu0 %v7791
        %v7793 = vand.u32 %v6386, 4294901760
        %7794 = vmatpush1.msra.mxu0 %v7793
        %v7795 = vand.u32 %v6383, 4294901760
        %7796 = vmatprep.subr.mxu0 %v7795
        %v7797 = vand.u32 %v6382, 4294901760
        %7798 = vmatpush1.msra.mxu0 %v7797
        %v7799 = vand.u32 %v6379, 4294901760
        %7800 = vmatprep.subr.mxu0 %v7799
        %v7801 = vand.u32 %v6378, 4294901760
        %7802 = vmatpush1.msra.mxu0 %v7801
        %v7803 = vand.u32 %v6375, 4294901760
        %7804 = vmatprep.subr.mxu0 %v7803
        %v7805 = vand.u32 %v6374, 4294901760
        %7806 = vmatpush1.msra.mxu0 %v7805
        %v7807 = vand.u32 %v6371, 4294901760
        %7808 = vmatprep.subr.mxu0 %v7807
        %v7809 = vand.u32 %v6370, 4294901760
        %7810 = vmatpush1.msra.mxu0 %v7809
        %v7811 = vand.u32 %v6367, 4294901760
        %7812 = vmatprep.subr.mxu0 %v7811
        %v7813 = vand.u32 %v6366, 4294901760
        %7814 = vmatpush1.msra.mxu0 %v7813
        %v7815 = vand.u32 %v6363, 4294901760
        %7816 = vmatprep.subr.mxu0 %v7815
        %v7817 = vand.u32 %v6362, 4294901760
        %7818 = vmatpush1.msra.mxu0 %v7817
        %v7819 = vand.u32 %v6359, 4294901760
        %7820 = vmatprep.subr.mxu0 %v7819
        %v7821 = vand.u32 %v6358, 4294901760
        %7822 = vmatpush1.msra.mxu0 %v7821
        %7823 = vmatprep.subr.mxu0 0.0
        %7824 = vmatpush2.msra.mxu0 0.0
        %7825 = vmatprep.subr.mxu0 0.0
        %7826 = vmatpush2.msra.mxu0 0.0
        %7827 = vmatprep.subr.mxu0 0.0
        %7828 = vmatpush2.msra.mxu0 0.0
        %7829 = vmatprep.subr.mxu0 0.0
        %7830 = vmatpush2.msra.mxu0 0.0
        %7831 = vmatprep.subr.mxu0 0.0
        %7832 = vmatpush2.msra.mxu0 0.0
        %7833 = vmatprep.subr.mxu0 0.0
        %7834 = vmatpush2.msra.mxu0 0.0
        %7835 = vmatprep.subr.mxu0 0.0
        %7836 = vmatpush2.msra.mxu0 0.0
        %7837 = vmatprep.subr.mxu0 0.0
        %7838 = vmatpush2.msra.mxu0 0.0
        %7839 = vmatprep.subr.mxu0 0.0
        %7840 = vmatpush2.msra.mxu0 0.0
        %7841 = vmatprep.subr.mxu0 0.0
        %7842 = vmatpush2.msra.mxu0 0.0
        %7843 = vmatprep.subr.mxu0 0.0
        %7844 = vmatpush2.msra.mxu0 0.0
        %7845 = vmatprep.subr.mxu0 0.0
        %7846 = vmatpush2.msra.mxu0 0.0
        %7847 = vmatprep.subr.mxu0 0.0
        %7848 = vmatpush2.msra.mxu0 0.0
        %7849 = vmatprep.subr.mxu0 0.0
        %7850 = vmatpush2.msra.mxu0 0.0
        %7851 = vmatprep.subr.mxu0 0.0
        %7852 = vmatpush2.msra.mxu0 0.0
        %7853 = vmatprep.subr.mxu0 0.0
        %7854 = vmatpush2.msra.mxu0 0.0
        %7855 = vmatprep.mubr.f32.mxu0 0.0
        %v7856 = vand.u32 %v6420, 4294901760
        %v7857 = vsub.f32 %v6420, %v7856
        %v7858 = vand.u32 %v7857, 4294901760
        %7859 = vmatmul.mubr.f32.gmra.mxu0 %v7858
        %v7860 = vpop.f32.mrf.mxu0
        %v7861 = vadd.f32 %v7755, %v7860
        %v7862 = vpop.f32.mrf.mxu0
        %v7863 = vadd.f32 %v7757, %v7862
        %7864 = vdwg.mxu0
        %v7865 = vand.u32 %v6419, 4294901760
        %v7866 = vsub.f32 %v6419, %v7865
        %v7867 = vand.u32 %v7866, 4294901760
        %7868 = vmatprep.subr.mxu0 %v7867
        %v7869 = vand.u32 %v6418, 4294901760
        %v7870 = vsub.f32 %v6418, %v7869
        %v7871 = vand.u32 %v7870, 4294901760
        %7872 = vmatpush1.msra.mxu0 %v7871
        %v7873 = vand.u32 %v6415, 4294901760
        %v7874 = vsub.f32 %v6415, %v7873
        %v7875 = vand.u32 %v7874, 4294901760
        %7876 = vmatprep.subr.mxu0 %v7875
        %v7877 = vand.u32 %v6414, 4294901760
        %v7878 = vsub.f32 %v6414, %v7877
        %v7879 = vand.u32 %v7878, 4294901760
        %7880 = vmatpush1.msra.mxu0 %v7879
        %v7881 = vand.u32 %v6411, 4294901760
        %v7882 = vsub.f32 %v6411, %v7881
        %v7883 = vand.u32 %v7882, 4294901760
        %7884 = vmatprep.subr.mxu0 %v7883
        %v7885 = vand.u32 %v6410, 4294901760
        %v7886 = vsub.f32 %v6410, %v7885
        %v7887 = vand.u32 %v7886, 4294901760
        %7888 = vmatpush1.msra.mxu0 %v7887
        %v7889 = vand.u32 %v6407, 4294901760
        %v7890 = vsub.f32 %v6407, %v7889
        %v7891 = vand.u32 %v7890, 4294901760
        %7892 = vmatprep.subr.mxu0 %v7891
        %v7893 = vand.u32 %v6406, 4294901760
        %v7894 = vsub.f32 %v6406, %v7893
        %v7895 = vand.u32 %v7894, 4294901760
        %7896 = vmatpush1.msra.mxu0 %v7895
        %v7897 = vand.u32 %v6403, 4294901760
        %v7898 = vsub.f32 %v6403, %v7897
        %v7899 = vand.u32 %v7898, 4294901760
        %7900 = vmatprep.subr.mxu0 %v7899
        %v7901 = vand.u32 %v6402, 4294901760
        %v7902 = vsub.f32 %v6402, %v7901
        %v7903 = vand.u32 %v7902, 4294901760
        %7904 = vmatpush1.msra.mxu0 %v7903
        %v7905 = vand.u32 %v6399, 4294901760
        %v7906 = vsub.f32 %v6399, %v7905
        %v7907 = vand.u32 %v7906, 4294901760
        %7908 = vmatprep.subr.mxu0 %v7907
        %v7909 = vand.u32 %v6398, 4294901760
        %v7910 = vsub.f32 %v6398, %v7909
        %v7911 = vand.u32 %v7910, 4294901760
        %7912 = vmatpush1.msra.mxu0 %v7911
        %v7913 = vand.u32 %v6395, 4294901760
        %v7914 = vsub.f32 %v6395, %v7913
        %v7915 = vand.u32 %v7914, 4294901760
        %7916 = vmatprep.subr.mxu0 %v7915
        %v7917 = vand.u32 %v6394, 4294901760
        %v7918 = vsub.f32 %v6394, %v7917
        %v7919 = vand.u32 %v7918, 4294901760
        %7920 = vmatpush1.msra.mxu0 %v7919
        %v7921 = vand.u32 %v6391, 4294901760
        %v7922 = vsub.f32 %v6391, %v7921
        %v7923 = vand.u32 %v7922, 4294901760
        %7924 = vmatprep.subr.mxu0 %v7923
        %v7925 = vand.u32 %v6390, 4294901760
        %v7926 = vsub.f32 %v6390, %v7925
        %v7927 = vand.u32 %v7926, 4294901760
        %7928 = vmatpush1.msra.mxu0 %v7927
        %v7929 = vand.u32 %v6387, 4294901760
        %v7930 = vsub.f32 %v6387, %v7929
        %v7931 = vand.u32 %v7930, 4294901760
        %7932 = vmatprep.subr.mxu0 %v7931
        %v7933 = vand.u32 %v6386, 4294901760
        %v7934 = vsub.f32 %v6386, %v7933
        %v7935 = vand.u32 %v7934, 4294901760
        %7936 = vmatpush1.msra.mxu0 %v7935
        %v7937 = vand.u32 %v6383, 4294901760
        %v7938 = vsub.f32 %v6383, %v7937
        %v7939 = vand.u32 %v7938, 4294901760
        %7940 = vmatprep.subr.mxu0 %v7939
        %v7941 = vand.u32 %v6382, 4294901760
        %v7942 = vsub.f32 %v6382, %v7941
        %v7943 = vand.u32 %v7942, 4294901760
        %7944 = vmatpush1.msra.mxu0 %v7943
        %v7945 = vand.u32 %v6379, 4294901760
        %v7946 = vsub.f32 %v6379, %v7945
        %v7947 = vand.u32 %v7946, 4294901760
        %7948 = vmatprep.subr.mxu0 %v7947
        %v7949 = vand.u32 %v6378, 4294901760
        %v7950 = vsub.f32 %v6378, %v7949
        %v7951 = vand.u32 %v7950, 4294901760
        %7952 = vmatpush1.msra.mxu0 %v7951
        %v7953 = vand.u32 %v6375, 4294901760
        %v7954 = vsub.f32 %v6375, %v7953
        %v7955 = vand.u32 %v7954, 4294901760
        %7956 = vmatprep.subr.mxu0 %v7955
        %v7957 = vand.u32 %v6374, 4294901760
        %v7958 = vsub.f32 %v6374, %v7957
        %v7959 = vand.u32 %v7958, 4294901760
        %7960 = vmatpush1.msra.mxu0 %v7959
        %v7961 = vand.u32 %v6371, 4294901760
        %v7962 = vsub.f32 %v6371, %v7961
        %v7963 = vand.u32 %v7962, 4294901760
        %7964 = vmatprep.subr.mxu0 %v7963
        %v7965 = vand.u32 %v6370, 4294901760
        %v7966 = vsub.f32 %v6370, %v7965
        %v7967 = vand.u32 %v7966, 4294901760
        %7968 = vmatpush1.msra.mxu0 %v7967
        %v7969 = vand.u32 %v6367, 4294901760
        %v7970 = vsub.f32 %v6367, %v7969
        %v7971 = vand.u32 %v7970, 4294901760
        %7972 = vmatprep.subr.mxu0 %v7971
        %v7973 = vand.u32 %v6366, 4294901760
        %v7974 = vsub.f32 %v6366, %v7973
        %v7975 = vand.u32 %v7974, 4294901760
        %7976 = vmatpush1.msra.mxu0 %v7975
        %v7977 = vand.u32 %v6363, 4294901760
        %v7978 = vsub.f32 %v6363, %v7977
        %v7979 = vand.u32 %v7978, 4294901760
        %7980 = vmatprep.subr.mxu0 %v7979
        %v7981 = vand.u32 %v6362, 4294901760
        %v7982 = vsub.f32 %v6362, %v7981
        %v7983 = vand.u32 %v7982, 4294901760
        %7984 = vmatpush1.msra.mxu0 %v7983
        %v7985 = vand.u32 %v6359, 4294901760
        %v7986 = vsub.f32 %v6359, %v7985
        %v7987 = vand.u32 %v7986, 4294901760
        %7988 = vmatprep.subr.mxu0 %v7987
        %v7989 = vand.u32 %v6358, 4294901760
        %v7990 = vsub.f32 %v6358, %v7989
        %v7991 = vand.u32 %v7990, 4294901760
        %7992 = vmatpush1.msra.mxu0 %v7991
        %7993 = vmatprep.subr.mxu0 0.0
        %7994 = vmatpush2.msra.mxu0 0.0
        %7995 = vmatprep.subr.mxu0 0.0
        %7996 = vmatpush2.msra.mxu0 0.0
        %7997 = vmatprep.subr.mxu0 0.0
        %7998 = vmatpush2.msra.mxu0 0.0
        %7999 = vmatprep.subr.mxu0 0.0
        %8000 = vmatpush2.msra.mxu0 0.0
        %8001 = vmatprep.subr.mxu0 0.0
        %8002 = vmatpush2.msra.mxu0 0.0
        %8003 = vmatprep.subr.mxu0 0.0
        %8004 = vmatpush2.msra.mxu0 0.0
        %8005 = vmatprep.subr.mxu0 0.0
        %8006 = vmatpush2.msra.mxu0 0.0
        %8007 = vmatprep.subr.mxu0 0.0
        %8008 = vmatpush2.msra.mxu0 0.0
        %8009 = vmatprep.subr.mxu0 0.0
        %8010 = vmatpush2.msra.mxu0 0.0
        %8011 = vmatprep.subr.mxu0 0.0
        %8012 = vmatpush2.msra.mxu0 0.0
        %8013 = vmatprep.subr.mxu0 0.0
        %8014 = vmatpush2.msra.mxu0 0.0
        %8015 = vmatprep.subr.mxu0 0.0
        %8016 = vmatpush2.msra.mxu0 0.0
        %8017 = vmatprep.subr.mxu0 0.0
        %8018 = vmatpush2.msra.mxu0 0.0
        %8019 = vmatprep.subr.mxu0 0.0
        %8020 = vmatpush2.msra.mxu0 0.0
        %8021 = vmatprep.subr.mxu0 0.0
        %8022 = vmatpush2.msra.mxu0 0.0
        %8023 = vmatprep.subr.mxu0 0.0
        %8024 = vmatpush2.msra.mxu0 0.0
        %8025 = vmatprep.mubr.f32.mxu0 0.0
        %v8026 = vand.u32 %v6420, 4294901760
        %8027 = vmatmul.mubr.f32.gmra.mxu0 %v8026
        %v8028 = vpop.f32.mrf.mxu0
        %v8029 = vadd.f32 %v7861, %v8028
        %v8030 = vpop.f32.mrf.mxu0
        %v8031 = vadd.f32 %v7863, %v8030
        %8032 = vdwg.mxu0
        %v8033 = vand.u32 %v6419, 4294901760
        %8034 = vmatprep.subr.mxu0 %v8033
        %v8035 = vand.u32 %v6418, 4294901760
        %8036 = vmatpush1.msra.mxu0 %v8035
        %v8037 = vand.u32 %v6415, 4294901760
        %8038 = vmatprep.subr.mxu0 %v8037
        %v8039 = vand.u32 %v6414, 4294901760
        %8040 = vmatpush1.msra.mxu0 %v8039
        %v8041 = vand.u32 %v6411, 4294901760
        %8042 = vmatprep.subr.mxu0 %v8041
        %v8043 = vand.u32 %v6410, 4294901760
        %8044 = vmatpush1.msra.mxu0 %v8043
        %v8045 = vand.u32 %v6407, 4294901760
        %8046 = vmatprep.subr.mxu0 %v8045
        %v8047 = vand.u32 %v6406, 4294901760
        %8048 = vmatpush1.msra.mxu0 %v8047
        %v8049 = vand.u32 %v6403, 4294901760
        %8050 = vmatprep.subr.mxu0 %v8049
        %v8051 = vand.u32 %v6402, 4294901760
        %8052 = vmatpush1.msra.mxu0 %v8051
        %v8053 = vand.u32 %v6399, 4294901760
        %8054 = vmatprep.subr.mxu0 %v8053
        %v8055 = vand.u32 %v6398, 4294901760
        %8056 = vmatpush1.msra.mxu0 %v8055
        %v8057 = vand.u32 %v6395, 4294901760
        %8058 = vmatprep.subr.mxu0 %v8057
        %v8059 = vand.u32 %v6394, 4294901760
        %8060 = vmatpush1.msra.mxu0 %v8059
        %v8061 = vand.u32 %v6391, 4294901760
        %8062 = vmatprep.subr.mxu0 %v8061
        %v8063 = vand.u32 %v6390, 4294901760
        %8064 = vmatpush1.msra.mxu0 %v8063
        %v8065 = vand.u32 %v6387, 4294901760
        %8066 = vmatprep.subr.mxu0 %v8065
        %v8067 = vand.u32 %v6386, 4294901760
        %8068 = vmatpush1.msra.mxu0 %v8067
        %v8069 = vand.u32 %v6383, 4294901760
        %8070 = vmatprep.subr.mxu0 %v8069
        %v8071 = vand.u32 %v6382, 4294901760
        %8072 = vmatpush1.msra.mxu0 %v8071
        %v8073 = vand.u32 %v6379, 4294901760
        %8074 = vmatprep.subr.mxu0 %v8073
        %v8075 = vand.u32 %v6378, 4294901760
        %8076 = vmatpush1.msra.mxu0 %v8075
        %v8077 = vand.u32 %v6375, 4294901760
        %8078 = vmatprep.subr.mxu0 %v8077
        %v8079 = vand.u32 %v6374, 4294901760
        %8080 = vmatpush1.msra.mxu0 %v8079
        %v8081 = vand.u32 %v6371, 4294901760
        %8082 = vmatprep.subr.mxu0 %v8081
        %v8083 = vand.u32 %v6370, 4294901760
        %8084 = vmatpush1.msra.mxu0 %v8083
        %v8085 = vand.u32 %v6367, 4294901760
        %8086 = vmatprep.subr.mxu0 %v8085
        %v8087 = vand.u32 %v6366, 4294901760
        %8088 = vmatpush1.msra.mxu0 %v8087
        %v8089 = vand.u32 %v6363, 4294901760
        %8090 = vmatprep.subr.mxu0 %v8089
        %v8091 = vand.u32 %v6362, 4294901760
        %8092 = vmatpush1.msra.mxu0 %v8091
        %v8093 = vand.u32 %v6359, 4294901760
        %8094 = vmatprep.subr.mxu0 %v8093
        %v8095 = vand.u32 %v6358, 4294901760
        %8096 = vmatpush1.msra.mxu0 %v8095
        %8097 = vmatprep.subr.mxu0 0.0
        %8098 = vmatpush2.msra.mxu0 0.0
        %8099 = vmatprep.subr.mxu0 0.0
        %8100 = vmatpush2.msra.mxu0 0.0
        %8101 = vmatprep.subr.mxu0 0.0
        %8102 = vmatpush2.msra.mxu0 0.0
        %8103 = vmatprep.subr.mxu0 0.0
        %8104 = vmatpush2.msra.mxu0 0.0
        %8105 = vmatprep.subr.mxu0 0.0
        %8106 = vmatpush2.msra.mxu0 0.0
        %8107 = vmatprep.subr.mxu0 0.0
        %8108 = vmatpush2.msra.mxu0 0.0
        %8109 = vmatprep.subr.mxu0 0.0
        %8110 = vmatpush2.msra.mxu0 0.0
        %8111 = vmatprep.subr.mxu0 0.0
        %8112 = vmatpush2.msra.mxu0 0.0
        %8113 = vmatprep.subr.mxu0 0.0
        %8114 = vmatpush2.msra.mxu0 0.0
        %8115 = vmatprep.subr.mxu0 0.0
        %8116 = vmatpush2.msra.mxu0 0.0
        %8117 = vmatprep.subr.mxu0 0.0
        %8118 = vmatpush2.msra.mxu0 0.0
        %8119 = vmatprep.subr.mxu0 0.0
        %8120 = vmatpush2.msra.mxu0 0.0
        %8121 = vmatprep.subr.mxu0 0.0
        %8122 = vmatpush2.msra.mxu0 0.0
        %8123 = vmatprep.subr.mxu0 0.0
        %8124 = vmatpush2.msra.mxu0 0.0
        %8125 = vmatprep.subr.mxu0 0.0
        %8126 = vmatpush2.msra.mxu0 0.0
        %8127 = vmatprep.subr.mxu0 0.0
        %8128 = vmatpush2.msra.mxu0 0.0
        %8129 = vmatprep.mubr.f32.mxu0 0.0
        %v8130 = vand.u32 %v6420, 4294901760
        %8131 = vmatmul.mubr.f32.gmra.mxu0 %v8130
        %v8132 = vpop.f32.mrf.mxu0
        %v8133 = vadd.f32 %v8029, %v8132
        %v8134 = vpop.f32.mrf.mxu0
        %v8135 = vadd.f32 %v8031, %v8134
        %8136 = vdwg.mxu0
        %8137 = vst [vmem:[%s321] sm:$0xff] %v7278
        %8138 = vst [vmem:[%s321 + $0x8] sm:$0xff] %v7280
        %8139 = vst [vmem:[%s321 + $0x10] sm:$0xff] %v8133
        %8140 = vst [vmem:[%s321 + $0x18] sm:$0xff] %v8135
        %s8141 = smul.u32 4, %s18
        %p8142 = scmp.lt.s32.totalorder %s8141, 7
        %s8143 = scalar_select %p8142, %s8141, 7
        %s8144 = smul.addr %s8143, 8
        %s8145 = scalar_lea.vmem %s7, %s8144
        // Predicated region
        $region72: #{gnn_regression_multi_output.1} parent=66 // pred_check
          %p8146 = pneg %p188
        $region73: #{gnn_regression_multi_output.1} parent=66 // pred_check_branch
          %8148 = sbr.rel (%p8146) target = $region75
        $region74: #{gnn_regression_multi_output.1} parent=66 // pred_region
          %s8149 = smul.u32 4, %s18
        $region75: #{gnn_regression_multi_output.1} parent=66 // pred_fallthru
          _
      $region67: #{gnn_regression_multi_output.1} parent=5 // pred_fallthru
        _
      %p8150 = scmp.le.s32.totalorder 2, %s13
      // Predicated region
      $region76: #{gnn_regression_multi_output.1} parent=5 // pred_check
        %p8151 = pneg %p8150
      $region77: #{gnn_regression_multi_output.1} parent=5 // pred_check_branch
        %8153 = sbr.rel (%p8151) target = $region79
      $region78: #{gnn_regression_multi_output.1} parent=5 // pred_region
        %s8154 = ssub.s32 %s13, 2
        // Predicated region
        $region80: #{gnn_regression_multi_output.1} parent=78 // pred_check
          %p8155 = pneg %p194
        $region81: #{gnn_regression_multi_output.1} parent=78 // pred_check_branch
          %8157 = sbr.rel (%p8155) target = $region83
        $region82: #{gnn_regression_multi_output.1} parent=78 // pred_region
          %s8158 = smul.u32 4, %s19
          %p8159 = scmp.lt.s32.totalorder %s8158, 7
          %s8160 = scalar_select %p8159, %s8158, 7
          %s8161 = smul.addr %s8160, 8
          %s8162 = scalar_lea.vmem %s7, %s8161
        $region83: #{gnn_regression_multi_output.1} parent=78 // pred_fallthru
          _
      $region79: #{gnn_regression_multi_output.1} parent=5 // pred_fallthru
        _
    $region6: #{gnn_regression_multi_output.1} parent=1 // loop_footer
      %s17 = sadd.s32 1, %s13
    $region7: #{gnn_regression_multi_output.1} parent=1 // loop_footer_branch
      %12 = sbr.rel target = $region3
    $region8: #{gnn_regression_multi_output.1} parent=1 // loop_exit
      _

</llo_original>
